<compile_context>
chip_gen: v5e
topology: v5e:2x2
jax: 0.10.0
libtpu: 0.0.40
codegen_flags: <defaults>
</compile_context>

<pallas_src>
import jax
import jax.numpy as jnp
from jax.experimental import pallas as pl
from jax.experimental.pallas import tpu as pltpu

IN_FEATURES = 2381
HIDDEN_DIMS = (1024, 512, 256, 100)
NUM_CLASSES = HIDDEN_DIMS[-1]
BN_EPS = 1e-5

F_PAD = 2432      # round_up(2381, 128) -- padded contraction dim for layer 1
OUT_PAD = 128     # round_up(100, 128)  -- lane-dense output width
NEG_BIG = -1e30   # mask value for padded logit columns (exp -> 0)


def _round_up(x, m):
    return (x + m - 1) // m * m


def mlp_classifier_kernel(
    x_ref,
    w1_ref, b1_ref,
    w2_ref, b2_ref,
    w3_ref, b3_ref,
    w4_ref, b4_ref,
    o_ref,
):
    def layer(h_bf16, w_ref, b_ref):
        # Linear (MXU, bf16 x bf16 -> f32 accumulate) with BN already folded in.
        y = jnp.dot(h_bf16, w_ref[...], preferred_element_type=jnp.float32)
        y = y + b_ref[...]
        # Dropout is identity in eval mode; ReLU:
        return jnp.maximum(y, 0.0)

    h = x_ref[...]                                           # (TB, F_PAD) bf16
    h = layer(h, w1_ref, b1_ref).astype(jnp.bfloat16)        # (TB, 1024)
    h = layer(h, w2_ref, b2_ref).astype(jnp.bfloat16)        # (TB, 512)
    h = layer(h, w3_ref, b3_ref).astype(jnp.bfloat16)        # (TB, 256)
    h = layer(h, w4_ref, b4_ref)                             # (TB, 128) f32, ReLU'd

    # Softmax over the real 100 classes: mask the 28 zero-padded columns so they
    # contribute exp(.) == 0, then normalize.
    col = jax.lax.broadcasted_iota(jnp.int32, h.shape, 1)
    h = jnp.where(col < NUM_CLASSES, h, jnp.float32(NEG_BIG))
    m = jnp.max(h, axis=-1, keepdims=True)
    e = jnp.exp(h - m)
    denom = jnp.sum(e, axis=-1, keepdims=True)
    o_ref[...] = e * pl.reciprocal(denom, approx=True)


def init_params(key):
    """Deterministic synthetic parameters matching the PyTorch module's shapes.

    Returns raw (w, b, gamma, beta, running_mean, running_var) per layer,
    with w stored transposed as (in_features, out_features)."""
    dims = (IN_FEATURES,) + HIDDEN_DIMS
    params = []
    for i in range(4):
        key, kw, kb, kg, kbe, krm, krv = jax.random.split(key, 7)
        fan_in, fan_out = dims[i], dims[i + 1]
        w = jax.random.normal(kw, (fan_in, fan_out), jnp.float32) * 0.02
        b = jax.random.normal(kb, (1, fan_out), jnp.float32) * 0.01
        gamma = 1.0 + 0.1 * jax.random.normal(kg, (1, fan_out), jnp.float32)
        beta = 0.1 * jax.random.normal(kbe, (1, fan_out), jnp.float32)
        run_mean = 0.1 * jax.random.normal(krm, (1, fan_out), jnp.float32)
        run_var = jax.random.uniform(krv, (1, fan_out), jnp.float32, 0.5, 1.5)
        params.append((w, b, gamma, beta, run_mean, run_var))
    return params


def prepare_params(raw_params):
    """One-time prep: fold BN into W/b, pad W1 rows and W4/b4 cols, cast W to bf16."""
    prepared = []
    for i, (w, b, gamma, beta, run_mean, run_var) in enumerate(raw_params):
        scale = gamma / jnp.sqrt(run_var + BN_EPS)           # (1, out)
        shift = beta - run_mean * scale
        w_f = w * scale                                       # fold BN scale into columns
        b_f = b * scale + shift
        if i == 0:
            # Pad contraction dim 2381 -> 2432 with zero rows (harmless).
            w_f = jnp.pad(w_f, ((0, F_PAD - IN_FEATURES), (0, 0)))
        if i == 3:
            # Pad output dim 100 -> 128 with zero cols (masked in the softmax).
            w_f = jnp.pad(w_f, ((0, 0), (0, OUT_PAD - NUM_CLASSES)))
            b_f = jnp.pad(b_f, ((0, 0), (0, OUT_PAD - NUM_CLASSES)))
        prepared.append((w_f.astype(jnp.bfloat16), b_f.astype(jnp.float32)))
    return jax.tree_util.tree_map(jnp.asarray, prepared)


@jax.jit
def classifier_forward(x, prepared_params):
    # TODO(synk): training-mode BatchNorm/Dropout not implemented (eval semantics only).
    # Replicate x.view(-1, 2381)
    x2d = x.reshape(-1, IN_FEATURES).astype(jnp.float32)
    B = x2d.shape[0]

    # Batch tile: multiple of 8 sublanes, capped at 256 rows.
    TB = min(256, _round_up(B, 8))
    B_pad = _round_up(B, TB)

    # Pad batch (zero rows, sliced off below) and contraction dim; cast to bf16 for MXU.
    x2d = jnp.pad(x2d, ((0, B_pad - B), (0, F_PAD - IN_FEATURES))).astype(jnp.bfloat16)

    (w1, b1), (w2, b2), (w3, b3), (w4, b4) = prepared_params
    flat_inputs = [x2d, w1, b1, w2, b2, w3, b3, w4, b4]

    def resident(arr):
        # Full-array block, constant index_map -> DMA'd once, resident across grid steps.
        return pl.BlockSpec(arr.shape, lambda i: (0,) * arr.ndim)

    in_specs = [pl.BlockSpec((TB, F_PAD), lambda i: (i, 0))] + [
        resident(a) for a in flat_inputs[1:]
    ]
    out_spec = pl.BlockSpec((TB, OUT_PAD), lambda i: (i, 0))

    out = pl.pallas_call(
        mlp_classifier_kernel,
        out_shape=jax.ShapeDtypeStruct((B_pad, OUT_PAD), jnp.float32),
        grid=(B_pad // TB,),
        in_specs=in_specs,
        out_specs=out_spec,
        compiler_params=pltpu.CompilerParams(
            dimension_semantics=("parallel",),
            vmem_limit_bytes=48 << 20,   # under v7x's 64 MiB physical VMEM
        ),
    )(*flat_inputs)

    # Drop batch padding and the 28 padded (zero-probability) logit columns.
    return out[:B, :NUM_CLASSES]


if __name__ == "__main__":
    key = jax.random.PRNGKey(0)
    key_x, key_p = jax.random.split(key)

    # Small batch shaped (B, input_channel, input_features) as the module implies.
    x = jax.random.normal(key_x, (2, 1, IN_FEATURES), jnp.float32)
    raw_params = init_params(key_p)
    params = prepare_params(raw_params)   # one-time fold/pad/cast, outside the jit path

    out = classifier_forward(x, params)
    out = jax.block_until_ready(out)

    assert out.shape == (2, NUM_CLASSES), out.shape
    assert bool(jnp.all(jnp.isfinite(out))), "non-finite output"
    assert bool(jnp.all(out >= 0.0)), "negative softmax probability"
    # softmax rows sum to ~1 (bf16 matmul + approx reciprocal -> looser tolerance)
    assert bool(jnp.allclose(jnp.sum(out, axis=-1), 1.0, atol=1e-2)), "softmax rows != 1"

    print("KERNEL_OK")
</pallas_src>

<mosaic_0001>
module attributes {stable_mosaic.version = 11 : i64} {
  func.func @mlp_classifier_kernel(%arg0: i32, %arg1: memref<8x2432xbf16, #tpu.memory_space<vmem>>, %arg2: memref<2432x1024xbf16, #tpu.memory_space<vmem>>, %arg3: memref<1x1024xf32, #tpu.memory_space<vmem>>, %arg4: memref<1024x512xbf16, #tpu.memory_space<vmem>>, %arg5: memref<1x512xf32, #tpu.memory_space<vmem>>, %arg6: memref<512x256xbf16, #tpu.memory_space<vmem>>, %arg7: memref<1x256xf32, #tpu.memory_space<vmem>>, %arg8: memref<256x128xbf16, #tpu.memory_space<vmem>>, %arg9: memref<1x128xf32, #tpu.memory_space<vmem>>, %arg10: memref<8x128xf32, #tpu.memory_space<vmem>>) attributes {dimension_semantics = [#tpu.dimension_semantics<parallel>], iteration_bounds = array<i64: 1>, scalar_prefetch = 0 : i64, scratch_operands = 0 : i64, tpu.core_type = #tpu.core_type<tc>, window_params = [{transform_indices = @transform_0, window_bounds = array<i64: 8, 2432>}, {pipeline_mode = #tpu.pipeline_mode<synchronous>, transform_indices = @transform_1, window_bounds = array<i64: 2432, 1024>}, {pipeline_mode = #tpu.pipeline_mode<synchronous>, transform_indices = @transform_2, window_bounds = array<i64: 1, 1024>}, {pipeline_mode = #tpu.pipeline_mode<synchronous>, transform_indices = @transform_3, window_bounds = array<i64: 1024, 512>}, {pipeline_mode = #tpu.pipeline_mode<synchronous>, transform_indices = @transform_4, window_bounds = array<i64: 1, 512>}, {pipeline_mode = #tpu.pipeline_mode<synchronous>, transform_indices = @transform_5, window_bounds = array<i64: 512, 256>}, {pipeline_mode = #tpu.pipeline_mode<synchronous>, transform_indices = @transform_6, window_bounds = array<i64: 1, 256>}, {pipeline_mode = #tpu.pipeline_mode<synchronous>, transform_indices = @transform_7, window_bounds = array<i64: 256, 128>}, {pipeline_mode = #tpu.pipeline_mode<synchronous>, transform_indices = @transform_8, window_bounds = array<i64: 1, 128>}, {transform_indices = @transform_9, window_bounds = array<i64: 8, 128>}]} {
    %c0 = arith.constant 0 : index
    %c0_0 = arith.constant 0 : index
    %0 = vector.load %arg1[%c0, %c0_0] : memref<8x2432xbf16, #tpu.memory_space<vmem>>, vector<8x2432xbf16>
    %c0_1 = arith.constant 0 : index
    %c0_2 = arith.constant 0 : index
    %1 = vector.load %arg2[%c0_1, %c0_2] : memref<2432x1024xbf16, #tpu.memory_space<vmem>>, vector<2432x1024xbf16>
    %cst = arith.constant dense<0.000000e+00> : vector<8x1024xf32>
    %2 = tpu.matmul %0, %1, %cst {dimension_numbers = #tpu.dot_dimension_numbers<[1], [0], [0], [1], [0, 0, 1, 1], [], []>} : vector<8x2432xbf16>, vector<2432x1024xbf16>, vector<8x1024xf32> -> vector<8x1024xf32>
    %c0_3 = arith.constant 0 : index
    %c0_4 = arith.constant 0 : index
    %3 = vector.load %arg3[%c0_3, %c0_4] : memref<1x1024xf32, #tpu.memory_space<vmem>>, vector<1x1024xf32>
    %4 = vector.broadcast %3 : vector<1x1024xf32> to vector<8x1024xf32>
    %5 = arith.addf %2, %4 : vector<8x1024xf32>
    %cst_5 = arith.constant 0.000000e+00 : f32
    %6 = vector.broadcast %cst_5 : f32 to vector<8x1024xf32>
    %7 = arith.maximumf %5, %6 : vector<8x1024xf32>
    %8 = arith.truncf %7 : vector<8x1024xf32> to vector<8x1024xbf16>
    %c0_6 = arith.constant 0 : index
    %c0_7 = arith.constant 0 : index
    %9 = vector.load %arg4[%c0_6, %c0_7] : memref<1024x512xbf16, #tpu.memory_space<vmem>>, vector<1024x512xbf16>
    %cst_8 = arith.constant dense<0.000000e+00> : vector<8x512xf32>
    %10 = tpu.matmul %8, %9, %cst_8 {dimension_numbers = #tpu.dot_dimension_numbers<[1], [0], [0], [1], [0, 0, 1, 1], [], []>} : vector<8x1024xbf16>, vector<1024x512xbf16>, vector<8x512xf32> -> vector<8x512xf32>
    %c0_9 = arith.constant 0 : index
    %c0_10 = arith.constant 0 : index
    %11 = vector.load %arg5[%c0_9, %c0_10] : memref<1x512xf32, #tpu.memory_space<vmem>>, vector<1x512xf32>
    %12 = vector.broadcast %11 : vector<1x512xf32> to vector<8x512xf32>
    %13 = arith.addf %10, %12 : vector<8x512xf32>
    %cst_11 = arith.constant 0.000000e+00 : f32
    %14 = vector.broadcast %cst_11 : f32 to vector<8x512xf32>
    %15 = arith.maximumf %13, %14 : vector<8x512xf32>
    %16 = arith.truncf %15 : vector<8x512xf32> to vector<8x512xbf16>
    %c0_12 = arith.constant 0 : index
    %c0_13 = arith.constant 0 : index
    %17 = vector.load %arg6[%c0_12, %c0_13] : memref<512x256xbf16, #tpu.memory_space<vmem>>, vector<512x256xbf16>
    %cst_14 = arith.constant dense<0.000000e+00> : vector<8x256xf32>
    %18 = tpu.matmul %16, %17, %cst_14 {dimension_numbers = #tpu.dot_dimension_numbers<[1], [0], [0], [1], [0, 0, 1, 1], [], []>} : vector<8x512xbf16>, vector<512x256xbf16>, vector<8x256xf32> -> vector<8x256xf32>
    %c0_15 = arith.constant 0 : index
    %c0_16 = arith.constant 0 : index
    %19 = vector.load %arg7[%c0_15, %c0_16] : memref<1x256xf32, #tpu.memory_space<vmem>>, vector<1x256xf32>
    %20 = vector.broadcast %19 : vector<1x256xf32> to vector<8x256xf32>
    %21 = arith.addf %18, %20 : vector<8x256xf32>
    %cst_17 = arith.constant 0.000000e+00 : f32
    %22 = vector.broadcast %cst_17 : f32 to vector<8x256xf32>
    %23 = arith.maximumf %21, %22 : vector<8x256xf32>
    %24 = arith.truncf %23 : vector<8x256xf32> to vector<8x256xbf16>
    %c0_18 = arith.constant 0 : index
    %c0_19 = arith.constant 0 : index
    %25 = vector.load %arg8[%c0_18, %c0_19] : memref<256x128xbf16, #tpu.memory_space<vmem>>, vector<256x128xbf16>
    %cst_20 = arith.constant dense<0.000000e+00> : vector<8x128xf32>
    %26 = tpu.matmul %24, %25, %cst_20 {dimension_numbers = #tpu.dot_dimension_numbers<[1], [0], [0], [1], [0, 0, 1, 1], [], []>} : vector<8x256xbf16>, vector<256x128xbf16>, vector<8x128xf32> -> vector<8x128xf32>
    %c0_21 = arith.constant 0 : index
    %c0_22 = arith.constant 0 : index
    %27 = vector.load %arg9[%c0_21, %c0_22] : memref<1x128xf32, #tpu.memory_space<vmem>>, vector<1x128xf32>
    %28 = vector.broadcast %27 : vector<1x128xf32> to vector<8x128xf32>
    %29 = arith.addf %26, %28 : vector<8x128xf32>
    %cst_23 = arith.constant 0.000000e+00 : f32
    %30 = vector.broadcast %cst_23 : f32 to vector<8x128xf32>
    %31 = arith.maximumf %29, %30 : vector<8x128xf32>
    %32 = tpu.iota {dimensions = array<i32: 1>} : vector<8x128xi32>
    %c100_i32 = arith.constant 100 : i32
    %33 = vector.broadcast %c100_i32 : i32 to vector<8x128xi32>
    %34 = arith.cmpi slt, %32, %33 : vector<8x128xi32>
    %cst_24 = arith.constant -1.000000e+30 : f32
    %35 = vector.broadcast %cst_24 : f32 to vector<8x128xf32>
    %36 = arith.select %34, %31, %35 : vector<8x128xi1>, vector<8x128xf32>
    %cst_25 = arith.constant dense<0xFF800000> : vector<8xf32>
    %37 = vector.multi_reduction <maximumf>, %36, %cst_25 [1] : vector<8x128xf32> to vector<8xf32>
    %38 = vector.shape_cast %37 : vector<8xf32> to vector<8x1xf32>
    %39 = vector.broadcast %38 : vector<8x1xf32> to vector<8x128xf32>
    %40 = arith.subf %36, %39 : vector<8x128xf32>
    %41 = math.exp %40 : vector<8x128xf32>
    %cst_26 = arith.constant dense<0.000000e+00> : vector<8xf32>
    %42 = vector.multi_reduction <add>, %41, %cst_26 [1] : vector<8x128xf32> to vector<8xf32>
    %43 = vector.shape_cast %42 : vector<8xf32> to vector<8x1xf32>
    %44 = tpu.reciprocal %43 {approx = true} : vector<8x1xf32> -> vector<8x1xf32>
    %45 = vector.broadcast %44 : vector<8x1xf32> to vector<8x128xf32>
    %46 = arith.mulf %41, %45 : vector<8x128xf32>
    %c0_27 = arith.constant 0 : index
    %c0_28 = arith.constant 0 : index
    %47 = vector.load %arg10[%c0_27, %c0_28] : memref<8x128xf32, #tpu.memory_space<vmem>>, vector<8x128xf32>
    tpu.vector_store %arg10[%c0_27, %c0_28], %46 {strides = array<i32>} : memref<8x128xf32, #tpu.memory_space<vmem>>, vector<8x128xf32>,
    return
  }
  func.func @transform_0(%arg0: i32) -> (i32, i32) {
    %c0_i32 = arith.constant 0 : i32
    %c0_i32_0 = arith.constant 0 : i32
    return %arg0, %c0_i32 : i32, i32
  }
  func.func @transform_1(%arg0: i32) -> (i32, i32) {
    %c0_i32 = arith.constant 0 : i32
    %c0_i32_0 = arith.constant 0 : i32
    %c0_i32_1 = arith.constant 0 : i32
    return %c0_i32, %c0_i32_0 : i32, i32
  }
  func.func @transform_2(%arg0: i32) -> (i32, i32) {
    %c0_i32 = arith.constant 0 : i32
    %c0_i32_0 = arith.constant 0 : i32
    %c0_i32_1 = arith.constant 0 : i32
    return %c0_i32, %c0_i32_0 : i32, i32
  }
  func.func @transform_3(%arg0: i32) -> (i32, i32) {
    %c0_i32 = arith.constant 0 : i32
    %c0_i32_0 = arith.constant 0 : i32
    %c0_i32_1 = arith.constant 0 : i32
    return %c0_i32, %c0_i32_0 : i32, i32
  }
  func.func @transform_4(%arg0: i32) -> (i32, i32) {
    %c0_i32 = arith.constant 0 : i32
    %c0_i32_0 = arith.constant 0 : i32
    %c0_i32_1 = arith.constant 0 : i32
    return %c0_i32, %c0_i32_0 : i32, i32
  }
  func.func @transform_5(%arg0: i32) -> (i32, i32) {
    %c0_i32 = arith.constant 0 : i32
    %c0_i32_0 = arith.constant 0 : i32
    %c0_i32_1 = arith.constant 0 : i32
    return %c0_i32, %c0_i32_0 : i32, i32
  }
  func.func @transform_6(%arg0: i32) -> (i32, i32) {
    %c0_i32 = arith.constant 0 : i32
    %c0_i32_0 = arith.constant 0 : i32
    %c0_i32_1 = arith.constant 0 : i32
    return %c0_i32, %c0_i32_0 : i32, i32
  }
  func.func @transform_7(%arg0: i32) -> (i32, i32) {
    %c0_i32 = arith.constant 0 : i32
    %c0_i32_0 = arith.constant 0 : i32
    %c0_i32_1 = arith.constant 0 : i32
    return %c0_i32, %c0_i32_0 : i32, i32
  }
  func.func @transform_8(%arg0: i32) -> (i32, i32) {
    %c0_i32 = arith.constant 0 : i32
    %c0_i32_0 = arith.constant 0 : i32
    %c0_i32_1 = arith.constant 0 : i32
    return %c0_i32, %c0_i32_0 : i32, i32
  }
  func.func @transform_9(%arg0: i32) -> (i32, i32) {
    %c0_i32 = arith.constant 0 : i32
    %c0_i32_0 = arith.constant 0 : i32
    return %arg0, %c0_i32 : i32, i32
  }
}

</mosaic_0001>

<llo_original>
// kernel: classifier_forward.1
$region0: #{classifier_forward.1}
  #allocation0 [shape = 'u32[]', space=smem, size = 0x4, offset = 0x4, fixed_abs, tag = 'smem constant byte address 0x4 - core index']
  #allocation1 [shape = 'u32[72,128]{1,0:T(1,128)}', space=vmem, size = 0x9000, scoped, tag = 'internal scratch']
  %s0 = inlined_call_operand.vmem [shape: bf16[8,2432], index: 0, kind: input, shape index: {}]
  %s1 = inlined_call_operand.hbm [shape: bf16[2432,1024], index: 1, kind: input, shape index: {}]
  %s2 = inlined_call_operand.hbm [shape: f32[1,1024], index: 2, kind: input, shape index: {}]
  %s3 = inlined_call_operand.hbm [shape: bf16[1024,512], index: 3, kind: input, shape index: {}]
  %s4 = inlined_call_operand.hbm [shape: f32[1,512], index: 4, kind: input, shape index: {}]
  %s5 = inlined_call_operand.hbm [shape: bf16[512,256], index: 5, kind: input, shape index: {}]
  %s6 = inlined_call_operand.hbm [shape: f32[1,256], index: 6, kind: input, shape index: {}]
  %s7 = inlined_call_operand.hbm [shape: bf16[256,128], index: 7, kind: input, shape index: {}]
  %s8 = inlined_call_operand.hbm [shape: f32[1,128], index: 8, kind: input, shape index: {}]
  %s9 = inlined_call_operand.vmem [shape: f32[8,128], index: 9, kind: output, shape index: {}]
  %s10 = sld [smem:[#allocation0]]
  $region78: #{classifier_forward.1} parent=0
    _
  %s12 = ssub.s32 1, %s10
  %s13 = scalar_select 0, %s12, %s10
  $region1: #{classifier_forward.1} parent=0
    #allocation2 [shape = 'u8[4980736]{0}', space=vmem, size = 0x4c0000, scoped, tag = 'input window, operand 1, single buffered']
    #allocation3 [shape = 's32[1]{0}', space=sflag, size = 0x4, scoped, tag = 'scoped memory for classifier_forward.1']
    #allocation4 [shape = 'u8[4096]{0}', space=vmem, size = 0x1000, scoped, tag = 'input window, operand 2, single buffered']
    #allocation5 [shape = 's32[1]{0}', space=sflag, size = 0x4, scoped, tag = 'scoped memory for classifier_forward.1']
    #allocation6 [shape = 'u8[1048576]{0}', space=vmem, size = 0x100000, scoped, tag = 'input window, operand 3, single buffered']
    #allocation7 [shape = 'u8[2048]{0}', space=vmem, size = 0x800, scoped, tag = 'input window, operand 4, single buffered']
    #allocation8 [shape = 's32[1]{0}', space=sflag, size = 0x4, scoped, tag = 'scoped memory for classifier_forward.1']
    #allocation9 [shape = 'u8[262144]{0}', space=vmem, size = 0x40000, scoped, tag = 'input window, operand 5, single buffered']
    #allocation10 [shape = 'u8[1024]{0}', space=vmem, size = 0x400, scoped, tag = 'input window, operand 6, single buffered']
    #allocation11 [shape = 's32[1]{0}', space=sflag, size = 0x4, scoped, tag = 'scoped memory for classifier_forward.1']
    #allocation12 [shape = 'u8[65536]{0}', space=vmem, size = 0x10000, scoped, tag = 'input window, operand 7, single buffered']
    #allocation13 [shape = 'u8[512]{0}', space=vmem, size = 0x400, scoped, tag = 'input window, operand 8, single buffered']
    #allocation14 [shape = 's32[1]{0}', space=sflag, size = 0x4, scoped, tag = 'scoped memory for classifier_forward.1']
    %14 = vsyncpa [#allocation3], 0
    %15 = vsyncpa [#allocation5], 0
    %16 = vsyncpa [#allocation8], 0
    %17 = vsyncpa [#allocation11], 0
    %18 = vsyncpa [#allocation14], 0
    // Predicated region
    $region2: #{classifier_forward.1} parent=1 // pred_check
      _
    $region3: #{classifier_forward.1} parent=1 // pred_check_branch
      %20 = sbr.rel (0) target = $region5
    $region4: #{classifier_forward.1} parent=1 // pred_region
      _
    $region5: #{classifier_forward.1} parent=1 // pred_fallthru
      _
    // Predicated region
    $region6: #{classifier_forward.1} parent=1 // pred_check
      _
    $region7: #{classifier_forward.1} parent=1 // pred_check_branch
      %22 = sbr.rel (0) target = $region9
    $region8: #{classifier_forward.1} parent=1 // pred_region
      %24 = vsyncadd [#allocation3], 0
      %s25 = sshll.u32 %s1, 4
      %s26 = int_to_ptr.hbm [resolvable:$true] %s25
      %s27 = sshll.u32 [#allocation2], 4
      %s28 = int_to_ptr.vmem [resolvable:$true] %s27
      %33 = dma.hbm_to_vmem [thread:$0]  %s26, 155648, %s28, [#allocation3], 512, 512, 32
    $region9: #{classifier_forward.1} parent=1 // pred_fallthru
      _
    // Predicated region
    $region10: #{classifier_forward.1} parent=1 // pred_check
      _
    $region11: #{classifier_forward.1} parent=1 // pred_check_branch
      %35 = sbr.rel (0) target = $region13
    $region12: #{classifier_forward.1} parent=1 // pred_region
      %37 = vsyncadd [#allocation5], 0
      %s39 = sshll.u32 %s2, 4
      %s40 = int_to_ptr.hbm [resolvable:$true] %s39
      %s41 = sshll.u32 [#allocation4], 4
      %s42 = int_to_ptr.vmem [resolvable:$true] %s41
      %44 = dma.hbm_to_vmem [thread:$0]  %s40, 128, %s42, [#allocation5]
    $region13: #{classifier_forward.1} parent=1 // pred_fallthru
      _
    // Predicated region
    $region14: #{classifier_forward.1} parent=1 // pred_check
      _
    $region15: #{classifier_forward.1} parent=1 // pred_check_branch
      %46 = sbr.rel (0) target = $region17
    $region16: #{classifier_forward.1} parent=1 // pred_region
      %48 = vsyncadd [#allocation5], 0
      %s49 = sshll.u32 %s3, 4
      %s50 = int_to_ptr.hbm [resolvable:$true] %s49
      %s51 = sshll.u32 [#allocation6], 4
      %s52 = int_to_ptr.vmem [resolvable:$true] %s51
      %57 = dma.hbm_to_vmem [thread:$0]  %s50, 32768, %s52, [#allocation5], 256, 256, 16
    $region17: #{classifier_forward.1} parent=1 // pred_fallthru
      _
    // Predicated region
    $region18: #{classifier_forward.1} parent=1 // pred_check
      _
    $region19: #{classifier_forward.1} parent=1 // pred_check_branch
      %59 = sbr.rel (0) target = $region21
    $region20: #{classifier_forward.1} parent=1 // pred_region
      %61 = vsyncadd [#allocation8], 0
      %s63 = sshll.u32 %s4, 4
      %s64 = int_to_ptr.hbm [resolvable:$true] %s63
      %s65 = sshll.u32 [#allocation7], 4
      %s66 = int_to_ptr.vmem [resolvable:$true] %s65
      %68 = dma.hbm_to_vmem [thread:$0]  %s64, 64, %s66, [#allocation8]
    $region21: #{classifier_forward.1} parent=1 // pred_fallthru
      _
    // Predicated region
    $region22: #{classifier_forward.1} parent=1 // pred_check
      _
    $region23: #{classifier_forward.1} parent=1 // pred_check_branch
      %70 = sbr.rel (0) target = $region25
    $region24: #{classifier_forward.1} parent=1 // pred_region
      %72 = vsyncadd [#allocation8], 0
      %s73 = sshll.u32 %s5, 4
      %s74 = int_to_ptr.hbm [resolvable:$true] %s73
      %s75 = sshll.u32 [#allocation9], 4
      %s76 = int_to_ptr.vmem [resolvable:$true] %s75
      %81 = dma.hbm_to_vmem [thread:$0]  %s74, 8192, %s76, [#allocation8], 128, 128, 8
    $region25: #{classifier_forward.1} parent=1 // pred_fallthru
      _
    // Predicated region
    $region26: #{classifier_forward.1} parent=1 // pred_check
      _
    $region27: #{classifier_forward.1} parent=1 // pred_check_branch
      %83 = sbr.rel (0) target = $region29
    $region28: #{classifier_forward.1} parent=1 // pred_region
      %85 = vsyncadd [#allocation11], 0
      %s87 = sshll.u32 %s6, 4
      %s88 = int_to_ptr.hbm [resolvable:$true] %s87
      %s89 = sshll.u32 [#allocation10], 4
      %s90 = int_to_ptr.vmem [resolvable:$true] %s89
      %92 = dma.hbm_to_vmem [thread:$0]  %s88, 32, %s90, [#allocation11]
    $region29: #{classifier_forward.1} parent=1 // pred_fallthru
      _
    // Predicated region
    $region30: #{classifier_forward.1} parent=1 // pred_check
      _
    $region31: #{classifier_forward.1} parent=1 // pred_check_branch
      %94 = sbr.rel (0) target = $region33
    $region32: #{classifier_forward.1} parent=1 // pred_region
      %96 = vsyncadd [#allocation11], 0
      %s97 = sshll.u32 %s7, 4
      %s98 = int_to_ptr.hbm [resolvable:$true] %s97
      %s99 = sshll.u32 [#allocation12], 4
      %s100 = int_to_ptr.vmem [resolvable:$true] %s99
      %105 = dma.hbm_to_vmem [thread:$0]  %s98, 2048, %s100, [#allocation11], 64, 64, 4
    $region33: #{classifier_forward.1} parent=1 // pred_fallthru
      _
    // Predicated region
    $region34: #{classifier_forward.1} parent=1 // pred_check
      _
    $region35: #{classifier_forward.1} parent=1 // pred_check_branch
      %107 = sbr.rel (0) target = $region37
    $region36: #{classifier_forward.1} parent=1 // pred_region
      %109 = vsyncadd [#allocation14], 0
      %s111 = sshll.u32 %s8, 4
      %s112 = int_to_ptr.hbm [resolvable:$true] %s111
      %s113 = sshll.u32 [#allocation13], 4
      %s114 = int_to_ptr.vmem [resolvable:$true] %s113
      %116 = dma.hbm_to_vmem [thread:$0]  %s112, 16, %s114, [#allocation14]
    $region37: #{classifier_forward.1} parent=1 // pred_fallthru
      _
    // Predicated region
    $region38: #{classifier_forward.1} parent=1 // pred_check
      _
    $region39: #{classifier_forward.1} parent=1 // pred_check_branch
      %118 = sbr.rel (0) target = $region41
    $region40: #{classifier_forward.1} parent=1 // pred_region
      %120 = dma.done [#allocation3], 155648
    $region41: #{classifier_forward.1} parent=1 // pred_fallthru
      _
    // Predicated region
    $region42: #{classifier_forward.1} parent=1 // pred_check
      _
    $region43: #{classifier_forward.1} parent=1 // pred_check_branch
      %122 = sbr.rel (0) target = $region45
    $region44: #{classifier_forward.1} parent=1 // pred_region
      %124 = dma.done [#allocation5], 128
    $region45: #{classifier_forward.1} parent=1 // pred_fallthru
      _
    // Predicated region
    $region46: #{classifier_forward.1} parent=1 // pred_check
      _
    $region47: #{classifier_forward.1} parent=1 // pred_check_branch
      %126 = sbr.rel (0) target = $region49
    $region48: #{classifier_forward.1} parent=1 // pred_region
      %128 = dma.done [#allocation5], 32768
    $region49: #{classifier_forward.1} parent=1 // pred_fallthru
      _
    // Predicated region
    $region50: #{classifier_forward.1} parent=1 // pred_check
      _
    $region51: #{classifier_forward.1} parent=1 // pred_check_branch
      %130 = sbr.rel (0) target = $region53
    $region52: #{classifier_forward.1} parent=1 // pred_region
      %132 = dma.done [#allocation8], 64
    $region53: #{classifier_forward.1} parent=1 // pred_fallthru
      _
    // Predicated region
    $region54: #{classifier_forward.1} parent=1 // pred_check
      _
    $region55: #{classifier_forward.1} parent=1 // pred_check_branch
      %134 = sbr.rel (0) target = $region57
    $region56: #{classifier_forward.1} parent=1 // pred_region
      %136 = dma.done [#allocation8], 8192
    $region57: #{classifier_forward.1} parent=1 // pred_fallthru
      _
    // Predicated region
    $region58: #{classifier_forward.1} parent=1 // pred_check
      _
    $region59: #{classifier_forward.1} parent=1 // pred_check_branch
      %138 = sbr.rel (0) target = $region61
    $region60: #{classifier_forward.1} parent=1 // pred_region
      %140 = dma.done [#allocation11], 32
    $region61: #{classifier_forward.1} parent=1 // pred_fallthru
      _
    // Predicated region
    $region62: #{classifier_forward.1} parent=1 // pred_check
      _
    $region63: #{classifier_forward.1} parent=1 // pred_check_branch
      %142 = sbr.rel (0) target = $region65
    $region64: #{classifier_forward.1} parent=1 // pred_region
      %144 = dma.done [#allocation11], 2048
    $region65: #{classifier_forward.1} parent=1 // pred_fallthru
      _
    // Predicated region
    $region66: #{classifier_forward.1} parent=1 // pred_check
      _
    $region67: #{classifier_forward.1} parent=1 // pred_check_branch
      %146 = sbr.rel (0) target = $region69
    $region68: #{classifier_forward.1} parent=1 // pred_region
      %148 = dma.done [#allocation14], 16
    $region69: #{classifier_forward.1} parent=1 // pred_fallthru
      _
    %v149 = vld [vmem:[%s0] sm:$0xff]
    %v150 = vld [vmem:[%s0 + $0x8] sm:$0xff]
    %v151 = vld [vmem:[%s0 + $0x10] sm:$0xff]
    %v152 = vld [vmem:[%s0 + $0x18] sm:$0xff]
    %v153 = vld [vmem:[%s0 + $0x20] sm:$0xff]
    %v154 = vld [vmem:[%s0 + $0x28] sm:$0xff]
    %v155 = vld [vmem:[%s0 + $0x30] sm:$0xff]
    %v156 = vld [vmem:[%s0 + $0x38] sm:$0xff]
    %v157 = vld [vmem:[%s0 + $0x40] sm:$0xff]
    %v158 = vld [vmem:[%s0 + $0x48] sm:$0xf]
    %v159 = vld [vmem:[#allocation2] sm:$0xff]
    %v160 = vld [vmem:[#allocation2 + $0x8] sm:$0xff]
    %v161 = vld [vmem:[#allocation2 + $0x10] sm:$0xff]
    %v162 = vld [vmem:[#allocation2 + $0x18] sm:$0xff]
    %v163 = vld [vmem:[#allocation2 + $0x20] sm:$0xff]
    %v164 = vld [vmem:[#allocation2 + $0x28] sm:$0xff]
    %v165 = vld [vmem:[#allocation2 + $0x30] sm:$0xff]
    %v166 = vld [vmem:[#allocation2 + $0x38] sm:$0xff]
    %v167 = vld [vmem:[#allocation2 + $0x40] sm:$0xff]
    %v168 = vld [vmem:[#allocation2 + $0x48] sm:$0xff]
    %v169 = vld [vmem:[#allocation2 + $0x50] sm:$0xff]
    %v170 = vld [vmem:[#allocation2 + $0x58] sm:$0xff]
    %v171 = vld [vmem:[#allocation2 + $0x60] sm:$0xff]
    %v172 = vld [vmem:[#allocation2 + $0x68] sm:$0xff]
    %v173 = vld [vmem:[#allocation2 + $0x70] sm:$0xff]
    %v174 = vld [vmem:[#allocation2 + $0x78] sm:$0xff]
    %v175 = vld [vmem:[#allocation2 + $0x80] sm:$0xff]
    %v176 = vld [vmem:[#allocation2 + $0x88] sm:$0xff]
    %v177 = vld [vmem:[#allocation2 + $0x90] sm:$0xff]
    %v178 = vld [vmem:[#allocation2 + $0x98] sm:$0xff]
    %v179 = vld [vmem:[#allocation2 + $0xa0] sm:$0xff]
    %v180 = vld [vmem:[#allocation2 + $0xa8] sm:$0xff]
    %v181 = vld [vmem:[#allocation2 + $0xb0] sm:$0xff]
    %v182 = vld [vmem:[#allocation2 + $0xb8] sm:$0xff]
    %v183 = vld [vmem:[#allocation2 + $0xc0] sm:$0xff]
    %v184 = vld [vmem:[#allocation2 + $0xc8] sm:$0xff]
    %v185 = vld [vmem:[#allocation2 + $0xd0] sm:$0xff]
    %v186 = vld [vmem:[#allocation2 + $0xd8] sm:$0xff]
    %v187 = vld [vmem:[#allocation2 + $0xe0] sm:$0xff]
    %v188 = vld [vmem:[#allocation2 + $0xe8] sm:$0xff]
    %v189 = vld [vmem:[#allocation2 + $0xf0] sm:$0xff]
    %v190 = vld [vmem:[#allocation2 + $0xf8] sm:$0xff]
    %v191 = vld [vmem:[#allocation2 + $0x100] sm:$0xff]
    %v192 = vld [vmem:[#allocation2 + $0x108] sm:$0xff]
    %v193 = vld [vmem:[#allocation2 + $0x110] sm:$0xff]
    %v194 = vld [vmem:[#allocation2 + $0x118] sm:$0xff]
    %v195 = vld [vmem:[#allocation2 + $0x120] sm:$0xff]
    %v196 = vld [vmem:[#allocation2 + $0x128] sm:$0xff]
    %v197 = vld [vmem:[#allocation2 + $0x130] sm:$0xff]
    %v198 = vld [vmem:[#allocation2 + $0x138] sm:$0xff]
    %v199 = vld [vmem:[#allocation2 + $0x140] sm:$0xff]
    %v200 = vld [vmem:[#allocation2 + $0x148] sm:$0xff]
    %v201 = vld [vmem:[#allocation2 + $0x150] sm:$0xff]
    %v202 = vld [vmem:[#allocation2 + $0x158] sm:$0xff]
    %v203 = vld [vmem:[#allocation2 + $0x160] sm:$0xff]
    %v204 = vld [vmem:[#allocation2 + $0x168] sm:$0xff]
    %v205 = vld [vmem:[#allocation2 + $0x170] sm:$0xff]
    %v206 = vld [vmem:[#allocation2 + $0x178] sm:$0xff]
    %v207 = vld [vmem:[#allocation2 + $0x180] sm:$0xff]
    %v208 = vld [vmem:[#allocation2 + $0x188] sm:$0xff]
    %v209 = vld [vmem:[#allocation2 + $0x190] sm:$0xff]
    %v210 = vld [vmem:[#allocation2 + $0x198] sm:$0xff]
    %v211 = vld [vmem:[#allocation2 + $0x1a0] sm:$0xff]
    %v212 = vld [vmem:[#allocation2 + $0x1a8] sm:$0xff]
    %v213 = vld [vmem:[#allocation2 + $0x1b0] sm:$0xff]
    %v214 = vld [vmem:[#allocation2 + $0x1b8] sm:$0xff]
    %v215 = vld [vmem:[#allocation2 + $0x1c0] sm:$0xff]
    %v216 = vld [vmem:[#allocation2 + $0x1c8] sm:$0xff]
    %v217 = vld [vmem:[#allocation2 + $0x1d0] sm:$0xff]
    %v218 = vld [vmem:[#allocation2 + $0x1d8] sm:$0xff]
    %v219 = vld [vmem:[#allocation2 + $0x1e0] sm:$0xff]
    %v220 = vld [vmem:[#allocation2 + $0x1e8] sm:$0xff]
    %v221 = vld [vmem:[#allocation2 + $0x1f0] sm:$0xff]
    %v222 = vld [vmem:[#allocation2 + $0x1f8] sm:$0xff]
    %v223 = vld [vmem:[#allocation2 + $0x200] sm:$0xff]
    %v224 = vld [vmem:[#allocation2 + $0x208] sm:$0xff]
    %v225 = vld [vmem:[#allocation2 + $0x210] sm:$0xff]
    %v226 = vld [vmem:[#allocation2 + $0x218] sm:$0xff]
    %v227 = vld [vmem:[#allocation2 + $0x220] sm:$0xff]
    %v228 = vld [vmem:[#allocation2 + $0x228] sm:$0xff]
    %v229 = vld [vmem:[#allocation2 + $0x230] sm:$0xff]
    %v230 = vld [vmem:[#allocation2 + $0x238] sm:$0xff]
    %v231 = vld [vmem:[#allocation2 + $0x240] sm:$0xff]
    %v232 = vld [vmem:[#allocation2 + $0x248] sm:$0xff]
    %v233 = vld [vmem:[#allocation2 + $0x250] sm:$0xff]
    %v234 = vld [vmem:[#allocation2 + $0x258] sm:$0xff]
    %v235 = vld [vmem:[#allocation2 + $0x260] sm:$0xff]
    %v236 = vld [vmem:[#allocation2 + $0x268] sm:$0xff]
    %v237 = vld [vmem:[#allocation2 + $0x270] sm:$0xff]
    %v238 = vld [vmem:[#allocation2 + $0x278] sm:$0xff]
    %v239 = vld [vmem:[#allocation2 + $0x280] sm:$0xff]
    %v240 = vld [vmem:[#allocation2 + $0x288] sm:$0xff]
    %v241 = vld [vmem:[#allocation2 + $0x290] sm:$0xff]
    %v242 = vld [vmem:[#allocation2 + $0x298] sm:$0xff]
    %v243 = vld [vmem:[#allocation2 + $0x2a0] sm:$0xff]
    %v244 = vld [vmem:[#allocation2 + $0x2a8] sm:$0xff]
    %v245 = vld [vmem:[#allocation2 + $0x2b0] sm:$0xff]
    %v246 = vld [vmem:[#allocation2 + $0x2b8] sm:$0xff]
    %v247 = vld [vmem:[#allocation2 + $0x2c0] sm:$0xff]
    %v248 = vld [vmem:[#allocation2 + $0x2c8] sm:$0xff]
    %v249 = vld [vmem:[#allocation2 + $0x2d0] sm:$0xff]
    %v250 = vld [vmem:[#allocation2 + $0x2d8] sm:$0xff]
    %v251 = vld [vmem:[#allocation2 + $0x2e0] sm:$0xff]
    %v252 = vld [vmem:[#allocation2 + $0x2e8] sm:$0xff]
    %v253 = vld [vmem:[#allocation2 + $0x2f0] sm:$0xff]
    %v254 = vld [vmem:[#allocation2 + $0x2f8] sm:$0xff]
    %v255 = vld [vmem:[#allocation2 + $0x300] sm:$0xff]
    %v256 = vld [vmem:[#allocation2 + $0x308] sm:$0xff]
    %v257 = vld [vmem:[#allocation2 + $0x310] sm:$0xff]
    %v258 = vld [vmem:[#allocation2 + $0x318] sm:$0xff]
    %v259 = vld [vmem:[#allocation2 + $0x320] sm:$0xff]
    %v260 = vld [vmem:[#allocation2 + $0x328] sm:$0xff]
    %v261 = vld [vmem:[#allocation2 + $0x330] sm:$0xff]
    %v262 = vld [vmem:[#allocation2 + $0x338] sm:$0xff]
    %v263 = vld [vmem:[#allocation2 + $0x340] sm:$0xff]
    %v264 = vld [vmem:[#allocation2 + $0x348] sm:$0xff]
    %v265 = vld [vmem:[#allocation2 + $0x350] sm:$0xff]
    %v266 = vld [vmem:[#allocation2 + $0x358] sm:$0xff]
    %v267 = vld [vmem:[#allocation2 + $0x360] sm:$0xff]
    %v268 = vld [vmem:[#allocation2 + $0x368] sm:$0xff]
    %v269 = vld [vmem:[#allocation2 + $0x370] sm:$0xff]
    %v270 = vld [vmem:[#allocation2 + $0x378] sm:$0xff]
    %v271 = vld [vmem:[#allocation2 + $0x380] sm:$0xff]
    %v272 = vld [vmem:[#allocation2 + $0x388] sm:$0xff]
    %v273 = vld [vmem:[#allocation2 + $0x390] sm:$0xff]
    %v274 = vld [vmem:[#allocation2 + $0x398] sm:$0xff]
    %v275 = vld [vmem:[#allocation2 + $0x3a0] sm:$0xff]
    %v276 = vld [vmem:[#allocation2 + $0x3a8] sm:$0xff]
    %v277 = vld [vmem:[#allocation2 + $0x3b0] sm:$0xff]
    %v278 = vld [vmem:[#allocation2 + $0x3b8] sm:$0xff]
    %v279 = vld [vmem:[#allocation2 + $0x3c0] sm:$0xff]
    %v280 = vld [vmem:[#allocation2 + $0x3c8] sm:$0xff]
    %v281 = vld [vmem:[#allocation2 + $0x3d0] sm:$0xff]
    %v282 = vld [vmem:[#allocation2 + $0x3d8] sm:$0xff]
    %v283 = vld [vmem:[#allocation2 + $0x3e0] sm:$0xff]
    %v284 = vld [vmem:[#allocation2 + $0x3e8] sm:$0xff]
    %v285 = vld [vmem:[#allocation2 + $0x3f0] sm:$0xff]
    %v286 = vld [vmem:[#allocation2 + $0x3f8] sm:$0xff]
    %v287 = vld [vmem:[#allocation2 + $0x400] sm:$0xff]
    %v288 = vld [vmem:[#allocation2 + $0x408] sm:$0xff]
    %v289 = vld [vmem:[#allocation2 + $0x410] sm:$0xff]
    %v290 = vld [vmem:[#allocation2 + $0x418] sm:$0xff]
    %v291 = vld [vmem:[#allocation2 + $0x420] sm:$0xff]
    %v292 = vld [vmem:[#allocation2 + $0x428] sm:$0xff]
    %v293 = vld [vmem:[#allocation2 + $0x430] sm:$0xff]
    %v294 = vld [vmem:[#allocation2 + $0x438] sm:$0xff]
    %v295 = vld [vmem:[#allocation2 + $0x440] sm:$0xff]
    %v296 = vld [vmem:[#allocation2 + $0x448] sm:$0xff]
    %v297 = vld [vmem:[#allocation2 + $0x450] sm:$0xff]
    %v298 = vld [vmem:[#allocation2 + $0x458] sm:$0xff]
    %v299 = vld [vmem:[#allocation2 + $0x460] sm:$0xff]
    %v300 = vld [vmem:[#allocation2 + $0x468] sm:$0xff]
    %v301 = vld [vmem:[#allocation2 + $0x470] sm:$0xff]
    %v302 = vld [vmem:[#allocation2 + $0x478] sm:$0xff]
    %v303 = vld [vmem:[#allocation2 + $0x480] sm:$0xff]
    %v304 = vld [vmem:[#allocation2 + $0x488] sm:$0xff]
    %v305 = vld [vmem:[#allocation2 + $0x490] sm:$0xff]
    %v306 = vld [vmem:[#allocation2 + $0x498] sm:$0xff]
    %v307 = vld [vmem:[#allocation2 + $0x4a0] sm:$0xff]
    %v308 = vld [vmem:[#allocation2 + $0x4a8] sm:$0xff]
    %v309 = vld [vmem:[#allocation2 + $0x4b0] sm:$0xff]
    %v310 = vld [vmem:[#allocation2 + $0x4b8] sm:$0xff]
    %v311 = vld [vmem:[#allocation2 + $0x4c0] sm:$0xff]
    %v312 = vld [vmem:[#allocation2 + $0x4c8] sm:$0xff]
    %v313 = vld [vmem:[#allocation2 + $0x4d0] sm:$0xff]
    %v314 = vld [vmem:[#allocation2 + $0x4d8] sm:$0xff]
    %v315 = vld [vmem:[#allocation2 + $0x4e0] sm:$0xff]
    %v316 = vld [vmem:[#allocation2 + $0x4e8] sm:$0xff]
    %v317 = vld [vmem:[#allocation2 + $0x4f0] sm:$0xff]
    %v318 = vld [vmem:[#allocation2 + $0x4f8] sm:$0xff]
    %v319 = vld [vmem:[#allocation2 + $0x500] sm:$0xff]
    %v320 = vld [vmem:[#allocation2 + $0x508] sm:$0xff]
    %v321 = vld [vmem:[#allocation2 + $0x510] sm:$0xff]
    %v322 = vld [vmem:[#allocation2 + $0x518] sm:$0xff]
    %v323 = vld [vmem:[#allocation2 + $0x520] sm:$0xff]
    %v324 = vld [vmem:[#allocation2 + $0x528] sm:$0xff]
    %v325 = vld [vmem:[#allocation2 + $0x530] sm:$0xff]
    %v326 = vld [vmem:[#allocation2 + $0x538] sm:$0xff]
    %v327 = vld [vmem:[#allocation2 + $0x540] sm:$0xff]
    %v328 = vld [vmem:[#allocation2 + $0x548] sm:$0xff]
    %v329 = vld [vmem:[#allocation2 + $0x550] sm:$0xff]
    %v330 = vld [vmem:[#allocation2 + $0x558] sm:$0xff]
    %v331 = vld [vmem:[#allocation2 + $0x560] sm:$0xff]
    %v332 = vld [vmem:[#allocation2 + $0x568] sm:$0xff]
    %v333 = vld [vmem:[#allocation2 + $0x570] sm:$0xff]
    %v334 = vld [vmem:[#allocation2 + $0x578] sm:$0xff]
    %v335 = vld [vmem:[#allocation2 + $0x580] sm:$0xff]
    %v336 = vld [vmem:[#allocation2 + $0x588] sm:$0xff]
    %v337 = vld [vmem:[#allocation2 + $0x590] sm:$0xff]
    %v338 = vld [vmem:[#allocation2 + $0x598] sm:$0xff]
    %v339 = vld [vmem:[#allocation2 + $0x5a0] sm:$0xff]
    %v340 = vld [vmem:[#allocation2 + $0x5a8] sm:$0xff]
    %v341 = vld [vmem:[#allocation2 + $0x5b0] sm:$0xff]
    %v342 = vld [vmem:[#allocation2 + $0x5b8] sm:$0xff]
    %v343 = vld [vmem:[#allocation2 + $0x5c0] sm:$0xff]
    %v344 = vld [vmem:[#allocation2 + $0x5c8] sm:$0xff]
    %v345 = vld [vmem:[#allocation2 + $0x5d0] sm:$0xff]
    %v346 = vld [vmem:[#allocation2 + $0x5d8] sm:$0xff]
    %v347 = vld [vmem:[#allocation2 + $0x5e0] sm:$0xff]
    %v348 = vld [vmem:[#allocation2 + $0x5e8] sm:$0xff]
    %v349 = vld [vmem:[#allocation2 + $0x5f0] sm:$0xff]
    %v350 = vld [vmem:[#allocation2 + $0x5f8] sm:$0xff]
    %v351 = vld [vmem:[#allocation2 + $0x600] sm:$0xff]
    %v352 = vld [vmem:[#allocation2 + $0x608] sm:$0xff]
    %v353 = vld [vmem:[#allocation2 + $0x610] sm:$0xff]
    %v354 = vld [vmem:[#allocation2 + $0x618] sm:$0xff]
    %v355 = vld [vmem:[#allocation2 + $0x620] sm:$0xff]
    %v356 = vld [vmem:[#allocation2 + $0x628] sm:$0xff]
    %v357 = vld [vmem:[#allocation2 + $0x630] sm:$0xff]
    %v358 = vld [vmem:[#allocation2 + $0x638] sm:$0xff]
    %v359 = vld [vmem:[#allocation2 + $0x640] sm:$0xff]
    %v360 = vld [vmem:[#allocation2 + $0x648] sm:$0xff]
    %v361 = vld [vmem:[#allocation2 + $0x650] sm:$0xff]
    %v362 = vld [vmem:[#allocation2 + $0x658] sm:$0xff]
    %v363 = vld [vmem:[#allocation2 + $0x660] sm:$0xff]
    %v364 = vld [vmem:[#allocation2 + $0x668] sm:$0xff]
    %v365 = vld [vmem:[#allocation2 + $0x670] sm:$0xff]
    %v366 = vld [vmem:[#allocation2 + $0x678] sm:$0xff]
    %v367 = vld [vmem:[#allocation2 + $0x680] sm:$0xff]
    %v368 = vld [vmem:[#allocation2 + $0x688] sm:$0xff]
    %v369 = vld [vmem:[#allocation2 + $0x690] sm:$0xff]
    %v370 = vld [vmem:[#allocation2 + $0x698] sm:$0xff]
    %v371 = vld [vmem:[#allocation2 + $0x6a0] sm:$0xff]
    %v372 = vld [vmem:[#allocation2 + $0x6a8] sm:$0xff]
    %v373 = vld [vmem:[#allocation2 + $0x6b0] sm:$0xff]
    %v374 = vld [vmem:[#allocation2 + $0x6b8] sm:$0xff]
    %v375 = vld [vmem:[#allocation2 + $0x6c0] sm:$0xff]
    %v376 = vld [vmem:[#allocation2 + $0x6c8] sm:$0xff]
    %v377 = vld [vmem:[#allocation2 + $0x6d0] sm:$0xff]
    %v378 = vld [vmem:[#allocation2 + $0x6d8] sm:$0xff]
    %v379 = vld [vmem:[#allocation2 + $0x6e0] sm:$0xff]
    %v380 = vld [vmem:[#allocation2 + $0x6e8] sm:$0xff]
    %v381 = vld [vmem:[#allocation2 + $0x6f0] sm:$0xff]
    %v382 = vld [vmem:[#allocation2 + $0x6f8] sm:$0xff]
    %v383 = vld [vmem:[#allocation2 + $0x700] sm:$0xff]
    %v384 = vld [vmem:[#allocation2 + $0x708] sm:$0xff]
    %v385 = vld [vmem:[#allocation2 + $0x710] sm:$0xff]
    %v386 = vld [vmem:[#allocation2 + $0x718] sm:$0xff]
    %v387 = vld [vmem:[#allocation2 + $0x720] sm:$0xff]
    %v388 = vld [vmem:[#allocation2 + $0x728] sm:$0xff]
    %v389 = vld [vmem:[#allocation2 + $0x730] sm:$0xff]
    %v390 = vld [vmem:[#allocation2 + $0x738] sm:$0xff]
    %v391 = vld [vmem:[#allocation2 + $0x740] sm:$0xff]
    %v392 = vld [vmem:[#allocation2 + $0x748] sm:$0xff]
    %v393 = vld [vmem:[#allocation2 + $0x750] sm:$0xff]
    %v394 = vld [vmem:[#allocation2 + $0x758] sm:$0xff]
    %v395 = vld [vmem:[#allocation2 + $0x760] sm:$0xff]
    %v396 = vld [vmem:[#allocation2 + $0x768] sm:$0xff]
    %v397 = vld [vmem:[#allocation2 + $0x770] sm:$0xff]
    %v398 = vld [vmem:[#allocation2 + $0x778] sm:$0xff]
    %v399 = vld [vmem:[#allocation2 + $0x780] sm:$0xff]
    %v400 = vld [vmem:[#allocation2 + $0x788] sm:$0xff]
    %v401 = vld [vmem:[#allocation2 + $0x790] sm:$0xff]
    %v402 = vld [vmem:[#allocation2 + $0x798] sm:$0xff]
    %v403 = vld [vmem:[#allocation2 + $0x7a0] sm:$0xff]
    %v404 = vld [vmem:[#allocation2 + $0x7a8] sm:$0xff]
    %v405 = vld [vmem:[#allocation2 + $0x7b0] sm:$0xff]
    %v406 = vld [vmem:[#allocation2 + $0x7b8] sm:$0xff]
    %v407 = vld [vmem:[#allocation2 + $0x7c0] sm:$0xff]
    %v408 = vld [vmem:[#allocation2 + $0x7c8] sm:$0xff]
    %v409 = vld [vmem:[#allocation2 + $0x7d0] sm:$0xff]
    %v410 = vld [vmem:[#allocation2 + $0x7d8] sm:$0xff]
    %v411 = vld [vmem:[#allocation2 + $0x7e0] sm:$0xff]
    %v412 = vld [vmem:[#allocation2 + $0x7e8] sm:$0xff]
    %v413 = vld [vmem:[#allocation2 + $0x7f0] sm:$0xff]
    %v414 = vld [vmem:[#allocation2 + $0x7f8] sm:$0xff]
    %v415 = vld [vmem:[#allocation2 + $0x800] sm:$0xff]
    %v416 = vld [vmem:[#allocation2 + $0x808] sm:$0xff]
    %v417 = vld [vmem:[#allocation2 + $0x810] sm:$0xff]
    %v418 = vld [vmem:[#allocation2 + $0x818] sm:$0xff]
    %v419 = vld [vmem:[#allocation2 + $0x820] sm:$0xff]
    %v420 = vld [vmem:[#allocation2 + $0x828] sm:$0xff]
    %v421 = vld [vmem:[#allocation2 + $0x830] sm:$0xff]
    %v422 = vld [vmem:[#allocation2 + $0x838] sm:$0xff]
    %v423 = vld [vmem:[#allocation2 + $0x840] sm:$0xff]
    %v424 = vld [vmem:[#allocation2 + $0x848] sm:$0xff]
    %v425 = vld [vmem:[#allocation2 + $0x850] sm:$0xff]
    %v426 = vld [vmem:[#allocation2 + $0x858] sm:$0xff]
    %v427 = vld [vmem:[#allocation2 + $0x860] sm:$0xff]
    %v428 = vld [vmem:[#allocation2 + $0x868] sm:$0xff]
    %v429 = vld [vmem:[#allocation2 + $0x870] sm:$0xff]
    %v430 = vld [vmem:[#allocation2 + $0x878] sm:$0xff]
    %v431 = vld [vmem:[#allocation2 + $0x880] sm:$0xff]
    %v432 = vld [vmem:[#allocation2 + $0x888] sm:$0xff]
    %v433 = vld [vmem:[#allocation2 + $0x890] sm:$0xff]
    %v434 = vld [vmem:[#allocation2 + $0x898] sm:$0xff]
    %v435 = vld [vmem:[#allocation2 + $0x8a0] sm:$0xff]
    %v436 = vld [vmem:[#allocation2 + $0x8a8] sm:$0xff]
    %v437 = vld [vmem:[#allocation2 + $0x8b0] sm:$0xff]
    %v438 = vld [vmem:[#allocation2 + $0x8b8] sm:$0xff]
    %v439 = vld [vmem:[#allocation2 + $0x8c0] sm:$0xff]
    %v440 = vld [vmem:[#allocation2 + $0x8c8] sm:$0xff]
    %v441 = vld [vmem:[#allocation2 + $0x8d0] sm:$0xff]
    %v442 = vld [vmem:[#allocation2 + $0x8d8] sm:$0xff]
    %v443 = vld [vmem:[#allocation2 + $0x8e0] sm:$0xff]
    %v444 = vld [vmem:[#allocation2 + $0x8e8] sm:$0xff]
    %v445 = vld [vmem:[#allocation2 + $0x8f0] sm:$0xff]
    %v446 = vld [vmem:[#allocation2 + $0x8f8] sm:$0xff]
    %v447 = vld [vmem:[#allocation2 + $0x900] sm:$0xff]
    %v448 = vld [vmem:[#allocation2 + $0x908] sm:$0xff]
    %v449 = vld [vmem:[#allocation2 + $0x910] sm:$0xff]
    %v450 = vld [vmem:[#allocation2 + $0x918] sm:$0xff]
    %v451 = vld [vmem:[#allocation2 + $0x920] sm:$0xff]
    %v452 = vld [vmem:[#allocation2 + $0x928] sm:$0xff]
    %v453 = vld [vmem:[#allocation2 + $0x930] sm:$0xff]
    %v454 = vld [vmem:[#allocation2 + $0x938] sm:$0xff]
    %v455 = vld [vmem:[#allocation2 + $0x940] sm:$0xff]
    %v456 = vld [vmem:[#allocation2 + $0x948] sm:$0xff]
    %v457 = vld [vmem:[#allocation2 + $0x950] sm:$0xff]
    %v458 = vld [vmem:[#allocation2 + $0x958] sm:$0xff]
    %v459 = vld [vmem:[#allocation2 + $0x960] sm:$0xff]
    %v460 = vld [vmem:[#allocation2 + $0x968] sm:$0xff]
    %v461 = vld [vmem:[#allocation2 + $0x970] sm:$0xff]
    %v462 = vld [vmem:[#allocation2 + $0x978] sm:$0xff]
    %v463 = vld [vmem:[#allocation2 + $0x980] sm:$0xff]
    %v464 = vld [vmem:[#allocation2 + $0x988] sm:$0xff]
    %v465 = vld [vmem:[#allocation2 + $0x990] sm:$0xff]
    %v466 = vld [vmem:[#allocation2 + $0x998] sm:$0xff]
    %v467 = vld [vmem:[#allocation2 + $0x9a0] sm:$0xff]
    %v468 = vld [vmem:[#allocation2 + $0x9a8] sm:$0xff]
    %v469 = vld [vmem:[#allocation2 + $0x9b0] sm:$0xff]
    %v470 = vld [vmem:[#allocation2 + $0x9b8] sm:$0xff]
    %v471 = vld [vmem:[#allocation2 + $0x9c0] sm:$0xff]
    %v472 = vld [vmem:[#allocation2 + $0x9c8] sm:$0xff]
    %v473 = vld [vmem:[#allocation2 + $0x9d0] sm:$0xff]
    %v474 = vld [vmem:[#allocation2 + $0x9d8] sm:$0xff]
    %v475 = vld [vmem:[#allocation2 + $0x9e0] sm:$0xff]
    %v476 = vld [vmem:[#allocation2 + $0x9e8] sm:$0xff]
    %v477 = vld [vmem:[#allocation2 + $0x9f0] sm:$0xff]
    %v478 = vld [vmem:[#allocation2 + $0x9f8] sm:$0xff]
    %v479 = vld [vmem:[#allocation2 + $0xa00] sm:$0xff]
    %v480 = vld [vmem:[#allocation2 + $0xa08] sm:$0xff]
    %v481 = vld [vmem:[#allocation2 + $0xa10] sm:$0xff]
    %v482 = vld [vmem:[#allocation2 + $0xa18] sm:$0xff]
    %v483 = vld [vmem:[#allocation2 + $0xa20] sm:$0xff]
    %v484 = vld [vmem:[#allocation2 + $0xa28] sm:$0xff]
    %v485 = vld [vmem:[#allocation2 + $0xa30] sm:$0xff]
    %v486 = vld [vmem:[#allocation2 + $0xa38] sm:$0xff]
    %v487 = vld [vmem:[#allocation2 + $0xa40] sm:$0xff]
    %v488 = vld [vmem:[#allocation2 + $0xa48] sm:$0xff]
    %v489 = vld [vmem:[#allocation2 + $0xa50] sm:$0xff]
    %v490 = vld [vmem:[#allocation2 + $0xa58] sm:$0xff]
    %v491 = vld [vmem:[#allocation2 + $0xa60] sm:$0xff]
    %v492 = vld [vmem:[#allocation2 + $0xa68] sm:$0xff]
    %v493 = vld [vmem:[#allocation2 + $0xa70] sm:$0xff]
    %v494 = vld [vmem:[#allocation2 + $0xa78] sm:$0xff]
    %v495 = vld [vmem:[#allocation2 + $0xa80] sm:$0xff]
    %v496 = vld [vmem:[#allocation2 + $0xa88] sm:$0xff]
    %v497 = vld [vmem:[#allocation2 + $0xa90] sm:$0xff]
    %v498 = vld [vmem:[#allocation2 + $0xa98] sm:$0xff]
    %v499 = vld [vmem:[#allocation2 + $0xaa0] sm:$0xff]
    %v500 = vld [vmem:[#allocation2 + $0xaa8] sm:$0xff]
    %v501 = vld [vmem:[#allocation2 + $0xab0] sm:$0xff]
    %v502 = vld [vmem:[#allocation2 + $0xab8] sm:$0xff]
    %v503 = vld [vmem:[#allocation2 + $0xac0] sm:$0xff]
    %v504 = vld [vmem:[#allocation2 + $0xac8] sm:$0xff]
    %v505 = vld [vmem:[#allocation2 + $0xad0] sm:$0xff]
    %v506 = vld [vmem:[#allocation2 + $0xad8] sm:$0xff]
    %v507 = vld [vmem:[#allocation2 + $0xae0] sm:$0xff]
    %v508 = vld [vmem:[#allocation2 + $0xae8] sm:$0xff]
    %v509 = vld [vmem:[#allocation2 + $0xaf0] sm:$0xff]
    %v510 = vld [vmem:[#allocation2 + $0xaf8] sm:$0xff]
    %v511 = vld [vmem:[#allocation2 + $0xb00] sm:$0xff]
    %v512 = vld [vmem:[#allocation2 + $0xb08] sm:$0xff]
    %v513 = vld [vmem:[#allocation2 + $0xb10] sm:$0xff]
    %v514 = vld [vmem:[#allocation2 + $0xb18] sm:$0xff]
    %v515 = vld [vmem:[#allocation2 + $0xb20] sm:$0xff]
    %v516 = vld [vmem:[#allocation2 + $0xb28] sm:$0xff]
    %v517 = vld [vmem:[#allocation2 + $0xb30] sm:$0xff]
    %v518 = vld [vmem:[#allocation2 + $0xb38] sm:$0xff]
    %v519 = vld [vmem:[#allocation2 + $0xb40] sm:$0xff]
    %v520 = vld [vmem:[#allocation2 + $0xb48] sm:$0xff]
    %v521 = vld [vmem:[#allocation2 + $0xb50] sm:$0xff]
    %v522 = vld [vmem:[#allocation2 + $0xb58] sm:$0xff]
    %v523 = vld [vmem:[#allocation2 + $0xb60] sm:$0xff]
    %v524 = vld [vmem:[#allocation2 + $0xb68] sm:$0xff]
    %v525 = vld [vmem:[#allocation2 + $0xb70] sm:$0xff]
    %v526 = vld [vmem:[#allocation2 + $0xb78] sm:$0xff]
    %v527 = vld [vmem:[#allocation2 + $0xb80] sm:$0xff]
    %v528 = vld [vmem:[#allocation2 + $0xb88] sm:$0xff]
    %v529 = vld [vmem:[#allocation2 + $0xb90] sm:$0xff]
    %v530 = vld [vmem:[#allocation2 + $0xb98] sm:$0xff]
    %v531 = vld [vmem:[#allocation2 + $0xba0] sm:$0xff]
    %v532 = vld [vmem:[#allocation2 + $0xba8] sm:$0xff]
    %v533 = vld [vmem:[#allocation2 + $0xbb0] sm:$0xff]
    %v534 = vld [vmem:[#allocation2 + $0xbb8] sm:$0xff]
    %v535 = vld [vmem:[#allocation2 + $0xbc0] sm:$0xff]
    %v536 = vld [vmem:[#allocation2 + $0xbc8] sm:$0xff]
    %v537 = vld [vmem:[#allocation2 + $0xbd0] sm:$0xff]
    %v538 = vld [vmem:[#allocation2 + $0xbd8] sm:$0xff]
    %v539 = vld [vmem:[#allocation2 + $0xbe0] sm:$0xff]
    %v540 = vld [vmem:[#allocation2 + $0xbe8] sm:$0xff]
    %v541 = vld [vmem:[#allocation2 + $0xbf0] sm:$0xff]
    %v542 = vld [vmem:[#allocation2 + $0xbf8] sm:$0xff]
    %v543 = vld [vmem:[#allocation2 + $0xc00] sm:$0xff]
    %v544 = vld [vmem:[#allocation2 + $0xc08] sm:$0xff]
    %v545 = vld [vmem:[#allocation2 + $0xc10] sm:$0xff]
    %v546 = vld [vmem:[#allocation2 + $0xc18] sm:$0xff]
    %v547 = vld [vmem:[#allocation2 + $0xc20] sm:$0xff]
    %v548 = vld [vmem:[#allocation2 + $0xc28] sm:$0xff]
    %v549 = vld [vmem:[#allocation2 + $0xc30] sm:$0xff]
    %v550 = vld [vmem:[#allocation2 + $0xc38] sm:$0xff]
    %v551 = vld [vmem:[#allocation2 + $0xc40] sm:$0xff]
    %v552 = vld [vmem:[#allocation2 + $0xc48] sm:$0xff]
    %v553 = vld [vmem:[#allocation2 + $0xc50] sm:$0xff]
    %v554 = vld [vmem:[#allocation2 + $0xc58] sm:$0xff]
    %v555 = vld [vmem:[#allocation2 + $0xc60] sm:$0xff]
    %v556 = vld [vmem:[#allocation2 + $0xc68] sm:$0xff]
    %v557 = vld [vmem:[#allocation2 + $0xc70] sm:$0xff]
    %v558 = vld [vmem:[#allocation2 + $0xc78] sm:$0xff]
    %v559 = vld [vmem:[#allocation2 + $0xc80] sm:$0xff]
    %v560 = vld [vmem:[#allocation2 + $0xc88] sm:$0xff]
    %v561 = vld [vmem:[#allocation2 + $0xc90] sm:$0xff]
    %v562 = vld [vmem:[#allocation2 + $0xc98] sm:$0xff]
    %v563 = vld [vmem:[#allocation2 + $0xca0] sm:$0xff]
    %v564 = vld [vmem:[#allocation2 + $0xca8] sm:$0xff]
    %v565 = vld [vmem:[#allocation2 + $0xcb0] sm:$0xff]
    %v566 = vld [vmem:[#allocation2 + $0xcb8] sm:$0xff]
    %v567 = vld [vmem:[#allocation2 + $0xcc0] sm:$0xff]
    %v568 = vld [vmem:[#allocation2 + $0xcc8] sm:$0xff]
    %v569 = vld [vmem:[#allocation2 + $0xcd0] sm:$0xff]
    %v570 = vld [vmem:[#allocation2 + $0xcd8] sm:$0xff]
    %v571 = vld [vmem:[#allocation2 + $0xce0] sm:$0xff]
    %v572 = vld [vmem:[#allocation2 + $0xce8] sm:$0xff]
    %v573 = vld [vmem:[#allocation2 + $0xcf0] sm:$0xff]
    %v574 = vld [vmem:[#allocation2 + $0xcf8] sm:$0xff]
    %v575 = vld [vmem:[#allocation2 + $0xd00] sm:$0xff]
    %v576 = vld [vmem:[#allocation2 + $0xd08] sm:$0xff]
    %v577 = vld [vmem:[#allocation2 + $0xd10] sm:$0xff]
    %v578 = vld [vmem:[#allocation2 + $0xd18] sm:$0xff]
    %v579 = vld [vmem:[#allocation2 + $0xd20] sm:$0xff]
    %v580 = vld [vmem:[#allocation2 + $0xd28] sm:$0xff]
    %v581 = vld [vmem:[#allocation2 + $0xd30] sm:$0xff]
    %v582 = vld [vmem:[#allocation2 + $0xd38] sm:$0xff]
    %v583 = vld [vmem:[#allocation2 + $0xd40] sm:$0xff]
    %v584 = vld [vmem:[#allocation2 + $0xd48] sm:$0xff]
    %v585 = vld [vmem:[#allocation2 + $0xd50] sm:$0xff]
    %v586 = vld [vmem:[#allocation2 + $0xd58] sm:$0xff]
    %v587 = vld [vmem:[#allocation2 + $0xd60] sm:$0xff]
    %v588 = vld [vmem:[#allocation2 + $0xd68] sm:$0xff]
    %v589 = vld [vmem:[#allocation2 + $0xd70] sm:$0xff]
    %v590 = vld [vmem:[#allocation2 + $0xd78] sm:$0xff]
    %v591 = vld [vmem:[#allocation2 + $0xd80] sm:$0xff]
    %v592 = vld [vmem:[#allocation2 + $0xd88] sm:$0xff]
    %v593 = vld [vmem:[#allocation2 + $0xd90] sm:$0xff]
    %v594 = vld [vmem:[#allocation2 + $0xd98] sm:$0xff]
    %v595 = vld [vmem:[#allocation2 + $0xda0] sm:$0xff]
    %v596 = vld [vmem:[#allocation2 + $0xda8] sm:$0xff]
    %v597 = vld [vmem:[#allocation2 + $0xdb0] sm:$0xff]
    %v598 = vld [vmem:[#allocation2 + $0xdb8] sm:$0xff]
    %v599 = vld [vmem:[#allocation2 + $0xdc0] sm:$0xff]
    %v600 = vld [vmem:[#allocation2 + $0xdc8] sm:$0xff]
    %v601 = vld [vmem:[#allocation2 + $0xdd0] sm:$0xff]
    %v602 = vld [vmem:[#allocation2 + $0xdd8] sm:$0xff]
    %v603 = vld [vmem:[#allocation2 + $0xde0] sm:$0xff]
    %v604 = vld [vmem:[#allocation2 + $0xde8] sm:$0xff]
    %v605 = vld [vmem:[#allocation2 + $0xdf0] sm:$0xff]
    %v606 = vld [vmem:[#allocation2 + $0xdf8] sm:$0xff]
    %v607 = vld [vmem:[#allocation2 + $0xe00] sm:$0xff]
    %v608 = vld [vmem:[#allocation2 + $0xe08] sm:$0xff]
    %v609 = vld [vmem:[#allocation2 + $0xe10] sm:$0xff]
    %v610 = vld [vmem:[#allocation2 + $0xe18] sm:$0xff]
    %v611 = vld [vmem:[#allocation2 + $0xe20] sm:$0xff]
    %v612 = vld [vmem:[#allocation2 + $0xe28] sm:$0xff]
    %v613 = vld [vmem:[#allocation2 + $0xe30] sm:$0xff]
    %v614 = vld [vmem:[#allocation2 + $0xe38] sm:$0xff]
    %v615 = vld [vmem:[#allocation2 + $0xe40] sm:$0xff]
    %v616 = vld [vmem:[#allocation2 + $0xe48] sm:$0xff]
    %v617 = vld [vmem:[#allocation2 + $0xe50] sm:$0xff]
    %v618 = vld [vmem:[#allocation2 + $0xe58] sm:$0xff]
    %v619 = vld [vmem:[#allocation2 + $0xe60] sm:$0xff]
    %v620 = vld [vmem:[#allocation2 + $0xe68] sm:$0xff]
    %v621 = vld [vmem:[#allocation2 + $0xe70] sm:$0xff]
    %v622 = vld [vmem:[#allocation2 + $0xe78] sm:$0xff]
    %v623 = vld [vmem:[#allocation2 + $0xe80] sm:$0xff]
    %v624 = vld [vmem:[#allocation2 + $0xe88] sm:$0xff]
    %v625 = vld [vmem:[#allocation2 + $0xe90] sm:$0xff]
    %v626 = vld [vmem:[#allocation2 + $0xe98] sm:$0xff]
    %v627 = vld [vmem:[#allocation2 + $0xea0] sm:$0xff]
    %v628 = vld [vmem:[#allocation2 + $0xea8] sm:$0xff]
    %v629 = vld [vmem:[#allocation2 + $0xeb0] sm:$0xff]
    %v630 = vld [vmem:[#allocation2 + $0xeb8] sm:$0xff]
    %v631 = vld [vmem:[#allocation2 + $0xec0] sm:$0xff]
    %v632 = vld [vmem:[#allocation2 + $0xec8] sm:$0xff]
    %v633 = vld [vmem:[#allocation2 + $0xed0] sm:$0xff]
    %v634 = vld [vmem:[#allocation2 + $0xed8] sm:$0xff]
    %v635 = vld [vmem:[#allocation2 + $0xee0] sm:$0xff]
    %v636 = vld [vmem:[#allocation2 + $0xee8] sm:$0xff]
    %v637 = vld [vmem:[#allocation2 + $0xef0] sm:$0xff]
    %v638 = vld [vmem:[#allocation2 + $0xef8] sm:$0xff]
    %v639 = vld [vmem:[#allocation2 + $0xf00] sm:$0xff]
    %v640 = vld [vmem:[#allocation2 + $0xf08] sm:$0xff]
    %v641 = vld [vmem:[#allocation2 + $0xf10] sm:$0xff]
    %v642 = vld [vmem:[#allocation2 + $0xf18] sm:$0xff]
    %v643 = vld [vmem:[#allocation2 + $0xf20] sm:$0xff]
    %v644 = vld [vmem:[#allocation2 + $0xf28] sm:$0xff]
    %v645 = vld [vmem:[#allocation2 + $0xf30] sm:$0xff]
    %v646 = vld [vmem:[#allocation2 + $0xf38] sm:$0xff]
    %v647 = vld [vmem:[#allocation2 + $0xf40] sm:$0xff]
    %v648 = vld [vmem:[#allocation2 + $0xf48] sm:$0xff]
    %v649 = vld [vmem:[#allocation2 + $0xf50] sm:$0xff]
    %v650 = vld [vmem:[#allocation2 + $0xf58] sm:$0xff]
    %v651 = vld [vmem:[#allocation2 + $0xf60] sm:$0xff]
    %v652 = vld [vmem:[#allocation2 + $0xf68] sm:$0xff]
    %v653 = vld [vmem:[#allocation2 + $0xf70] sm:$0xff]
    %v654 = vld [vmem:[#allocation2 + $0xf78] sm:$0xff]
    %v655 = vld [vmem:[#allocation2 + $0xf80] sm:$0xff]
    %v656 = vld [vmem:[#allocation2 + $0xf88] sm:$0xff]
    %v657 = vld [vmem:[#allocation2 + $0xf90] sm:$0xff]
    %v658 = vld [vmem:[#allocation2 + $0xf98] sm:$0xff]
    %v659 = vld [vmem:[#allocation2 + $0xfa0] sm:$0xff]
    %v660 = vld [vmem:[#allocation2 + $0xfa8] sm:$0xff]
    %v661 = vld [vmem:[#allocation2 + $0xfb0] sm:$0xff]
    %v662 = vld [vmem:[#allocation2 + $0xfb8] sm:$0xff]
    %v663 = vld [vmem:[#allocation2 + $0xfc0] sm:$0xff]
    %v664 = vld [vmem:[#allocation2 + $0xfc8] sm:$0xff]
    %v665 = vld [vmem:[#allocation2 + $0xfd0] sm:$0xff]
    %v666 = vld [vmem:[#allocation2 + $0xfd8] sm:$0xff]
    %v667 = vld [vmem:[#allocation2 + $0xfe0] sm:$0xff]
    %v668 = vld [vmem:[#allocation2 + $0xfe8] sm:$0xff]
    %v669 = vld [vmem:[#allocation2 + $0xff0] sm:$0xff]
    %v670 = vld [vmem:[#allocation2 + $0xff8] sm:$0xff]
    %v671 = vld [vmem:[#allocation2 + $0x1000] sm:$0xff]
    %v672 = vld [vmem:[#allocation2 + $0x1008] sm:$0xff]
    %v673 = vld [vmem:[#allocation2 + $0x1010] sm:$0xff]
    %v674 = vld [vmem:[#allocation2 + $0x1018] sm:$0xff]
    %v675 = vld [vmem:[#allocation2 + $0x1020] sm:$0xff]
    %v676 = vld [vmem:[#allocation2 + $0x1028] sm:$0xff]
    %v677 = vld [vmem:[#allocation2 + $0x1030] sm:$0xff]
    %v678 = vld [vmem:[#allocation2 + $0x1038] sm:$0xff]
    %v679 = vld [vmem:[#allocation2 + $0x1040] sm:$0xff]
    %v680 = vld [vmem:[#allocation2 + $0x1048] sm:$0xff]
    %v681 = vld [vmem:[#allocation2 + $0x1050] sm:$0xff]
    %v682 = vld [vmem:[#allocation2 + $0x1058] sm:$0xff]
    %v683 = vld [vmem:[#allocation2 + $0x1060] sm:$0xff]
    %v684 = vld [vmem:[#allocation2 + $0x1068] sm:$0xff]
    %v685 = vld [vmem:[#allocation2 + $0x1070] sm:$0xff]
    %v686 = vld [vmem:[#allocation2 + $0x1078] sm:$0xff]
    %v687 = vld [vmem:[#allocation2 + $0x1080] sm:$0xff]
    %v688 = vld [vmem:[#allocation2 + $0x1088] sm:$0xff]
    %v689 = vld [vmem:[#allocation2 + $0x1090] sm:$0xff]
    %v690 = vld [vmem:[#allocation2 + $0x1098] sm:$0xff]
    %v691 = vld [vmem:[#allocation2 + $0x10a0] sm:$0xff]
    %v692 = vld [vmem:[#allocation2 + $0x10a8] sm:$0xff]
    %v693 = vld [vmem:[#allocation2 + $0x10b0] sm:$0xff]
    %v694 = vld [vmem:[#allocation2 + $0x10b8] sm:$0xff]
    %v695 = vld [vmem:[#allocation2 + $0x10c0] sm:$0xff]
    %v696 = vld [vmem:[#allocation2 + $0x10c8] sm:$0xff]
    %v697 = vld [vmem:[#allocation2 + $0x10d0] sm:$0xff]
    %v698 = vld [vmem:[#allocation2 + $0x10d8] sm:$0xff]
    %v699 = vld [vmem:[#allocation2 + $0x10e0] sm:$0xff]
    %v700 = vld [vmem:[#allocation2 + $0x10e8] sm:$0xff]
    %v701 = vld [vmem:[#allocation2 + $0x10f0] sm:$0xff]
    %v702 = vld [vmem:[#allocation2 + $0x10f8] sm:$0xff]
    %v703 = vld [vmem:[#allocation2 + $0x1100] sm:$0xff]
    %v704 = vld [vmem:[#allocation2 + $0x1108] sm:$0xff]
    %v705 = vld [vmem:[#allocation2 + $0x1110] sm:$0xff]
    %v706 = vld [vmem:[#allocation2 + $0x1118] sm:$0xff]
    %v707 = vld [vmem:[#allocation2 + $0x1120] sm:$0xff]
    %v708 = vld [vmem:[#allocation2 + $0x1128] sm:$0xff]
    %v709 = vld [vmem:[#allocation2 + $0x1130] sm:$0xff]
    %v710 = vld [vmem:[#allocation2 + $0x1138] sm:$0xff]
    %v711 = vld [vmem:[#allocation2 + $0x1140] sm:$0xff]
    %v712 = vld [vmem:[#allocation2 + $0x1148] sm:$0xff]
    %v713 = vld [vmem:[#allocation2 + $0x1150] sm:$0xff]
    %v714 = vld [vmem:[#allocation2 + $0x1158] sm:$0xff]
    %v715 = vld [vmem:[#allocation2 + $0x1160] sm:$0xff]
    %v716 = vld [vmem:[#allocation2 + $0x1168] sm:$0xff]
    %v717 = vld [vmem:[#allocation2 + $0x1170] sm:$0xff]
    %v718 = vld [vmem:[#allocation2 + $0x1178] sm:$0xff]
    %v719 = vld [vmem:[#allocation2 + $0x1180] sm:$0xff]
    %v720 = vld [vmem:[#allocation2 + $0x1188] sm:$0xff]
    %v721 = vld [vmem:[#allocation2 + $0x1190] sm:$0xff]
    %v722 = vld [vmem:[#allocation2 + $0x1198] sm:$0xff]
    %v723 = vld [vmem:[#allocation2 + $0x11a0] sm:$0xff]
    %v724 = vld [vmem:[#allocation2 + $0x11a8] sm:$0xff]
    %v725 = vld [vmem:[#allocation2 + $0x11b0] sm:$0xff]
    %v726 = vld [vmem:[#allocation2 + $0x11b8] sm:$0xff]
    %v727 = vld [vmem:[#allocation2 + $0x11c0] sm:$0xff]
    %v728 = vld [vmem:[#allocation2 + $0x11c8] sm:$0xff]
    %v729 = vld [vmem:[#allocation2 + $0x11d0] sm:$0xff]
    %v730 = vld [vmem:[#allocation2 + $0x11d8] sm:$0xff]
    %v731 = vld [vmem:[#allocation2 + $0x11e0] sm:$0xff]
    %v732 = vld [vmem:[#allocation2 + $0x11e8] sm:$0xff]
    %v733 = vld [vmem:[#allocation2 + $0x11f0] sm:$0xff]
    %v734 = vld [vmem:[#allocation2 + $0x11f8] sm:$0xff]
    %v735 = vld [vmem:[#allocation2 + $0x1200] sm:$0xff]
    %v736 = vld [vmem:[#allocation2 + $0x1208] sm:$0xff]
    %v737 = vld [vmem:[#allocation2 + $0x1210] sm:$0xff]
    %v738 = vld [vmem:[#allocation2 + $0x1218] sm:$0xff]
    %v739 = vld [vmem:[#allocation2 + $0x1220] sm:$0xff]
    %v740 = vld [vmem:[#allocation2 + $0x1228] sm:$0xff]
    %v741 = vld [vmem:[#allocation2 + $0x1230] sm:$0xff]
    %v742 = vld [vmem:[#allocation2 + $0x1238] sm:$0xff]
    %v743 = vld [vmem:[#allocation2 + $0x1240] sm:$0xff]
    %v744 = vld [vmem:[#allocation2 + $0x1248] sm:$0xff]
    %v745 = vld [vmem:[#allocation2 + $0x1250] sm:$0xff]
    %v746 = vld [vmem:[#allocation2 + $0x1258] sm:$0xff]
    %v747 = vld [vmem:[#allocation2 + $0x1260] sm:$0xff]
    %v748 = vld [vmem:[#allocation2 + $0x1268] sm:$0xff]
    %v749 = vld [vmem:[#allocation2 + $0x1270] sm:$0xff]
    %v750 = vld [vmem:[#allocation2 + $0x1278] sm:$0xff]
    %v751 = vld [vmem:[#allocation2 + $0x1280] sm:$0xff]
    %v752 = vld [vmem:[#allocation2 + $0x1288] sm:$0xff]
    %v753 = vld [vmem:[#allocation2 + $0x1290] sm:$0xff]
    %v754 = vld [vmem:[#allocation2 + $0x1298] sm:$0xff]
    %v755 = vld [vmem:[#allocation2 + $0x12a0] sm:$0xff]
    %v756 = vld [vmem:[#allocation2 + $0x12a8] sm:$0xff]
    %v757 = vld [vmem:[#allocation2 + $0x12b0] sm:$0xff]
    %v758 = vld [vmem:[#allocation2 + $0x12b8] sm:$0xff]
    %v759 = vld [vmem:[#allocation2 + $0x12c0] sm:$0xff]
    %v760 = vld [vmem:[#allocation2 + $0x12c8] sm:$0xff]
    %v761 = vld [vmem:[#allocation2 + $0x12d0] sm:$0xff]
    %v762 = vld [vmem:[#allocation2 + $0x12d8] sm:$0xff]
    %v763 = vld [vmem:[#allocation2 + $0x12e0] sm:$0xff]
    %v764 = vld [vmem:[#allocation2 + $0x12e8] sm:$0xff]
    %v765 = vld [vmem:[#allocation2 + $0x12f0] sm:$0xff]
    %v766 = vld [vmem:[#allocation2 + $0x12f8] sm:$0xff]
    %v767 = vld [vmem:[#allocation2 + $0x1300] sm:$0xff]
    %v768 = vld [vmem:[#allocation2 + $0x1308] sm:$0xff]
    %v769 = vld [vmem:[#allocation2 + $0x1310] sm:$0xff]
    %v770 = vld [vmem:[#allocation2 + $0x1318] sm:$0xff]
    %v771 = vld [vmem:[#allocation2 + $0x1320] sm:$0xff]
    %v772 = vld [vmem:[#allocation2 + $0x1328] sm:$0xff]
    %v773 = vld [vmem:[#allocation2 + $0x1330] sm:$0xff]
    %v774 = vld [vmem:[#allocation2 + $0x1338] sm:$0xff]
    %v775 = vld [vmem:[#allocation2 + $0x1340] sm:$0xff]
    %v776 = vld [vmem:[#allocation2 + $0x1348] sm:$0xff]
    %v777 = vld [vmem:[#allocation2 + $0x1350] sm:$0xff]
    %v778 = vld [vmem:[#allocation2 + $0x1358] sm:$0xff]
    %v779 = vld [vmem:[#allocation2 + $0x1360] sm:$0xff]
    %v780 = vld [vmem:[#allocation2 + $0x1368] sm:$0xff]
    %v781 = vld [vmem:[#allocation2 + $0x1370] sm:$0xff]
    %v782 = vld [vmem:[#allocation2 + $0x1378] sm:$0xff]
    %v783 = vld [vmem:[#allocation2 + $0x1380] sm:$0xff]
    %v784 = vld [vmem:[#allocation2 + $0x1388] sm:$0xff]
    %v785 = vld [vmem:[#allocation2 + $0x1390] sm:$0xff]
    %v786 = vld [vmem:[#allocation2 + $0x1398] sm:$0xff]
    %v787 = vld [vmem:[#allocation2 + $0x13a0] sm:$0xff]
    %v788 = vld [vmem:[#allocation2 + $0x13a8] sm:$0xff]
    %v789 = vld [vmem:[#allocation2 + $0x13b0] sm:$0xff]
    %v790 = vld [vmem:[#allocation2 + $0x13b8] sm:$0xff]
    %v791 = vld [vmem:[#allocation2 + $0x13c0] sm:$0xff]
    %v792 = vld [vmem:[#allocation2 + $0x13c8] sm:$0xff]
    %v793 = vld [vmem:[#allocation2 + $0x13d0] sm:$0xff]
    %v794 = vld [vmem:[#allocation2 + $0x13d8] sm:$0xff]
    %v795 = vld [vmem:[#allocation2 + $0x13e0] sm:$0xff]
    %v796 = vld [vmem:[#allocation2 + $0x13e8] sm:$0xff]
    %v797 = vld [vmem:[#allocation2 + $0x13f0] sm:$0xff]
    %v798 = vld [vmem:[#allocation2 + $0x13f8] sm:$0xff]
    %v799 = vld [vmem:[#allocation2 + $0x1400] sm:$0xff]
    %v800 = vld [vmem:[#allocation2 + $0x1408] sm:$0xff]
    %v801 = vld [vmem:[#allocation2 + $0x1410] sm:$0xff]
    %v802 = vld [vmem:[#allocation2 + $0x1418] sm:$0xff]
    %v803 = vld [vmem:[#allocation2 + $0x1420] sm:$0xff]
    %v804 = vld [vmem:[#allocation2 + $0x1428] sm:$0xff]
    %v805 = vld [vmem:[#allocation2 + $0x1430] sm:$0xff]
    %v806 = vld [vmem:[#allocation2 + $0x1438] sm:$0xff]
    %v807 = vld [vmem:[#allocation2 + $0x1440] sm:$0xff]
    %v808 = vld [vmem:[#allocation2 + $0x1448] sm:$0xff]
    %v809 = vld [vmem:[#allocation2 + $0x1450] sm:$0xff]
    %v810 = vld [vmem:[#allocation2 + $0x1458] sm:$0xff]
    %v811 = vld [vmem:[#allocation2 + $0x1460] sm:$0xff]
    %v812 = vld [vmem:[#allocation2 + $0x1468] sm:$0xff]
    %v813 = vld [vmem:[#allocation2 + $0x1470] sm:$0xff]
    %v814 = vld [vmem:[#allocation2 + $0x1478] sm:$0xff]
    %v815 = vld [vmem:[#allocation2 + $0x1480] sm:$0xff]
    %v816 = vld [vmem:[#allocation2 + $0x1488] sm:$0xff]
    %v817 = vld [vmem:[#allocation2 + $0x1490] sm:$0xff]
    %v818 = vld [vmem:[#allocation2 + $0x1498] sm:$0xff]
    %v819 = vld [vmem:[#allocation2 + $0x14a0] sm:$0xff]
    %v820 = vld [vmem:[#allocation2 + $0x14a8] sm:$0xff]
    %v821 = vld [vmem:[#allocation2 + $0x14b0] sm:$0xff]
    %v822 = vld [vmem:[#allocation2 + $0x14b8] sm:$0xff]
    %v823 = vld [vmem:[#allocation2 + $0x14c0] sm:$0xff]
    %v824 = vld [vmem:[#allocation2 + $0x14c8] sm:$0xff]
    %v825 = vld [vmem:[#allocation2 + $0x14d0] sm:$0xff]
    %v826 = vld [vmem:[#allocation2 + $0x14d8] sm:$0xff]
    %v827 = vld [vmem:[#allocation2 + $0x14e0] sm:$0xff]
    %v828 = vld [vmem:[#allocation2 + $0x14e8] sm:$0xff]
    %v829 = vld [vmem:[#allocation2 + $0x14f0] sm:$0xff]
    %v830 = vld [vmem:[#allocation2 + $0x14f8] sm:$0xff]
    %v831 = vld [vmem:[#allocation2 + $0x1500] sm:$0xff]
    %v832 = vld [vmem:[#allocation2 + $0x1508] sm:$0xff]
    %v833 = vld [vmem:[#allocation2 + $0x1510] sm:$0xff]
    %v834 = vld [vmem:[#allocation2 + $0x1518] sm:$0xff]
    %v835 = vld [vmem:[#allocation2 + $0x1520] sm:$0xff]
    %v836 = vld [vmem:[#allocation2 + $0x1528] sm:$0xff]
    %v837 = vld [vmem:[#allocation2 + $0x1530] sm:$0xff]
    %v838 = vld [vmem:[#allocation2 + $0x1538] sm:$0xff]
    %v839 = vld [vmem:[#allocation2 + $0x1540] sm:$0xff]
    %v840 = vld [vmem:[#allocation2 + $0x1548] sm:$0xff]
    %v841 = vld [vmem:[#allocation2 + $0x1550] sm:$0xff]
    %v842 = vld [vmem:[#allocation2 + $0x1558] sm:$0xff]
    %v843 = vld [vmem:[#allocation2 + $0x1560] sm:$0xff]
    %v844 = vld [vmem:[#allocation2 + $0x1568] sm:$0xff]
    %v845 = vld [vmem:[#allocation2 + $0x1570] sm:$0xff]
    %v846 = vld [vmem:[#allocation2 + $0x1578] sm:$0xff]
    %v847 = vld [vmem:[#allocation2 + $0x1580] sm:$0xff]
    %v848 = vld [vmem:[#allocation2 + $0x1588] sm:$0xff]
    %v849 = vld [vmem:[#allocation2 + $0x1590] sm:$0xff]
    %v850 = vld [vmem:[#allocation2 + $0x1598] sm:$0xff]
    %v851 = vld [vmem:[#allocation2 + $0x15a0] sm:$0xff]
    %v852 = vld [vmem:[#allocation2 + $0x15a8] sm:$0xff]
    %v853 = vld [vmem:[#allocation2 + $0x15b0] sm:$0xff]
    %v854 = vld [vmem:[#allocation2 + $0x15b8] sm:$0xff]
    %v855 = vld [vmem:[#allocation2 + $0x15c0] sm:$0xff]
    %v856 = vld [vmem:[#allocation2 + $0x15c8] sm:$0xff]
    %v857 = vld [vmem:[#allocation2 + $0x15d0] sm:$0xff]
    %v858 = vld [vmem:[#allocation2 + $0x15d8] sm:$0xff]
    %v859 = vld [vmem:[#allocation2 + $0x15e0] sm:$0xff]
    %v860 = vld [vmem:[#allocation2 + $0x15e8] sm:$0xff]
    %v861 = vld [vmem:[#allocation2 + $0x15f0] sm:$0xff]
    %v862 = vld [vmem:[#allocation2 + $0x15f8] sm:$0xff]
    %v863 = vld [vmem:[#allocation2 + $0x1600] sm:$0xff]
    %v864 = vld [vmem:[#allocation2 + $0x1608] sm:$0xff]
    %v865 = vld [vmem:[#allocation2 + $0x1610] sm:$0xff]
    %v866 = vld [vmem:[#allocation2 + $0x1618] sm:$0xff]
    %v867 = vld [vmem:[#allocation2 + $0x1620] sm:$0xff]
    %v868 = vld [vmem:[#allocation2 + $0x1628] sm:$0xff]
    %v869 = vld [vmem:[#allocation2 + $0x1630] sm:$0xff]
    %v870 = vld [vmem:[#allocation2 + $0x1638] sm:$0xff]
    %v871 = vld [vmem:[#allocation2 + $0x1640] sm:$0xff]
    %v872 = vld [vmem:[#allocation2 + $0x1648] sm:$0xff]
    %v873 = vld [vmem:[#allocation2 + $0x1650] sm:$0xff]
    %v874 = vld [vmem:[#allocation2 + $0x1658] sm:$0xff]
    %v875 = vld [vmem:[#allocation2 + $0x1660] sm:$0xff]
    %v876 = vld [vmem:[#allocation2 + $0x1668] sm:$0xff]
    %v877 = vld [vmem:[#allocation2 + $0x1670] sm:$0xff]
    %v878 = vld [vmem:[#allocation2 + $0x1678] sm:$0xff]
    %v879 = vld [vmem:[#allocation2 + $0x1680] sm:$0xff]
    %v880 = vld [vmem:[#allocation2 + $0x1688] sm:$0xff]
    %v881 = vld [vmem:[#allocation2 + $0x1690] sm:$0xff]
    %v882 = vld [vmem:[#allocation2 + $0x1698] sm:$0xff]
    %v883 = vld [vmem:[#allocation2 + $0x16a0] sm:$0xff]
    %v884 = vld [vmem:[#allocation2 + $0x16a8] sm:$0xff]
    %v885 = vld [vmem:[#allocation2 + $0x16b0] sm:$0xff]
    %v886 = vld [vmem:[#allocation2 + $0x16b8] sm:$0xff]
    %v887 = vld [vmem:[#allocation2 + $0x16c0] sm:$0xff]
    %v888 = vld [vmem:[#allocation2 + $0x16c8] sm:$0xff]
    %v889 = vld [vmem:[#allocation2 + $0x16d0] sm:$0xff]
    %v890 = vld [vmem:[#allocation2 + $0x16d8] sm:$0xff]
    %v891 = vld [vmem:[#allocation2 + $0x16e0] sm:$0xff]
    %v892 = vld [vmem:[#allocation2 + $0x16e8] sm:$0xff]
    %v893 = vld [vmem:[#allocation2 + $0x16f0] sm:$0xff]
    %v894 = vld [vmem:[#allocation2 + $0x16f8] sm:$0xff]
    %v895 = vld [vmem:[#allocation2 + $0x1700] sm:$0xff]
    %v896 = vld [vmem:[#allocation2 + $0x1708] sm:$0xff]
    %v897 = vld [vmem:[#allocation2 + $0x1710] sm:$0xff]
    %v898 = vld [vmem:[#allocation2 + $0x1718] sm:$0xff]
    %v899 = vld [vmem:[#allocation2 + $0x1720] sm:$0xff]
    %v900 = vld [vmem:[#allocation2 + $0x1728] sm:$0xff]
    %v901 = vld [vmem:[#allocation2 + $0x1730] sm:$0xff]
    %v902 = vld [vmem:[#allocation2 + $0x1738] sm:$0xff]
    %v903 = vld [vmem:[#allocation2 + $0x1740] sm:$0xff]
    %v904 = vld [vmem:[#allocation2 + $0x1748] sm:$0xff]
    %v905 = vld [vmem:[#allocation2 + $0x1750] sm:$0xff]
    %v906 = vld [vmem:[#allocation2 + $0x1758] sm:$0xff]
    %v907 = vld [vmem:[#allocation2 + $0x1760] sm:$0xff]
    %v908 = vld [vmem:[#allocation2 + $0x1768] sm:$0xff]
    %v909 = vld [vmem:[#allocation2 + $0x1770] sm:$0xff]
    %v910 = vld [vmem:[#allocation2 + $0x1778] sm:$0xff]
    %v911 = vld [vmem:[#allocation2 + $0x1780] sm:$0xff]
    %v912 = vld [vmem:[#allocation2 + $0x1788] sm:$0xff]
    %v913 = vld [vmem:[#allocation2 + $0x1790] sm:$0xff]
    %v914 = vld [vmem:[#allocation2 + $0x1798] sm:$0xff]
    %v915 = vld [vmem:[#allocation2 + $0x17a0] sm:$0xff]
    %v916 = vld [vmem:[#allocation2 + $0x17a8] sm:$0xff]
    %v917 = vld [vmem:[#allocation2 + $0x17b0] sm:$0xff]
    %v918 = vld [vmem:[#allocation2 + $0x17b8] sm:$0xff]
    %v919 = vld [vmem:[#allocation2 + $0x17c0] sm:$0xff]
    %v920 = vld [vmem:[#allocation2 + $0x17c8] sm:$0xff]
    %v921 = vld [vmem:[#allocation2 + $0x17d0] sm:$0xff]
    %v922 = vld [vmem:[#allocation2 + $0x17d8] sm:$0xff]
    %v923 = vld [vmem:[#allocation2 + $0x17e0] sm:$0xff]
    %v924 = vld [vmem:[#allocation2 + $0x17e8] sm:$0xff]
    %v925 = vld [vmem:[#allocation2 + $0x17f0] sm:$0xff]
    %v926 = vld [vmem:[#allocation2 + $0x17f8] sm:$0xff]
    %v927 = vld [vmem:[#allocation2 + $0x1800] sm:$0xff]
    %v928 = vld [vmem:[#allocation2 + $0x1808] sm:$0xff]
    %v929 = vld [vmem:[#allocation2 + $0x1810] sm:$0xff]
    %v930 = vld [vmem:[#allocation2 + $0x1818] sm:$0xff]
    %v931 = vld [vmem:[#allocation2 + $0x1820] sm:$0xff]
    %v932 = vld [vmem:[#allocation2 + $0x1828] sm:$0xff]
    %v933 = vld [vmem:[#allocation2 + $0x1830] sm:$0xff]
    %v934 = vld [vmem:[#allocation2 + $0x1838] sm:$0xff]
    %v935 = vld [vmem:[#allocation2 + $0x1840] sm:$0xff]
    %v936 = vld [vmem:[#allocation2 + $0x1848] sm:$0xff]
    %v937 = vld [vmem:[#allocation2 + $0x1850] sm:$0xff]
    %v938 = vld [vmem:[#allocation2 + $0x1858] sm:$0xff]
    %v939 = vld [vmem:[#allocation2 + $0x1860] sm:$0xff]
    %v940 = vld [vmem:[#allocation2 + $0x1868] sm:$0xff]
    %v941 = vld [vmem:[#allocation2 + $0x1870] sm:$0xff]
    %v942 = vld [vmem:[#allocation2 + $0x1878] sm:$0xff]
    %v943 = vld [vmem:[#allocation2 + $0x1880] sm:$0xff]
    %v944 = vld [vmem:[#allocation2 + $0x1888] sm:$0xff]
    %v945 = vld [vmem:[#allocation2 + $0x1890] sm:$0xff]
    %v946 = vld [vmem:[#allocation2 + $0x1898] sm:$0xff]
    %v947 = vld [vmem:[#allocation2 + $0x18a0] sm:$0xff]
    %v948 = vld [vmem:[#allocation2 + $0x18a8] sm:$0xff]
    %v949 = vld [vmem:[#allocation2 + $0x18b0] sm:$0xff]
    %v950 = vld [vmem:[#allocation2 + $0x18b8] sm:$0xff]
    %v951 = vld [vmem:[#allocation2 + $0x18c0] sm:$0xff]
    %v952 = vld [vmem:[#allocation2 + $0x18c8] sm:$0xff]
    %v953 = vld [vmem:[#allocation2 + $0x18d0] sm:$0xff]
    %v954 = vld [vmem:[#allocation2 + $0x18d8] sm:$0xff]
    %v955 = vld [vmem:[#allocation2 + $0x18e0] sm:$0xff]
    %v956 = vld [vmem:[#allocation2 + $0x18e8] sm:$0xff]
    %v957 = vld [vmem:[#allocation2 + $0x18f0] sm:$0xff]
    %v958 = vld [vmem:[#allocation2 + $0x18f8] sm:$0xff]
    %v959 = vld [vmem:[#allocation2 + $0x1900] sm:$0xff]
    %v960 = vld [vmem:[#allocation2 + $0x1908] sm:$0xff]
    %v961 = vld [vmem:[#allocation2 + $0x1910] sm:$0xff]
    %v962 = vld [vmem:[#allocation2 + $0x1918] sm:$0xff]
    %v963 = vld [vmem:[#allocation2 + $0x1920] sm:$0xff]
    %v964 = vld [vmem:[#allocation2 + $0x1928] sm:$0xff]
    %v965 = vld [vmem:[#allocation2 + $0x1930] sm:$0xff]
    %v966 = vld [vmem:[#allocation2 + $0x1938] sm:$0xff]
    %v967 = vld [vmem:[#allocation2 + $0x1940] sm:$0xff]
    %v968 = vld [vmem:[#allocation2 + $0x1948] sm:$0xff]
    %v969 = vld [vmem:[#allocation2 + $0x1950] sm:$0xff]
    %v970 = vld [vmem:[#allocation2 + $0x1958] sm:$0xff]
    %v971 = vld [vmem:[#allocation2 + $0x1960] sm:$0xff]
    %v972 = vld [vmem:[#allocation2 + $0x1968] sm:$0xff]
    %v973 = vld [vmem:[#allocation2 + $0x1970] sm:$0xff]
    %v974 = vld [vmem:[#allocation2 + $0x1978] sm:$0xff]
    %v975 = vld [vmem:[#allocation2 + $0x1980] sm:$0xff]
    %v976 = vld [vmem:[#allocation2 + $0x1988] sm:$0xff]
    %v977 = vld [vmem:[#allocation2 + $0x1990] sm:$0xff]
    %v978 = vld [vmem:[#allocation2 + $0x1998] sm:$0xff]
    %v979 = vld [vmem:[#allocation2 + $0x19a0] sm:$0xff]
    %v980 = vld [vmem:[#allocation2 + $0x19a8] sm:$0xff]
    %v981 = vld [vmem:[#allocation2 + $0x19b0] sm:$0xff]
    %v982 = vld [vmem:[#allocation2 + $0x19b8] sm:$0xff]
    %v983 = vld [vmem:[#allocation2 + $0x19c0] sm:$0xff]
    %v984 = vld [vmem:[#allocation2 + $0x19c8] sm:$0xff]
    %v985 = vld [vmem:[#allocation2 + $0x19d0] sm:$0xff]
    %v986 = vld [vmem:[#allocation2 + $0x19d8] sm:$0xff]
    %v987 = vld [vmem:[#allocation2 + $0x19e0] sm:$0xff]
    %v988 = vld [vmem:[#allocation2 + $0x19e8] sm:$0xff]
    %v989 = vld [vmem:[#allocation2 + $0x19f0] sm:$0xff]
    %v990 = vld [vmem:[#allocation2 + $0x19f8] sm:$0xff]
    %v991 = vld [vmem:[#allocation2 + $0x1a00] sm:$0xff]
    %v992 = vld [vmem:[#allocation2 + $0x1a08] sm:$0xff]
    %v993 = vld [vmem:[#allocation2 + $0x1a10] sm:$0xff]
    %v994 = vld [vmem:[#allocation2 + $0x1a18] sm:$0xff]
    %v995 = vld [vmem:[#allocation2 + $0x1a20] sm:$0xff]
    %v996 = vld [vmem:[#allocation2 + $0x1a28] sm:$0xff]
    %v997 = vld [vmem:[#allocation2 + $0x1a30] sm:$0xff]
    %v998 = vld [vmem:[#allocation2 + $0x1a38] sm:$0xff]
    %v999 = vld [vmem:[#allocation2 + $0x1a40] sm:$0xff]
    %v1000 = vld [vmem:[#allocation2 + $0x1a48] sm:$0xff]
    %v1001 = vld [vmem:[#allocation2 + $0x1a50] sm:$0xff]
    %v1002 = vld [vmem:[#allocation2 + $0x1a58] sm:$0xff]
    %v1003 = vld [vmem:[#allocation2 + $0x1a60] sm:$0xff]
    %v1004 = vld [vmem:[#allocation2 + $0x1a68] sm:$0xff]
    %v1005 = vld [vmem:[#allocation2 + $0x1a70] sm:$0xff]
    %v1006 = vld [vmem:[#allocation2 + $0x1a78] sm:$0xff]
    %v1007 = vld [vmem:[#allocation2 + $0x1a80] sm:$0xff]
    %v1008 = vld [vmem:[#allocation2 + $0x1a88] sm:$0xff]
    %v1009 = vld [vmem:[#allocation2 + $0x1a90] sm:$0xff]
    %v1010 = vld [vmem:[#allocation2 + $0x1a98] sm:$0xff]
    %v1011 = vld [vmem:[#allocation2 + $0x1aa0] sm:$0xff]
    %v1012 = vld [vmem:[#allocation2 + $0x1aa8] sm:$0xff]
    %v1013 = vld [vmem:[#allocation2 + $0x1ab0] sm:$0xff]
    %v1014 = vld [vmem:[#allocation2 + $0x1ab8] sm:$0xff]
    %v1015 = vld [vmem:[#allocation2 + $0x1ac0] sm:$0xff]
    %v1016 = vld [vmem:[#allocation2 + $0x1ac8] sm:$0xff]
    %v1017 = vld [vmem:[#allocation2 + $0x1ad0] sm:$0xff]
    %v1018 = vld [vmem:[#allocation2 + $0x1ad8] sm:$0xff]
    %v1019 = vld [vmem:[#allocation2 + $0x1ae0] sm:$0xff]
    %v1020 = vld [vmem:[#allocation2 + $0x1ae8] sm:$0xff]
    %v1021 = vld [vmem:[#allocation2 + $0x1af0] sm:$0xff]
    %v1022 = vld [vmem:[#allocation2 + $0x1af8] sm:$0xff]
    %v1023 = vld [vmem:[#allocation2 + $0x1b00] sm:$0xff]
    %v1024 = vld [vmem:[#allocation2 + $0x1b08] sm:$0xff]
    %v1025 = vld [vmem:[#allocation2 + $0x1b10] sm:$0xff]
    %v1026 = vld [vmem:[#allocation2 + $0x1b18] sm:$0xff]
    %v1027 = vld [vmem:[#allocation2 + $0x1b20] sm:$0xff]
    %v1028 = vld [vmem:[#allocation2 + $0x1b28] sm:$0xff]
    %v1029 = vld [vmem:[#allocation2 + $0x1b30] sm:$0xff]
    %v1030 = vld [vmem:[#allocation2 + $0x1b38] sm:$0xff]
    %v1031 = vld [vmem:[#allocation2 + $0x1b40] sm:$0xff]
    %v1032 = vld [vmem:[#allocation2 + $0x1b48] sm:$0xff]
    %v1033 = vld [vmem:[#allocation2 + $0x1b50] sm:$0xff]
    %v1034 = vld [vmem:[#allocation2 + $0x1b58] sm:$0xff]
    %v1035 = vld [vmem:[#allocation2 + $0x1b60] sm:$0xff]
    %v1036 = vld [vmem:[#allocation2 + $0x1b68] sm:$0xff]
    %v1037 = vld [vmem:[#allocation2 + $0x1b70] sm:$0xff]
    %v1038 = vld [vmem:[#allocation2 + $0x1b78] sm:$0xff]
    %v1039 = vld [vmem:[#allocation2 + $0x1b80] sm:$0xff]
    %v1040 = vld [vmem:[#allocation2 + $0x1b88] sm:$0xff]
    %v1041 = vld [vmem:[#allocation2 + $0x1b90] sm:$0xff]
    %v1042 = vld [vmem:[#allocation2 + $0x1b98] sm:$0xff]
    %v1043 = vld [vmem:[#allocation2 + $0x1ba0] sm:$0xff]
    %v1044 = vld [vmem:[#allocation2 + $0x1ba8] sm:$0xff]
    %v1045 = vld [vmem:[#allocation2 + $0x1bb0] sm:$0xff]
    %v1046 = vld [vmem:[#allocation2 + $0x1bb8] sm:$0xff]
    %v1047 = vld [vmem:[#allocation2 + $0x1bc0] sm:$0xff]
    %v1048 = vld [vmem:[#allocation2 + $0x1bc8] sm:$0xff]
    %v1049 = vld [vmem:[#allocation2 + $0x1bd0] sm:$0xff]
    %v1050 = vld [vmem:[#allocation2 + $0x1bd8] sm:$0xff]
    %v1051 = vld [vmem:[#allocation2 + $0x1be0] sm:$0xff]
    %v1052 = vld [vmem:[#allocation2 + $0x1be8] sm:$0xff]
    %v1053 = vld [vmem:[#allocation2 + $0x1bf0] sm:$0xff]
    %v1054 = vld [vmem:[#allocation2 + $0x1bf8] sm:$0xff]
    %v1055 = vld [vmem:[#allocation2 + $0x1c00] sm:$0xff]
    %v1056 = vld [vmem:[#allocation2 + $0x1c08] sm:$0xff]
    %v1057 = vld [vmem:[#allocation2 + $0x1c10] sm:$0xff]
    %v1058 = vld [vmem:[#allocation2 + $0x1c18] sm:$0xff]
    %v1059 = vld [vmem:[#allocation2 + $0x1c20] sm:$0xff]
    %v1060 = vld [vmem:[#allocation2 + $0x1c28] sm:$0xff]
    %v1061 = vld [vmem:[#allocation2 + $0x1c30] sm:$0xff]
    %v1062 = vld [vmem:[#allocation2 + $0x1c38] sm:$0xff]
    %v1063 = vld [vmem:[#allocation2 + $0x1c40] sm:$0xff]
    %v1064 = vld [vmem:[#allocation2 + $0x1c48] sm:$0xff]
    %v1065 = vld [vmem:[#allocation2 + $0x1c50] sm:$0xff]
    %v1066 = vld [vmem:[#allocation2 + $0x1c58] sm:$0xff]
    %v1067 = vld [vmem:[#allocation2 + $0x1c60] sm:$0xff]
    %v1068 = vld [vmem:[#allocation2 + $0x1c68] sm:$0xff]
    %v1069 = vld [vmem:[#allocation2 + $0x1c70] sm:$0xff]
    %v1070 = vld [vmem:[#allocation2 + $0x1c78] sm:$0xff]
    %v1071 = vld [vmem:[#allocation2 + $0x1c80] sm:$0xff]
    %v1072 = vld [vmem:[#allocation2 + $0x1c88] sm:$0xff]
    %v1073 = vld [vmem:[#allocation2 + $0x1c90] sm:$0xff]
    %v1074 = vld [vmem:[#allocation2 + $0x1c98] sm:$0xff]
    %v1075 = vld [vmem:[#allocation2 + $0x1ca0] sm:$0xff]
    %v1076 = vld [vmem:[#allocation2 + $0x1ca8] sm:$0xff]
    %v1077 = vld [vmem:[#allocation2 + $0x1cb0] sm:$0xff]
    %v1078 = vld [vmem:[#allocation2 + $0x1cb8] sm:$0xff]
    %v1079 = vld [vmem:[#allocation2 + $0x1cc0] sm:$0xff]
    %v1080 = vld [vmem:[#allocation2 + $0x1cc8] sm:$0xff]
    %v1081 = vld [vmem:[#allocation2 + $0x1cd0] sm:$0xff]
    %v1082 = vld [vmem:[#allocation2 + $0x1cd8] sm:$0xff]
    %v1083 = vld [vmem:[#allocation2 + $0x1ce0] sm:$0xff]
    %v1084 = vld [vmem:[#allocation2 + $0x1ce8] sm:$0xff]
    %v1085 = vld [vmem:[#allocation2 + $0x1cf0] sm:$0xff]
    %v1086 = vld [vmem:[#allocation2 + $0x1cf8] sm:$0xff]
    %v1087 = vld [vmem:[#allocation2 + $0x1d00] sm:$0xff]
    %v1088 = vld [vmem:[#allocation2 + $0x1d08] sm:$0xff]
    %v1089 = vld [vmem:[#allocation2 + $0x1d10] sm:$0xff]
    %v1090 = vld [vmem:[#allocation2 + $0x1d18] sm:$0xff]
    %v1091 = vld [vmem:[#allocation2 + $0x1d20] sm:$0xff]
    %v1092 = vld [vmem:[#allocation2 + $0x1d28] sm:$0xff]
    %v1093 = vld [vmem:[#allocation2 + $0x1d30] sm:$0xff]
    %v1094 = vld [vmem:[#allocation2 + $0x1d38] sm:$0xff]
    %v1095 = vld [vmem:[#allocation2 + $0x1d40] sm:$0xff]
    %v1096 = vld [vmem:[#allocation2 + $0x1d48] sm:$0xff]
    %v1097 = vld [vmem:[#allocation2 + $0x1d50] sm:$0xff]
    %v1098 = vld [vmem:[#allocation2 + $0x1d58] sm:$0xff]
    %v1099 = vld [vmem:[#allocation2 + $0x1d60] sm:$0xff]
    %v1100 = vld [vmem:[#allocation2 + $0x1d68] sm:$0xff]
    %v1101 = vld [vmem:[#allocation2 + $0x1d70] sm:$0xff]
    %v1102 = vld [vmem:[#allocation2 + $0x1d78] sm:$0xff]
    %v1103 = vld [vmem:[#allocation2 + $0x1d80] sm:$0xff]
    %v1104 = vld [vmem:[#allocation2 + $0x1d88] sm:$0xff]
    %v1105 = vld [vmem:[#allocation2 + $0x1d90] sm:$0xff]
    %v1106 = vld [vmem:[#allocation2 + $0x1d98] sm:$0xff]
    %v1107 = vld [vmem:[#allocation2 + $0x1da0] sm:$0xff]
    %v1108 = vld [vmem:[#allocation2 + $0x1da8] sm:$0xff]
    %v1109 = vld [vmem:[#allocation2 + $0x1db0] sm:$0xff]
    %v1110 = vld [vmem:[#allocation2 + $0x1db8] sm:$0xff]
    %v1111 = vld [vmem:[#allocation2 + $0x1dc0] sm:$0xff]
    %v1112 = vld [vmem:[#allocation2 + $0x1dc8] sm:$0xff]
    %v1113 = vld [vmem:[#allocation2 + $0x1dd0] sm:$0xff]
    %v1114 = vld [vmem:[#allocation2 + $0x1dd8] sm:$0xff]
    %v1115 = vld [vmem:[#allocation2 + $0x1de0] sm:$0xff]
    %v1116 = vld [vmem:[#allocation2 + $0x1de8] sm:$0xff]
    %v1117 = vld [vmem:[#allocation2 + $0x1df0] sm:$0xff]
    %v1118 = vld [vmem:[#allocation2 + $0x1df8] sm:$0xff]
    %v1119 = vld [vmem:[#allocation2 + $0x1e00] sm:$0xff]
    %v1120 = vld [vmem:[#allocation2 + $0x1e08] sm:$0xff]
    %v1121 = vld [vmem:[#allocation2 + $0x1e10] sm:$0xff]
    %v1122 = vld [vmem:[#allocation2 + $0x1e18] sm:$0xff]
    %v1123 = vld [vmem:[#allocation2 + $0x1e20] sm:$0xff]
    %v1124 = vld [vmem:[#allocation2 + $0x1e28] sm:$0xff]
    %v1125 = vld [vmem:[#allocation2 + $0x1e30] sm:$0xff]
    %v1126 = vld [vmem:[#allocation2 + $0x1e38] sm:$0xff]
    %v1127 = vld [vmem:[#allocation2 + $0x1e40] sm:$0xff]
    %v1128 = vld [vmem:[#allocation2 + $0x1e48] sm:$0xff]
    %v1129 = vld [vmem:[#allocation2 + $0x1e50] sm:$0xff]
    %v1130 = vld [vmem:[#allocation2 + $0x1e58] sm:$0xff]
    %v1131 = vld [vmem:[#allocation2 + $0x1e60] sm:$0xff]
    %v1132 = vld [vmem:[#allocation2 + $0x1e68] sm:$0xff]
    %v1133 = vld [vmem:[#allocation2 + $0x1e70] sm:$0xff]
    %v1134 = vld [vmem:[#allocation2 + $0x1e78] sm:$0xff]
    %v1135 = vld [vmem:[#allocation2 + $0x1e80] sm:$0xff]
    %v1136 = vld [vmem:[#allocation2 + $0x1e88] sm:$0xff]
    %v1137 = vld [vmem:[#allocation2 + $0x1e90] sm:$0xff]
    %v1138 = vld [vmem:[#allocation2 + $0x1e98] sm:$0xff]
    %v1139 = vld [vmem:[#allocation2 + $0x1ea0] sm:$0xff]
    %v1140 = vld [vmem:[#allocation2 + $0x1ea8] sm:$0xff]
    %v1141 = vld [vmem:[#allocation2 + $0x1eb0] sm:$0xff]
    %v1142 = vld [vmem:[#allocation2 + $0x1eb8] sm:$0xff]
    %v1143 = vld [vmem:[#allocation2 + $0x1ec0] sm:$0xff]
    %v1144 = vld [vmem:[#allocation2 + $0x1ec8] sm:$0xff]
    %v1145 = vld [vmem:[#allocation2 + $0x1ed0] sm:$0xff]
    %v1146 = vld [vmem:[#allocation2 + $0x1ed8] sm:$0xff]
    %v1147 = vld [vmem:[#allocation2 + $0x1ee0] sm:$0xff]
    %v1148 = vld [vmem:[#allocation2 + $0x1ee8] sm:$0xff]
    %v1149 = vld [vmem:[#allocation2 + $0x1ef0] sm:$0xff]
    %v1150 = vld [vmem:[#allocation2 + $0x1ef8] sm:$0xff]
    %v1151 = vld [vmem:[#allocation2 + $0x1f00] sm:$0xff]
    %v1152 = vld [vmem:[#allocation2 + $0x1f08] sm:$0xff]
    %v1153 = vld [vmem:[#allocation2 + $0x1f10] sm:$0xff]
    %v1154 = vld [vmem:[#allocation2 + $0x1f18] sm:$0xff]
    %v1155 = vld [vmem:[#allocation2 + $0x1f20] sm:$0xff]
    %v1156 = vld [vmem:[#allocation2 + $0x1f28] sm:$0xff]
    %v1157 = vld [vmem:[#allocation2 + $0x1f30] sm:$0xff]
    %v1158 = vld [vmem:[#allocation2 + $0x1f38] sm:$0xff]
    %v1159 = vld [vmem:[#allocation2 + $0x1f40] sm:$0xff]
    %v1160 = vld [vmem:[#allocation2 + $0x1f48] sm:$0xff]
    %v1161 = vld [vmem:[#allocation2 + $0x1f50] sm:$0xff]
    %v1162 = vld [vmem:[#allocation2 + $0x1f58] sm:$0xff]
    %v1163 = vld [vmem:[#allocation2 + $0x1f60] sm:$0xff]
    %v1164 = vld [vmem:[#allocation2 + $0x1f68] sm:$0xff]
    %v1165 = vld [vmem:[#allocation2 + $0x1f70] sm:$0xff]
    %v1166 = vld [vmem:[#allocation2 + $0x1f78] sm:$0xff]
    %v1167 = vld [vmem:[#allocation2 + $0x1f80] sm:$0xff]
    %v1168 = vld [vmem:[#allocation2 + $0x1f88] sm:$0xff]
    %v1169 = vld [vmem:[#allocation2 + $0x1f90] sm:$0xff]
    %v1170 = vld [vmem:[#allocation2 + $0x1f98] sm:$0xff]
    %v1171 = vld [vmem:[#allocation2 + $0x1fa0] sm:$0xff]
    %v1172 = vld [vmem:[#allocation2 + $0x1fa8] sm:$0xff]
    %v1173 = vld [vmem:[#allocation2 + $0x1fb0] sm:$0xff]
    %v1174 = vld [vmem:[#allocation2 + $0x1fb8] sm:$0xff]
    %v1175 = vld [vmem:[#allocation2 + $0x1fc0] sm:$0xff]
    %v1176 = vld [vmem:[#allocation2 + $0x1fc8] sm:$0xff]
    %v1177 = vld [vmem:[#allocation2 + $0x1fd0] sm:$0xff]
    %v1178 = vld [vmem:[#allocation2 + $0x1fd8] sm:$0xff]
    %v1179 = vld [vmem:[#allocation2 + $0x1fe0] sm:$0xff]
    %v1180 = vld [vmem:[#allocation2 + $0x1fe8] sm:$0xff]
    %v1181 = vld [vmem:[#allocation2 + $0x1ff0] sm:$0xff]
    %v1182 = vld [vmem:[#allocation2 + $0x1ff8] sm:$0xff]
    %v1183 = vld [vmem:[#allocation2 + $0x2000] sm:$0xff]
    %v1184 = vld [vmem:[#allocation2 + $0x2008] sm:$0xff]
    %v1185 = vld [vmem:[#allocation2 + $0x2010] sm:$0xff]
    %v1186 = vld [vmem:[#allocation2 + $0x2018] sm:$0xff]
    %v1187 = vld [vmem:[#allocation2 + $0x2020] sm:$0xff]
    %v1188 = vld [vmem:[#allocation2 + $0x2028] sm:$0xff]
    %v1189 = vld [vmem:[#allocation2 + $0x2030] sm:$0xff]
    %v1190 = vld [vmem:[#allocation2 + $0x2038] sm:$0xff]
    %v1191 = vld [vmem:[#allocation2 + $0x2040] sm:$0xff]
    %v1192 = vld [vmem:[#allocation2 + $0x2048] sm:$0xff]
    %v1193 = vld [vmem:[#allocation2 + $0x2050] sm:$0xff]
    %v1194 = vld [vmem:[#allocation2 + $0x2058] sm:$0xff]
    %v1195 = vld [vmem:[#allocation2 + $0x2060] sm:$0xff]
    %v1196 = vld [vmem:[#allocation2 + $0x2068] sm:$0xff]
    %v1197 = vld [vmem:[#allocation2 + $0x2070] sm:$0xff]
    %v1198 = vld [vmem:[#allocation2 + $0x2078] sm:$0xff]
    %v1199 = vld [vmem:[#allocation2 + $0x2080] sm:$0xff]
    %v1200 = vld [vmem:[#allocation2 + $0x2088] sm:$0xff]
    %v1201 = vld [vmem:[#allocation2 + $0x2090] sm:$0xff]
    %v1202 = vld [vmem:[#allocation2 + $0x2098] sm:$0xff]
    %v1203 = vld [vmem:[#allocation2 + $0x20a0] sm:$0xff]
    %v1204 = vld [vmem:[#allocation2 + $0x20a8] sm:$0xff]
    %v1205 = vld [vmem:[#allocation2 + $0x20b0] sm:$0xff]
    %v1206 = vld [vmem:[#allocation2 + $0x20b8] sm:$0xff]
    %v1207 = vld [vmem:[#allocation2 + $0x20c0] sm:$0xff]
    %v1208 = vld [vmem:[#allocation2 + $0x20c8] sm:$0xff]
    %v1209 = vld [vmem:[#allocation2 + $0x20d0] sm:$0xff]
    %v1210 = vld [vmem:[#allocation2 + $0x20d8] sm:$0xff]
    %v1211 = vld [vmem:[#allocation2 + $0x20e0] sm:$0xff]
    %v1212 = vld [vmem:[#allocation2 + $0x20e8] sm:$0xff]
    %v1213 = vld [vmem:[#allocation2 + $0x20f0] sm:$0xff]
    %v1214 = vld [vmem:[#allocation2 + $0x20f8] sm:$0xff]
    %v1215 = vld [vmem:[#allocation2 + $0x2100] sm:$0xff]
    %v1216 = vld [vmem:[#allocation2 + $0x2108] sm:$0xff]
    %v1217 = vld [vmem:[#allocation2 + $0x2110] sm:$0xff]
    %v1218 = vld [vmem:[#allocation2 + $0x2118] sm:$0xff]
    %v1219 = vld [vmem:[#allocation2 + $0x2120] sm:$0xff]
    %v1220 = vld [vmem:[#allocation2 + $0x2128] sm:$0xff]
    %v1221 = vld [vmem:[#allocation2 + $0x2130] sm:$0xff]
    %v1222 = vld [vmem:[#allocation2 + $0x2138] sm:$0xff]
    %v1223 = vld [vmem:[#allocation2 + $0x2140] sm:$0xff]
    %v1224 = vld [vmem:[#allocation2 + $0x2148] sm:$0xff]
    %v1225 = vld [vmem:[#allocation2 + $0x2150] sm:$0xff]
    %v1226 = vld [vmem:[#allocation2 + $0x2158] sm:$0xff]
    %v1227 = vld [vmem:[#allocation2 + $0x2160] sm:$0xff]
    %v1228 = vld [vmem:[#allocation2 + $0x2168] sm:$0xff]
    %v1229 = vld [vmem:[#allocation2 + $0x2170] sm:$0xff]
    %v1230 = vld [vmem:[#allocation2 + $0x2178] sm:$0xff]
    %v1231 = vld [vmem:[#allocation2 + $0x2180] sm:$0xff]
    %v1232 = vld [vmem:[#allocation2 + $0x2188] sm:$0xff]
    %v1233 = vld [vmem:[#allocation2 + $0x2190] sm:$0xff]
    %v1234 = vld [vmem:[#allocation2 + $0x2198] sm:$0xff]
    %v1235 = vld [vmem:[#allocation2 + $0x21a0] sm:$0xff]
    %v1236 = vld [vmem:[#allocation2 + $0x21a8] sm:$0xff]
    %v1237 = vld [vmem:[#allocation2 + $0x21b0] sm:$0xff]
    %v1238 = vld [vmem:[#allocation2 + $0x21b8] sm:$0xff]
    %v1239 = vld [vmem:[#allocation2 + $0x21c0] sm:$0xff]
    %v1240 = vld [vmem:[#allocation2 + $0x21c8] sm:$0xff]
    %v1241 = vld [vmem:[#allocation2 + $0x21d0] sm:$0xff]
    %v1242 = vld [vmem:[#allocation2 + $0x21d8] sm:$0xff]
    %v1243 = vld [vmem:[#allocation2 + $0x21e0] sm:$0xff]
    %v1244 = vld [vmem:[#allocation2 + $0x21e8] sm:$0xff]
    %v1245 = vld [vmem:[#allocation2 + $0x21f0] sm:$0xff]
    %v1246 = vld [vmem:[#allocation2 + $0x21f8] sm:$0xff]
    %v1247 = vld [vmem:[#allocation2 + $0x2200] sm:$0xff]
    %v1248 = vld [vmem:[#allocation2 + $0x2208] sm:$0xff]
    %v1249 = vld [vmem:[#allocation2 + $0x2210] sm:$0xff]
    %v1250 = vld [vmem:[#allocation2 + $0x2218] sm:$0xff]
    %v1251 = vld [vmem:[#allocation2 + $0x2220] sm:$0xff]
    %v1252 = vld [vmem:[#allocation2 + $0x2228] sm:$0xff]
    %v1253 = vld [vmem:[#allocation2 + $0x2230] sm:$0xff]
    %v1254 = vld [vmem:[#allocation2 + $0x2238] sm:$0xff]
    %v1255 = vld [vmem:[#allocation2 + $0x2240] sm:$0xff]
    %v1256 = vld [vmem:[#allocation2 + $0x2248] sm:$0xff]
    %v1257 = vld [vmem:[#allocation2 + $0x2250] sm:$0xff]
    %v1258 = vld [vmem:[#allocation2 + $0x2258] sm:$0xff]
    %v1259 = vld [vmem:[#allocation2 + $0x2260] sm:$0xff]
    %v1260 = vld [vmem:[#allocation2 + $0x2268] sm:$0xff]
    %v1261 = vld [vmem:[#allocation2 + $0x2270] sm:$0xff]
    %v1262 = vld [vmem:[#allocation2 + $0x2278] sm:$0xff]
    %v1263 = vld [vmem:[#allocation2 + $0x2280] sm:$0xff]
    %v1264 = vld [vmem:[#allocation2 + $0x2288] sm:$0xff]
    %v1265 = vld [vmem:[#allocation2 + $0x2290] sm:$0xff]
    %v1266 = vld [vmem:[#allocation2 + $0x2298] sm:$0xff]
    %v1267 = vld [vmem:[#allocation2 + $0x22a0] sm:$0xff]
    %v1268 = vld [vmem:[#allocation2 + $0x22a8] sm:$0xff]
    %v1269 = vld [vmem:[#allocation2 + $0x22b0] sm:$0xff]
    %v1270 = vld [vmem:[#allocation2 + $0x22b8] sm:$0xff]
    %v1271 = vld [vmem:[#allocation2 + $0x22c0] sm:$0xff]
    %v1272 = vld [vmem:[#allocation2 + $0x22c8] sm:$0xff]
    %v1273 = vld [vmem:[#allocation2 + $0x22d0] sm:$0xff]
    %v1274 = vld [vmem:[#allocation2 + $0x22d8] sm:$0xff]
    %v1275 = vld [vmem:[#allocation2 + $0x22e0] sm:$0xff]
    %v1276 = vld [vmem:[#allocation2 + $0x22e8] sm:$0xff]
    %v1277 = vld [vmem:[#allocation2 + $0x22f0] sm:$0xff]
    %v1278 = vld [vmem:[#allocation2 + $0x22f8] sm:$0xff]
    %v1279 = vld [vmem:[#allocation2 + $0x2300] sm:$0xff]
    %v1280 = vld [vmem:[#allocation2 + $0x2308] sm:$0xff]
    %v1281 = vld [vmem:[#allocation2 + $0x2310] sm:$0xff]
    %v1282 = vld [vmem:[#allocation2 + $0x2318] sm:$0xff]
    %v1283 = vld [vmem:[#allocation2 + $0x2320] sm:$0xff]
    %v1284 = vld [vmem:[#allocation2 + $0x2328] sm:$0xff]
    %v1285 = vld [vmem:[#allocation2 + $0x2330] sm:$0xff]
    %v1286 = vld [vmem:[#allocation2 + $0x2338] sm:$0xff]
    %v1287 = vld [vmem:[#allocation2 + $0x2340] sm:$0xff]
    %v1288 = vld [vmem:[#allocation2 + $0x2348] sm:$0xff]
    %v1289 = vld [vmem:[#allocation2 + $0x2350] sm:$0xff]
    %v1290 = vld [vmem:[#allocation2 + $0x2358] sm:$0xff]
    %v1291 = vld [vmem:[#allocation2 + $0x2360] sm:$0xff]
    %v1292 = vld [vmem:[#allocation2 + $0x2368] sm:$0xff]
    %v1293 = vld [vmem:[#allocation2 + $0x2370] sm:$0xff]
    %v1294 = vld [vmem:[#allocation2 + $0x2378] sm:$0xff]
    %v1295 = vld [vmem:[#allocation2 + $0x2380] sm:$0xff]
    %v1296 = vld [vmem:[#allocation2 + $0x2388] sm:$0xff]
    %v1297 = vld [vmem:[#allocation2 + $0x2390] sm:$0xff]
    %v1298 = vld [vmem:[#allocation2 + $0x2398] sm:$0xff]
    %v1299 = vld [vmem:[#allocation2 + $0x23a0] sm:$0xff]
    %v1300 = vld [vmem:[#allocation2 + $0x23a8] sm:$0xff]
    %v1301 = vld [vmem:[#allocation2 + $0x23b0] sm:$0xff]
    %v1302 = vld [vmem:[#allocation2 + $0x23b8] sm:$0xff]
    %v1303 = vld [vmem:[#allocation2 + $0x23c0] sm:$0xff]
    %v1304 = vld [vmem:[#allocation2 + $0x23c8] sm:$0xff]
    %v1305 = vld [vmem:[#allocation2 + $0x23d0] sm:$0xff]
    %v1306 = vld [vmem:[#allocation2 + $0x23d8] sm:$0xff]
    %v1307 = vld [vmem:[#allocation2 + $0x23e0] sm:$0xff]
    %v1308 = vld [vmem:[#allocation2 + $0x23e8] sm:$0xff]
    %v1309 = vld [vmem:[#allocation2 + $0x23f0] sm:$0xff]
    %v1310 = vld [vmem:[#allocation2 + $0x23f8] sm:$0xff]
    %v1311 = vld [vmem:[#allocation2 + $0x2400] sm:$0xff]
    %v1312 = vld [vmem:[#allocation2 + $0x2408] sm:$0xff]
    %v1313 = vld [vmem:[#allocation2 + $0x2410] sm:$0xff]
    %v1314 = vld [vmem:[#allocation2 + $0x2418] sm:$0xff]
    %v1315 = vld [vmem:[#allocation2 + $0x2420] sm:$0xff]
    %v1316 = vld [vmem:[#allocation2 + $0x2428] sm:$0xff]
    %v1317 = vld [vmem:[#allocation2 + $0x2430] sm:$0xff]
    %v1318 = vld [vmem:[#allocation2 + $0x2438] sm:$0xff]
    %v1319 = vld [vmem:[#allocation2 + $0x2440] sm:$0xff]
    %v1320 = vld [vmem:[#allocation2 + $0x2448] sm:$0xff]
    %v1321 = vld [vmem:[#allocation2 + $0x2450] sm:$0xff]
    %v1322 = vld [vmem:[#allocation2 + $0x2458] sm:$0xff]
    %v1323 = vld [vmem:[#allocation2 + $0x2460] sm:$0xff]
    %v1324 = vld [vmem:[#allocation2 + $0x2468] sm:$0xff]
    %v1325 = vld [vmem:[#allocation2 + $0x2470] sm:$0xff]
    %v1326 = vld [vmem:[#allocation2 + $0x2478] sm:$0xff]
    %v1327 = vld [vmem:[#allocation2 + $0x2480] sm:$0xff]
    %v1328 = vld [vmem:[#allocation2 + $0x2488] sm:$0xff]
    %v1329 = vld [vmem:[#allocation2 + $0x2490] sm:$0xff]
    %v1330 = vld [vmem:[#allocation2 + $0x2498] sm:$0xff]
    %v1331 = vld [vmem:[#allocation2 + $0x24a0] sm:$0xff]
    %v1332 = vld [vmem:[#allocation2 + $0x24a8] sm:$0xff]
    %v1333 = vld [vmem:[#allocation2 + $0x24b0] sm:$0xff]
    %v1334 = vld [vmem:[#allocation2 + $0x24b8] sm:$0xff]
    %v1335 = vld [vmem:[#allocation2 + $0x24c0] sm:$0xff]
    %v1336 = vld [vmem:[#allocation2 + $0x24c8] sm:$0xff]
    %v1337 = vld [vmem:[#allocation2 + $0x24d0] sm:$0xff]
    %v1338 = vld [vmem:[#allocation2 + $0x24d8] sm:$0xff]
    %v1339 = vld [vmem:[#allocation2 + $0x24e0] sm:$0xff]
    %v1340 = vld [vmem:[#allocation2 + $0x24e8] sm:$0xff]
    %v1341 = vld [vmem:[#allocation2 + $0x24f0] sm:$0xff]
    %v1342 = vld [vmem:[#allocation2 + $0x24f8] sm:$0xff]
    %v1343 = vld [vmem:[#allocation2 + $0x2500] sm:$0xff]
    %v1344 = vld [vmem:[#allocation2 + $0x2508] sm:$0xff]
    %v1345 = vld [vmem:[#allocation2 + $0x2510] sm:$0xff]
    %v1346 = vld [vmem:[#allocation2 + $0x2518] sm:$0xff]
    %v1347 = vld [vmem:[#allocation2 + $0x2520] sm:$0xff]
    %v1348 = vld [vmem:[#allocation2 + $0x2528] sm:$0xff]
    %v1349 = vld [vmem:[#allocation2 + $0x2530] sm:$0xff]
    %v1350 = vld [vmem:[#allocation2 + $0x2538] sm:$0xff]
    %v1351 = vld [vmem:[#allocation2 + $0x2540] sm:$0xff]
    %v1352 = vld [vmem:[#allocation2 + $0x2548] sm:$0xff]
    %v1353 = vld [vmem:[#allocation2 + $0x2550] sm:$0xff]
    %v1354 = vld [vmem:[#allocation2 + $0x2558] sm:$0xff]
    %v1355 = vld [vmem:[#allocation2 + $0x2560] sm:$0xff]
    %v1356 = vld [vmem:[#allocation2 + $0x2568] sm:$0xff]
    %v1357 = vld [vmem:[#allocation2 + $0x2570] sm:$0xff]
    %v1358 = vld [vmem:[#allocation2 + $0x2578] sm:$0xff]
    %v1359 = vld [vmem:[#allocation2 + $0x2580] sm:$0xff]
    %v1360 = vld [vmem:[#allocation2 + $0x2588] sm:$0xff]
    %v1361 = vld [vmem:[#allocation2 + $0x2590] sm:$0xff]
    %v1362 = vld [vmem:[#allocation2 + $0x2598] sm:$0xff]
    %v1363 = vld [vmem:[#allocation2 + $0x25a0] sm:$0xff]
    %v1364 = vld [vmem:[#allocation2 + $0x25a8] sm:$0xff]
    %v1365 = vld [vmem:[#allocation2 + $0x25b0] sm:$0xff]
    %v1366 = vld [vmem:[#allocation2 + $0x25b8] sm:$0xff]
    %v1367 = vld [vmem:[#allocation2 + $0x25c0] sm:$0xff]
    %v1368 = vld [vmem:[#allocation2 + $0x25c8] sm:$0xff]
    %v1369 = vld [vmem:[#allocation2 + $0x25d0] sm:$0xff]
    %v1370 = vld [vmem:[#allocation2 + $0x25d8] sm:$0xff]
    %v1371 = vld [vmem:[#allocation2 + $0x25e0] sm:$0xff]
    %v1372 = vld [vmem:[#allocation2 + $0x25e8] sm:$0xff]
    %v1373 = vld [vmem:[#allocation2 + $0x25f0] sm:$0xff]
    %v1374 = vld [vmem:[#allocation2 + $0x25f8] sm:$0xff]
    %v1375 = vld [vmem:[#allocation4] sm:$0xff]
    %v1377 = vperm.slane %v1375, 0
    %v1378 = vperm.slane %v1375, 1
    %v1379 = vperm.slane %v1375, 2
    %v1380 = vperm.slane %v1375, 3
    %v1381 = vperm.slane %v1375, 4
    %v1382 = vperm.slane %v1375, 5
    %v1383 = vperm.slane %v1375, 6
    %v1384 = vperm.slane %v1375, 7
    %v1403 = vunpack.c.l.b16 %v149
    %v1404 = vunpack.c.h.b16 %v149
    %v1405 = vunpack.c.l.b16 %v150
    %v1406 = vunpack.c.h.b16 %v150
    %v1407 = vunpack.c.l.b16 %v151
    %v1408 = vunpack.c.h.b16 %v151
    %v1409 = vunpack.c.l.b16 %v152
    %v1410 = vunpack.c.h.b16 %v152
    %v1411 = vunpack.c.l.b16 %v153
    %v1412 = vunpack.c.h.b16 %v153
    %v1413 = vunpack.c.l.b16 %v154
    %v1414 = vunpack.c.h.b16 %v154
    %v1415 = vunpack.c.l.b16 %v155
    %v1416 = vunpack.c.h.b16 %v155
    %v1417 = vunpack.c.l.b16 %v156
    %v1418 = vunpack.c.h.b16 %v156
    %v1419 = vunpack.c.l.b16 %v157
    %v1420 = vunpack.c.h.b16 %v157
    %v1421 = vunpack.c.l.b16 %v158
    %v1422 = vpack.c.b16 %v1403, %v1403
    %v1423 = vpack.c.b16 %v1404, %v1404
    %v1424 = vpack.c.b16 %v1405, %v1405
    %v1425 = vpack.c.b16 %v1406, %v1406
    %v1426 = vpack.c.b16 %v1407, %v1407
    %v1427 = vpack.c.b16 %v1408, %v1408
    %v1428 = vpack.c.b16 %v1409, %v1409
    %v1429 = vpack.c.b16 %v1410, %v1410
    %v1430 = vpack.c.b16 %v1411, %v1411
    %v1431 = vpack.c.b16 %v1412, %v1412
    %v1432 = vpack.c.b16 %v1413, %v1413
    %v1433 = vpack.c.b16 %v1414, %v1414
    %v1434 = vpack.c.b16 %v1415, %v1415
    %v1435 = vpack.c.b16 %v1416, %v1416
    %v1436 = vpack.c.b16 %v1417, %v1417
    %v1437 = vpack.c.b16 %v1418, %v1418
    %v1438 = vpack.c.b16 %v1419, %v1419
    %v1439 = vpack.c.b16 %v1420, %v1420
    %v1440 = vpack.c.b16 %v1421, %v1421
    %v2676 = vunpack.c.l.b16 %v159
    %v2677 = vunpack.c.h.b16 %v159
    %v2678 = vunpack.c.l.b16 %v160
    %v2679 = vunpack.c.h.b16 %v160
    %v2680 = vunpack.c.l.b16 %v161
    %v2681 = vunpack.c.h.b16 %v161
    %v2682 = vunpack.c.l.b16 %v162
    %v2683 = vunpack.c.h.b16 %v162
    %v2684 = vunpack.c.l.b16 %v163
    %v2685 = vunpack.c.h.b16 %v163
    %v2686 = vunpack.c.l.b16 %v164
    %v2687 = vunpack.c.h.b16 %v164
    %v2688 = vunpack.c.l.b16 %v165
    %v2689 = vunpack.c.h.b16 %v165
    %v2690 = vunpack.c.l.b16 %v166
    %v2691 = vunpack.c.h.b16 %v166
    %v2692 = vunpack.c.l.b16 %v167
    %v2693 = vunpack.c.h.b16 %v167
    %v2694 = vunpack.c.l.b16 %v168
    %v2695 = vunpack.c.h.b16 %v168
    %v2696 = vunpack.c.l.b16 %v169
    %v2697 = vunpack.c.h.b16 %v169
    %v2698 = vunpack.c.l.b16 %v170
    %v2699 = vunpack.c.h.b16 %v170
    %v2700 = vunpack.c.l.b16 %v171
    %v2701 = vunpack.c.h.b16 %v171
    %v2702 = vunpack.c.l.b16 %v172
    %v2703 = vunpack.c.h.b16 %v172
    %v2704 = vunpack.c.l.b16 %v173
    %v2705 = vunpack.c.h.b16 %v173
    %v2706 = vunpack.c.l.b16 %v174
    %v2707 = vunpack.c.h.b16 %v174
    %v2708 = vunpack.c.l.b16 %v175
    %v2709 = vunpack.c.h.b16 %v175
    %v2710 = vunpack.c.l.b16 %v176
    %v2711 = vunpack.c.h.b16 %v176
    %v2712 = vunpack.c.l.b16 %v177
    %v2713 = vunpack.c.h.b16 %v177
    %v2714 = vunpack.c.l.b16 %v178
    %v2715 = vunpack.c.h.b16 %v178
    %v2716 = vunpack.c.l.b16 %v179
    %v2717 = vunpack.c.h.b16 %v179
    %v2718 = vunpack.c.l.b16 %v180
    %v2719 = vunpack.c.h.b16 %v180
    %v2720 = vunpack.c.l.b16 %v181
    %v2721 = vunpack.c.h.b16 %v181
    %v2722 = vunpack.c.l.b16 %v182
    %v2723 = vunpack.c.h.b16 %v182
    %v2724 = vunpack.c.l.b16 %v183
    %v2725 = vunpack.c.h.b16 %v183
    %v2726 = vunpack.c.l.b16 %v184
    %v2727 = vunpack.c.h.b16 %v184
    %v2728 = vunpack.c.l.b16 %v185
    %v2729 = vunpack.c.h.b16 %v185
    %v2730 = vunpack.c.l.b16 %v186
    %v2731 = vunpack.c.h.b16 %v186
    %v2732 = vunpack.c.l.b16 %v187
    %v2733 = vunpack.c.h.b16 %v187
    %v2734 = vunpack.c.l.b16 %v188
    %v2735 = vunpack.c.h.b16 %v188
    %v2736 = vunpack.c.l.b16 %v189
    %v2737 = vunpack.c.h.b16 %v189
    %v2738 = vunpack.c.l.b16 %v190
    %v2739 = vunpack.c.h.b16 %v190
    %v2740 = vunpack.c.l.b16 %v191
    %v2741 = vunpack.c.h.b16 %v191
    %v2742 = vunpack.c.l.b16 %v192
    %v2743 = vunpack.c.h.b16 %v192
    %v2744 = vunpack.c.l.b16 %v193
    %v2745 = vunpack.c.h.b16 %v193
    %v2746 = vunpack.c.l.b16 %v194
    %v2747 = vunpack.c.h.b16 %v194
    %v2748 = vunpack.c.l.b16 %v195
    %v2749 = vunpack.c.h.b16 %v195
    %v2750 = vunpack.c.l.b16 %v196
    %v2751 = vunpack.c.h.b16 %v196
    %v2752 = vunpack.c.l.b16 %v197
    %v2753 = vunpack.c.h.b16 %v197
    %v2754 = vunpack.c.l.b16 %v198
    %v2755 = vunpack.c.h.b16 %v198
    %v2756 = vunpack.c.l.b16 %v199
    %v2757 = vunpack.c.h.b16 %v199
    %v2758 = vunpack.c.l.b16 %v200
    %v2759 = vunpack.c.h.b16 %v200
    %v2760 = vunpack.c.l.b16 %v201
    %v2761 = vunpack.c.h.b16 %v201
    %v2762 = vunpack.c.l.b16 %v202
    %v2763 = vunpack.c.h.b16 %v202
    %v2764 = vunpack.c.l.b16 %v203
    %v2765 = vunpack.c.h.b16 %v203
    %v2766 = vunpack.c.l.b16 %v204
    %v2767 = vunpack.c.h.b16 %v204
    %v2768 = vunpack.c.l.b16 %v205
    %v2769 = vunpack.c.h.b16 %v205
    %v2770 = vunpack.c.l.b16 %v206
    %v2771 = vunpack.c.h.b16 %v206
    %v2772 = vunpack.c.l.b16 %v207
    %v2773 = vunpack.c.h.b16 %v207
    %v2774 = vunpack.c.l.b16 %v208
    %v2775 = vunpack.c.h.b16 %v208
    %v2776 = vunpack.c.l.b16 %v209
    %v2777 = vunpack.c.h.b16 %v209
    %v2778 = vunpack.c.l.b16 %v210
    %v2779 = vunpack.c.h.b16 %v210
    %v2780 = vunpack.c.l.b16 %v211
    %v2781 = vunpack.c.h.b16 %v211
    %v2782 = vunpack.c.l.b16 %v212
    %v2783 = vunpack.c.h.b16 %v212
    %v2784 = vunpack.c.l.b16 %v213
    %v2785 = vunpack.c.h.b16 %v213
    %v2786 = vunpack.c.l.b16 %v214
    %v2787 = vunpack.c.h.b16 %v214
    %v2788 = vunpack.c.l.b16 %v215
    %v2789 = vunpack.c.h.b16 %v215
    %v2790 = vunpack.c.l.b16 %v216
    %v2791 = vunpack.c.h.b16 %v216
    %v2792 = vunpack.c.l.b16 %v217
    %v2793 = vunpack.c.h.b16 %v217
    %v2794 = vunpack.c.l.b16 %v218
    %v2795 = vunpack.c.h.b16 %v218
    %v2796 = vunpack.c.l.b16 %v219
    %v2797 = vunpack.c.h.b16 %v219
    %v2798 = vunpack.c.l.b16 %v220
    %v2799 = vunpack.c.h.b16 %v220
    %v2800 = vunpack.c.l.b16 %v221
    %v2801 = vunpack.c.h.b16 %v221
    %v2802 = vunpack.c.l.b16 %v222
    %v2803 = vunpack.c.h.b16 %v222
    %v2804 = vunpack.c.l.b16 %v223
    %v2805 = vunpack.c.h.b16 %v223
    %v2806 = vunpack.c.l.b16 %v224
    %v2807 = vunpack.c.h.b16 %v224
    %v2808 = vunpack.c.l.b16 %v225
    %v2809 = vunpack.c.h.b16 %v225
    %v2810 = vunpack.c.l.b16 %v226
    %v2811 = vunpack.c.h.b16 %v226
    %v2812 = vunpack.c.l.b16 %v227
    %v2813 = vunpack.c.h.b16 %v227
    %v2814 = vunpack.c.l.b16 %v228
    %v2815 = vunpack.c.h.b16 %v228
    %v2816 = vunpack.c.l.b16 %v229
    %v2817 = vunpack.c.h.b16 %v229
    %v2818 = vunpack.c.l.b16 %v230
    %v2819 = vunpack.c.h.b16 %v230
    %v2820 = vunpack.c.l.b16 %v231
    %v2821 = vunpack.c.h.b16 %v231
    %v2822 = vunpack.c.l.b16 %v232
    %v2823 = vunpack.c.h.b16 %v232
    %v2824 = vunpack.c.l.b16 %v233
    %v2825 = vunpack.c.h.b16 %v233
    %v2826 = vunpack.c.l.b16 %v234
    %v2827 = vunpack.c.h.b16 %v234
    %v2828 = vunpack.c.l.b16 %v235
    %v2829 = vunpack.c.h.b16 %v235
    %v2830 = vunpack.c.l.b16 %v236
    %v2831 = vunpack.c.h.b16 %v236
    %v2832 = vunpack.c.l.b16 %v237
    %v2833 = vunpack.c.h.b16 %v237
    %v2834 = vunpack.c.l.b16 %v238
    %v2835 = vunpack.c.h.b16 %v238
    %v2836 = vunpack.c.l.b16 %v239
    %v2837 = vunpack.c.h.b16 %v239
    %v2838 = vunpack.c.l.b16 %v240
    %v2839 = vunpack.c.h.b16 %v240
    %v2840 = vunpack.c.l.b16 %v241
    %v2841 = vunpack.c.h.b16 %v241
    %v2842 = vunpack.c.l.b16 %v242
    %v2843 = vunpack.c.h.b16 %v242
    %v2844 = vunpack.c.l.b16 %v243
    %v2845 = vunpack.c.h.b16 %v243
    %v2846 = vunpack.c.l.b16 %v244
    %v2847 = vunpack.c.h.b16 %v244
    %v2848 = vunpack.c.l.b16 %v245
    %v2849 = vunpack.c.h.b16 %v245
    %v2850 = vunpack.c.l.b16 %v246
    %v2851 = vunpack.c.h.b16 %v246
    %v2852 = vunpack.c.l.b16 %v247
    %v2853 = vunpack.c.h.b16 %v247
    %v2854 = vunpack.c.l.b16 %v248
    %v2855 = vunpack.c.h.b16 %v248
    %v2856 = vunpack.c.l.b16 %v249
    %v2857 = vunpack.c.h.b16 %v249
    %v2858 = vunpack.c.l.b16 %v250
    %v2859 = vunpack.c.h.b16 %v250
    %v2860 = vunpack.c.l.b16 %v251
    %v2861 = vunpack.c.h.b16 %v251
    %v2862 = vunpack.c.l.b16 %v252
    %v2863 = vunpack.c.h.b16 %v252
    %v2864 = vunpack.c.l.b16 %v253
    %v2865 = vunpack.c.h.b16 %v253
    %v2866 = vunpack.c.l.b16 %v254
    %v2867 = vunpack.c.h.b16 %v254
    %v2868 = vunpack.c.l.b16 %v255
    %v2869 = vunpack.c.h.b16 %v255
    %v2870 = vunpack.c.l.b16 %v256
    %v2871 = vunpack.c.h.b16 %v256
    %v2872 = vunpack.c.l.b16 %v257
    %v2873 = vunpack.c.h.b16 %v257
    %v2874 = vunpack.c.l.b16 %v258
    %v2875 = vunpack.c.h.b16 %v258
    %v2876 = vunpack.c.l.b16 %v259
    %v2877 = vunpack.c.h.b16 %v259
    %v2878 = vunpack.c.l.b16 %v260
    %v2879 = vunpack.c.h.b16 %v260
    %v2880 = vunpack.c.l.b16 %v261
    %v2881 = vunpack.c.h.b16 %v261
    %v2882 = vunpack.c.l.b16 %v262
    %v2883 = vunpack.c.h.b16 %v262
    %v2884 = vunpack.c.l.b16 %v263
    %v2885 = vunpack.c.h.b16 %v263
    %v2886 = vunpack.c.l.b16 %v264
    %v2887 = vunpack.c.h.b16 %v264
    %v2888 = vunpack.c.l.b16 %v265
    %v2889 = vunpack.c.h.b16 %v265
    %v2890 = vunpack.c.l.b16 %v266
    %v2891 = vunpack.c.h.b16 %v266
    %v2892 = vunpack.c.l.b16 %v267
    %v2893 = vunpack.c.h.b16 %v267
    %v2894 = vunpack.c.l.b16 %v268
    %v2895 = vunpack.c.h.b16 %v268
    %v2896 = vunpack.c.l.b16 %v269
    %v2897 = vunpack.c.h.b16 %v269
    %v2898 = vunpack.c.l.b16 %v270
    %v2899 = vunpack.c.h.b16 %v270
    %v2900 = vunpack.c.l.b16 %v271
    %v2901 = vunpack.c.h.b16 %v271
    %v2902 = vunpack.c.l.b16 %v272
    %v2903 = vunpack.c.h.b16 %v272
    %v2904 = vunpack.c.l.b16 %v273
    %v2905 = vunpack.c.h.b16 %v273
    %v2906 = vunpack.c.l.b16 %v274
    %v2907 = vunpack.c.h.b16 %v274
    %v2908 = vunpack.c.l.b16 %v275
    %v2909 = vunpack.c.h.b16 %v275
    %v2910 = vunpack.c.l.b16 %v276
    %v2911 = vunpack.c.h.b16 %v276
    %v2912 = vunpack.c.l.b16 %v277
    %v2913 = vunpack.c.h.b16 %v277
    %v2914 = vunpack.c.l.b16 %v278
    %v2915 = vunpack.c.h.b16 %v278
    %v2916 = vunpack.c.l.b16 %v279
    %v2917 = vunpack.c.h.b16 %v279
    %v2918 = vunpack.c.l.b16 %v280
    %v2919 = vunpack.c.h.b16 %v280
    %v2920 = vunpack.c.l.b16 %v281
    %v2921 = vunpack.c.h.b16 %v281
    %v2922 = vunpack.c.l.b16 %v282
    %v2923 = vunpack.c.h.b16 %v282
    %v2924 = vunpack.c.l.b16 %v283
    %v2925 = vunpack.c.h.b16 %v283
    %v2926 = vunpack.c.l.b16 %v284
    %v2927 = vunpack.c.h.b16 %v284
    %v2928 = vunpack.c.l.b16 %v285
    %v2929 = vunpack.c.h.b16 %v285
    %v2930 = vunpack.c.l.b16 %v286
    %v2931 = vunpack.c.h.b16 %v286
    %v2932 = vunpack.c.l.b16 %v287
    %v2933 = vunpack.c.h.b16 %v287
    %v2934 = vunpack.c.l.b16 %v288
    %v2935 = vunpack.c.h.b16 %v288
    %v2936 = vunpack.c.l.b16 %v289
    %v2937 = vunpack.c.h.b16 %v289
    %v2938 = vunpack.c.l.b16 %v290
    %v2939 = vunpack.c.h.b16 %v290
    %v2940 = vunpack.c.l.b16 %v291
    %v2941 = vunpack.c.h.b16 %v291
    %v2942 = vunpack.c.l.b16 %v292
    %v2943 = vunpack.c.h.b16 %v292
    %v2944 = vunpack.c.l.b16 %v293
    %v2945 = vunpack.c.h.b16 %v293
    %v2946 = vunpack.c.l.b16 %v294
    %v2947 = vunpack.c.h.b16 %v294
    %v2948 = vunpack.c.l.b16 %v295
    %v2949 = vunpack.c.h.b16 %v295
    %v2950 = vunpack.c.l.b16 %v296
    %v2951 = vunpack.c.h.b16 %v296
    %v2952 = vunpack.c.l.b16 %v297
    %v2953 = vunpack.c.h.b16 %v297
    %v2954 = vunpack.c.l.b16 %v298
    %v2955 = vunpack.c.h.b16 %v298
    %v2956 = vunpack.c.l.b16 %v299
    %v2957 = vunpack.c.h.b16 %v299
    %v2958 = vunpack.c.l.b16 %v300
    %v2959 = vunpack.c.h.b16 %v300
    %v2960 = vunpack.c.l.b16 %v301
    %v2961 = vunpack.c.h.b16 %v301
    %v2962 = vunpack.c.l.b16 %v302
    %v2963 = vunpack.c.h.b16 %v302
    %v2964 = vunpack.c.l.b16 %v303
    %v2965 = vunpack.c.h.b16 %v303
    %v2966 = vunpack.c.l.b16 %v304
    %v2967 = vunpack.c.h.b16 %v304
    %v2968 = vunpack.c.l.b16 %v305
    %v2969 = vunpack.c.h.b16 %v305
    %v2970 = vunpack.c.l.b16 %v306
    %v2971 = vunpack.c.h.b16 %v306
    %v2972 = vunpack.c.l.b16 %v307
    %v2973 = vunpack.c.h.b16 %v307
    %v2974 = vunpack.c.l.b16 %v308
    %v2975 = vunpack.c.h.b16 %v308
    %v2976 = vunpack.c.l.b16 %v309
    %v2977 = vunpack.c.h.b16 %v309
    %v2978 = vunpack.c.l.b16 %v310
    %v2979 = vunpack.c.h.b16 %v310
    %v2980 = vunpack.c.l.b16 %v311
    %v2981 = vunpack.c.h.b16 %v311
    %v2982 = vunpack.c.l.b16 %v312
    %v2983 = vunpack.c.h.b16 %v312
    %v2984 = vunpack.c.l.b16 %v313
    %v2985 = vunpack.c.h.b16 %v313
    %v2986 = vunpack.c.l.b16 %v314
    %v2987 = vunpack.c.h.b16 %v314
    %v2988 = vunpack.c.l.b16 %v315
    %v2989 = vunpack.c.h.b16 %v315
    %v2990 = vunpack.c.l.b16 %v316
    %v2991 = vunpack.c.h.b16 %v316
    %v2992 = vunpack.c.l.b16 %v317
    %v2993 = vunpack.c.h.b16 %v317
    %v2994 = vunpack.c.l.b16 %v318
    %v2995 = vunpack.c.h.b16 %v318
    %v2996 = vunpack.c.l.b16 %v319
    %v2997 = vunpack.c.h.b16 %v319
    %v2998 = vunpack.c.l.b16 %v320
    %v2999 = vunpack.c.h.b16 %v320
    %v3000 = vunpack.c.l.b16 %v321
    %v3001 = vunpack.c.h.b16 %v321
    %v3002 = vunpack.c.l.b16 %v322
    %v3003 = vunpack.c.h.b16 %v322
    %v3004 = vunpack.c.l.b16 %v323
    %v3005 = vunpack.c.h.b16 %v323
    %v3006 = vunpack.c.l.b16 %v324
    %v3007 = vunpack.c.h.b16 %v324
    %v3008 = vunpack.c.l.b16 %v325
    %v3009 = vunpack.c.h.b16 %v325
    %v3010 = vunpack.c.l.b16 %v326
    %v3011 = vunpack.c.h.b16 %v326
    %v3012 = vunpack.c.l.b16 %v327
    %v3013 = vunpack.c.h.b16 %v327
    %v3014 = vunpack.c.l.b16 %v328
    %v3015 = vunpack.c.h.b16 %v328
    %v3016 = vunpack.c.l.b16 %v329
    %v3017 = vunpack.c.h.b16 %v329
    %v3018 = vunpack.c.l.b16 %v330
    %v3019 = vunpack.c.h.b16 %v330
    %v3020 = vunpack.c.l.b16 %v331
    %v3021 = vunpack.c.h.b16 %v331
    %v3022 = vunpack.c.l.b16 %v332
    %v3023 = vunpack.c.h.b16 %v332
    %v3024 = vunpack.c.l.b16 %v333
    %v3025 = vunpack.c.h.b16 %v333
    %v3026 = vunpack.c.l.b16 %v334
    %v3027 = vunpack.c.h.b16 %v334
    %v3028 = vunpack.c.l.b16 %v335
    %v3029 = vunpack.c.h.b16 %v335
    %v3030 = vunpack.c.l.b16 %v336
    %v3031 = vunpack.c.h.b16 %v336
    %v3032 = vunpack.c.l.b16 %v337
    %v3033 = vunpack.c.h.b16 %v337
    %v3034 = vunpack.c.l.b16 %v338
    %v3035 = vunpack.c.h.b16 %v338
    %v3036 = vunpack.c.l.b16 %v339
    %v3037 = vunpack.c.h.b16 %v339
    %v3038 = vunpack.c.l.b16 %v340
    %v3039 = vunpack.c.h.b16 %v340
    %v3040 = vunpack.c.l.b16 %v341
    %v3041 = vunpack.c.h.b16 %v341
    %v3042 = vunpack.c.l.b16 %v342
    %v3043 = vunpack.c.h.b16 %v342
    %v3044 = vunpack.c.l.b16 %v343
    %v3045 = vunpack.c.h.b16 %v343
    %v3046 = vunpack.c.l.b16 %v344
    %v3047 = vunpack.c.h.b16 %v344
    %v3048 = vunpack.c.l.b16 %v345
    %v3049 = vunpack.c.h.b16 %v345
    %v3050 = vunpack.c.l.b16 %v346
    %v3051 = vunpack.c.h.b16 %v346
    %v3052 = vunpack.c.l.b16 %v347
    %v3053 = vunpack.c.h.b16 %v347
    %v3054 = vunpack.c.l.b16 %v348
    %v3055 = vunpack.c.h.b16 %v348
    %v3056 = vunpack.c.l.b16 %v349
    %v3057 = vunpack.c.h.b16 %v349
    %v3058 = vunpack.c.l.b16 %v350
    %v3059 = vunpack.c.h.b16 %v350
    %v3060 = vunpack.c.l.b16 %v351
    %v3061 = vunpack.c.h.b16 %v351
    %v3062 = vunpack.c.l.b16 %v352
    %v3063 = vunpack.c.h.b16 %v352
    %v3064 = vunpack.c.l.b16 %v353
    %v3065 = vunpack.c.h.b16 %v353
    %v3066 = vunpack.c.l.b16 %v354
    %v3067 = vunpack.c.h.b16 %v354
    %v3068 = vunpack.c.l.b16 %v355
    %v3069 = vunpack.c.h.b16 %v355
    %v3070 = vunpack.c.l.b16 %v356
    %v3071 = vunpack.c.h.b16 %v356
    %v3072 = vunpack.c.l.b16 %v357
    %v3073 = vunpack.c.h.b16 %v357
    %v3074 = vunpack.c.l.b16 %v358
    %v3075 = vunpack.c.h.b16 %v358
    %v3076 = vunpack.c.l.b16 %v359
    %v3077 = vunpack.c.h.b16 %v359
    %v3078 = vunpack.c.l.b16 %v360
    %v3079 = vunpack.c.h.b16 %v360
    %v3080 = vunpack.c.l.b16 %v361
    %v3081 = vunpack.c.h.b16 %v361
    %v3082 = vunpack.c.l.b16 %v362
    %v3083 = vunpack.c.h.b16 %v362
    %v3084 = vunpack.c.l.b16 %v363
    %v3085 = vunpack.c.h.b16 %v363
    %v3086 = vunpack.c.l.b16 %v364
    %v3087 = vunpack.c.h.b16 %v364
    %v3088 = vunpack.c.l.b16 %v365
    %v3089 = vunpack.c.h.b16 %v365
    %v3090 = vunpack.c.l.b16 %v366
    %v3091 = vunpack.c.h.b16 %v366
    %v3092 = vunpack.c.l.b16 %v367
    %v3093 = vunpack.c.h.b16 %v367
    %v3094 = vunpack.c.l.b16 %v368
    %v3095 = vunpack.c.h.b16 %v368
    %v3096 = vunpack.c.l.b16 %v369
    %v3097 = vunpack.c.h.b16 %v369
    %v3098 = vunpack.c.l.b16 %v370
    %v3099 = vunpack.c.h.b16 %v370
    %v3100 = vunpack.c.l.b16 %v371
    %v3101 = vunpack.c.h.b16 %v371
    %v3102 = vunpack.c.l.b16 %v372
    %v3103 = vunpack.c.h.b16 %v372
    %v3104 = vunpack.c.l.b16 %v373
    %v3105 = vunpack.c.h.b16 %v373
    %v3106 = vunpack.c.l.b16 %v374
    %v3107 = vunpack.c.h.b16 %v374
    %v3108 = vunpack.c.l.b16 %v375
    %v3109 = vunpack.c.h.b16 %v375
    %v3110 = vunpack.c.l.b16 %v376
    %v3111 = vunpack.c.h.b16 %v376
    %v3112 = vunpack.c.l.b16 %v377
    %v3113 = vunpack.c.h.b16 %v377
    %v3114 = vunpack.c.l.b16 %v378
    %v3115 = vunpack.c.h.b16 %v378
    %v3116 = vunpack.c.l.b16 %v379
    %v3117 = vunpack.c.h.b16 %v379
    %v3118 = vunpack.c.l.b16 %v380
    %v3119 = vunpack.c.h.b16 %v380
    %v3120 = vunpack.c.l.b16 %v381
    %v3121 = vunpack.c.h.b16 %v381
    %v3122 = vunpack.c.l.b16 %v382
    %v3123 = vunpack.c.h.b16 %v382
    %v3124 = vunpack.c.l.b16 %v383
    %v3125 = vunpack.c.h.b16 %v383
    %v3126 = vunpack.c.l.b16 %v384
    %v3127 = vunpack.c.h.b16 %v384
    %v3128 = vunpack.c.l.b16 %v385
    %v3129 = vunpack.c.h.b16 %v385
    %v3130 = vunpack.c.l.b16 %v386
    %v3131 = vunpack.c.h.b16 %v386
    %v3132 = vunpack.c.l.b16 %v387
    %v3133 = vunpack.c.h.b16 %v387
    %v3134 = vunpack.c.l.b16 %v388
    %v3135 = vunpack.c.h.b16 %v388
    %v3136 = vunpack.c.l.b16 %v389
    %v3137 = vunpack.c.h.b16 %v389
    %v3138 = vunpack.c.l.b16 %v390
    %v3139 = vunpack.c.h.b16 %v390
    %v3140 = vunpack.c.l.b16 %v391
    %v3141 = vunpack.c.h.b16 %v391
    %v3142 = vunpack.c.l.b16 %v392
    %v3143 = vunpack.c.h.b16 %v392
    %v3144 = vunpack.c.l.b16 %v393
    %v3145 = vunpack.c.h.b16 %v393
    %v3146 = vunpack.c.l.b16 %v394
    %v3147 = vunpack.c.h.b16 %v394
    %v3148 = vunpack.c.l.b16 %v395
    %v3149 = vunpack.c.h.b16 %v395
    %v3150 = vunpack.c.l.b16 %v396
    %v3151 = vunpack.c.h.b16 %v396
    %v3152 = vunpack.c.l.b16 %v397
    %v3153 = vunpack.c.h.b16 %v397
    %v3154 = vunpack.c.l.b16 %v398
    %v3155 = vunpack.c.h.b16 %v398
    %v3156 = vunpack.c.l.b16 %v399
    %v3157 = vunpack.c.h.b16 %v399
    %v3158 = vunpack.c.l.b16 %v400
    %v3159 = vunpack.c.h.b16 %v400
    %v3160 = vunpack.c.l.b16 %v401
    %v3161 = vunpack.c.h.b16 %v401
    %v3162 = vunpack.c.l.b16 %v402
    %v3163 = vunpack.c.h.b16 %v402
    %v3164 = vunpack.c.l.b16 %v403
    %v3165 = vunpack.c.h.b16 %v403
    %v3166 = vunpack.c.l.b16 %v404
    %v3167 = vunpack.c.h.b16 %v404
    %v3168 = vunpack.c.l.b16 %v405
    %v3169 = vunpack.c.h.b16 %v405
    %v3170 = vunpack.c.l.b16 %v406
    %v3171 = vunpack.c.h.b16 %v406
    %v3172 = vunpack.c.l.b16 %v407
    %v3173 = vunpack.c.h.b16 %v407
    %v3174 = vunpack.c.l.b16 %v408
    %v3175 = vunpack.c.h.b16 %v408
    %v3176 = vunpack.c.l.b16 %v409
    %v3177 = vunpack.c.h.b16 %v409
    %v3178 = vunpack.c.l.b16 %v410
    %v3179 = vunpack.c.h.b16 %v410
    %v3180 = vunpack.c.l.b16 %v411
    %v3181 = vunpack.c.h.b16 %v411
    %v3182 = vunpack.c.l.b16 %v412
    %v3183 = vunpack.c.h.b16 %v412
    %v3184 = vunpack.c.l.b16 %v413
    %v3185 = vunpack.c.h.b16 %v413
    %v3186 = vunpack.c.l.b16 %v414
    %v3187 = vunpack.c.h.b16 %v414
    %v3188 = vunpack.c.l.b16 %v415
    %v3189 = vunpack.c.h.b16 %v415
    %v3190 = vunpack.c.l.b16 %v416
    %v3191 = vunpack.c.h.b16 %v416
    %v3192 = vunpack.c.l.b16 %v417
    %v3193 = vunpack.c.h.b16 %v417
    %v3194 = vunpack.c.l.b16 %v418
    %v3195 = vunpack.c.h.b16 %v418
    %v3196 = vunpack.c.l.b16 %v419
    %v3197 = vunpack.c.h.b16 %v419
    %v3198 = vunpack.c.l.b16 %v420
    %v3199 = vunpack.c.h.b16 %v420
    %v3200 = vunpack.c.l.b16 %v421
    %v3201 = vunpack.c.h.b16 %v421
    %v3202 = vunpack.c.l.b16 %v422
    %v3203 = vunpack.c.h.b16 %v422
    %v3204 = vunpack.c.l.b16 %v423
    %v3205 = vunpack.c.h.b16 %v423
    %v3206 = vunpack.c.l.b16 %v424
    %v3207 = vunpack.c.h.b16 %v424
    %v3208 = vunpack.c.l.b16 %v425
    %v3209 = vunpack.c.h.b16 %v425
    %v3210 = vunpack.c.l.b16 %v426
    %v3211 = vunpack.c.h.b16 %v426
    %v3212 = vunpack.c.l.b16 %v427
    %v3213 = vunpack.c.h.b16 %v427
    %v3214 = vunpack.c.l.b16 %v428
    %v3215 = vunpack.c.h.b16 %v428
    %v3216 = vunpack.c.l.b16 %v429
    %v3217 = vunpack.c.h.b16 %v429
    %v3218 = vunpack.c.l.b16 %v430
    %v3219 = vunpack.c.h.b16 %v430
    %v3220 = vunpack.c.l.b16 %v431
    %v3221 = vunpack.c.h.b16 %v431
    %v3222 = vunpack.c.l.b16 %v432
    %v3223 = vunpack.c.h.b16 %v432
    %v3224 = vunpack.c.l.b16 %v433
    %v3225 = vunpack.c.h.b16 %v433
    %v3226 = vunpack.c.l.b16 %v434
    %v3227 = vunpack.c.h.b16 %v434
    %v3228 = vunpack.c.l.b16 %v435
    %v3229 = vunpack.c.h.b16 %v435
    %v3230 = vunpack.c.l.b16 %v436
    %v3231 = vunpack.c.h.b16 %v436
    %v3232 = vunpack.c.l.b16 %v437
    %v3233 = vunpack.c.h.b16 %v437
    %v3234 = vunpack.c.l.b16 %v438
    %v3235 = vunpack.c.h.b16 %v438
    %v3236 = vunpack.c.l.b16 %v439
    %v3237 = vunpack.c.h.b16 %v439
    %v3238 = vunpack.c.l.b16 %v440
    %v3239 = vunpack.c.h.b16 %v440
    %v3240 = vunpack.c.l.b16 %v441
    %v3241 = vunpack.c.h.b16 %v441
    %v3242 = vunpack.c.l.b16 %v442
    %v3243 = vunpack.c.h.b16 %v442
    %v3244 = vunpack.c.l.b16 %v443
    %v3245 = vunpack.c.h.b16 %v443
    %v3246 = vunpack.c.l.b16 %v444
    %v3247 = vunpack.c.h.b16 %v444
    %v3248 = vunpack.c.l.b16 %v445
    %v3249 = vunpack.c.h.b16 %v445
    %v3250 = vunpack.c.l.b16 %v446
    %v3251 = vunpack.c.h.b16 %v446
    %v3252 = vunpack.c.l.b16 %v447
    %v3253 = vunpack.c.h.b16 %v447
    %v3254 = vunpack.c.l.b16 %v448
    %v3255 = vunpack.c.h.b16 %v448
    %v3256 = vunpack.c.l.b16 %v449
    %v3257 = vunpack.c.h.b16 %v449
    %v3258 = vunpack.c.l.b16 %v450
    %v3259 = vunpack.c.h.b16 %v450
    %v3260 = vunpack.c.l.b16 %v451
    %v3261 = vunpack.c.h.b16 %v451
    %v3262 = vunpack.c.l.b16 %v452
    %v3263 = vunpack.c.h.b16 %v452
    %v3264 = vunpack.c.l.b16 %v453
    %v3265 = vunpack.c.h.b16 %v453
    %v3266 = vunpack.c.l.b16 %v454
    %v3267 = vunpack.c.h.b16 %v454
    %v3268 = vunpack.c.l.b16 %v455
    %v3269 = vunpack.c.h.b16 %v455
    %v3270 = vunpack.c.l.b16 %v456
    %v3271 = vunpack.c.h.b16 %v456
    %v3272 = vunpack.c.l.b16 %v457
    %v3273 = vunpack.c.h.b16 %v457
    %v3274 = vunpack.c.l.b16 %v458
    %v3275 = vunpack.c.h.b16 %v458
    %v3276 = vunpack.c.l.b16 %v459
    %v3277 = vunpack.c.h.b16 %v459
    %v3278 = vunpack.c.l.b16 %v460
    %v3279 = vunpack.c.h.b16 %v460
    %v3280 = vunpack.c.l.b16 %v461
    %v3281 = vunpack.c.h.b16 %v461
    %v3282 = vunpack.c.l.b16 %v462
    %v3283 = vunpack.c.h.b16 %v462
    %v3284 = vunpack.c.l.b16 %v463
    %v3285 = vunpack.c.h.b16 %v463
    %v3286 = vunpack.c.l.b16 %v464
    %v3287 = vunpack.c.h.b16 %v464
    %v3288 = vunpack.c.l.b16 %v465
    %v3289 = vunpack.c.h.b16 %v465
    %v3290 = vunpack.c.l.b16 %v466
    %v3291 = vunpack.c.h.b16 %v466
    %v3292 = vunpack.c.l.b16 %v467
    %v3293 = vunpack.c.h.b16 %v467
    %v3294 = vunpack.c.l.b16 %v468
    %v3295 = vunpack.c.h.b16 %v468
    %v3296 = vunpack.c.l.b16 %v469
    %v3297 = vunpack.c.h.b16 %v469
    %v3298 = vunpack.c.l.b16 %v470
    %v3299 = vunpack.c.h.b16 %v470
    %v3300 = vunpack.c.l.b16 %v471
    %v3301 = vunpack.c.h.b16 %v471
    %v3302 = vunpack.c.l.b16 %v472
    %v3303 = vunpack.c.h.b16 %v472
    %v3304 = vunpack.c.l.b16 %v473
    %v3305 = vunpack.c.h.b16 %v473
    %v3306 = vunpack.c.l.b16 %v474
    %v3307 = vunpack.c.h.b16 %v474
    %v3308 = vunpack.c.l.b16 %v475
    %v3309 = vunpack.c.h.b16 %v475
    %v3310 = vunpack.c.l.b16 %v476
    %v3311 = vunpack.c.h.b16 %v476
    %v3312 = vunpack.c.l.b16 %v477
    %v3313 = vunpack.c.h.b16 %v477
    %v3314 = vunpack.c.l.b16 %v478
    %v3315 = vunpack.c.h.b16 %v478
    %v3316 = vunpack.c.l.b16 %v479
    %v3317 = vunpack.c.h.b16 %v479
    %v3318 = vunpack.c.l.b16 %v480
    %v3319 = vunpack.c.h.b16 %v480
    %v3320 = vunpack.c.l.b16 %v481
    %v3321 = vunpack.c.h.b16 %v481
    %v3322 = vunpack.c.l.b16 %v482
    %v3323 = vunpack.c.h.b16 %v482
    %v3324 = vunpack.c.l.b16 %v483
    %v3325 = vunpack.c.h.b16 %v483
    %v3326 = vunpack.c.l.b16 %v484
    %v3327 = vunpack.c.h.b16 %v484
    %v3328 = vunpack.c.l.b16 %v485
    %v3329 = vunpack.c.h.b16 %v485
    %v3330 = vunpack.c.l.b16 %v486
    %v3331 = vunpack.c.h.b16 %v486
    %v3332 = vunpack.c.l.b16 %v487
    %v3333 = vunpack.c.h.b16 %v487
    %v3334 = vunpack.c.l.b16 %v488
    %v3335 = vunpack.c.h.b16 %v488
    %v3336 = vunpack.c.l.b16 %v489
    %v3337 = vunpack.c.h.b16 %v489
    %v3338 = vunpack.c.l.b16 %v490
    %v3339 = vunpack.c.h.b16 %v490
    %v3340 = vunpack.c.l.b16 %v491
    %v3341 = vunpack.c.h.b16 %v491
    %v3342 = vunpack.c.l.b16 %v492
    %v3343 = vunpack.c.h.b16 %v492
    %v3344 = vunpack.c.l.b16 %v493
    %v3345 = vunpack.c.h.b16 %v493
    %v3346 = vunpack.c.l.b16 %v494
    %v3347 = vunpack.c.h.b16 %v494
    %v3348 = vunpack.c.l.b16 %v495
    %v3349 = vunpack.c.h.b16 %v495
    %v3350 = vunpack.c.l.b16 %v496
    %v3351 = vunpack.c.h.b16 %v496
    %v3352 = vunpack.c.l.b16 %v497
    %v3353 = vunpack.c.h.b16 %v497
    %v3354 = vunpack.c.l.b16 %v498
    %v3355 = vunpack.c.h.b16 %v498
    %v3356 = vunpack.c.l.b16 %v499
    %v3357 = vunpack.c.h.b16 %v499
    %v3358 = vunpack.c.l.b16 %v500
    %v3359 = vunpack.c.h.b16 %v500
    %v3360 = vunpack.c.l.b16 %v501
    %v3361 = vunpack.c.h.b16 %v501
    %v3362 = vunpack.c.l.b16 %v502
    %v3363 = vunpack.c.h.b16 %v502
    %v3364 = vunpack.c.l.b16 %v503
    %v3365 = vunpack.c.h.b16 %v503
    %v3366 = vunpack.c.l.b16 %v504
    %v3367 = vunpack.c.h.b16 %v504
    %v3368 = vunpack.c.l.b16 %v505
    %v3369 = vunpack.c.h.b16 %v505
    %v3370 = vunpack.c.l.b16 %v506
    %v3371 = vunpack.c.h.b16 %v506
    %v3372 = vunpack.c.l.b16 %v507
    %v3373 = vunpack.c.h.b16 %v507
    %v3374 = vunpack.c.l.b16 %v508
    %v3375 = vunpack.c.h.b16 %v508
    %v3376 = vunpack.c.l.b16 %v509
    %v3377 = vunpack.c.h.b16 %v509
    %v3378 = vunpack.c.l.b16 %v510
    %v3379 = vunpack.c.h.b16 %v510
    %v3380 = vunpack.c.l.b16 %v511
    %v3381 = vunpack.c.h.b16 %v511
    %v3382 = vunpack.c.l.b16 %v512
    %v3383 = vunpack.c.h.b16 %v512
    %v3384 = vunpack.c.l.b16 %v513
    %v3385 = vunpack.c.h.b16 %v513
    %v3386 = vunpack.c.l.b16 %v514
    %v3387 = vunpack.c.h.b16 %v514
    %v3388 = vunpack.c.l.b16 %v515
    %v3389 = vunpack.c.h.b16 %v515
    %v3390 = vunpack.c.l.b16 %v516
    %v3391 = vunpack.c.h.b16 %v516
    %v3392 = vunpack.c.l.b16 %v517
    %v3393 = vunpack.c.h.b16 %v517
    %v3394 = vunpack.c.l.b16 %v518
    %v3395 = vunpack.c.h.b16 %v518
    %v3396 = vunpack.c.l.b16 %v519
    %v3397 = vunpack.c.h.b16 %v519
    %v3398 = vunpack.c.l.b16 %v520
    %v3399 = vunpack.c.h.b16 %v520
    %v3400 = vunpack.c.l.b16 %v521
    %v3401 = vunpack.c.h.b16 %v521
    %v3402 = vunpack.c.l.b16 %v522
    %v3403 = vunpack.c.h.b16 %v522
    %v3404 = vunpack.c.l.b16 %v523
    %v3405 = vunpack.c.h.b16 %v523
    %v3406 = vunpack.c.l.b16 %v524
    %v3407 = vunpack.c.h.b16 %v524
    %v3408 = vunpack.c.l.b16 %v525
    %v3409 = vunpack.c.h.b16 %v525
    %v3410 = vunpack.c.l.b16 %v526
    %v3411 = vunpack.c.h.b16 %v526
    %v3412 = vunpack.c.l.b16 %v527
    %v3413 = vunpack.c.h.b16 %v527
    %v3414 = vunpack.c.l.b16 %v528
    %v3415 = vunpack.c.h.b16 %v528
    %v3416 = vunpack.c.l.b16 %v529
    %v3417 = vunpack.c.h.b16 %v529
    %v3418 = vunpack.c.l.b16 %v530
    %v3419 = vunpack.c.h.b16 %v530
    %v3420 = vunpack.c.l.b16 %v531
    %v3421 = vunpack.c.h.b16 %v531
    %v3422 = vunpack.c.l.b16 %v532
    %v3423 = vunpack.c.h.b16 %v532
    %v3424 = vunpack.c.l.b16 %v533
    %v3425 = vunpack.c.h.b16 %v533
    %v3426 = vunpack.c.l.b16 %v534
    %v3427 = vunpack.c.h.b16 %v534
    %v3428 = vunpack.c.l.b16 %v535
    %v3429 = vunpack.c.h.b16 %v535
    %v3430 = vunpack.c.l.b16 %v536
    %v3431 = vunpack.c.h.b16 %v536
    %v3432 = vunpack.c.l.b16 %v537
    %v3433 = vunpack.c.h.b16 %v537
    %v3434 = vunpack.c.l.b16 %v538
    %v3435 = vunpack.c.h.b16 %v538
    %v3436 = vunpack.c.l.b16 %v539
    %v3437 = vunpack.c.h.b16 %v539
    %v3438 = vunpack.c.l.b16 %v540
    %v3439 = vunpack.c.h.b16 %v540
    %v3440 = vunpack.c.l.b16 %v541
    %v3441 = vunpack.c.h.b16 %v541
    %v3442 = vunpack.c.l.b16 %v542
    %v3443 = vunpack.c.h.b16 %v542
    %v3444 = vunpack.c.l.b16 %v543
    %v3445 = vunpack.c.h.b16 %v543
    %v3446 = vunpack.c.l.b16 %v544
    %v3447 = vunpack.c.h.b16 %v544
    %v3448 = vunpack.c.l.b16 %v545
    %v3449 = vunpack.c.h.b16 %v545
    %v3450 = vunpack.c.l.b16 %v546
    %v3451 = vunpack.c.h.b16 %v546
    %v3452 = vunpack.c.l.b16 %v547
    %v3453 = vunpack.c.h.b16 %v547
    %v3454 = vunpack.c.l.b16 %v548
    %v3455 = vunpack.c.h.b16 %v548
    %v3456 = vunpack.c.l.b16 %v549
    %v3457 = vunpack.c.h.b16 %v549
    %v3458 = vunpack.c.l.b16 %v550
    %v3459 = vunpack.c.h.b16 %v550
    %v3460 = vunpack.c.l.b16 %v551
    %v3461 = vunpack.c.h.b16 %v551
    %v3462 = vunpack.c.l.b16 %v552
    %v3463 = vunpack.c.h.b16 %v552
    %v3464 = vunpack.c.l.b16 %v553
    %v3465 = vunpack.c.h.b16 %v553
    %v3466 = vunpack.c.l.b16 %v554
    %v3467 = vunpack.c.h.b16 %v554
    %v3468 = vunpack.c.l.b16 %v555
    %v3469 = vunpack.c.h.b16 %v555
    %v3470 = vunpack.c.l.b16 %v556
    %v3471 = vunpack.c.h.b16 %v556
    %v3472 = vunpack.c.l.b16 %v557
    %v3473 = vunpack.c.h.b16 %v557
    %v3474 = vunpack.c.l.b16 %v558
    %v3475 = vunpack.c.h.b16 %v558
    %v3476 = vunpack.c.l.b16 %v559
    %v3477 = vunpack.c.h.b16 %v559
    %v3478 = vunpack.c.l.b16 %v560
    %v3479 = vunpack.c.h.b16 %v560
    %v3480 = vunpack.c.l.b16 %v561
    %v3481 = vunpack.c.h.b16 %v561
    %v3482 = vunpack.c.l.b16 %v562
    %v3483 = vunpack.c.h.b16 %v562
    %v3484 = vunpack.c.l.b16 %v563
    %v3485 = vunpack.c.h.b16 %v563
    %v3486 = vunpack.c.l.b16 %v564
    %v3487 = vunpack.c.h.b16 %v564
    %v3488 = vunpack.c.l.b16 %v565
    %v3489 = vunpack.c.h.b16 %v565
    %v3490 = vunpack.c.l.b16 %v566
    %v3491 = vunpack.c.h.b16 %v566
    %v3492 = vunpack.c.l.b16 %v567
    %v3493 = vunpack.c.h.b16 %v567
    %v3494 = vunpack.c.l.b16 %v568
    %v3495 = vunpack.c.h.b16 %v568
    %v3496 = vunpack.c.l.b16 %v569
    %v3497 = vunpack.c.h.b16 %v569
    %v3498 = vunpack.c.l.b16 %v570
    %v3499 = vunpack.c.h.b16 %v570
    %v3500 = vunpack.c.l.b16 %v571
    %v3501 = vunpack.c.h.b16 %v571
    %v3502 = vunpack.c.l.b16 %v572
    %v3503 = vunpack.c.h.b16 %v572
    %v3504 = vunpack.c.l.b16 %v573
    %v3505 = vunpack.c.h.b16 %v573
    %v3506 = vunpack.c.l.b16 %v574
    %v3507 = vunpack.c.h.b16 %v574
    %v3508 = vunpack.c.l.b16 %v575
    %v3509 = vunpack.c.h.b16 %v575
    %v3510 = vunpack.c.l.b16 %v576
    %v3511 = vunpack.c.h.b16 %v576
    %v3512 = vunpack.c.l.b16 %v577
    %v3513 = vunpack.c.h.b16 %v577
    %v3514 = vunpack.c.l.b16 %v578
    %v3515 = vunpack.c.h.b16 %v578
    %v3516 = vunpack.c.l.b16 %v579
    %v3517 = vunpack.c.h.b16 %v579
    %v3518 = vunpack.c.l.b16 %v580
    %v3519 = vunpack.c.h.b16 %v580
    %v3520 = vunpack.c.l.b16 %v581
    %v3521 = vunpack.c.h.b16 %v581
    %v3522 = vunpack.c.l.b16 %v582
    %v3523 = vunpack.c.h.b16 %v582
    %v3524 = vunpack.c.l.b16 %v583
    %v3525 = vunpack.c.h.b16 %v583
    %v3526 = vunpack.c.l.b16 %v584
    %v3527 = vunpack.c.h.b16 %v584
    %v3528 = vunpack.c.l.b16 %v585
    %v3529 = vunpack.c.h.b16 %v585
    %v3530 = vunpack.c.l.b16 %v586
    %v3531 = vunpack.c.h.b16 %v586
    %v3532 = vunpack.c.l.b16 %v587
    %v3533 = vunpack.c.h.b16 %v587
    %v3534 = vunpack.c.l.b16 %v588
    %v3535 = vunpack.c.h.b16 %v588
    %v3536 = vunpack.c.l.b16 %v589
    %v3537 = vunpack.c.h.b16 %v589
    %v3538 = vunpack.c.l.b16 %v590
    %v3539 = vunpack.c.h.b16 %v590
    %v3540 = vunpack.c.l.b16 %v591
    %v3541 = vunpack.c.h.b16 %v591
    %v3542 = vunpack.c.l.b16 %v592
    %v3543 = vunpack.c.h.b16 %v592
    %v3544 = vunpack.c.l.b16 %v593
    %v3545 = vunpack.c.h.b16 %v593
    %v3546 = vunpack.c.l.b16 %v594
    %v3547 = vunpack.c.h.b16 %v594
    %v3548 = vunpack.c.l.b16 %v595
    %v3549 = vunpack.c.h.b16 %v595
    %v3550 = vunpack.c.l.b16 %v596
    %v3551 = vunpack.c.h.b16 %v596
    %v3552 = vunpack.c.l.b16 %v597
    %v3553 = vunpack.c.h.b16 %v597
    %v3554 = vunpack.c.l.b16 %v598
    %v3555 = vunpack.c.h.b16 %v598
    %v3556 = vunpack.c.l.b16 %v599
    %v3557 = vunpack.c.h.b16 %v599
    %v3558 = vunpack.c.l.b16 %v600
    %v3559 = vunpack.c.h.b16 %v600
    %v3560 = vunpack.c.l.b16 %v601
    %v3561 = vunpack.c.h.b16 %v601
    %v3562 = vunpack.c.l.b16 %v602
    %v3563 = vunpack.c.h.b16 %v602
    %v3564 = vunpack.c.l.b16 %v603
    %v3565 = vunpack.c.h.b16 %v603
    %v3566 = vunpack.c.l.b16 %v604
    %v3567 = vunpack.c.h.b16 %v604
    %v3568 = vunpack.c.l.b16 %v605
    %v3569 = vunpack.c.h.b16 %v605
    %v3570 = vunpack.c.l.b16 %v606
    %v3571 = vunpack.c.h.b16 %v606
    %v3572 = vunpack.c.l.b16 %v607
    %v3573 = vunpack.c.h.b16 %v607
    %v3574 = vunpack.c.l.b16 %v608
    %v3575 = vunpack.c.h.b16 %v608
    %v3576 = vunpack.c.l.b16 %v609
    %v3577 = vunpack.c.h.b16 %v609
    %v3578 = vunpack.c.l.b16 %v610
    %v3579 = vunpack.c.h.b16 %v610
    %v3580 = vunpack.c.l.b16 %v611
    %v3581 = vunpack.c.h.b16 %v611
    %v3582 = vunpack.c.l.b16 %v612
    %v3583 = vunpack.c.h.b16 %v612
    %v3584 = vunpack.c.l.b16 %v613
    %v3585 = vunpack.c.h.b16 %v613
    %v3586 = vunpack.c.l.b16 %v614
    %v3587 = vunpack.c.h.b16 %v614
    %v3588 = vunpack.c.l.b16 %v615
    %v3589 = vunpack.c.h.b16 %v615
    %v3590 = vunpack.c.l.b16 %v616
    %v3591 = vunpack.c.h.b16 %v616
    %v3592 = vunpack.c.l.b16 %v617
    %v3593 = vunpack.c.h.b16 %v617
    %v3594 = vunpack.c.l.b16 %v618
    %v3595 = vunpack.c.h.b16 %v618
    %v3596 = vunpack.c.l.b16 %v619
    %v3597 = vunpack.c.h.b16 %v619
    %v3598 = vunpack.c.l.b16 %v620
    %v3599 = vunpack.c.h.b16 %v620
    %v3600 = vunpack.c.l.b16 %v621
    %v3601 = vunpack.c.h.b16 %v621
    %v3602 = vunpack.c.l.b16 %v622
    %v3603 = vunpack.c.h.b16 %v622
    %v3604 = vunpack.c.l.b16 %v623
    %v3605 = vunpack.c.h.b16 %v623
    %v3606 = vunpack.c.l.b16 %v624
    %v3607 = vunpack.c.h.b16 %v624
    %v3608 = vunpack.c.l.b16 %v625
    %v3609 = vunpack.c.h.b16 %v625
    %v3610 = vunpack.c.l.b16 %v626
    %v3611 = vunpack.c.h.b16 %v626
    %v3612 = vunpack.c.l.b16 %v627
    %v3613 = vunpack.c.h.b16 %v627
    %v3614 = vunpack.c.l.b16 %v628
    %v3615 = vunpack.c.h.b16 %v628
    %v3616 = vunpack.c.l.b16 %v629
    %v3617 = vunpack.c.h.b16 %v629
    %v3618 = vunpack.c.l.b16 %v630
    %v3619 = vunpack.c.h.b16 %v630
    %v3620 = vunpack.c.l.b16 %v631
    %v3621 = vunpack.c.h.b16 %v631
    %v3622 = vunpack.c.l.b16 %v632
    %v3623 = vunpack.c.h.b16 %v632
    %v3624 = vunpack.c.l.b16 %v633
    %v3625 = vunpack.c.h.b16 %v633
    %v3626 = vunpack.c.l.b16 %v634
    %v3627 = vunpack.c.h.b16 %v634
    %v3628 = vunpack.c.l.b16 %v635
    %v3629 = vunpack.c.h.b16 %v635
    %v3630 = vunpack.c.l.b16 %v636
    %v3631 = vunpack.c.h.b16 %v636
    %v3632 = vunpack.c.l.b16 %v637
    %v3633 = vunpack.c.h.b16 %v637
    %v3634 = vunpack.c.l.b16 %v638
    %v3635 = vunpack.c.h.b16 %v638
    %v3636 = vunpack.c.l.b16 %v639
    %v3637 = vunpack.c.h.b16 %v639
    %v3638 = vunpack.c.l.b16 %v640
    %v3639 = vunpack.c.h.b16 %v640
    %v3640 = vunpack.c.l.b16 %v641
    %v3641 = vunpack.c.h.b16 %v641
    %v3642 = vunpack.c.l.b16 %v642
    %v3643 = vunpack.c.h.b16 %v642
    %v3644 = vunpack.c.l.b16 %v643
    %v3645 = vunpack.c.h.b16 %v643
    %v3646 = vunpack.c.l.b16 %v644
    %v3647 = vunpack.c.h.b16 %v644
    %v3648 = vunpack.c.l.b16 %v645
    %v3649 = vunpack.c.h.b16 %v645
    %v3650 = vunpack.c.l.b16 %v646
    %v3651 = vunpack.c.h.b16 %v646
    %v3652 = vunpack.c.l.b16 %v647
    %v3653 = vunpack.c.h.b16 %v647
    %v3654 = vunpack.c.l.b16 %v648
    %v3655 = vunpack.c.h.b16 %v648
    %v3656 = vunpack.c.l.b16 %v649
    %v3657 = vunpack.c.h.b16 %v649
    %v3658 = vunpack.c.l.b16 %v650
    %v3659 = vunpack.c.h.b16 %v650
    %v3660 = vunpack.c.l.b16 %v651
    %v3661 = vunpack.c.h.b16 %v651
    %v3662 = vunpack.c.l.b16 %v652
    %v3663 = vunpack.c.h.b16 %v652
    %v3664 = vunpack.c.l.b16 %v653
    %v3665 = vunpack.c.h.b16 %v653
    %v3666 = vunpack.c.l.b16 %v654
    %v3667 = vunpack.c.h.b16 %v654
    %v3668 = vunpack.c.l.b16 %v655
    %v3669 = vunpack.c.h.b16 %v655
    %v3670 = vunpack.c.l.b16 %v656
    %v3671 = vunpack.c.h.b16 %v656
    %v3672 = vunpack.c.l.b16 %v657
    %v3673 = vunpack.c.h.b16 %v657
    %v3674 = vunpack.c.l.b16 %v658
    %v3675 = vunpack.c.h.b16 %v658
    %v3676 = vunpack.c.l.b16 %v659
    %v3677 = vunpack.c.h.b16 %v659
    %v3678 = vunpack.c.l.b16 %v660
    %v3679 = vunpack.c.h.b16 %v660
    %v3680 = vunpack.c.l.b16 %v661
    %v3681 = vunpack.c.h.b16 %v661
    %v3682 = vunpack.c.l.b16 %v662
    %v3683 = vunpack.c.h.b16 %v662
    %v3684 = vunpack.c.l.b16 %v663
    %v3685 = vunpack.c.h.b16 %v663
    %v3686 = vunpack.c.l.b16 %v664
    %v3687 = vunpack.c.h.b16 %v664
    %v3688 = vunpack.c.l.b16 %v665
    %v3689 = vunpack.c.h.b16 %v665
    %v3690 = vunpack.c.l.b16 %v666
    %v3691 = vunpack.c.h.b16 %v666
    %v3692 = vunpack.c.l.b16 %v667
    %v3693 = vunpack.c.h.b16 %v667
    %v3694 = vunpack.c.l.b16 %v668
    %v3695 = vunpack.c.h.b16 %v668
    %v3696 = vunpack.c.l.b16 %v669
    %v3697 = vunpack.c.h.b16 %v669
    %v3698 = vunpack.c.l.b16 %v670
    %v3699 = vunpack.c.h.b16 %v670
    %v3700 = vunpack.c.l.b16 %v671
    %v3701 = vunpack.c.h.b16 %v671
    %v3702 = vunpack.c.l.b16 %v672
    %v3703 = vunpack.c.h.b16 %v672
    %v3704 = vunpack.c.l.b16 %v673
    %v3705 = vunpack.c.h.b16 %v673
    %v3706 = vunpack.c.l.b16 %v674
    %v3707 = vunpack.c.h.b16 %v674
    %v3708 = vunpack.c.l.b16 %v675
    %v3709 = vunpack.c.h.b16 %v675
    %v3710 = vunpack.c.l.b16 %v676
    %v3711 = vunpack.c.h.b16 %v676
    %v3712 = vunpack.c.l.b16 %v677
    %v3713 = vunpack.c.h.b16 %v677
    %v3714 = vunpack.c.l.b16 %v678
    %v3715 = vunpack.c.h.b16 %v678
    %v3716 = vunpack.c.l.b16 %v679
    %v3717 = vunpack.c.h.b16 %v679
    %v3718 = vunpack.c.l.b16 %v680
    %v3719 = vunpack.c.h.b16 %v680
    %v3720 = vunpack.c.l.b16 %v681
    %v3721 = vunpack.c.h.b16 %v681
    %v3722 = vunpack.c.l.b16 %v682
    %v3723 = vunpack.c.h.b16 %v682
    %v3724 = vunpack.c.l.b16 %v683
    %v3725 = vunpack.c.h.b16 %v683
    %v3726 = vunpack.c.l.b16 %v684
    %v3727 = vunpack.c.h.b16 %v684
    %v3728 = vunpack.c.l.b16 %v685
    %v3729 = vunpack.c.h.b16 %v685
    %v3730 = vunpack.c.l.b16 %v686
    %v3731 = vunpack.c.h.b16 %v686
    %v3732 = vunpack.c.l.b16 %v687
    %v3733 = vunpack.c.h.b16 %v687
    %v3734 = vunpack.c.l.b16 %v688
    %v3735 = vunpack.c.h.b16 %v688
    %v3736 = vunpack.c.l.b16 %v689
    %v3737 = vunpack.c.h.b16 %v689
    %v3738 = vunpack.c.l.b16 %v690
    %v3739 = vunpack.c.h.b16 %v690
    %v3740 = vunpack.c.l.b16 %v691
    %v3741 = vunpack.c.h.b16 %v691
    %v3742 = vunpack.c.l.b16 %v692
    %v3743 = vunpack.c.h.b16 %v692
    %v3744 = vunpack.c.l.b16 %v693
    %v3745 = vunpack.c.h.b16 %v693
    %v3746 = vunpack.c.l.b16 %v694
    %v3747 = vunpack.c.h.b16 %v694
    %v3748 = vunpack.c.l.b16 %v695
    %v3749 = vunpack.c.h.b16 %v695
    %v3750 = vunpack.c.l.b16 %v696
    %v3751 = vunpack.c.h.b16 %v696
    %v3752 = vunpack.c.l.b16 %v697
    %v3753 = vunpack.c.h.b16 %v697
    %v3754 = vunpack.c.l.b16 %v698
    %v3755 = vunpack.c.h.b16 %v698
    %v3756 = vunpack.c.l.b16 %v699
    %v3757 = vunpack.c.h.b16 %v699
    %v3758 = vunpack.c.l.b16 %v700
    %v3759 = vunpack.c.h.b16 %v700
    %v3760 = vunpack.c.l.b16 %v701
    %v3761 = vunpack.c.h.b16 %v701
    %v3762 = vunpack.c.l.b16 %v702
    %v3763 = vunpack.c.h.b16 %v702
    %v3764 = vunpack.c.l.b16 %v703
    %v3765 = vunpack.c.h.b16 %v703
    %v3766 = vunpack.c.l.b16 %v704
    %v3767 = vunpack.c.h.b16 %v704
    %v3768 = vunpack.c.l.b16 %v705
    %v3769 = vunpack.c.h.b16 %v705
    %v3770 = vunpack.c.l.b16 %v706
    %v3771 = vunpack.c.h.b16 %v706
    %v3772 = vunpack.c.l.b16 %v707
    %v3773 = vunpack.c.h.b16 %v707
    %v3774 = vunpack.c.l.b16 %v708
    %v3775 = vunpack.c.h.b16 %v708
    %v3776 = vunpack.c.l.b16 %v709
    %v3777 = vunpack.c.h.b16 %v709
    %v3778 = vunpack.c.l.b16 %v710
    %v3779 = vunpack.c.h.b16 %v710
    %v3780 = vunpack.c.l.b16 %v711
    %v3781 = vunpack.c.h.b16 %v711
    %v3782 = vunpack.c.l.b16 %v712
    %v3783 = vunpack.c.h.b16 %v712
    %v3784 = vunpack.c.l.b16 %v713
    %v3785 = vunpack.c.h.b16 %v713
    %v3786 = vunpack.c.l.b16 %v714
    %v3787 = vunpack.c.h.b16 %v714
    %v3788 = vunpack.c.l.b16 %v715
    %v3789 = vunpack.c.h.b16 %v715
    %v3790 = vunpack.c.l.b16 %v716
    %v3791 = vunpack.c.h.b16 %v716
    %v3792 = vunpack.c.l.b16 %v717
    %v3793 = vunpack.c.h.b16 %v717
    %v3794 = vunpack.c.l.b16 %v718
    %v3795 = vunpack.c.h.b16 %v718
    %v3796 = vunpack.c.l.b16 %v719
    %v3797 = vunpack.c.h.b16 %v719
    %v3798 = vunpack.c.l.b16 %v720
    %v3799 = vunpack.c.h.b16 %v720
    %v3800 = vunpack.c.l.b16 %v721
    %v3801 = vunpack.c.h.b16 %v721
    %v3802 = vunpack.c.l.b16 %v722
    %v3803 = vunpack.c.h.b16 %v722
    %v3804 = vunpack.c.l.b16 %v723
    %v3805 = vunpack.c.h.b16 %v723
    %v3806 = vunpack.c.l.b16 %v724
    %v3807 = vunpack.c.h.b16 %v724
    %v3808 = vunpack.c.l.b16 %v725
    %v3809 = vunpack.c.h.b16 %v725
    %v3810 = vunpack.c.l.b16 %v726
    %v3811 = vunpack.c.h.b16 %v726
    %v3812 = vunpack.c.l.b16 %v727
    %v3813 = vunpack.c.h.b16 %v727
    %v3814 = vunpack.c.l.b16 %v728
    %v3815 = vunpack.c.h.b16 %v728
    %v3816 = vunpack.c.l.b16 %v729
    %v3817 = vunpack.c.h.b16 %v729
    %v3818 = vunpack.c.l.b16 %v730
    %v3819 = vunpack.c.h.b16 %v730
    %v3820 = vunpack.c.l.b16 %v731
    %v3821 = vunpack.c.h.b16 %v731
    %v3822 = vunpack.c.l.b16 %v732
    %v3823 = vunpack.c.h.b16 %v732
    %v3824 = vunpack.c.l.b16 %v733
    %v3825 = vunpack.c.h.b16 %v733
    %v3826 = vunpack.c.l.b16 %v734
    %v3827 = vunpack.c.h.b16 %v734
    %v3828 = vunpack.c.l.b16 %v735
    %v3829 = vunpack.c.h.b16 %v735
    %v3830 = vunpack.c.l.b16 %v736
    %v3831 = vunpack.c.h.b16 %v736
    %v3832 = vunpack.c.l.b16 %v737
    %v3833 = vunpack.c.h.b16 %v737
    %v3834 = vunpack.c.l.b16 %v738
    %v3835 = vunpack.c.h.b16 %v738
    %v3836 = vunpack.c.l.b16 %v739
    %v3837 = vunpack.c.h.b16 %v739
    %v3838 = vunpack.c.l.b16 %v740
    %v3839 = vunpack.c.h.b16 %v740
    %v3840 = vunpack.c.l.b16 %v741
    %v3841 = vunpack.c.h.b16 %v741
    %v3842 = vunpack.c.l.b16 %v742
    %v3843 = vunpack.c.h.b16 %v742
    %v3844 = vunpack.c.l.b16 %v743
    %v3845 = vunpack.c.h.b16 %v743
    %v3846 = vunpack.c.l.b16 %v744
    %v3847 = vunpack.c.h.b16 %v744
    %v3848 = vunpack.c.l.b16 %v745
    %v3849 = vunpack.c.h.b16 %v745
    %v3850 = vunpack.c.l.b16 %v746
    %v3851 = vunpack.c.h.b16 %v746
    %v3852 = vunpack.c.l.b16 %v747
    %v3853 = vunpack.c.h.b16 %v747
    %v3854 = vunpack.c.l.b16 %v748
    %v3855 = vunpack.c.h.b16 %v748
    %v3856 = vunpack.c.l.b16 %v749
    %v3857 = vunpack.c.h.b16 %v749
    %v3858 = vunpack.c.l.b16 %v750
    %v3859 = vunpack.c.h.b16 %v750
    %v3860 = vunpack.c.l.b16 %v751
    %v3861 = vunpack.c.h.b16 %v751
    %v3862 = vunpack.c.l.b16 %v752
    %v3863 = vunpack.c.h.b16 %v752
    %v3864 = vunpack.c.l.b16 %v753
    %v3865 = vunpack.c.h.b16 %v753
    %v3866 = vunpack.c.l.b16 %v754
    %v3867 = vunpack.c.h.b16 %v754
    %v3868 = vunpack.c.l.b16 %v755
    %v3869 = vunpack.c.h.b16 %v755
    %v3870 = vunpack.c.l.b16 %v756
    %v3871 = vunpack.c.h.b16 %v756
    %v3872 = vunpack.c.l.b16 %v757
    %v3873 = vunpack.c.h.b16 %v757
    %v3874 = vunpack.c.l.b16 %v758
    %v3875 = vunpack.c.h.b16 %v758
    %v3876 = vunpack.c.l.b16 %v759
    %v3877 = vunpack.c.h.b16 %v759
    %v3878 = vunpack.c.l.b16 %v760
    %v3879 = vunpack.c.h.b16 %v760
    %v3880 = vunpack.c.l.b16 %v761
    %v3881 = vunpack.c.h.b16 %v761
    %v3882 = vunpack.c.l.b16 %v762
    %v3883 = vunpack.c.h.b16 %v762
    %v3884 = vunpack.c.l.b16 %v763
    %v3885 = vunpack.c.h.b16 %v763
    %v3886 = vunpack.c.l.b16 %v764
    %v3887 = vunpack.c.h.b16 %v764
    %v3888 = vunpack.c.l.b16 %v765
    %v3889 = vunpack.c.h.b16 %v765
    %v3890 = vunpack.c.l.b16 %v766
    %v3891 = vunpack.c.h.b16 %v766
    %v3892 = vunpack.c.l.b16 %v767
    %v3893 = vunpack.c.h.b16 %v767
    %v3894 = vunpack.c.l.b16 %v768
    %v3895 = vunpack.c.h.b16 %v768
    %v3896 = vunpack.c.l.b16 %v769
    %v3897 = vunpack.c.h.b16 %v769
    %v3898 = vunpack.c.l.b16 %v770
    %v3899 = vunpack.c.h.b16 %v770
    %v3900 = vunpack.c.l.b16 %v771
    %v3901 = vunpack.c.h.b16 %v771
    %v3902 = vunpack.c.l.b16 %v772
    %v3903 = vunpack.c.h.b16 %v772
    %v3904 = vunpack.c.l.b16 %v773
    %v3905 = vunpack.c.h.b16 %v773
    %v3906 = vunpack.c.l.b16 %v774
    %v3907 = vunpack.c.h.b16 %v774
    %v3908 = vunpack.c.l.b16 %v775
    %v3909 = vunpack.c.h.b16 %v775
    %v3910 = vunpack.c.l.b16 %v776
    %v3911 = vunpack.c.h.b16 %v776
    %v3912 = vunpack.c.l.b16 %v777
    %v3913 = vunpack.c.h.b16 %v777
    %v3914 = vunpack.c.l.b16 %v778
    %v3915 = vunpack.c.h.b16 %v778
    %v3916 = vunpack.c.l.b16 %v779
    %v3917 = vunpack.c.h.b16 %v779
    %v3918 = vunpack.c.l.b16 %v780
    %v3919 = vunpack.c.h.b16 %v780
    %v3920 = vunpack.c.l.b16 %v781
    %v3921 = vunpack.c.h.b16 %v781
    %v3922 = vunpack.c.l.b16 %v782
    %v3923 = vunpack.c.h.b16 %v782
    %v3924 = vunpack.c.l.b16 %v783
    %v3925 = vunpack.c.h.b16 %v783
    %v3926 = vunpack.c.l.b16 %v784
    %v3927 = vunpack.c.h.b16 %v784
    %v3928 = vunpack.c.l.b16 %v785
    %v3929 = vunpack.c.h.b16 %v785
    %v3930 = vunpack.c.l.b16 %v786
    %v3931 = vunpack.c.h.b16 %v786
    %v3932 = vunpack.c.l.b16 %v787
    %v3933 = vunpack.c.h.b16 %v787
    %v3934 = vunpack.c.l.b16 %v788
    %v3935 = vunpack.c.h.b16 %v788
    %v3936 = vunpack.c.l.b16 %v789
    %v3937 = vunpack.c.h.b16 %v789
    %v3938 = vunpack.c.l.b16 %v790
    %v3939 = vunpack.c.h.b16 %v790
    %v3940 = vunpack.c.l.b16 %v791
    %v3941 = vunpack.c.h.b16 %v791
    %v3942 = vunpack.c.l.b16 %v792
    %v3943 = vunpack.c.h.b16 %v792
    %v3944 = vunpack.c.l.b16 %v793
    %v3945 = vunpack.c.h.b16 %v793
    %v3946 = vunpack.c.l.b16 %v794
    %v3947 = vunpack.c.h.b16 %v794
    %v3948 = vunpack.c.l.b16 %v795
    %v3949 = vunpack.c.h.b16 %v795
    %v3950 = vunpack.c.l.b16 %v796
    %v3951 = vunpack.c.h.b16 %v796
    %v3952 = vunpack.c.l.b16 %v797
    %v3953 = vunpack.c.h.b16 %v797
    %v3954 = vunpack.c.l.b16 %v798
    %v3955 = vunpack.c.h.b16 %v798
    %v3956 = vunpack.c.l.b16 %v799
    %v3957 = vunpack.c.h.b16 %v799
    %v3958 = vunpack.c.l.b16 %v800
    %v3959 = vunpack.c.h.b16 %v800
    %v3960 = vunpack.c.l.b16 %v801
    %v3961 = vunpack.c.h.b16 %v801
    %v3962 = vunpack.c.l.b16 %v802
    %v3963 = vunpack.c.h.b16 %v802
    %v3964 = vunpack.c.l.b16 %v803
    %v3965 = vunpack.c.h.b16 %v803
    %v3966 = vunpack.c.l.b16 %v804
    %v3967 = vunpack.c.h.b16 %v804
    %v3968 = vunpack.c.l.b16 %v805
    %v3969 = vunpack.c.h.b16 %v805
    %v3970 = vunpack.c.l.b16 %v806
    %v3971 = vunpack.c.h.b16 %v806
    %v3972 = vunpack.c.l.b16 %v807
    %v3973 = vunpack.c.h.b16 %v807
    %v3974 = vunpack.c.l.b16 %v808
    %v3975 = vunpack.c.h.b16 %v808
    %v3976 = vunpack.c.l.b16 %v809
    %v3977 = vunpack.c.h.b16 %v809
    %v3978 = vunpack.c.l.b16 %v810
    %v3979 = vunpack.c.h.b16 %v810
    %v3980 = vunpack.c.l.b16 %v811
    %v3981 = vunpack.c.h.b16 %v811
    %v3982 = vunpack.c.l.b16 %v812
    %v3983 = vunpack.c.h.b16 %v812
    %v3984 = vunpack.c.l.b16 %v813
    %v3985 = vunpack.c.h.b16 %v813
    %v3986 = vunpack.c.l.b16 %v814
    %v3987 = vunpack.c.h.b16 %v814
    %v3988 = vunpack.c.l.b16 %v815
    %v3989 = vunpack.c.h.b16 %v815
    %v3990 = vunpack.c.l.b16 %v816
    %v3991 = vunpack.c.h.b16 %v816
    %v3992 = vunpack.c.l.b16 %v817
    %v3993 = vunpack.c.h.b16 %v817
    %v3994 = vunpack.c.l.b16 %v818
    %v3995 = vunpack.c.h.b16 %v818
    %v3996 = vunpack.c.l.b16 %v819
    %v3997 = vunpack.c.h.b16 %v819
    %v3998 = vunpack.c.l.b16 %v820
    %v3999 = vunpack.c.h.b16 %v820
    %v4000 = vunpack.c.l.b16 %v821
    %v4001 = vunpack.c.h.b16 %v821
    %v4002 = vunpack.c.l.b16 %v822
    %v4003 = vunpack.c.h.b16 %v822
    %v4004 = vunpack.c.l.b16 %v823
    %v4005 = vunpack.c.h.b16 %v823
    %v4006 = vunpack.c.l.b16 %v824
    %v4007 = vunpack.c.h.b16 %v824
    %v4008 = vunpack.c.l.b16 %v825
    %v4009 = vunpack.c.h.b16 %v825
    %v4010 = vunpack.c.l.b16 %v826
    %v4011 = vunpack.c.h.b16 %v826
    %v4012 = vunpack.c.l.b16 %v827
    %v4013 = vunpack.c.h.b16 %v827
    %v4014 = vunpack.c.l.b16 %v828
    %v4015 = vunpack.c.h.b16 %v828
    %v4016 = vunpack.c.l.b16 %v829
    %v4017 = vunpack.c.h.b16 %v829
    %v4018 = vunpack.c.l.b16 %v830
    %v4019 = vunpack.c.h.b16 %v830
    %v4020 = vunpack.c.l.b16 %v831
    %v4021 = vunpack.c.h.b16 %v831
    %v4022 = vunpack.c.l.b16 %v832
    %v4023 = vunpack.c.h.b16 %v832
    %v4024 = vunpack.c.l.b16 %v833
    %v4025 = vunpack.c.h.b16 %v833
    %v4026 = vunpack.c.l.b16 %v834
    %v4027 = vunpack.c.h.b16 %v834
    %v4028 = vunpack.c.l.b16 %v835
    %v4029 = vunpack.c.h.b16 %v835
    %v4030 = vunpack.c.l.b16 %v836
    %v4031 = vunpack.c.h.b16 %v836
    %v4032 = vunpack.c.l.b16 %v837
    %v4033 = vunpack.c.h.b16 %v837
    %v4034 = vunpack.c.l.b16 %v838
    %v4035 = vunpack.c.h.b16 %v838
    %v4036 = vunpack.c.l.b16 %v839
    %v4037 = vunpack.c.h.b16 %v839
    %v4038 = vunpack.c.l.b16 %v840
    %v4039 = vunpack.c.h.b16 %v840
    %v4040 = vunpack.c.l.b16 %v841
    %v4041 = vunpack.c.h.b16 %v841
    %v4042 = vunpack.c.l.b16 %v842
    %v4043 = vunpack.c.h.b16 %v842
    %v4044 = vunpack.c.l.b16 %v843
    %v4045 = vunpack.c.h.b16 %v843
    %v4046 = vunpack.c.l.b16 %v844
    %v4047 = vunpack.c.h.b16 %v844
    %v4048 = vunpack.c.l.b16 %v845
    %v4049 = vunpack.c.h.b16 %v845
    %v4050 = vunpack.c.l.b16 %v846
    %v4051 = vunpack.c.h.b16 %v846
    %v4052 = vunpack.c.l.b16 %v847
    %v4053 = vunpack.c.h.b16 %v847
    %v4054 = vunpack.c.l.b16 %v848
    %v4055 = vunpack.c.h.b16 %v848
    %v4056 = vunpack.c.l.b16 %v849
    %v4057 = vunpack.c.h.b16 %v849
    %v4058 = vunpack.c.l.b16 %v850
    %v4059 = vunpack.c.h.b16 %v850
    %v4060 = vunpack.c.l.b16 %v851
    %v4061 = vunpack.c.h.b16 %v851
    %v4062 = vunpack.c.l.b16 %v852
    %v4063 = vunpack.c.h.b16 %v852
    %v4064 = vunpack.c.l.b16 %v853
    %v4065 = vunpack.c.h.b16 %v853
    %v4066 = vunpack.c.l.b16 %v854
    %v4067 = vunpack.c.h.b16 %v854
    %v4068 = vunpack.c.l.b16 %v855
    %v4069 = vunpack.c.h.b16 %v855
    %v4070 = vunpack.c.l.b16 %v856
    %v4071 = vunpack.c.h.b16 %v856
    %v4072 = vunpack.c.l.b16 %v857
    %v4073 = vunpack.c.h.b16 %v857
    %v4074 = vunpack.c.l.b16 %v858
    %v4075 = vunpack.c.h.b16 %v858
    %v4076 = vunpack.c.l.b16 %v859
    %v4077 = vunpack.c.h.b16 %v859
    %v4078 = vunpack.c.l.b16 %v860
    %v4079 = vunpack.c.h.b16 %v860
    %v4080 = vunpack.c.l.b16 %v861
    %v4081 = vunpack.c.h.b16 %v861
    %v4082 = vunpack.c.l.b16 %v862
    %v4083 = vunpack.c.h.b16 %v862
    %v4084 = vunpack.c.l.b16 %v863
    %v4085 = vunpack.c.h.b16 %v863
    %v4086 = vunpack.c.l.b16 %v864
    %v4087 = vunpack.c.h.b16 %v864
    %v4088 = vunpack.c.l.b16 %v865
    %v4089 = vunpack.c.h.b16 %v865
    %v4090 = vunpack.c.l.b16 %v866
    %v4091 = vunpack.c.h.b16 %v866
    %v4092 = vunpack.c.l.b16 %v867
    %v4093 = vunpack.c.h.b16 %v867
    %v4094 = vunpack.c.l.b16 %v868
    %v4095 = vunpack.c.h.b16 %v868
    %v4096 = vunpack.c.l.b16 %v869
    %v4097 = vunpack.c.h.b16 %v869
    %v4098 = vunpack.c.l.b16 %v870
    %v4099 = vunpack.c.h.b16 %v870
    %v4100 = vunpack.c.l.b16 %v871
    %v4101 = vunpack.c.h.b16 %v871
    %v4102 = vunpack.c.l.b16 %v872
    %v4103 = vunpack.c.h.b16 %v872
    %v4104 = vunpack.c.l.b16 %v873
    %v4105 = vunpack.c.h.b16 %v873
    %v4106 = vunpack.c.l.b16 %v874
    %v4107 = vunpack.c.h.b16 %v874
    %v4108 = vunpack.c.l.b16 %v875
    %v4109 = vunpack.c.h.b16 %v875
    %v4110 = vunpack.c.l.b16 %v876
    %v4111 = vunpack.c.h.b16 %v876
    %v4112 = vunpack.c.l.b16 %v877
    %v4113 = vunpack.c.h.b16 %v877
    %v4114 = vunpack.c.l.b16 %v878
    %v4115 = vunpack.c.h.b16 %v878
    %v4116 = vunpack.c.l.b16 %v879
    %v4117 = vunpack.c.h.b16 %v879
    %v4118 = vunpack.c.l.b16 %v880
    %v4119 = vunpack.c.h.b16 %v880
    %v4120 = vunpack.c.l.b16 %v881
    %v4121 = vunpack.c.h.b16 %v881
    %v4122 = vunpack.c.l.b16 %v882
    %v4123 = vunpack.c.h.b16 %v882
    %v4124 = vunpack.c.l.b16 %v883
    %v4125 = vunpack.c.h.b16 %v883
    %v4126 = vunpack.c.l.b16 %v884
    %v4127 = vunpack.c.h.b16 %v884
    %v4128 = vunpack.c.l.b16 %v885
    %v4129 = vunpack.c.h.b16 %v885
    %v4130 = vunpack.c.l.b16 %v886
    %v4131 = vunpack.c.h.b16 %v886
    %v4132 = vunpack.c.l.b16 %v887
    %v4133 = vunpack.c.h.b16 %v887
    %v4134 = vunpack.c.l.b16 %v888
    %v4135 = vunpack.c.h.b16 %v888
    %v4136 = vunpack.c.l.b16 %v889
    %v4137 = vunpack.c.h.b16 %v889
    %v4138 = vunpack.c.l.b16 %v890
    %v4139 = vunpack.c.h.b16 %v890
    %v4140 = vunpack.c.l.b16 %v891
    %v4141 = vunpack.c.h.b16 %v891
    %v4142 = vunpack.c.l.b16 %v892
    %v4143 = vunpack.c.h.b16 %v892
    %v4144 = vunpack.c.l.b16 %v893
    %v4145 = vunpack.c.h.b16 %v893
    %v4146 = vunpack.c.l.b16 %v894
    %v4147 = vunpack.c.h.b16 %v894
    %v4148 = vunpack.c.l.b16 %v895
    %v4149 = vunpack.c.h.b16 %v895
    %v4150 = vunpack.c.l.b16 %v896
    %v4151 = vunpack.c.h.b16 %v896
    %v4152 = vunpack.c.l.b16 %v897
    %v4153 = vunpack.c.h.b16 %v897
    %v4154 = vunpack.c.l.b16 %v898
    %v4155 = vunpack.c.h.b16 %v898
    %v4156 = vunpack.c.l.b16 %v899
    %v4157 = vunpack.c.h.b16 %v899
    %v4158 = vunpack.c.l.b16 %v900
    %v4159 = vunpack.c.h.b16 %v900
    %v4160 = vunpack.c.l.b16 %v901
    %v4161 = vunpack.c.h.b16 %v901
    %v4162 = vunpack.c.l.b16 %v902
    %v4163 = vunpack.c.h.b16 %v902
    %v4164 = vunpack.c.l.b16 %v903
    %v4165 = vunpack.c.h.b16 %v903
    %v4166 = vunpack.c.l.b16 %v904
    %v4167 = vunpack.c.h.b16 %v904
    %v4168 = vunpack.c.l.b16 %v905
    %v4169 = vunpack.c.h.b16 %v905
    %v4170 = vunpack.c.l.b16 %v906
    %v4171 = vunpack.c.h.b16 %v906
    %v4172 = vunpack.c.l.b16 %v907
    %v4173 = vunpack.c.h.b16 %v907
    %v4174 = vunpack.c.l.b16 %v908
    %v4175 = vunpack.c.h.b16 %v908
    %v4176 = vunpack.c.l.b16 %v909
    %v4177 = vunpack.c.h.b16 %v909
    %v4178 = vunpack.c.l.b16 %v910
    %v4179 = vunpack.c.h.b16 %v910
    %v4180 = vunpack.c.l.b16 %v911
    %v4181 = vunpack.c.h.b16 %v911
    %v4182 = vunpack.c.l.b16 %v912
    %v4183 = vunpack.c.h.b16 %v912
    %v4184 = vunpack.c.l.b16 %v913
    %v4185 = vunpack.c.h.b16 %v913
    %v4186 = vunpack.c.l.b16 %v914
    %v4187 = vunpack.c.h.b16 %v914
    %v4188 = vunpack.c.l.b16 %v915
    %v4189 = vunpack.c.h.b16 %v915
    %v4190 = vunpack.c.l.b16 %v916
    %v4191 = vunpack.c.h.b16 %v916
    %v4192 = vunpack.c.l.b16 %v917
    %v4193 = vunpack.c.h.b16 %v917
    %v4194 = vunpack.c.l.b16 %v918
    %v4195 = vunpack.c.h.b16 %v918
    %v4196 = vunpack.c.l.b16 %v919
    %v4197 = vunpack.c.h.b16 %v919
    %v4198 = vunpack.c.l.b16 %v920
    %v4199 = vunpack.c.h.b16 %v920
    %v4200 = vunpack.c.l.b16 %v921
    %v4201 = vunpack.c.h.b16 %v921
    %v4202 = vunpack.c.l.b16 %v922
    %v4203 = vunpack.c.h.b16 %v922
    %v4204 = vunpack.c.l.b16 %v923
    %v4205 = vunpack.c.h.b16 %v923
    %v4206 = vunpack.c.l.b16 %v924
    %v4207 = vunpack.c.h.b16 %v924
    %v4208 = vunpack.c.l.b16 %v925
    %v4209 = vunpack.c.h.b16 %v925
    %v4210 = vunpack.c.l.b16 %v926
    %v4211 = vunpack.c.h.b16 %v926
    %v4212 = vunpack.c.l.b16 %v927
    %v4213 = vunpack.c.h.b16 %v927
    %v4214 = vunpack.c.l.b16 %v928
    %v4215 = vunpack.c.h.b16 %v928
    %v4216 = vunpack.c.l.b16 %v929
    %v4217 = vunpack.c.h.b16 %v929
    %v4218 = vunpack.c.l.b16 %v930
    %v4219 = vunpack.c.h.b16 %v930
    %v4220 = vunpack.c.l.b16 %v931
    %v4221 = vunpack.c.h.b16 %v931
    %v4222 = vunpack.c.l.b16 %v932
    %v4223 = vunpack.c.h.b16 %v932
    %v4224 = vunpack.c.l.b16 %v933
    %v4225 = vunpack.c.h.b16 %v933
    %v4226 = vunpack.c.l.b16 %v934
    %v4227 = vunpack.c.h.b16 %v934
    %v4228 = vunpack.c.l.b16 %v935
    %v4229 = vunpack.c.h.b16 %v935
    %v4230 = vunpack.c.l.b16 %v936
    %v4231 = vunpack.c.h.b16 %v936
    %v4232 = vunpack.c.l.b16 %v937
    %v4233 = vunpack.c.h.b16 %v937
    %v4234 = vunpack.c.l.b16 %v938
    %v4235 = vunpack.c.h.b16 %v938
    %v4236 = vunpack.c.l.b16 %v939
    %v4237 = vunpack.c.h.b16 %v939
    %v4238 = vunpack.c.l.b16 %v940
    %v4239 = vunpack.c.h.b16 %v940
    %v4240 = vunpack.c.l.b16 %v941
    %v4241 = vunpack.c.h.b16 %v941
    %v4242 = vunpack.c.l.b16 %v942
    %v4243 = vunpack.c.h.b16 %v942
    %v4244 = vunpack.c.l.b16 %v943
    %v4245 = vunpack.c.h.b16 %v943
    %v4246 = vunpack.c.l.b16 %v944
    %v4247 = vunpack.c.h.b16 %v944
    %v4248 = vunpack.c.l.b16 %v945
    %v4249 = vunpack.c.h.b16 %v945
    %v4250 = vunpack.c.l.b16 %v946
    %v4251 = vunpack.c.h.b16 %v946
    %v4252 = vunpack.c.l.b16 %v947
    %v4253 = vunpack.c.h.b16 %v947
    %v4254 = vunpack.c.l.b16 %v948
    %v4255 = vunpack.c.h.b16 %v948
    %v4256 = vunpack.c.l.b16 %v949
    %v4257 = vunpack.c.h.b16 %v949
    %v4258 = vunpack.c.l.b16 %v950
    %v4259 = vunpack.c.h.b16 %v950
    %v4260 = vunpack.c.l.b16 %v951
    %v4261 = vunpack.c.h.b16 %v951
    %v4262 = vunpack.c.l.b16 %v952
    %v4263 = vunpack.c.h.b16 %v952
    %v4264 = vunpack.c.l.b16 %v953
    %v4265 = vunpack.c.h.b16 %v953
    %v4266 = vunpack.c.l.b16 %v954
    %v4267 = vunpack.c.h.b16 %v954
    %v4268 = vunpack.c.l.b16 %v955
    %v4269 = vunpack.c.h.b16 %v955
    %v4270 = vunpack.c.l.b16 %v956
    %v4271 = vunpack.c.h.b16 %v956
    %v4272 = vunpack.c.l.b16 %v957
    %v4273 = vunpack.c.h.b16 %v957
    %v4274 = vunpack.c.l.b16 %v958
    %v4275 = vunpack.c.h.b16 %v958
    %v4276 = vunpack.c.l.b16 %v959
    %v4277 = vunpack.c.h.b16 %v959
    %v4278 = vunpack.c.l.b16 %v960
    %v4279 = vunpack.c.h.b16 %v960
    %v4280 = vunpack.c.l.b16 %v961
    %v4281 = vunpack.c.h.b16 %v961
    %v4282 = vunpack.c.l.b16 %v962
    %v4283 = vunpack.c.h.b16 %v962
    %v4284 = vunpack.c.l.b16 %v963
    %v4285 = vunpack.c.h.b16 %v963
    %v4286 = vunpack.c.l.b16 %v964
    %v4287 = vunpack.c.h.b16 %v964
    %v4288 = vunpack.c.l.b16 %v965
    %v4289 = vunpack.c.h.b16 %v965
    %v4290 = vunpack.c.l.b16 %v966
    %v4291 = vunpack.c.h.b16 %v966
    %v4292 = vunpack.c.l.b16 %v967
    %v4293 = vunpack.c.h.b16 %v967
    %v4294 = vunpack.c.l.b16 %v968
    %v4295 = vunpack.c.h.b16 %v968
    %v4296 = vunpack.c.l.b16 %v969
    %v4297 = vunpack.c.h.b16 %v969
    %v4298 = vunpack.c.l.b16 %v970
    %v4299 = vunpack.c.h.b16 %v970
    %v4300 = vunpack.c.l.b16 %v971
    %v4301 = vunpack.c.h.b16 %v971
    %v4302 = vunpack.c.l.b16 %v972
    %v4303 = vunpack.c.h.b16 %v972
    %v4304 = vunpack.c.l.b16 %v973
    %v4305 = vunpack.c.h.b16 %v973
    %v4306 = vunpack.c.l.b16 %v974
    %v4307 = vunpack.c.h.b16 %v974
    %v4308 = vunpack.c.l.b16 %v975
    %v4309 = vunpack.c.h.b16 %v975
    %v4310 = vunpack.c.l.b16 %v976
    %v4311 = vunpack.c.h.b16 %v976
    %v4312 = vunpack.c.l.b16 %v977
    %v4313 = vunpack.c.h.b16 %v977
    %v4314 = vunpack.c.l.b16 %v978
    %v4315 = vunpack.c.h.b16 %v978
    %v4316 = vunpack.c.l.b16 %v979
    %v4317 = vunpack.c.h.b16 %v979
    %v4318 = vunpack.c.l.b16 %v980
    %v4319 = vunpack.c.h.b16 %v980
    %v4320 = vunpack.c.l.b16 %v981
    %v4321 = vunpack.c.h.b16 %v981
    %v4322 = vunpack.c.l.b16 %v982
    %v4323 = vunpack.c.h.b16 %v982
    %v4324 = vunpack.c.l.b16 %v983
    %v4325 = vunpack.c.h.b16 %v983
    %v4326 = vunpack.c.l.b16 %v984
    %v4327 = vunpack.c.h.b16 %v984
    %v4328 = vunpack.c.l.b16 %v985
    %v4329 = vunpack.c.h.b16 %v985
    %v4330 = vunpack.c.l.b16 %v986
    %v4331 = vunpack.c.h.b16 %v986
    %v4332 = vunpack.c.l.b16 %v987
    %v4333 = vunpack.c.h.b16 %v987
    %v4334 = vunpack.c.l.b16 %v988
    %v4335 = vunpack.c.h.b16 %v988
    %v4336 = vunpack.c.l.b16 %v989
    %v4337 = vunpack.c.h.b16 %v989
    %v4338 = vunpack.c.l.b16 %v990
    %v4339 = vunpack.c.h.b16 %v990
    %v4340 = vunpack.c.l.b16 %v991
    %v4341 = vunpack.c.h.b16 %v991
    %v4342 = vunpack.c.l.b16 %v992
    %v4343 = vunpack.c.h.b16 %v992
    %v4344 = vunpack.c.l.b16 %v993
    %v4345 = vunpack.c.h.b16 %v993
    %v4346 = vunpack.c.l.b16 %v994
    %v4347 = vunpack.c.h.b16 %v994
    %v4348 = vunpack.c.l.b16 %v995
    %v4349 = vunpack.c.h.b16 %v995
    %v4350 = vunpack.c.l.b16 %v996
    %v4351 = vunpack.c.h.b16 %v996
    %v4352 = vunpack.c.l.b16 %v997
    %v4353 = vunpack.c.h.b16 %v997
    %v4354 = vunpack.c.l.b16 %v998
    %v4355 = vunpack.c.h.b16 %v998
    %v4356 = vunpack.c.l.b16 %v999
    %v4357 = vunpack.c.h.b16 %v999
    %v4358 = vunpack.c.l.b16 %v1000
    %v4359 = vunpack.c.h.b16 %v1000
    %v4360 = vunpack.c.l.b16 %v1001
    %v4361 = vunpack.c.h.b16 %v1001
    %v4362 = vunpack.c.l.b16 %v1002
    %v4363 = vunpack.c.h.b16 %v1002
    %v4364 = vunpack.c.l.b16 %v1003
    %v4365 = vunpack.c.h.b16 %v1003
    %v4366 = vunpack.c.l.b16 %v1004
    %v4367 = vunpack.c.h.b16 %v1004
    %v4368 = vunpack.c.l.b16 %v1005
    %v4369 = vunpack.c.h.b16 %v1005
    %v4370 = vunpack.c.l.b16 %v1006
    %v4371 = vunpack.c.h.b16 %v1006
    %v4372 = vunpack.c.l.b16 %v1007
    %v4373 = vunpack.c.h.b16 %v1007
    %v4374 = vunpack.c.l.b16 %v1008
    %v4375 = vunpack.c.h.b16 %v1008
    %v4376 = vunpack.c.l.b16 %v1009
    %v4377 = vunpack.c.h.b16 %v1009
    %v4378 = vunpack.c.l.b16 %v1010
    %v4379 = vunpack.c.h.b16 %v1010
    %v4380 = vunpack.c.l.b16 %v1011
    %v4381 = vunpack.c.h.b16 %v1011
    %v4382 = vunpack.c.l.b16 %v1012
    %v4383 = vunpack.c.h.b16 %v1012
    %v4384 = vunpack.c.l.b16 %v1013
    %v4385 = vunpack.c.h.b16 %v1013
    %v4386 = vunpack.c.l.b16 %v1014
    %v4387 = vunpack.c.h.b16 %v1014
    %v4388 = vunpack.c.l.b16 %v1015
    %v4389 = vunpack.c.h.b16 %v1015
    %v4390 = vunpack.c.l.b16 %v1016
    %v4391 = vunpack.c.h.b16 %v1016
    %v4392 = vunpack.c.l.b16 %v1017
    %v4393 = vunpack.c.h.b16 %v1017
    %v4394 = vunpack.c.l.b16 %v1018
    %v4395 = vunpack.c.h.b16 %v1018
    %v4396 = vunpack.c.l.b16 %v1019
    %v4397 = vunpack.c.h.b16 %v1019
    %v4398 = vunpack.c.l.b16 %v1020
    %v4399 = vunpack.c.h.b16 %v1020
    %v4400 = vunpack.c.l.b16 %v1021
    %v4401 = vunpack.c.h.b16 %v1021
    %v4402 = vunpack.c.l.b16 %v1022
    %v4403 = vunpack.c.h.b16 %v1022
    %v4404 = vunpack.c.l.b16 %v1023
    %v4405 = vunpack.c.h.b16 %v1023
    %v4406 = vunpack.c.l.b16 %v1024
    %v4407 = vunpack.c.h.b16 %v1024
    %v4408 = vunpack.c.l.b16 %v1025
    %v4409 = vunpack.c.h.b16 %v1025
    %v4410 = vunpack.c.l.b16 %v1026
    %v4411 = vunpack.c.h.b16 %v1026
    %v4412 = vunpack.c.l.b16 %v1027
    %v4413 = vunpack.c.h.b16 %v1027
    %v4414 = vunpack.c.l.b16 %v1028
    %v4415 = vunpack.c.h.b16 %v1028
    %v4416 = vunpack.c.l.b16 %v1029
    %v4417 = vunpack.c.h.b16 %v1029
    %v4418 = vunpack.c.l.b16 %v1030
    %v4419 = vunpack.c.h.b16 %v1030
    %v4420 = vunpack.c.l.b16 %v1031
    %v4421 = vunpack.c.h.b16 %v1031
    %v4422 = vunpack.c.l.b16 %v1032
    %v4423 = vunpack.c.h.b16 %v1032
    %v4424 = vunpack.c.l.b16 %v1033
    %v4425 = vunpack.c.h.b16 %v1033
    %v4426 = vunpack.c.l.b16 %v1034
    %v4427 = vunpack.c.h.b16 %v1034
    %v4428 = vunpack.c.l.b16 %v1035
    %v4429 = vunpack.c.h.b16 %v1035
    %v4430 = vunpack.c.l.b16 %v1036
    %v4431 = vunpack.c.h.b16 %v1036
    %v4432 = vunpack.c.l.b16 %v1037
    %v4433 = vunpack.c.h.b16 %v1037
    %v4434 = vunpack.c.l.b16 %v1038
    %v4435 = vunpack.c.h.b16 %v1038
    %v4436 = vunpack.c.l.b16 %v1039
    %v4437 = vunpack.c.h.b16 %v1039
    %v4438 = vunpack.c.l.b16 %v1040
    %v4439 = vunpack.c.h.b16 %v1040
    %v4440 = vunpack.c.l.b16 %v1041
    %v4441 = vunpack.c.h.b16 %v1041
    %v4442 = vunpack.c.l.b16 %v1042
    %v4443 = vunpack.c.h.b16 %v1042
    %v4444 = vunpack.c.l.b16 %v1043
    %v4445 = vunpack.c.h.b16 %v1043
    %v4446 = vunpack.c.l.b16 %v1044
    %v4447 = vunpack.c.h.b16 %v1044
    %v4448 = vunpack.c.l.b16 %v1045
    %v4449 = vunpack.c.h.b16 %v1045
    %v4450 = vunpack.c.l.b16 %v1046
    %v4451 = vunpack.c.h.b16 %v1046
    %v4452 = vunpack.c.l.b16 %v1047
    %v4453 = vunpack.c.h.b16 %v1047
    %v4454 = vunpack.c.l.b16 %v1048
    %v4455 = vunpack.c.h.b16 %v1048
    %v4456 = vunpack.c.l.b16 %v1049
    %v4457 = vunpack.c.h.b16 %v1049
    %v4458 = vunpack.c.l.b16 %v1050
    %v4459 = vunpack.c.h.b16 %v1050
    %v4460 = vunpack.c.l.b16 %v1051
    %v4461 = vunpack.c.h.b16 %v1051
    %v4462 = vunpack.c.l.b16 %v1052
    %v4463 = vunpack.c.h.b16 %v1052
    %v4464 = vunpack.c.l.b16 %v1053
    %v4465 = vunpack.c.h.b16 %v1053
    %v4466 = vunpack.c.l.b16 %v1054
    %v4467 = vunpack.c.h.b16 %v1054
    %v4468 = vunpack.c.l.b16 %v1055
    %v4469 = vunpack.c.h.b16 %v1055
    %v4470 = vunpack.c.l.b16 %v1056
    %v4471 = vunpack.c.h.b16 %v1056
    %v4472 = vunpack.c.l.b16 %v1057
    %v4473 = vunpack.c.h.b16 %v1057
    %v4474 = vunpack.c.l.b16 %v1058
    %v4475 = vunpack.c.h.b16 %v1058
    %v4476 = vunpack.c.l.b16 %v1059
    %v4477 = vunpack.c.h.b16 %v1059
    %v4478 = vunpack.c.l.b16 %v1060
    %v4479 = vunpack.c.h.b16 %v1060
    %v4480 = vunpack.c.l.b16 %v1061
    %v4481 = vunpack.c.h.b16 %v1061
    %v4482 = vunpack.c.l.b16 %v1062
    %v4483 = vunpack.c.h.b16 %v1062
    %v4484 = vunpack.c.l.b16 %v1063
    %v4485 = vunpack.c.h.b16 %v1063
    %v4486 = vunpack.c.l.b16 %v1064
    %v4487 = vunpack.c.h.b16 %v1064
    %v4488 = vunpack.c.l.b16 %v1065
    %v4489 = vunpack.c.h.b16 %v1065
    %v4490 = vunpack.c.l.b16 %v1066
    %v4491 = vunpack.c.h.b16 %v1066
    %v4492 = vunpack.c.l.b16 %v1067
    %v4493 = vunpack.c.h.b16 %v1067
    %v4494 = vunpack.c.l.b16 %v1068
    %v4495 = vunpack.c.h.b16 %v1068
    %v4496 = vunpack.c.l.b16 %v1069
    %v4497 = vunpack.c.h.b16 %v1069
    %v4498 = vunpack.c.l.b16 %v1070
    %v4499 = vunpack.c.h.b16 %v1070
    %v4500 = vunpack.c.l.b16 %v1071
    %v4501 = vunpack.c.h.b16 %v1071
    %v4502 = vunpack.c.l.b16 %v1072
    %v4503 = vunpack.c.h.b16 %v1072
    %v4504 = vunpack.c.l.b16 %v1073
    %v4505 = vunpack.c.h.b16 %v1073
    %v4506 = vunpack.c.l.b16 %v1074
    %v4507 = vunpack.c.h.b16 %v1074
    %v4508 = vunpack.c.l.b16 %v1075
    %v4509 = vunpack.c.h.b16 %v1075
    %v4510 = vunpack.c.l.b16 %v1076
    %v4511 = vunpack.c.h.b16 %v1076
    %v4512 = vunpack.c.l.b16 %v1077
    %v4513 = vunpack.c.h.b16 %v1077
    %v4514 = vunpack.c.l.b16 %v1078
    %v4515 = vunpack.c.h.b16 %v1078
    %v4516 = vunpack.c.l.b16 %v1079
    %v4517 = vunpack.c.h.b16 %v1079
    %v4518 = vunpack.c.l.b16 %v1080
    %v4519 = vunpack.c.h.b16 %v1080
    %v4520 = vunpack.c.l.b16 %v1081
    %v4521 = vunpack.c.h.b16 %v1081
    %v4522 = vunpack.c.l.b16 %v1082
    %v4523 = vunpack.c.h.b16 %v1082
    %v4524 = vunpack.c.l.b16 %v1083
    %v4525 = vunpack.c.h.b16 %v1083
    %v4526 = vunpack.c.l.b16 %v1084
    %v4527 = vunpack.c.h.b16 %v1084
    %v4528 = vunpack.c.l.b16 %v1085
    %v4529 = vunpack.c.h.b16 %v1085
    %v4530 = vunpack.c.l.b16 %v1086
    %v4531 = vunpack.c.h.b16 %v1086
    %v4532 = vunpack.c.l.b16 %v1087
    %v4533 = vunpack.c.h.b16 %v1087
    %v4534 = vunpack.c.l.b16 %v1088
    %v4535 = vunpack.c.h.b16 %v1088
    %v4536 = vunpack.c.l.b16 %v1089
    %v4537 = vunpack.c.h.b16 %v1089
    %v4538 = vunpack.c.l.b16 %v1090
    %v4539 = vunpack.c.h.b16 %v1090
    %v4540 = vunpack.c.l.b16 %v1091
    %v4541 = vunpack.c.h.b16 %v1091
    %v4542 = vunpack.c.l.b16 %v1092
    %v4543 = vunpack.c.h.b16 %v1092
    %v4544 = vunpack.c.l.b16 %v1093
    %v4545 = vunpack.c.h.b16 %v1093
    %v4546 = vunpack.c.l.b16 %v1094
    %v4547 = vunpack.c.h.b16 %v1094
    %v4548 = vunpack.c.l.b16 %v1095
    %v4549 = vunpack.c.h.b16 %v1095
    %v4550 = vunpack.c.l.b16 %v1096
    %v4551 = vunpack.c.h.b16 %v1096
    %v4552 = vunpack.c.l.b16 %v1097
    %v4553 = vunpack.c.h.b16 %v1097
    %v4554 = vunpack.c.l.b16 %v1098
    %v4555 = vunpack.c.h.b16 %v1098
    %v4556 = vunpack.c.l.b16 %v1099
    %v4557 = vunpack.c.h.b16 %v1099
    %v4558 = vunpack.c.l.b16 %v1100
    %v4559 = vunpack.c.h.b16 %v1100
    %v4560 = vunpack.c.l.b16 %v1101
    %v4561 = vunpack.c.h.b16 %v1101
    %v4562 = vunpack.c.l.b16 %v1102
    %v4563 = vunpack.c.h.b16 %v1102
    %v4564 = vunpack.c.l.b16 %v1103
    %v4565 = vunpack.c.h.b16 %v1103
    %v4566 = vunpack.c.l.b16 %v1104
    %v4567 = vunpack.c.h.b16 %v1104
    %v4568 = vunpack.c.l.b16 %v1105
    %v4569 = vunpack.c.h.b16 %v1105
    %v4570 = vunpack.c.l.b16 %v1106
    %v4571 = vunpack.c.h.b16 %v1106
    %v4572 = vunpack.c.l.b16 %v1107
    %v4573 = vunpack.c.h.b16 %v1107
    %v4574 = vunpack.c.l.b16 %v1108
    %v4575 = vunpack.c.h.b16 %v1108
    %v4576 = vunpack.c.l.b16 %v1109
    %v4577 = vunpack.c.h.b16 %v1109
    %v4578 = vunpack.c.l.b16 %v1110
    %v4579 = vunpack.c.h.b16 %v1110
    %v4580 = vunpack.c.l.b16 %v1111
    %v4581 = vunpack.c.h.b16 %v1111
    %v4582 = vunpack.c.l.b16 %v1112
    %v4583 = vunpack.c.h.b16 %v1112
    %v4584 = vunpack.c.l.b16 %v1113
    %v4585 = vunpack.c.h.b16 %v1113
    %v4586 = vunpack.c.l.b16 %v1114
    %v4587 = vunpack.c.h.b16 %v1114
    %v4588 = vunpack.c.l.b16 %v1115
    %v4589 = vunpack.c.h.b16 %v1115
    %v4590 = vunpack.c.l.b16 %v1116
    %v4591 = vunpack.c.h.b16 %v1116
    %v4592 = vunpack.c.l.b16 %v1117
    %v4593 = vunpack.c.h.b16 %v1117
    %v4594 = vunpack.c.l.b16 %v1118
    %v4595 = vunpack.c.h.b16 %v1118
    %v4596 = vunpack.c.l.b16 %v1119
    %v4597 = vunpack.c.h.b16 %v1119
    %v4598 = vunpack.c.l.b16 %v1120
    %v4599 = vunpack.c.h.b16 %v1120
    %v4600 = vunpack.c.l.b16 %v1121
    %v4601 = vunpack.c.h.b16 %v1121
    %v4602 = vunpack.c.l.b16 %v1122
    %v4603 = vunpack.c.h.b16 %v1122
    %v4604 = vunpack.c.l.b16 %v1123
    %v4605 = vunpack.c.h.b16 %v1123
    %v4606 = vunpack.c.l.b16 %v1124
    %v4607 = vunpack.c.h.b16 %v1124
    %v4608 = vunpack.c.l.b16 %v1125
    %v4609 = vunpack.c.h.b16 %v1125
    %v4610 = vunpack.c.l.b16 %v1126
    %v4611 = vunpack.c.h.b16 %v1126
    %v4612 = vunpack.c.l.b16 %v1127
    %v4613 = vunpack.c.h.b16 %v1127
    %v4614 = vunpack.c.l.b16 %v1128
    %v4615 = vunpack.c.h.b16 %v1128
    %v4616 = vunpack.c.l.b16 %v1129
    %v4617 = vunpack.c.h.b16 %v1129
    %v4618 = vunpack.c.l.b16 %v1130
    %v4619 = vunpack.c.h.b16 %v1130
    %v4620 = vunpack.c.l.b16 %v1131
    %v4621 = vunpack.c.h.b16 %v1131
    %v4622 = vunpack.c.l.b16 %v1132
    %v4623 = vunpack.c.h.b16 %v1132
    %v4624 = vunpack.c.l.b16 %v1133
    %v4625 = vunpack.c.h.b16 %v1133
    %v4626 = vunpack.c.l.b16 %v1134
    %v4627 = vunpack.c.h.b16 %v1134
    %v4628 = vunpack.c.l.b16 %v1135
    %v4629 = vunpack.c.h.b16 %v1135
    %v4630 = vunpack.c.l.b16 %v1136
    %v4631 = vunpack.c.h.b16 %v1136
    %v4632 = vunpack.c.l.b16 %v1137
    %v4633 = vunpack.c.h.b16 %v1137
    %v4634 = vunpack.c.l.b16 %v1138
    %v4635 = vunpack.c.h.b16 %v1138
    %v4636 = vunpack.c.l.b16 %v1139
    %v4637 = vunpack.c.h.b16 %v1139
    %v4638 = vunpack.c.l.b16 %v1140
    %v4639 = vunpack.c.h.b16 %v1140
    %v4640 = vunpack.c.l.b16 %v1141
    %v4641 = vunpack.c.h.b16 %v1141
    %v4642 = vunpack.c.l.b16 %v1142
    %v4643 = vunpack.c.h.b16 %v1142
    %v4644 = vunpack.c.l.b16 %v1143
    %v4645 = vunpack.c.h.b16 %v1143
    %v4646 = vunpack.c.l.b16 %v1144
    %v4647 = vunpack.c.h.b16 %v1144
    %v4648 = vunpack.c.l.b16 %v1145
    %v4649 = vunpack.c.h.b16 %v1145
    %v4650 = vunpack.c.l.b16 %v1146
    %v4651 = vunpack.c.h.b16 %v1146
    %v4652 = vunpack.c.l.b16 %v1147
    %v4653 = vunpack.c.h.b16 %v1147
    %v4654 = vunpack.c.l.b16 %v1148
    %v4655 = vunpack.c.h.b16 %v1148
    %v4656 = vunpack.c.l.b16 %v1149
    %v4657 = vunpack.c.h.b16 %v1149
    %v4658 = vunpack.c.l.b16 %v1150
    %v4659 = vunpack.c.h.b16 %v1150
    %v4660 = vunpack.c.l.b16 %v1151
    %v4661 = vunpack.c.h.b16 %v1151
    %v4662 = vunpack.c.l.b16 %v1152
    %v4663 = vunpack.c.h.b16 %v1152
    %v4664 = vunpack.c.l.b16 %v1153
    %v4665 = vunpack.c.h.b16 %v1153
    %v4666 = vunpack.c.l.b16 %v1154
    %v4667 = vunpack.c.h.b16 %v1154
    %v4668 = vunpack.c.l.b16 %v1155
    %v4669 = vunpack.c.h.b16 %v1155
    %v4670 = vunpack.c.l.b16 %v1156
    %v4671 = vunpack.c.h.b16 %v1156
    %v4672 = vunpack.c.l.b16 %v1157
    %v4673 = vunpack.c.h.b16 %v1157
    %v4674 = vunpack.c.l.b16 %v1158
    %v4675 = vunpack.c.h.b16 %v1158
    %v4676 = vunpack.c.l.b16 %v1159
    %v4677 = vunpack.c.h.b16 %v1159
    %v4678 = vunpack.c.l.b16 %v1160
    %v4679 = vunpack.c.h.b16 %v1160
    %v4680 = vunpack.c.l.b16 %v1161
    %v4681 = vunpack.c.h.b16 %v1161
    %v4682 = vunpack.c.l.b16 %v1162
    %v4683 = vunpack.c.h.b16 %v1162
    %v4684 = vunpack.c.l.b16 %v1163
    %v4685 = vunpack.c.h.b16 %v1163
    %v4686 = vunpack.c.l.b16 %v1164
    %v4687 = vunpack.c.h.b16 %v1164
    %v4688 = vunpack.c.l.b16 %v1165
    %v4689 = vunpack.c.h.b16 %v1165
    %v4690 = vunpack.c.l.b16 %v1166
    %v4691 = vunpack.c.h.b16 %v1166
    %v4692 = vunpack.c.l.b16 %v1167
    %v4693 = vunpack.c.h.b16 %v1167
    %v4694 = vunpack.c.l.b16 %v1168
    %v4695 = vunpack.c.h.b16 %v1168
    %v4696 = vunpack.c.l.b16 %v1169
    %v4697 = vunpack.c.h.b16 %v1169
    %v4698 = vunpack.c.l.b16 %v1170
    %v4699 = vunpack.c.h.b16 %v1170
    %v4700 = vunpack.c.l.b16 %v1171
    %v4701 = vunpack.c.h.b16 %v1171
    %v4702 = vunpack.c.l.b16 %v1172
    %v4703 = vunpack.c.h.b16 %v1172
    %v4704 = vunpack.c.l.b16 %v1173
    %v4705 = vunpack.c.h.b16 %v1173
    %v4706 = vunpack.c.l.b16 %v1174
    %v4707 = vunpack.c.h.b16 %v1174
    %v4708 = vunpack.c.l.b16 %v1175
    %v4709 = vunpack.c.h.b16 %v1175
    %v4710 = vunpack.c.l.b16 %v1176
    %v4711 = vunpack.c.h.b16 %v1176
    %v4712 = vunpack.c.l.b16 %v1177
    %v4713 = vunpack.c.h.b16 %v1177
    %v4714 = vunpack.c.l.b16 %v1178
    %v4715 = vunpack.c.h.b16 %v1178
    %v4716 = vunpack.c.l.b16 %v1179
    %v4717 = vunpack.c.h.b16 %v1179
    %v4718 = vunpack.c.l.b16 %v1180
    %v4719 = vunpack.c.h.b16 %v1180
    %v4720 = vunpack.c.l.b16 %v1181
    %v4721 = vunpack.c.h.b16 %v1181
    %v4722 = vunpack.c.l.b16 %v1182
    %v4723 = vunpack.c.h.b16 %v1182
    %v4724 = vunpack.c.l.b16 %v1183
    %v4725 = vunpack.c.h.b16 %v1183
    %v4726 = vunpack.c.l.b16 %v1184
    %v4727 = vunpack.c.h.b16 %v1184
    %v4728 = vunpack.c.l.b16 %v1185
    %v4729 = vunpack.c.h.b16 %v1185
    %v4730 = vunpack.c.l.b16 %v1186
    %v4731 = vunpack.c.h.b16 %v1186
    %v4732 = vunpack.c.l.b16 %v1187
    %v4733 = vunpack.c.h.b16 %v1187
    %v4734 = vunpack.c.l.b16 %v1188
    %v4735 = vunpack.c.h.b16 %v1188
    %v4736 = vunpack.c.l.b16 %v1189
    %v4737 = vunpack.c.h.b16 %v1189
    %v4738 = vunpack.c.l.b16 %v1190
    %v4739 = vunpack.c.h.b16 %v1190
    %v4740 = vunpack.c.l.b16 %v1191
    %v4741 = vunpack.c.h.b16 %v1191
    %v4742 = vunpack.c.l.b16 %v1192
    %v4743 = vunpack.c.h.b16 %v1192
    %v4744 = vunpack.c.l.b16 %v1193
    %v4745 = vunpack.c.h.b16 %v1193
    %v4746 = vunpack.c.l.b16 %v1194
    %v4747 = vunpack.c.h.b16 %v1194
    %v4748 = vunpack.c.l.b16 %v1195
    %v4749 = vunpack.c.h.b16 %v1195
    %v4750 = vunpack.c.l.b16 %v1196
    %v4751 = vunpack.c.h.b16 %v1196
    %v4752 = vunpack.c.l.b16 %v1197
    %v4753 = vunpack.c.h.b16 %v1197
    %v4754 = vunpack.c.l.b16 %v1198
    %v4755 = vunpack.c.h.b16 %v1198
    %v4756 = vunpack.c.l.b16 %v1199
    %v4757 = vunpack.c.h.b16 %v1199
    %v4758 = vunpack.c.l.b16 %v1200
    %v4759 = vunpack.c.h.b16 %v1200
    %v4760 = vunpack.c.l.b16 %v1201
    %v4761 = vunpack.c.h.b16 %v1201
    %v4762 = vunpack.c.l.b16 %v1202
    %v4763 = vunpack.c.h.b16 %v1202
    %v4764 = vunpack.c.l.b16 %v1203
    %v4765 = vunpack.c.h.b16 %v1203
    %v4766 = vunpack.c.l.b16 %v1204
    %v4767 = vunpack.c.h.b16 %v1204
    %v4768 = vunpack.c.l.b16 %v1205
    %v4769 = vunpack.c.h.b16 %v1205
    %v4770 = vunpack.c.l.b16 %v1206
    %v4771 = vunpack.c.h.b16 %v1206
    %v4772 = vunpack.c.l.b16 %v1207
    %v4773 = vunpack.c.h.b16 %v1207
    %v4774 = vunpack.c.l.b16 %v1208
    %v4775 = vunpack.c.h.b16 %v1208
    %v4776 = vunpack.c.l.b16 %v1209
    %v4777 = vunpack.c.h.b16 %v1209
    %v4778 = vunpack.c.l.b16 %v1210
    %v4779 = vunpack.c.h.b16 %v1210
    %v4780 = vunpack.c.l.b16 %v1211
    %v4781 = vunpack.c.h.b16 %v1211
    %v4782 = vunpack.c.l.b16 %v1212
    %v4783 = vunpack.c.h.b16 %v1212
    %v4784 = vunpack.c.l.b16 %v1213
    %v4785 = vunpack.c.h.b16 %v1213
    %v4786 = vunpack.c.l.b16 %v1214
    %v4787 = vunpack.c.h.b16 %v1214
    %v4788 = vunpack.c.l.b16 %v1215
    %v4789 = vunpack.c.h.b16 %v1215
    %v4790 = vunpack.c.l.b16 %v1216
    %v4791 = vunpack.c.h.b16 %v1216
    %v4792 = vunpack.c.l.b16 %v1217
    %v4793 = vunpack.c.h.b16 %v1217
    %v4794 = vunpack.c.l.b16 %v1218
    %v4795 = vunpack.c.h.b16 %v1218
    %v4796 = vunpack.c.l.b16 %v1219
    %v4797 = vunpack.c.h.b16 %v1219
    %v4798 = vunpack.c.l.b16 %v1220
    %v4799 = vunpack.c.h.b16 %v1220
    %v4800 = vunpack.c.l.b16 %v1221
    %v4801 = vunpack.c.h.b16 %v1221
    %v4802 = vunpack.c.l.b16 %v1222
    %v4803 = vunpack.c.h.b16 %v1222
    %v4804 = vunpack.c.l.b16 %v1223
    %v4805 = vunpack.c.h.b16 %v1223
    %v4806 = vunpack.c.l.b16 %v1224
    %v4807 = vunpack.c.h.b16 %v1224
    %v4808 = vunpack.c.l.b16 %v1225
    %v4809 = vunpack.c.h.b16 %v1225
    %v4810 = vunpack.c.l.b16 %v1226
    %v4811 = vunpack.c.h.b16 %v1226
    %v4812 = vunpack.c.l.b16 %v1227
    %v4813 = vunpack.c.h.b16 %v1227
    %v4814 = vunpack.c.l.b16 %v1228
    %v4815 = vunpack.c.h.b16 %v1228
    %v4816 = vunpack.c.l.b16 %v1229
    %v4817 = vunpack.c.h.b16 %v1229
    %v4818 = vunpack.c.l.b16 %v1230
    %v4819 = vunpack.c.h.b16 %v1230
    %v4820 = vunpack.c.l.b16 %v1231
    %v4821 = vunpack.c.h.b16 %v1231
    %v4822 = vunpack.c.l.b16 %v1232
    %v4823 = vunpack.c.h.b16 %v1232
    %v4824 = vunpack.c.l.b16 %v1233
    %v4825 = vunpack.c.h.b16 %v1233
    %v4826 = vunpack.c.l.b16 %v1234
    %v4827 = vunpack.c.h.b16 %v1234
    %v4828 = vunpack.c.l.b16 %v1235
    %v4829 = vunpack.c.h.b16 %v1235
    %v4830 = vunpack.c.l.b16 %v1236
    %v4831 = vunpack.c.h.b16 %v1236
    %v4832 = vunpack.c.l.b16 %v1237
    %v4833 = vunpack.c.h.b16 %v1237
    %v4834 = vunpack.c.l.b16 %v1238
    %v4835 = vunpack.c.h.b16 %v1238
    %v4836 = vunpack.c.l.b16 %v1239
    %v4837 = vunpack.c.h.b16 %v1239
    %v4838 = vunpack.c.l.b16 %v1240
    %v4839 = vunpack.c.h.b16 %v1240
    %v4840 = vunpack.c.l.b16 %v1241
    %v4841 = vunpack.c.h.b16 %v1241
    %v4842 = vunpack.c.l.b16 %v1242
    %v4843 = vunpack.c.h.b16 %v1242
    %v4844 = vunpack.c.l.b16 %v1243
    %v4845 = vunpack.c.h.b16 %v1243
    %v4846 = vunpack.c.l.b16 %v1244
    %v4847 = vunpack.c.h.b16 %v1244
    %v4848 = vunpack.c.l.b16 %v1245
    %v4849 = vunpack.c.h.b16 %v1245
    %v4850 = vunpack.c.l.b16 %v1246
    %v4851 = vunpack.c.h.b16 %v1246
    %v4852 = vunpack.c.l.b16 %v1247
    %v4853 = vunpack.c.h.b16 %v1247
    %v4854 = vunpack.c.l.b16 %v1248
    %v4855 = vunpack.c.h.b16 %v1248
    %v4856 = vunpack.c.l.b16 %v1249
    %v4857 = vunpack.c.h.b16 %v1249
    %v4858 = vunpack.c.l.b16 %v1250
    %v4859 = vunpack.c.h.b16 %v1250
    %v4860 = vunpack.c.l.b16 %v1251
    %v4861 = vunpack.c.h.b16 %v1251
    %v4862 = vunpack.c.l.b16 %v1252
    %v4863 = vunpack.c.h.b16 %v1252
    %v4864 = vunpack.c.l.b16 %v1253
    %v4865 = vunpack.c.h.b16 %v1253
    %v4866 = vunpack.c.l.b16 %v1254
    %v4867 = vunpack.c.h.b16 %v1254
    %v4868 = vunpack.c.l.b16 %v1255
    %v4869 = vunpack.c.h.b16 %v1255
    %v4870 = vunpack.c.l.b16 %v1256
    %v4871 = vunpack.c.h.b16 %v1256
    %v4872 = vunpack.c.l.b16 %v1257
    %v4873 = vunpack.c.h.b16 %v1257
    %v4874 = vunpack.c.l.b16 %v1258
    %v4875 = vunpack.c.h.b16 %v1258
    %v4876 = vunpack.c.l.b16 %v1259
    %v4877 = vunpack.c.h.b16 %v1259
    %v4878 = vunpack.c.l.b16 %v1260
    %v4879 = vunpack.c.h.b16 %v1260
    %v4880 = vunpack.c.l.b16 %v1261
    %v4881 = vunpack.c.h.b16 %v1261
    %v4882 = vunpack.c.l.b16 %v1262
    %v4883 = vunpack.c.h.b16 %v1262
    %v4884 = vunpack.c.l.b16 %v1263
    %v4885 = vunpack.c.h.b16 %v1263
    %v4886 = vunpack.c.l.b16 %v1264
    %v4887 = vunpack.c.h.b16 %v1264
    %v4888 = vunpack.c.l.b16 %v1265
    %v4889 = vunpack.c.h.b16 %v1265
    %v4890 = vunpack.c.l.b16 %v1266
    %v4891 = vunpack.c.h.b16 %v1266
    %v4892 = vunpack.c.l.b16 %v1267
    %v4893 = vunpack.c.h.b16 %v1267
    %v4894 = vunpack.c.l.b16 %v1268
    %v4895 = vunpack.c.h.b16 %v1268
    %v4896 = vunpack.c.l.b16 %v1269
    %v4897 = vunpack.c.h.b16 %v1269
    %v4898 = vunpack.c.l.b16 %v1270
    %v4899 = vunpack.c.h.b16 %v1270
    %v4900 = vunpack.c.l.b16 %v1271
    %v4901 = vunpack.c.h.b16 %v1271
    %v4902 = vunpack.c.l.b16 %v1272
    %v4903 = vunpack.c.h.b16 %v1272
    %v4904 = vunpack.c.l.b16 %v1273
    %v4905 = vunpack.c.h.b16 %v1273
    %v4906 = vunpack.c.l.b16 %v1274
    %v4907 = vunpack.c.h.b16 %v1274
    %v4908 = vunpack.c.l.b16 %v1275
    %v4909 = vunpack.c.h.b16 %v1275
    %v4910 = vunpack.c.l.b16 %v1276
    %v4911 = vunpack.c.h.b16 %v1276
    %v4912 = vunpack.c.l.b16 %v1277
    %v4913 = vunpack.c.h.b16 %v1277
    %v4914 = vunpack.c.l.b16 %v1278
    %v4915 = vunpack.c.h.b16 %v1278
    %v4916 = vunpack.c.l.b16 %v1279
    %v4917 = vunpack.c.h.b16 %v1279
    %v4918 = vunpack.c.l.b16 %v1280
    %v4919 = vunpack.c.h.b16 %v1280
    %v4920 = vunpack.c.l.b16 %v1281
    %v4921 = vunpack.c.h.b16 %v1281
    %v4922 = vunpack.c.l.b16 %v1282
    %v4923 = vunpack.c.h.b16 %v1282
    %v4924 = vunpack.c.l.b16 %v1283
    %v4925 = vunpack.c.h.b16 %v1283
    %v4926 = vunpack.c.l.b16 %v1284
    %v4927 = vunpack.c.h.b16 %v1284
    %v4928 = vunpack.c.l.b16 %v1285
    %v4929 = vunpack.c.h.b16 %v1285
    %v4930 = vunpack.c.l.b16 %v1286
    %v4931 = vunpack.c.h.b16 %v1286
    %v4932 = vunpack.c.l.b16 %v1287
    %v4933 = vunpack.c.h.b16 %v1287
    %v4934 = vunpack.c.l.b16 %v1288
    %v4935 = vunpack.c.h.b16 %v1288
    %v4936 = vunpack.c.l.b16 %v1289
    %v4937 = vunpack.c.h.b16 %v1289
    %v4938 = vunpack.c.l.b16 %v1290
    %v4939 = vunpack.c.h.b16 %v1290
    %v4940 = vunpack.c.l.b16 %v1291
    %v4941 = vunpack.c.h.b16 %v1291
    %v4942 = vunpack.c.l.b16 %v1292
    %v4943 = vunpack.c.h.b16 %v1292
    %v4944 = vunpack.c.l.b16 %v1293
    %v4945 = vunpack.c.h.b16 %v1293
    %v4946 = vunpack.c.l.b16 %v1294
    %v4947 = vunpack.c.h.b16 %v1294
    %v4948 = vunpack.c.l.b16 %v1295
    %v4949 = vunpack.c.h.b16 %v1295
    %v4950 = vunpack.c.l.b16 %v1296
    %v4951 = vunpack.c.h.b16 %v1296
    %v4952 = vunpack.c.l.b16 %v1297
    %v4953 = vunpack.c.h.b16 %v1297
    %v4954 = vunpack.c.l.b16 %v1298
    %v4955 = vunpack.c.h.b16 %v1298
    %v4956 = vunpack.c.l.b16 %v1299
    %v4957 = vunpack.c.h.b16 %v1299
    %v4958 = vunpack.c.l.b16 %v1300
    %v4959 = vunpack.c.h.b16 %v1300
    %v4960 = vunpack.c.l.b16 %v1301
    %v4961 = vunpack.c.h.b16 %v1301
    %v4962 = vunpack.c.l.b16 %v1302
    %v4963 = vunpack.c.h.b16 %v1302
    %v4964 = vunpack.c.l.b16 %v1303
    %v4965 = vunpack.c.h.b16 %v1303
    %v4966 = vunpack.c.l.b16 %v1304
    %v4967 = vunpack.c.h.b16 %v1304
    %v4968 = vunpack.c.l.b16 %v1305
    %v4969 = vunpack.c.h.b16 %v1305
    %v4970 = vunpack.c.l.b16 %v1306
    %v4971 = vunpack.c.h.b16 %v1306
    %v4972 = vunpack.c.l.b16 %v1307
    %v4973 = vunpack.c.h.b16 %v1307
    %v4974 = vunpack.c.l.b16 %v1308
    %v4975 = vunpack.c.h.b16 %v1308
    %v4976 = vunpack.c.l.b16 %v1309
    %v4977 = vunpack.c.h.b16 %v1309
    %v4978 = vunpack.c.l.b16 %v1310
    %v4979 = vunpack.c.h.b16 %v1310
    %v4980 = vunpack.c.l.b16 %v1311
    %v4981 = vunpack.c.h.b16 %v1311
    %v4982 = vunpack.c.l.b16 %v1312
    %v4983 = vunpack.c.h.b16 %v1312
    %v4984 = vunpack.c.l.b16 %v1313
    %v4985 = vunpack.c.h.b16 %v1313
    %v4986 = vunpack.c.l.b16 %v1314
    %v4987 = vunpack.c.h.b16 %v1314
    %v4988 = vunpack.c.l.b16 %v1315
    %v4989 = vunpack.c.h.b16 %v1315
    %v4990 = vunpack.c.l.b16 %v1316
    %v4991 = vunpack.c.h.b16 %v1316
    %v4992 = vunpack.c.l.b16 %v1317
    %v4993 = vunpack.c.h.b16 %v1317
    %v4994 = vunpack.c.l.b16 %v1318
    %v4995 = vunpack.c.h.b16 %v1318
    %v4996 = vunpack.c.l.b16 %v1319
    %v4997 = vunpack.c.h.b16 %v1319
    %v4998 = vunpack.c.l.b16 %v1320
    %v4999 = vunpack.c.h.b16 %v1320
    %v5000 = vunpack.c.l.b16 %v1321
    %v5001 = vunpack.c.h.b16 %v1321
    %v5002 = vunpack.c.l.b16 %v1322
    %v5003 = vunpack.c.h.b16 %v1322
    %v5004 = vunpack.c.l.b16 %v1323
    %v5005 = vunpack.c.h.b16 %v1323
    %v5006 = vunpack.c.l.b16 %v1324
    %v5007 = vunpack.c.h.b16 %v1324
    %v5008 = vunpack.c.l.b16 %v1325
    %v5009 = vunpack.c.h.b16 %v1325
    %v5010 = vunpack.c.l.b16 %v1326
    %v5011 = vunpack.c.h.b16 %v1326
    %v5012 = vunpack.c.l.b16 %v1327
    %v5013 = vunpack.c.h.b16 %v1327
    %v5014 = vunpack.c.l.b16 %v1328
    %v5015 = vunpack.c.h.b16 %v1328
    %v5016 = vunpack.c.l.b16 %v1329
    %v5017 = vunpack.c.h.b16 %v1329
    %v5018 = vunpack.c.l.b16 %v1330
    %v5019 = vunpack.c.h.b16 %v1330
    %v5020 = vunpack.c.l.b16 %v1331
    %v5021 = vunpack.c.h.b16 %v1331
    %v5022 = vunpack.c.l.b16 %v1332
    %v5023 = vunpack.c.h.b16 %v1332
    %v5024 = vunpack.c.l.b16 %v1333
    %v5025 = vunpack.c.h.b16 %v1333
    %v5026 = vunpack.c.l.b16 %v1334
    %v5027 = vunpack.c.h.b16 %v1334
    %v5028 = vunpack.c.l.b16 %v1335
    %v5029 = vunpack.c.h.b16 %v1335
    %v5030 = vunpack.c.l.b16 %v1336
    %v5031 = vunpack.c.h.b16 %v1336
    %v5032 = vunpack.c.l.b16 %v1337
    %v5033 = vunpack.c.h.b16 %v1337
    %v5034 = vunpack.c.l.b16 %v1338
    %v5035 = vunpack.c.h.b16 %v1338
    %v5036 = vunpack.c.l.b16 %v1339
    %v5037 = vunpack.c.h.b16 %v1339
    %v5038 = vunpack.c.l.b16 %v1340
    %v5039 = vunpack.c.h.b16 %v1340
    %v5040 = vunpack.c.l.b16 %v1341
    %v5041 = vunpack.c.h.b16 %v1341
    %v5042 = vunpack.c.l.b16 %v1342
    %v5043 = vunpack.c.h.b16 %v1342
    %v5044 = vunpack.c.l.b16 %v1343
    %v5045 = vunpack.c.h.b16 %v1343
    %v5046 = vunpack.c.l.b16 %v1344
    %v5047 = vunpack.c.h.b16 %v1344
    %v5048 = vunpack.c.l.b16 %v1345
    %v5049 = vunpack.c.h.b16 %v1345
    %v5050 = vunpack.c.l.b16 %v1346
    %v5051 = vunpack.c.h.b16 %v1346
    %v5052 = vunpack.c.l.b16 %v1347
    %v5053 = vunpack.c.h.b16 %v1347
    %v5054 = vunpack.c.l.b16 %v1348
    %v5055 = vunpack.c.h.b16 %v1348
    %v5056 = vunpack.c.l.b16 %v1349
    %v5057 = vunpack.c.h.b16 %v1349
    %v5058 = vunpack.c.l.b16 %v1350
    %v5059 = vunpack.c.h.b16 %v1350
    %v5060 = vunpack.c.l.b16 %v1351
    %v5061 = vunpack.c.h.b16 %v1351
    %v5062 = vunpack.c.l.b16 %v1352
    %v5063 = vunpack.c.h.b16 %v1352
    %v5064 = vunpack.c.l.b16 %v1353
    %v5065 = vunpack.c.h.b16 %v1353
    %v5066 = vunpack.c.l.b16 %v1354
    %v5067 = vunpack.c.h.b16 %v1354
    %v5068 = vunpack.c.l.b16 %v1355
    %v5069 = vunpack.c.h.b16 %v1355
    %v5070 = vunpack.c.l.b16 %v1356
    %v5071 = vunpack.c.h.b16 %v1356
    %v5072 = vunpack.c.l.b16 %v1357
    %v5073 = vunpack.c.h.b16 %v1357
    %v5074 = vunpack.c.l.b16 %v1358
    %v5075 = vunpack.c.h.b16 %v1358
    %v5076 = vunpack.c.l.b16 %v1359
    %v5077 = vunpack.c.h.b16 %v1359
    %v5078 = vunpack.c.l.b16 %v1360
    %v5079 = vunpack.c.h.b16 %v1360
    %v5080 = vunpack.c.l.b16 %v1361
    %v5081 = vunpack.c.h.b16 %v1361
    %v5082 = vunpack.c.l.b16 %v1362
    %v5083 = vunpack.c.h.b16 %v1362
    %v5084 = vunpack.c.l.b16 %v1363
    %v5085 = vunpack.c.h.b16 %v1363
    %v5086 = vunpack.c.l.b16 %v1364
    %v5087 = vunpack.c.h.b16 %v1364
    %v5088 = vunpack.c.l.b16 %v1365
    %v5089 = vunpack.c.h.b16 %v1365
    %v5090 = vunpack.c.l.b16 %v1366
    %v5091 = vunpack.c.h.b16 %v1366
    %v5092 = vunpack.c.l.b16 %v1367
    %v5093 = vunpack.c.h.b16 %v1367
    %v5094 = vunpack.c.l.b16 %v1368
    %v5095 = vunpack.c.h.b16 %v1368
    %v5096 = vunpack.c.l.b16 %v1369
    %v5097 = vunpack.c.h.b16 %v1369
    %v5098 = vunpack.c.l.b16 %v1370
    %v5099 = vunpack.c.h.b16 %v1370
    %v5100 = vunpack.c.l.b16 %v1371
    %v5101 = vunpack.c.h.b16 %v1371
    %v5102 = vunpack.c.l.b16 %v1372
    %v5103 = vunpack.c.h.b16 %v1372
    %v5104 = vunpack.c.l.b16 %v1373
    %v5105 = vunpack.c.h.b16 %v1373
    %v5106 = vunpack.c.l.b16 %v1374
    %v5107 = vunpack.c.h.b16 %v1374
    %v5108 = vpack.c.b16 %v2684, %v2676
    %v5109 = vpack.c.b16 %v2685, %v2677
    %v5110 = vpack.c.b16 %v2686, %v2678
    %v5111 = vpack.c.b16 %v2687, %v2679
    %v5112 = vpack.c.b16 %v2688, %v2680
    %v5113 = vpack.c.b16 %v2689, %v2681
    %v5114 = vpack.c.b16 %v2690, %v2682
    %v5115 = vpack.c.b16 %v2691, %v2683
    %v5116 = vpack.c.b16 %v2700, %v2692
    %v5117 = vpack.c.b16 %v2701, %v2693
    %v5118 = vpack.c.b16 %v2702, %v2694
    %v5119 = vpack.c.b16 %v2703, %v2695
    %v5120 = vpack.c.b16 %v2704, %v2696
    %v5121 = vpack.c.b16 %v2705, %v2697
    %v5122 = vpack.c.b16 %v2706, %v2698
    %v5123 = vpack.c.b16 %v2707, %v2699
    %v5124 = vpack.c.b16 %v2716, %v2708
    %v5125 = vpack.c.b16 %v2717, %v2709
    %v5126 = vpack.c.b16 %v2718, %v2710
    %v5127 = vpack.c.b16 %v2719, %v2711
    %v5128 = vpack.c.b16 %v2720, %v2712
    %v5129 = vpack.c.b16 %v2721, %v2713
    %v5130 = vpack.c.b16 %v2722, %v2714
    %v5131 = vpack.c.b16 %v2723, %v2715
    %v5132 = vpack.c.b16 %v2732, %v2724
    %v5133 = vpack.c.b16 %v2733, %v2725
    %v5134 = vpack.c.b16 %v2734, %v2726
    %v5135 = vpack.c.b16 %v2735, %v2727
    %v5136 = vpack.c.b16 %v2736, %v2728
    %v5137 = vpack.c.b16 %v2737, %v2729
    %v5138 = vpack.c.b16 %v2738, %v2730
    %v5139 = vpack.c.b16 %v2739, %v2731
    %v5140 = vpack.c.b16 %v2748, %v2740
    %v5141 = vpack.c.b16 %v2749, %v2741
    %v5142 = vpack.c.b16 %v2750, %v2742
    %v5143 = vpack.c.b16 %v2751, %v2743
    %v5144 = vpack.c.b16 %v2752, %v2744
    %v5145 = vpack.c.b16 %v2753, %v2745
    %v5146 = vpack.c.b16 %v2754, %v2746
    %v5147 = vpack.c.b16 %v2755, %v2747
    %v5148 = vpack.c.b16 %v2764, %v2756
    %v5149 = vpack.c.b16 %v2765, %v2757
    %v5150 = vpack.c.b16 %v2766, %v2758
    %v5151 = vpack.c.b16 %v2767, %v2759
    %v5152 = vpack.c.b16 %v2768, %v2760
    %v5153 = vpack.c.b16 %v2769, %v2761
    %v5154 = vpack.c.b16 %v2770, %v2762
    %v5155 = vpack.c.b16 %v2771, %v2763
    %v5156 = vpack.c.b16 %v2780, %v2772
    %v5157 = vpack.c.b16 %v2781, %v2773
    %v5158 = vpack.c.b16 %v2782, %v2774
    %v5159 = vpack.c.b16 %v2783, %v2775
    %v5160 = vpack.c.b16 %v2784, %v2776
    %v5161 = vpack.c.b16 %v2785, %v2777
    %v5162 = vpack.c.b16 %v2786, %v2778
    %v5163 = vpack.c.b16 %v2787, %v2779
    %v5164 = vpack.c.b16 %v2796, %v2788
    %v5165 = vpack.c.b16 %v2797, %v2789
    %v5166 = vpack.c.b16 %v2798, %v2790
    %v5167 = vpack.c.b16 %v2799, %v2791
    %v5168 = vpack.c.b16 %v2800, %v2792
    %v5169 = vpack.c.b16 %v2801, %v2793
    %v5170 = vpack.c.b16 %v2802, %v2794
    %v5171 = vpack.c.b16 %v2803, %v2795
    %v5172 = vpack.c.b16 %v2812, %v2804
    %v5173 = vpack.c.b16 %v2813, %v2805
    %v5174 = vpack.c.b16 %v2814, %v2806
    %v5175 = vpack.c.b16 %v2815, %v2807
    %v5176 = vpack.c.b16 %v2816, %v2808
    %v5177 = vpack.c.b16 %v2817, %v2809
    %v5178 = vpack.c.b16 %v2818, %v2810
    %v5179 = vpack.c.b16 %v2819, %v2811
    %v5180 = vpack.c.b16 %v2828, %v2820
    %v5181 = vpack.c.b16 %v2829, %v2821
    %v5182 = vpack.c.b16 %v2830, %v2822
    %v5183 = vpack.c.b16 %v2831, %v2823
    %v5184 = vpack.c.b16 %v2832, %v2824
    %v5185 = vpack.c.b16 %v2833, %v2825
    %v5186 = vpack.c.b16 %v2834, %v2826
    %v5187 = vpack.c.b16 %v2835, %v2827
    %v5188 = vpack.c.b16 %v2844, %v2836
    %v5189 = vpack.c.b16 %v2845, %v2837
    %v5190 = vpack.c.b16 %v2846, %v2838
    %v5191 = vpack.c.b16 %v2847, %v2839
    %v5192 = vpack.c.b16 %v2848, %v2840
    %v5193 = vpack.c.b16 %v2849, %v2841
    %v5194 = vpack.c.b16 %v2850, %v2842
    %v5195 = vpack.c.b16 %v2851, %v2843
    %v5196 = vpack.c.b16 %v2860, %v2852
    %v5197 = vpack.c.b16 %v2861, %v2853
    %v5198 = vpack.c.b16 %v2862, %v2854
    %v5199 = vpack.c.b16 %v2863, %v2855
    %v5200 = vpack.c.b16 %v2864, %v2856
    %v5201 = vpack.c.b16 %v2865, %v2857
    %v5202 = vpack.c.b16 %v2866, %v2858
    %v5203 = vpack.c.b16 %v2867, %v2859
    %v5204 = vpack.c.b16 %v2876, %v2868
    %v5205 = vpack.c.b16 %v2877, %v2869
    %v5206 = vpack.c.b16 %v2878, %v2870
    %v5207 = vpack.c.b16 %v2879, %v2871
    %v5208 = vpack.c.b16 %v2880, %v2872
    %v5209 = vpack.c.b16 %v2881, %v2873
    %v5210 = vpack.c.b16 %v2882, %v2874
    %v5211 = vpack.c.b16 %v2883, %v2875
    %v5212 = vpack.c.b16 %v2892, %v2884
    %v5213 = vpack.c.b16 %v2893, %v2885
    %v5214 = vpack.c.b16 %v2894, %v2886
    %v5215 = vpack.c.b16 %v2895, %v2887
    %v5216 = vpack.c.b16 %v2896, %v2888
    %v5217 = vpack.c.b16 %v2897, %v2889
    %v5218 = vpack.c.b16 %v2898, %v2890
    %v5219 = vpack.c.b16 %v2899, %v2891
    %v5220 = vpack.c.b16 %v2908, %v2900
    %v5221 = vpack.c.b16 %v2909, %v2901
    %v5222 = vpack.c.b16 %v2910, %v2902
    %v5223 = vpack.c.b16 %v2911, %v2903
    %v5224 = vpack.c.b16 %v2912, %v2904
    %v5225 = vpack.c.b16 %v2913, %v2905
    %v5226 = vpack.c.b16 %v2914, %v2906
    %v5227 = vpack.c.b16 %v2915, %v2907
    %v5228 = vpack.c.b16 %v2924, %v2916
    %v5229 = vpack.c.b16 %v2925, %v2917
    %v5230 = vpack.c.b16 %v2926, %v2918
    %v5231 = vpack.c.b16 %v2927, %v2919
    %v5232 = vpack.c.b16 %v2928, %v2920
    %v5233 = vpack.c.b16 %v2929, %v2921
    %v5234 = vpack.c.b16 %v2930, %v2922
    %v5235 = vpack.c.b16 %v2931, %v2923
    %v5236 = vpack.c.b16 %v2940, %v2932
    %v5237 = vpack.c.b16 %v2941, %v2933
    %v5238 = vpack.c.b16 %v2942, %v2934
    %v5239 = vpack.c.b16 %v2943, %v2935
    %v5240 = vpack.c.b16 %v2944, %v2936
    %v5241 = vpack.c.b16 %v2945, %v2937
    %v5242 = vpack.c.b16 %v2946, %v2938
    %v5243 = vpack.c.b16 %v2947, %v2939
    %v5244 = vpack.c.b16 %v2956, %v2948
    %v5245 = vpack.c.b16 %v2957, %v2949
    %v5246 = vpack.c.b16 %v2958, %v2950
    %v5247 = vpack.c.b16 %v2959, %v2951
    %v5248 = vpack.c.b16 %v2960, %v2952
    %v5249 = vpack.c.b16 %v2961, %v2953
    %v5250 = vpack.c.b16 %v2962, %v2954
    %v5251 = vpack.c.b16 %v2963, %v2955
    %v5252 = vpack.c.b16 %v2972, %v2964
    %v5253 = vpack.c.b16 %v2973, %v2965
    %v5254 = vpack.c.b16 %v2974, %v2966
    %v5255 = vpack.c.b16 %v2975, %v2967
    %v5256 = vpack.c.b16 %v2976, %v2968
    %v5257 = vpack.c.b16 %v2977, %v2969
    %v5258 = vpack.c.b16 %v2978, %v2970
    %v5259 = vpack.c.b16 %v2979, %v2971
    %v5260 = vpack.c.b16 %v2988, %v2980
    %v5261 = vpack.c.b16 %v2989, %v2981
    %v5262 = vpack.c.b16 %v2990, %v2982
    %v5263 = vpack.c.b16 %v2991, %v2983
    %v5264 = vpack.c.b16 %v2992, %v2984
    %v5265 = vpack.c.b16 %v2993, %v2985
    %v5266 = vpack.c.b16 %v2994, %v2986
    %v5267 = vpack.c.b16 %v2995, %v2987
    %v5268 = vpack.c.b16 %v3004, %v2996
    %v5269 = vpack.c.b16 %v3005, %v2997
    %v5270 = vpack.c.b16 %v3006, %v2998
    %v5271 = vpack.c.b16 %v3007, %v2999
    %v5272 = vpack.c.b16 %v3008, %v3000
    %v5273 = vpack.c.b16 %v3009, %v3001
    %v5274 = vpack.c.b16 %v3010, %v3002
    %v5275 = vpack.c.b16 %v3011, %v3003
    %v5276 = vpack.c.b16 %v3020, %v3012
    %v5277 = vpack.c.b16 %v3021, %v3013
    %v5278 = vpack.c.b16 %v3022, %v3014
    %v5279 = vpack.c.b16 %v3023, %v3015
    %v5280 = vpack.c.b16 %v3024, %v3016
    %v5281 = vpack.c.b16 %v3025, %v3017
    %v5282 = vpack.c.b16 %v3026, %v3018
    %v5283 = vpack.c.b16 %v3027, %v3019
    %v5284 = vpack.c.b16 %v3036, %v3028
    %v5285 = vpack.c.b16 %v3037, %v3029
    %v5286 = vpack.c.b16 %v3038, %v3030
    %v5287 = vpack.c.b16 %v3039, %v3031
    %v5288 = vpack.c.b16 %v3040, %v3032
    %v5289 = vpack.c.b16 %v3041, %v3033
    %v5290 = vpack.c.b16 %v3042, %v3034
    %v5291 = vpack.c.b16 %v3043, %v3035
    %v5292 = vpack.c.b16 %v3052, %v3044
    %v5293 = vpack.c.b16 %v3053, %v3045
    %v5294 = vpack.c.b16 %v3054, %v3046
    %v5295 = vpack.c.b16 %v3055, %v3047
    %v5296 = vpack.c.b16 %v3056, %v3048
    %v5297 = vpack.c.b16 %v3057, %v3049
    %v5298 = vpack.c.b16 %v3058, %v3050
    %v5299 = vpack.c.b16 %v3059, %v3051
    %v5300 = vpack.c.b16 %v3068, %v3060
    %v5301 = vpack.c.b16 %v3069, %v3061
    %v5302 = vpack.c.b16 %v3070, %v3062
    %v5303 = vpack.c.b16 %v3071, %v3063
    %v5304 = vpack.c.b16 %v3072, %v3064
    %v5305 = vpack.c.b16 %v3073, %v3065
    %v5306 = vpack.c.b16 %v3074, %v3066
    %v5307 = vpack.c.b16 %v3075, %v3067
    %v5308 = vpack.c.b16 %v3084, %v3076
    %v5309 = vpack.c.b16 %v3085, %v3077
    %v5310 = vpack.c.b16 %v3086, %v3078
    %v5311 = vpack.c.b16 %v3087, %v3079
    %v5312 = vpack.c.b16 %v3088, %v3080
    %v5313 = vpack.c.b16 %v3089, %v3081
    %v5314 = vpack.c.b16 %v3090, %v3082
    %v5315 = vpack.c.b16 %v3091, %v3083
    %v5316 = vpack.c.b16 %v3100, %v3092
    %v5317 = vpack.c.b16 %v3101, %v3093
    %v5318 = vpack.c.b16 %v3102, %v3094
    %v5319 = vpack.c.b16 %v3103, %v3095
    %v5320 = vpack.c.b16 %v3104, %v3096
    %v5321 = vpack.c.b16 %v3105, %v3097
    %v5322 = vpack.c.b16 %v3106, %v3098
    %v5323 = vpack.c.b16 %v3107, %v3099
    %v5324 = vpack.c.b16 %v3116, %v3108
    %v5325 = vpack.c.b16 %v3117, %v3109
    %v5326 = vpack.c.b16 %v3118, %v3110
    %v5327 = vpack.c.b16 %v3119, %v3111
    %v5328 = vpack.c.b16 %v3120, %v3112
    %v5329 = vpack.c.b16 %v3121, %v3113
    %v5330 = vpack.c.b16 %v3122, %v3114
    %v5331 = vpack.c.b16 %v3123, %v3115
    %v5332 = vpack.c.b16 %v3132, %v3124
    %v5333 = vpack.c.b16 %v3133, %v3125
    %v5334 = vpack.c.b16 %v3134, %v3126
    %v5335 = vpack.c.b16 %v3135, %v3127
    %v5336 = vpack.c.b16 %v3136, %v3128
    %v5337 = vpack.c.b16 %v3137, %v3129
    %v5338 = vpack.c.b16 %v3138, %v3130
    %v5339 = vpack.c.b16 %v3139, %v3131
    %v5340 = vpack.c.b16 %v3148, %v3140
    %v5341 = vpack.c.b16 %v3149, %v3141
    %v5342 = vpack.c.b16 %v3150, %v3142
    %v5343 = vpack.c.b16 %v3151, %v3143
    %v5344 = vpack.c.b16 %v3152, %v3144
    %v5345 = vpack.c.b16 %v3153, %v3145
    %v5346 = vpack.c.b16 %v3154, %v3146
    %v5347 = vpack.c.b16 %v3155, %v3147
    %v5348 = vpack.c.b16 %v3164, %v3156
    %v5349 = vpack.c.b16 %v3165, %v3157
    %v5350 = vpack.c.b16 %v3166, %v3158
    %v5351 = vpack.c.b16 %v3167, %v3159
    %v5352 = vpack.c.b16 %v3168, %v3160
    %v5353 = vpack.c.b16 %v3169, %v3161
    %v5354 = vpack.c.b16 %v3170, %v3162
    %v5355 = vpack.c.b16 %v3171, %v3163
    %v5356 = vpack.c.b16 %v3180, %v3172
    %v5357 = vpack.c.b16 %v3181, %v3173
    %v5358 = vpack.c.b16 %v3182, %v3174
    %v5359 = vpack.c.b16 %v3183, %v3175
    %v5360 = vpack.c.b16 %v3184, %v3176
    %v5361 = vpack.c.b16 %v3185, %v3177
    %v5362 = vpack.c.b16 %v3186, %v3178
    %v5363 = vpack.c.b16 %v3187, %v3179
    %v5364 = vpack.c.b16 %v3196, %v3188
    %v5365 = vpack.c.b16 %v3197, %v3189
    %v5366 = vpack.c.b16 %v3198, %v3190
    %v5367 = vpack.c.b16 %v3199, %v3191
    %v5368 = vpack.c.b16 %v3200, %v3192
    %v5369 = vpack.c.b16 %v3201, %v3193
    %v5370 = vpack.c.b16 %v3202, %v3194
    %v5371 = vpack.c.b16 %v3203, %v3195
    %v5372 = vpack.c.b16 %v3212, %v3204
    %v5373 = vpack.c.b16 %v3213, %v3205
    %v5374 = vpack.c.b16 %v3214, %v3206
    %v5375 = vpack.c.b16 %v3215, %v3207
    %v5376 = vpack.c.b16 %v3216, %v3208
    %v5377 = vpack.c.b16 %v3217, %v3209
    %v5378 = vpack.c.b16 %v3218, %v3210
    %v5379 = vpack.c.b16 %v3219, %v3211
    %v5380 = vpack.c.b16 %v3228, %v3220
    %v5381 = vpack.c.b16 %v3229, %v3221
    %v5382 = vpack.c.b16 %v3230, %v3222
    %v5383 = vpack.c.b16 %v3231, %v3223
    %v5384 = vpack.c.b16 %v3232, %v3224
    %v5385 = vpack.c.b16 %v3233, %v3225
    %v5386 = vpack.c.b16 %v3234, %v3226
    %v5387 = vpack.c.b16 %v3235, %v3227
    %v5388 = vpack.c.b16 %v3244, %v3236
    %v5389 = vpack.c.b16 %v3245, %v3237
    %v5390 = vpack.c.b16 %v3246, %v3238
    %v5391 = vpack.c.b16 %v3247, %v3239
    %v5392 = vpack.c.b16 %v3248, %v3240
    %v5393 = vpack.c.b16 %v3249, %v3241
    %v5394 = vpack.c.b16 %v3250, %v3242
    %v5395 = vpack.c.b16 %v3251, %v3243
    %v5396 = vpack.c.b16 %v3260, %v3252
    %v5397 = vpack.c.b16 %v3261, %v3253
    %v5398 = vpack.c.b16 %v3262, %v3254
    %v5399 = vpack.c.b16 %v3263, %v3255
    %v5400 = vpack.c.b16 %v3264, %v3256
    %v5401 = vpack.c.b16 %v3265, %v3257
    %v5402 = vpack.c.b16 %v3266, %v3258
    %v5403 = vpack.c.b16 %v3267, %v3259
    %v5404 = vpack.c.b16 %v3276, %v3268
    %v5405 = vpack.c.b16 %v3277, %v3269
    %v5406 = vpack.c.b16 %v3278, %v3270
    %v5407 = vpack.c.b16 %v3279, %v3271
    %v5408 = vpack.c.b16 %v3280, %v3272
    %v5409 = vpack.c.b16 %v3281, %v3273
    %v5410 = vpack.c.b16 %v3282, %v3274
    %v5411 = vpack.c.b16 %v3283, %v3275
    %v5412 = vpack.c.b16 %v3292, %v3284
    %v5413 = vpack.c.b16 %v3293, %v3285
    %v5414 = vpack.c.b16 %v3294, %v3286
    %v5415 = vpack.c.b16 %v3295, %v3287
    %v5416 = vpack.c.b16 %v3296, %v3288
    %v5417 = vpack.c.b16 %v3297, %v3289
    %v5418 = vpack.c.b16 %v3298, %v3290
    %v5419 = vpack.c.b16 %v3299, %v3291
    %v5420 = vpack.c.b16 %v3308, %v3300
    %v5421 = vpack.c.b16 %v3309, %v3301
    %v5422 = vpack.c.b16 %v3310, %v3302
    %v5423 = vpack.c.b16 %v3311, %v3303
    %v5424 = vpack.c.b16 %v3312, %v3304
    %v5425 = vpack.c.b16 %v3313, %v3305
    %v5426 = vpack.c.b16 %v3314, %v3306
    %v5427 = vpack.c.b16 %v3315, %v3307
    %v5428 = vpack.c.b16 %v3324, %v3316
    %v5429 = vpack.c.b16 %v3325, %v3317
    %v5430 = vpack.c.b16 %v3326, %v3318
    %v5431 = vpack.c.b16 %v3327, %v3319
    %v5432 = vpack.c.b16 %v3328, %v3320
    %v5433 = vpack.c.b16 %v3329, %v3321
    %v5434 = vpack.c.b16 %v3330, %v3322
    %v5435 = vpack.c.b16 %v3331, %v3323
    %v5436 = vpack.c.b16 %v3340, %v3332
    %v5437 = vpack.c.b16 %v3341, %v3333
    %v5438 = vpack.c.b16 %v3342, %v3334
    %v5439 = vpack.c.b16 %v3343, %v3335
    %v5440 = vpack.c.b16 %v3344, %v3336
    %v5441 = vpack.c.b16 %v3345, %v3337
    %v5442 = vpack.c.b16 %v3346, %v3338
    %v5443 = vpack.c.b16 %v3347, %v3339
    %v5444 = vpack.c.b16 %v3356, %v3348
    %v5445 = vpack.c.b16 %v3357, %v3349
    %v5446 = vpack.c.b16 %v3358, %v3350
    %v5447 = vpack.c.b16 %v3359, %v3351
    %v5448 = vpack.c.b16 %v3360, %v3352
    %v5449 = vpack.c.b16 %v3361, %v3353
    %v5450 = vpack.c.b16 %v3362, %v3354
    %v5451 = vpack.c.b16 %v3363, %v3355
    %v5452 = vpack.c.b16 %v3372, %v3364
    %v5453 = vpack.c.b16 %v3373, %v3365
    %v5454 = vpack.c.b16 %v3374, %v3366
    %v5455 = vpack.c.b16 %v3375, %v3367
    %v5456 = vpack.c.b16 %v3376, %v3368
    %v5457 = vpack.c.b16 %v3377, %v3369
    %v5458 = vpack.c.b16 %v3378, %v3370
    %v5459 = vpack.c.b16 %v3379, %v3371
    %v5460 = vpack.c.b16 %v3388, %v3380
    %v5461 = vpack.c.b16 %v3389, %v3381
    %v5462 = vpack.c.b16 %v3390, %v3382
    %v5463 = vpack.c.b16 %v3391, %v3383
    %v5464 = vpack.c.b16 %v3392, %v3384
    %v5465 = vpack.c.b16 %v3393, %v3385
    %v5466 = vpack.c.b16 %v3394, %v3386
    %v5467 = vpack.c.b16 %v3395, %v3387
    %v5468 = vpack.c.b16 %v3404, %v3396
    %v5469 = vpack.c.b16 %v3405, %v3397
    %v5470 = vpack.c.b16 %v3406, %v3398
    %v5471 = vpack.c.b16 %v3407, %v3399
    %v5472 = vpack.c.b16 %v3408, %v3400
    %v5473 = vpack.c.b16 %v3409, %v3401
    %v5474 = vpack.c.b16 %v3410, %v3402
    %v5475 = vpack.c.b16 %v3411, %v3403
    %v5476 = vpack.c.b16 %v3420, %v3412
    %v5477 = vpack.c.b16 %v3421, %v3413
    %v5478 = vpack.c.b16 %v3422, %v3414
    %v5479 = vpack.c.b16 %v3423, %v3415
    %v5480 = vpack.c.b16 %v3424, %v3416
    %v5481 = vpack.c.b16 %v3425, %v3417
    %v5482 = vpack.c.b16 %v3426, %v3418
    %v5483 = vpack.c.b16 %v3427, %v3419
    %v5484 = vpack.c.b16 %v3436, %v3428
    %v5485 = vpack.c.b16 %v3437, %v3429
    %v5486 = vpack.c.b16 %v3438, %v3430
    %v5487 = vpack.c.b16 %v3439, %v3431
    %v5488 = vpack.c.b16 %v3440, %v3432
    %v5489 = vpack.c.b16 %v3441, %v3433
    %v5490 = vpack.c.b16 %v3442, %v3434
    %v5491 = vpack.c.b16 %v3443, %v3435
    %v5492 = vpack.c.b16 %v3452, %v3444
    %v5493 = vpack.c.b16 %v3453, %v3445
    %v5494 = vpack.c.b16 %v3454, %v3446
    %v5495 = vpack.c.b16 %v3455, %v3447
    %v5496 = vpack.c.b16 %v3456, %v3448
    %v5497 = vpack.c.b16 %v3457, %v3449
    %v5498 = vpack.c.b16 %v3458, %v3450
    %v5499 = vpack.c.b16 %v3459, %v3451
    %v5500 = vpack.c.b16 %v3468, %v3460
    %v5501 = vpack.c.b16 %v3469, %v3461
    %v5502 = vpack.c.b16 %v3470, %v3462
    %v5503 = vpack.c.b16 %v3471, %v3463
    %v5504 = vpack.c.b16 %v3472, %v3464
    %v5505 = vpack.c.b16 %v3473, %v3465
    %v5506 = vpack.c.b16 %v3474, %v3466
    %v5507 = vpack.c.b16 %v3475, %v3467
    %v5508 = vpack.c.b16 %v3484, %v3476
    %v5509 = vpack.c.b16 %v3485, %v3477
    %v5510 = vpack.c.b16 %v3486, %v3478
    %v5511 = vpack.c.b16 %v3487, %v3479
    %v5512 = vpack.c.b16 %v3488, %v3480
    %v5513 = vpack.c.b16 %v3489, %v3481
    %v5514 = vpack.c.b16 %v3490, %v3482
    %v5515 = vpack.c.b16 %v3491, %v3483
    %v5516 = vpack.c.b16 %v3500, %v3492
    %v5517 = vpack.c.b16 %v3501, %v3493
    %v5518 = vpack.c.b16 %v3502, %v3494
    %v5519 = vpack.c.b16 %v3503, %v3495
    %v5520 = vpack.c.b16 %v3504, %v3496
    %v5521 = vpack.c.b16 %v3505, %v3497
    %v5522 = vpack.c.b16 %v3506, %v3498
    %v5523 = vpack.c.b16 %v3507, %v3499
    %v5524 = vpack.c.b16 %v3516, %v3508
    %v5525 = vpack.c.b16 %v3517, %v3509
    %v5526 = vpack.c.b16 %v3518, %v3510
    %v5527 = vpack.c.b16 %v3519, %v3511
    %v5528 = vpack.c.b16 %v3520, %v3512
    %v5529 = vpack.c.b16 %v3521, %v3513
    %v5530 = vpack.c.b16 %v3522, %v3514
    %v5531 = vpack.c.b16 %v3523, %v3515
    %v5532 = vpack.c.b16 %v3532, %v3524
    %v5533 = vpack.c.b16 %v3533, %v3525
    %v5534 = vpack.c.b16 %v3534, %v3526
    %v5535 = vpack.c.b16 %v3535, %v3527
    %v5536 = vpack.c.b16 %v3536, %v3528
    %v5537 = vpack.c.b16 %v3537, %v3529
    %v5538 = vpack.c.b16 %v3538, %v3530
    %v5539 = vpack.c.b16 %v3539, %v3531
    %v5540 = vpack.c.b16 %v3548, %v3540
    %v5541 = vpack.c.b16 %v3549, %v3541
    %v5542 = vpack.c.b16 %v3550, %v3542
    %v5543 = vpack.c.b16 %v3551, %v3543
    %v5544 = vpack.c.b16 %v3552, %v3544
    %v5545 = vpack.c.b16 %v3553, %v3545
    %v5546 = vpack.c.b16 %v3554, %v3546
    %v5547 = vpack.c.b16 %v3555, %v3547
    %v5548 = vpack.c.b16 %v3564, %v3556
    %v5549 = vpack.c.b16 %v3565, %v3557
    %v5550 = vpack.c.b16 %v3566, %v3558
    %v5551 = vpack.c.b16 %v3567, %v3559
    %v5552 = vpack.c.b16 %v3568, %v3560
    %v5553 = vpack.c.b16 %v3569, %v3561
    %v5554 = vpack.c.b16 %v3570, %v3562
    %v5555 = vpack.c.b16 %v3571, %v3563
    %v5556 = vpack.c.b16 %v3580, %v3572
    %v5557 = vpack.c.b16 %v3581, %v3573
    %v5558 = vpack.c.b16 %v3582, %v3574
    %v5559 = vpack.c.b16 %v3583, %v3575
    %v5560 = vpack.c.b16 %v3584, %v3576
    %v5561 = vpack.c.b16 %v3585, %v3577
    %v5562 = vpack.c.b16 %v3586, %v3578
    %v5563 = vpack.c.b16 %v3587, %v3579
    %v5564 = vpack.c.b16 %v3596, %v3588
    %v5565 = vpack.c.b16 %v3597, %v3589
    %v5566 = vpack.c.b16 %v3598, %v3590
    %v5567 = vpack.c.b16 %v3599, %v3591
    %v5568 = vpack.c.b16 %v3600, %v3592
    %v5569 = vpack.c.b16 %v3601, %v3593
    %v5570 = vpack.c.b16 %v3602, %v3594
    %v5571 = vpack.c.b16 %v3603, %v3595
    %v5572 = vpack.c.b16 %v3612, %v3604
    %v5573 = vpack.c.b16 %v3613, %v3605
    %v5574 = vpack.c.b16 %v3614, %v3606
    %v5575 = vpack.c.b16 %v3615, %v3607
    %v5576 = vpack.c.b16 %v3616, %v3608
    %v5577 = vpack.c.b16 %v3617, %v3609
    %v5578 = vpack.c.b16 %v3618, %v3610
    %v5579 = vpack.c.b16 %v3619, %v3611
    %v5580 = vpack.c.b16 %v3628, %v3620
    %v5581 = vpack.c.b16 %v3629, %v3621
    %v5582 = vpack.c.b16 %v3630, %v3622
    %v5583 = vpack.c.b16 %v3631, %v3623
    %v5584 = vpack.c.b16 %v3632, %v3624
    %v5585 = vpack.c.b16 %v3633, %v3625
    %v5586 = vpack.c.b16 %v3634, %v3626
    %v5587 = vpack.c.b16 %v3635, %v3627
    %v5588 = vpack.c.b16 %v3644, %v3636
    %v5589 = vpack.c.b16 %v3645, %v3637
    %v5590 = vpack.c.b16 %v3646, %v3638
    %v5591 = vpack.c.b16 %v3647, %v3639
    %v5592 = vpack.c.b16 %v3648, %v3640
    %v5593 = vpack.c.b16 %v3649, %v3641
    %v5594 = vpack.c.b16 %v3650, %v3642
    %v5595 = vpack.c.b16 %v3651, %v3643
    %v5596 = vpack.c.b16 %v3660, %v3652
    %v5597 = vpack.c.b16 %v3661, %v3653
    %v5598 = vpack.c.b16 %v3662, %v3654
    %v5599 = vpack.c.b16 %v3663, %v3655
    %v5600 = vpack.c.b16 %v3664, %v3656
    %v5601 = vpack.c.b16 %v3665, %v3657
    %v5602 = vpack.c.b16 %v3666, %v3658
    %v5603 = vpack.c.b16 %v3667, %v3659
    %v5604 = vpack.c.b16 %v3676, %v3668
    %v5605 = vpack.c.b16 %v3677, %v3669
    %v5606 = vpack.c.b16 %v3678, %v3670
    %v5607 = vpack.c.b16 %v3679, %v3671
    %v5608 = vpack.c.b16 %v3680, %v3672
    %v5609 = vpack.c.b16 %v3681, %v3673
    %v5610 = vpack.c.b16 %v3682, %v3674
    %v5611 = vpack.c.b16 %v3683, %v3675
    %v5612 = vpack.c.b16 %v3692, %v3684
    %v5613 = vpack.c.b16 %v3693, %v3685
    %v5614 = vpack.c.b16 %v3694, %v3686
    %v5615 = vpack.c.b16 %v3695, %v3687
    %v5616 = vpack.c.b16 %v3696, %v3688
    %v5617 = vpack.c.b16 %v3697, %v3689
    %v5618 = vpack.c.b16 %v3698, %v3690
    %v5619 = vpack.c.b16 %v3699, %v3691
    %v5620 = vpack.c.b16 %v3708, %v3700
    %v5621 = vpack.c.b16 %v3709, %v3701
    %v5622 = vpack.c.b16 %v3710, %v3702
    %v5623 = vpack.c.b16 %v3711, %v3703
    %v5624 = vpack.c.b16 %v3712, %v3704
    %v5625 = vpack.c.b16 %v3713, %v3705
    %v5626 = vpack.c.b16 %v3714, %v3706
    %v5627 = vpack.c.b16 %v3715, %v3707
    %v5628 = vpack.c.b16 %v3724, %v3716
    %v5629 = vpack.c.b16 %v3725, %v3717
    %v5630 = vpack.c.b16 %v3726, %v3718
    %v5631 = vpack.c.b16 %v3727, %v3719
    %v5632 = vpack.c.b16 %v3728, %v3720
    %v5633 = vpack.c.b16 %v3729, %v3721
    %v5634 = vpack.c.b16 %v3730, %v3722
    %v5635 = vpack.c.b16 %v3731, %v3723
    %v5636 = vpack.c.b16 %v3740, %v3732
    %v5637 = vpack.c.b16 %v3741, %v3733
    %v5638 = vpack.c.b16 %v3742, %v3734
    %v5639 = vpack.c.b16 %v3743, %v3735
    %v5640 = vpack.c.b16 %v3744, %v3736
    %v5641 = vpack.c.b16 %v3745, %v3737
    %v5642 = vpack.c.b16 %v3746, %v3738
    %v5643 = vpack.c.b16 %v3747, %v3739
    %v5644 = vpack.c.b16 %v3756, %v3748
    %v5645 = vpack.c.b16 %v3757, %v3749
    %v5646 = vpack.c.b16 %v3758, %v3750
    %v5647 = vpack.c.b16 %v3759, %v3751
    %v5648 = vpack.c.b16 %v3760, %v3752
    %v5649 = vpack.c.b16 %v3761, %v3753
    %v5650 = vpack.c.b16 %v3762, %v3754
    %v5651 = vpack.c.b16 %v3763, %v3755
    %v5652 = vpack.c.b16 %v3772, %v3764
    %v5653 = vpack.c.b16 %v3773, %v3765
    %v5654 = vpack.c.b16 %v3774, %v3766
    %v5655 = vpack.c.b16 %v3775, %v3767
    %v5656 = vpack.c.b16 %v3776, %v3768
    %v5657 = vpack.c.b16 %v3777, %v3769
    %v5658 = vpack.c.b16 %v3778, %v3770
    %v5659 = vpack.c.b16 %v3779, %v3771
    %v5660 = vpack.c.b16 %v3788, %v3780
    %v5661 = vpack.c.b16 %v3789, %v3781
    %v5662 = vpack.c.b16 %v3790, %v3782
    %v5663 = vpack.c.b16 %v3791, %v3783
    %v5664 = vpack.c.b16 %v3792, %v3784
    %v5665 = vpack.c.b16 %v3793, %v3785
    %v5666 = vpack.c.b16 %v3794, %v3786
    %v5667 = vpack.c.b16 %v3795, %v3787
    %v5668 = vpack.c.b16 %v3804, %v3796
    %v5669 = vpack.c.b16 %v3805, %v3797
    %v5670 = vpack.c.b16 %v3806, %v3798
    %v5671 = vpack.c.b16 %v3807, %v3799
    %v5672 = vpack.c.b16 %v3808, %v3800
    %v5673 = vpack.c.b16 %v3809, %v3801
    %v5674 = vpack.c.b16 %v3810, %v3802
    %v5675 = vpack.c.b16 %v3811, %v3803
    %v5676 = vpack.c.b16 %v3820, %v3812
    %v5677 = vpack.c.b16 %v3821, %v3813
    %v5678 = vpack.c.b16 %v3822, %v3814
    %v5679 = vpack.c.b16 %v3823, %v3815
    %v5680 = vpack.c.b16 %v3824, %v3816
    %v5681 = vpack.c.b16 %v3825, %v3817
    %v5682 = vpack.c.b16 %v3826, %v3818
    %v5683 = vpack.c.b16 %v3827, %v3819
    %v5684 = vpack.c.b16 %v3836, %v3828
    %v5685 = vpack.c.b16 %v3837, %v3829
    %v5686 = vpack.c.b16 %v3838, %v3830
    %v5687 = vpack.c.b16 %v3839, %v3831
    %v5688 = vpack.c.b16 %v3840, %v3832
    %v5689 = vpack.c.b16 %v3841, %v3833
    %v5690 = vpack.c.b16 %v3842, %v3834
    %v5691 = vpack.c.b16 %v3843, %v3835
    %v5692 = vpack.c.b16 %v3852, %v3844
    %v5693 = vpack.c.b16 %v3853, %v3845
    %v5694 = vpack.c.b16 %v3854, %v3846
    %v5695 = vpack.c.b16 %v3855, %v3847
    %v5696 = vpack.c.b16 %v3856, %v3848
    %v5697 = vpack.c.b16 %v3857, %v3849
    %v5698 = vpack.c.b16 %v3858, %v3850
    %v5699 = vpack.c.b16 %v3859, %v3851
    %v5700 = vpack.c.b16 %v3868, %v3860
    %v5701 = vpack.c.b16 %v3869, %v3861
    %v5702 = vpack.c.b16 %v3870, %v3862
    %v5703 = vpack.c.b16 %v3871, %v3863
    %v5704 = vpack.c.b16 %v3872, %v3864
    %v5705 = vpack.c.b16 %v3873, %v3865
    %v5706 = vpack.c.b16 %v3874, %v3866
    %v5707 = vpack.c.b16 %v3875, %v3867
    %v5708 = vpack.c.b16 %v3884, %v3876
    %v5709 = vpack.c.b16 %v3885, %v3877
    %v5710 = vpack.c.b16 %v3886, %v3878
    %v5711 = vpack.c.b16 %v3887, %v3879
    %v5712 = vpack.c.b16 %v3888, %v3880
    %v5713 = vpack.c.b16 %v3889, %v3881
    %v5714 = vpack.c.b16 %v3890, %v3882
    %v5715 = vpack.c.b16 %v3891, %v3883
    %v5716 = vpack.c.b16 %v3900, %v3892
    %v5717 = vpack.c.b16 %v3901, %v3893
    %v5718 = vpack.c.b16 %v3902, %v3894
    %v5719 = vpack.c.b16 %v3903, %v3895
    %v5720 = vpack.c.b16 %v3904, %v3896
    %v5721 = vpack.c.b16 %v3905, %v3897
    %v5722 = vpack.c.b16 %v3906, %v3898
    %v5723 = vpack.c.b16 %v3907, %v3899
    %v5724 = vpack.c.b16 %v3916, %v3908
    %v5725 = vpack.c.b16 %v3917, %v3909
    %v5726 = vpack.c.b16 %v3918, %v3910
    %v5727 = vpack.c.b16 %v3919, %v3911
    %v5728 = vpack.c.b16 %v3920, %v3912
    %v5729 = vpack.c.b16 %v3921, %v3913
    %v5730 = vpack.c.b16 %v3922, %v3914
    %v5731 = vpack.c.b16 %v3923, %v3915
    %v5732 = vpack.c.b16 %v3932, %v3924
    %v5733 = vpack.c.b16 %v3933, %v3925
    %v5734 = vpack.c.b16 %v3934, %v3926
    %v5735 = vpack.c.b16 %v3935, %v3927
    %v5736 = vpack.c.b16 %v3936, %v3928
    %v5737 = vpack.c.b16 %v3937, %v3929
    %v5738 = vpack.c.b16 %v3938, %v3930
    %v5739 = vpack.c.b16 %v3939, %v3931
    %v5740 = vpack.c.b16 %v3948, %v3940
    %v5741 = vpack.c.b16 %v3949, %v3941
    %v5742 = vpack.c.b16 %v3950, %v3942
    %v5743 = vpack.c.b16 %v3951, %v3943
    %v5744 = vpack.c.b16 %v3952, %v3944
    %v5745 = vpack.c.b16 %v3953, %v3945
    %v5746 = vpack.c.b16 %v3954, %v3946
    %v5747 = vpack.c.b16 %v3955, %v3947
    %v5748 = vpack.c.b16 %v3964, %v3956
    %v5749 = vpack.c.b16 %v3965, %v3957
    %v5750 = vpack.c.b16 %v3966, %v3958
    %v5751 = vpack.c.b16 %v3967, %v3959
    %v5752 = vpack.c.b16 %v3968, %v3960
    %v5753 = vpack.c.b16 %v3969, %v3961
    %v5754 = vpack.c.b16 %v3970, %v3962
    %v5755 = vpack.c.b16 %v3971, %v3963
    %v5756 = vpack.c.b16 %v3980, %v3972
    %v5757 = vpack.c.b16 %v3981, %v3973
    %v5758 = vpack.c.b16 %v3982, %v3974
    %v5759 = vpack.c.b16 %v3983, %v3975
    %v5760 = vpack.c.b16 %v3984, %v3976
    %v5761 = vpack.c.b16 %v3985, %v3977
    %v5762 = vpack.c.b16 %v3986, %v3978
    %v5763 = vpack.c.b16 %v3987, %v3979
    %v5764 = vpack.c.b16 %v3996, %v3988
    %v5765 = vpack.c.b16 %v3997, %v3989
    %v5766 = vpack.c.b16 %v3998, %v3990
    %v5767 = vpack.c.b16 %v3999, %v3991
    %v5768 = vpack.c.b16 %v4000, %v3992
    %v5769 = vpack.c.b16 %v4001, %v3993
    %v5770 = vpack.c.b16 %v4002, %v3994
    %v5771 = vpack.c.b16 %v4003, %v3995
    %v5772 = vpack.c.b16 %v4012, %v4004
    %v5773 = vpack.c.b16 %v4013, %v4005
    %v5774 = vpack.c.b16 %v4014, %v4006
    %v5775 = vpack.c.b16 %v4015, %v4007
    %v5776 = vpack.c.b16 %v4016, %v4008
    %v5777 = vpack.c.b16 %v4017, %v4009
    %v5778 = vpack.c.b16 %v4018, %v4010
    %v5779 = vpack.c.b16 %v4019, %v4011
    %v5780 = vpack.c.b16 %v4028, %v4020
    %v5781 = vpack.c.b16 %v4029, %v4021
    %v5782 = vpack.c.b16 %v4030, %v4022
    %v5783 = vpack.c.b16 %v4031, %v4023
    %v5784 = vpack.c.b16 %v4032, %v4024
    %v5785 = vpack.c.b16 %v4033, %v4025
    %v5786 = vpack.c.b16 %v4034, %v4026
    %v5787 = vpack.c.b16 %v4035, %v4027
    %v5788 = vpack.c.b16 %v4044, %v4036
    %v5789 = vpack.c.b16 %v4045, %v4037
    %v5790 = vpack.c.b16 %v4046, %v4038
    %v5791 = vpack.c.b16 %v4047, %v4039
    %v5792 = vpack.c.b16 %v4048, %v4040
    %v5793 = vpack.c.b16 %v4049, %v4041
    %v5794 = vpack.c.b16 %v4050, %v4042
    %v5795 = vpack.c.b16 %v4051, %v4043
    %v5796 = vpack.c.b16 %v4060, %v4052
    %v5797 = vpack.c.b16 %v4061, %v4053
    %v5798 = vpack.c.b16 %v4062, %v4054
    %v5799 = vpack.c.b16 %v4063, %v4055
    %v5800 = vpack.c.b16 %v4064, %v4056
    %v5801 = vpack.c.b16 %v4065, %v4057
    %v5802 = vpack.c.b16 %v4066, %v4058
    %v5803 = vpack.c.b16 %v4067, %v4059
    %v5804 = vpack.c.b16 %v4076, %v4068
    %v5805 = vpack.c.b16 %v4077, %v4069
    %v5806 = vpack.c.b16 %v4078, %v4070
    %v5807 = vpack.c.b16 %v4079, %v4071
    %v5808 = vpack.c.b16 %v4080, %v4072
    %v5809 = vpack.c.b16 %v4081, %v4073
    %v5810 = vpack.c.b16 %v4082, %v4074
    %v5811 = vpack.c.b16 %v4083, %v4075
    %v5812 = vpack.c.b16 %v4092, %v4084
    %v5813 = vpack.c.b16 %v4093, %v4085
    %v5814 = vpack.c.b16 %v4094, %v4086
    %v5815 = vpack.c.b16 %v4095, %v4087
    %v5816 = vpack.c.b16 %v4096, %v4088
    %v5817 = vpack.c.b16 %v4097, %v4089
    %v5818 = vpack.c.b16 %v4098, %v4090
    %v5819 = vpack.c.b16 %v4099, %v4091
    %v5820 = vpack.c.b16 %v4108, %v4100
    %v5821 = vpack.c.b16 %v4109, %v4101
    %v5822 = vpack.c.b16 %v4110, %v4102
    %v5823 = vpack.c.b16 %v4111, %v4103
    %v5824 = vpack.c.b16 %v4112, %v4104
    %v5825 = vpack.c.b16 %v4113, %v4105
    %v5826 = vpack.c.b16 %v4114, %v4106
    %v5827 = vpack.c.b16 %v4115, %v4107
    %v5828 = vpack.c.b16 %v4124, %v4116
    %v5829 = vpack.c.b16 %v4125, %v4117
    %v5830 = vpack.c.b16 %v4126, %v4118
    %v5831 = vpack.c.b16 %v4127, %v4119
    %v5832 = vpack.c.b16 %v4128, %v4120
    %v5833 = vpack.c.b16 %v4129, %v4121
    %v5834 = vpack.c.b16 %v4130, %v4122
    %v5835 = vpack.c.b16 %v4131, %v4123
    %v5836 = vpack.c.b16 %v4140, %v4132
    %v5837 = vpack.c.b16 %v4141, %v4133
    %v5838 = vpack.c.b16 %v4142, %v4134
    %v5839 = vpack.c.b16 %v4143, %v4135
    %v5840 = vpack.c.b16 %v4144, %v4136
    %v5841 = vpack.c.b16 %v4145, %v4137
    %v5842 = vpack.c.b16 %v4146, %v4138
    %v5843 = vpack.c.b16 %v4147, %v4139
    %v5844 = vpack.c.b16 %v4156, %v4148
    %v5845 = vpack.c.b16 %v4157, %v4149
    %v5846 = vpack.c.b16 %v4158, %v4150
    %v5847 = vpack.c.b16 %v4159, %v4151
    %v5848 = vpack.c.b16 %v4160, %v4152
    %v5849 = vpack.c.b16 %v4161, %v4153
    %v5850 = vpack.c.b16 %v4162, %v4154
    %v5851 = vpack.c.b16 %v4163, %v4155
    %v5852 = vpack.c.b16 %v4172, %v4164
    %v5853 = vpack.c.b16 %v4173, %v4165
    %v5854 = vpack.c.b16 %v4174, %v4166
    %v5855 = vpack.c.b16 %v4175, %v4167
    %v5856 = vpack.c.b16 %v4176, %v4168
    %v5857 = vpack.c.b16 %v4177, %v4169
    %v5858 = vpack.c.b16 %v4178, %v4170
    %v5859 = vpack.c.b16 %v4179, %v4171
    %v5860 = vpack.c.b16 %v4188, %v4180
    %v5861 = vpack.c.b16 %v4189, %v4181
    %v5862 = vpack.c.b16 %v4190, %v4182
    %v5863 = vpack.c.b16 %v4191, %v4183
    %v5864 = vpack.c.b16 %v4192, %v4184
    %v5865 = vpack.c.b16 %v4193, %v4185
    %v5866 = vpack.c.b16 %v4194, %v4186
    %v5867 = vpack.c.b16 %v4195, %v4187
    %v5868 = vpack.c.b16 %v4204, %v4196
    %v5869 = vpack.c.b16 %v4205, %v4197
    %v5870 = vpack.c.b16 %v4206, %v4198
    %v5871 = vpack.c.b16 %v4207, %v4199
    %v5872 = vpack.c.b16 %v4208, %v4200
    %v5873 = vpack.c.b16 %v4209, %v4201
    %v5874 = vpack.c.b16 %v4210, %v4202
    %v5875 = vpack.c.b16 %v4211, %v4203
    %v5876 = vpack.c.b16 %v4220, %v4212
    %v5877 = vpack.c.b16 %v4221, %v4213
    %v5878 = vpack.c.b16 %v4222, %v4214
    %v5879 = vpack.c.b16 %v4223, %v4215
    %v5880 = vpack.c.b16 %v4224, %v4216
    %v5881 = vpack.c.b16 %v4225, %v4217
    %v5882 = vpack.c.b16 %v4226, %v4218
    %v5883 = vpack.c.b16 %v4227, %v4219
    %v5884 = vpack.c.b16 %v4236, %v4228
    %v5885 = vpack.c.b16 %v4237, %v4229
    %v5886 = vpack.c.b16 %v4238, %v4230
    %v5887 = vpack.c.b16 %v4239, %v4231
    %v5888 = vpack.c.b16 %v4240, %v4232
    %v5889 = vpack.c.b16 %v4241, %v4233
    %v5890 = vpack.c.b16 %v4242, %v4234
    %v5891 = vpack.c.b16 %v4243, %v4235
    %v5892 = vpack.c.b16 %v4252, %v4244
    %v5893 = vpack.c.b16 %v4253, %v4245
    %v5894 = vpack.c.b16 %v4254, %v4246
    %v5895 = vpack.c.b16 %v4255, %v4247
    %v5896 = vpack.c.b16 %v4256, %v4248
    %v5897 = vpack.c.b16 %v4257, %v4249
    %v5898 = vpack.c.b16 %v4258, %v4250
    %v5899 = vpack.c.b16 %v4259, %v4251
    %v5900 = vpack.c.b16 %v4268, %v4260
    %v5901 = vpack.c.b16 %v4269, %v4261
    %v5902 = vpack.c.b16 %v4270, %v4262
    %v5903 = vpack.c.b16 %v4271, %v4263
    %v5904 = vpack.c.b16 %v4272, %v4264
    %v5905 = vpack.c.b16 %v4273, %v4265
    %v5906 = vpack.c.b16 %v4274, %v4266
    %v5907 = vpack.c.b16 %v4275, %v4267
    %v5908 = vpack.c.b16 %v4284, %v4276
    %v5909 = vpack.c.b16 %v4285, %v4277
    %v5910 = vpack.c.b16 %v4286, %v4278
    %v5911 = vpack.c.b16 %v4287, %v4279
    %v5912 = vpack.c.b16 %v4288, %v4280
    %v5913 = vpack.c.b16 %v4289, %v4281
    %v5914 = vpack.c.b16 %v4290, %v4282
    %v5915 = vpack.c.b16 %v4291, %v4283
    %v5916 = vpack.c.b16 %v4300, %v4292
    %v5917 = vpack.c.b16 %v4301, %v4293
    %v5918 = vpack.c.b16 %v4302, %v4294
    %v5919 = vpack.c.b16 %v4303, %v4295
    %v5920 = vpack.c.b16 %v4304, %v4296
    %v5921 = vpack.c.b16 %v4305, %v4297
    %v5922 = vpack.c.b16 %v4306, %v4298
    %v5923 = vpack.c.b16 %v4307, %v4299
    %v5924 = vpack.c.b16 %v4316, %v4308
    %v5925 = vpack.c.b16 %v4317, %v4309
    %v5926 = vpack.c.b16 %v4318, %v4310
    %v5927 = vpack.c.b16 %v4319, %v4311
    %v5928 = vpack.c.b16 %v4320, %v4312
    %v5929 = vpack.c.b16 %v4321, %v4313
    %v5930 = vpack.c.b16 %v4322, %v4314
    %v5931 = vpack.c.b16 %v4323, %v4315
    %v5932 = vpack.c.b16 %v4332, %v4324
    %v5933 = vpack.c.b16 %v4333, %v4325
    %v5934 = vpack.c.b16 %v4334, %v4326
    %v5935 = vpack.c.b16 %v4335, %v4327
    %v5936 = vpack.c.b16 %v4336, %v4328
    %v5937 = vpack.c.b16 %v4337, %v4329
    %v5938 = vpack.c.b16 %v4338, %v4330
    %v5939 = vpack.c.b16 %v4339, %v4331
    %v5940 = vpack.c.b16 %v4348, %v4340
    %v5941 = vpack.c.b16 %v4349, %v4341
    %v5942 = vpack.c.b16 %v4350, %v4342
    %v5943 = vpack.c.b16 %v4351, %v4343
    %v5944 = vpack.c.b16 %v4352, %v4344
    %v5945 = vpack.c.b16 %v4353, %v4345
    %v5946 = vpack.c.b16 %v4354, %v4346
    %v5947 = vpack.c.b16 %v4355, %v4347
    %v5948 = vpack.c.b16 %v4364, %v4356
    %v5949 = vpack.c.b16 %v4365, %v4357
    %v5950 = vpack.c.b16 %v4366, %v4358
    %v5951 = vpack.c.b16 %v4367, %v4359
    %v5952 = vpack.c.b16 %v4368, %v4360
    %v5953 = vpack.c.b16 %v4369, %v4361
    %v5954 = vpack.c.b16 %v4370, %v4362
    %v5955 = vpack.c.b16 %v4371, %v4363
    %v5956 = vpack.c.b16 %v4380, %v4372
    %v5957 = vpack.c.b16 %v4381, %v4373
    %v5958 = vpack.c.b16 %v4382, %v4374
    %v5959 = vpack.c.b16 %v4383, %v4375
    %v5960 = vpack.c.b16 %v4384, %v4376
    %v5961 = vpack.c.b16 %v4385, %v4377
    %v5962 = vpack.c.b16 %v4386, %v4378
    %v5963 = vpack.c.b16 %v4387, %v4379
    %v5964 = vpack.c.b16 %v4396, %v4388
    %v5965 = vpack.c.b16 %v4397, %v4389
    %v5966 = vpack.c.b16 %v4398, %v4390
    %v5967 = vpack.c.b16 %v4399, %v4391
    %v5968 = vpack.c.b16 %v4400, %v4392
    %v5969 = vpack.c.b16 %v4401, %v4393
    %v5970 = vpack.c.b16 %v4402, %v4394
    %v5971 = vpack.c.b16 %v4403, %v4395
    %v5972 = vpack.c.b16 %v4412, %v4404
    %v5973 = vpack.c.b16 %v4413, %v4405
    %v5974 = vpack.c.b16 %v4414, %v4406
    %v5975 = vpack.c.b16 %v4415, %v4407
    %v5976 = vpack.c.b16 %v4416, %v4408
    %v5977 = vpack.c.b16 %v4417, %v4409
    %v5978 = vpack.c.b16 %v4418, %v4410
    %v5979 = vpack.c.b16 %v4419, %v4411
    %v5980 = vpack.c.b16 %v4428, %v4420
    %v5981 = vpack.c.b16 %v4429, %v4421
    %v5982 = vpack.c.b16 %v4430, %v4422
    %v5983 = vpack.c.b16 %v4431, %v4423
    %v5984 = vpack.c.b16 %v4432, %v4424
    %v5985 = vpack.c.b16 %v4433, %v4425
    %v5986 = vpack.c.b16 %v4434, %v4426
    %v5987 = vpack.c.b16 %v4435, %v4427
    %v5988 = vpack.c.b16 %v4444, %v4436
    %v5989 = vpack.c.b16 %v4445, %v4437
    %v5990 = vpack.c.b16 %v4446, %v4438
    %v5991 = vpack.c.b16 %v4447, %v4439
    %v5992 = vpack.c.b16 %v4448, %v4440
    %v5993 = vpack.c.b16 %v4449, %v4441
    %v5994 = vpack.c.b16 %v4450, %v4442
    %v5995 = vpack.c.b16 %v4451, %v4443
    %v5996 = vpack.c.b16 %v4460, %v4452
    %v5997 = vpack.c.b16 %v4461, %v4453
    %v5998 = vpack.c.b16 %v4462, %v4454
    %v5999 = vpack.c.b16 %v4463, %v4455
    %v6000 = vpack.c.b16 %v4464, %v4456
    %v6001 = vpack.c.b16 %v4465, %v4457
    %v6002 = vpack.c.b16 %v4466, %v4458
    %v6003 = vpack.c.b16 %v4467, %v4459
    %v6004 = vpack.c.b16 %v4476, %v4468
    %v6005 = vpack.c.b16 %v4477, %v4469
    %v6006 = vpack.c.b16 %v4478, %v4470
    %v6007 = vpack.c.b16 %v4479, %v4471
    %v6008 = vpack.c.b16 %v4480, %v4472
    %v6009 = vpack.c.b16 %v4481, %v4473
    %v6010 = vpack.c.b16 %v4482, %v4474
    %v6011 = vpack.c.b16 %v4483, %v4475
    %v6012 = vpack.c.b16 %v4492, %v4484
    %v6013 = vpack.c.b16 %v4493, %v4485
    %v6014 = vpack.c.b16 %v4494, %v4486
    %v6015 = vpack.c.b16 %v4495, %v4487
    %v6016 = vpack.c.b16 %v4496, %v4488
    %v6017 = vpack.c.b16 %v4497, %v4489
    %v6018 = vpack.c.b16 %v4498, %v4490
    %v6019 = vpack.c.b16 %v4499, %v4491
    %v6020 = vpack.c.b16 %v4508, %v4500
    %v6021 = vpack.c.b16 %v4509, %v4501
    %v6022 = vpack.c.b16 %v4510, %v4502
    %v6023 = vpack.c.b16 %v4511, %v4503
    %v6024 = vpack.c.b16 %v4512, %v4504
    %v6025 = vpack.c.b16 %v4513, %v4505
    %v6026 = vpack.c.b16 %v4514, %v4506
    %v6027 = vpack.c.b16 %v4515, %v4507
    %v6028 = vpack.c.b16 %v4524, %v4516
    %v6029 = vpack.c.b16 %v4525, %v4517
    %v6030 = vpack.c.b16 %v4526, %v4518
    %v6031 = vpack.c.b16 %v4527, %v4519
    %v6032 = vpack.c.b16 %v4528, %v4520
    %v6033 = vpack.c.b16 %v4529, %v4521
    %v6034 = vpack.c.b16 %v4530, %v4522
    %v6035 = vpack.c.b16 %v4531, %v4523
    %v6036 = vpack.c.b16 %v4540, %v4532
    %v6037 = vpack.c.b16 %v4541, %v4533
    %v6038 = vpack.c.b16 %v4542, %v4534
    %v6039 = vpack.c.b16 %v4543, %v4535
    %v6040 = vpack.c.b16 %v4544, %v4536
    %v6041 = vpack.c.b16 %v4545, %v4537
    %v6042 = vpack.c.b16 %v4546, %v4538
    %v6043 = vpack.c.b16 %v4547, %v4539
    %v6044 = vpack.c.b16 %v4556, %v4548
    %v6045 = vpack.c.b16 %v4557, %v4549
    %v6046 = vpack.c.b16 %v4558, %v4550
    %v6047 = vpack.c.b16 %v4559, %v4551
    %v6048 = vpack.c.b16 %v4560, %v4552
    %v6049 = vpack.c.b16 %v4561, %v4553
    %v6050 = vpack.c.b16 %v4562, %v4554
    %v6051 = vpack.c.b16 %v4563, %v4555
    %v6052 = vpack.c.b16 %v4572, %v4564
    %v6053 = vpack.c.b16 %v4573, %v4565
    %v6054 = vpack.c.b16 %v4574, %v4566
    %v6055 = vpack.c.b16 %v4575, %v4567
    %v6056 = vpack.c.b16 %v4576, %v4568
    %v6057 = vpack.c.b16 %v4577, %v4569
    %v6058 = vpack.c.b16 %v4578, %v4570
    %v6059 = vpack.c.b16 %v4579, %v4571
    %v6060 = vpack.c.b16 %v4588, %v4580
    %v6061 = vpack.c.b16 %v4589, %v4581
    %v6062 = vpack.c.b16 %v4590, %v4582
    %v6063 = vpack.c.b16 %v4591, %v4583
    %v6064 = vpack.c.b16 %v4592, %v4584
    %v6065 = vpack.c.b16 %v4593, %v4585
    %v6066 = vpack.c.b16 %v4594, %v4586
    %v6067 = vpack.c.b16 %v4595, %v4587
    %v6068 = vpack.c.b16 %v4604, %v4596
    %v6069 = vpack.c.b16 %v4605, %v4597
    %v6070 = vpack.c.b16 %v4606, %v4598
    %v6071 = vpack.c.b16 %v4607, %v4599
    %v6072 = vpack.c.b16 %v4608, %v4600
    %v6073 = vpack.c.b16 %v4609, %v4601
    %v6074 = vpack.c.b16 %v4610, %v4602
    %v6075 = vpack.c.b16 %v4611, %v4603
    %v6076 = vpack.c.b16 %v4620, %v4612
    %v6077 = vpack.c.b16 %v4621, %v4613
    %v6078 = vpack.c.b16 %v4622, %v4614
    %v6079 = vpack.c.b16 %v4623, %v4615
    %v6080 = vpack.c.b16 %v4624, %v4616
    %v6081 = vpack.c.b16 %v4625, %v4617
    %v6082 = vpack.c.b16 %v4626, %v4618
    %v6083 = vpack.c.b16 %v4627, %v4619
    %v6084 = vpack.c.b16 %v4636, %v4628
    %v6085 = vpack.c.b16 %v4637, %v4629
    %v6086 = vpack.c.b16 %v4638, %v4630
    %v6087 = vpack.c.b16 %v4639, %v4631
    %v6088 = vpack.c.b16 %v4640, %v4632
    %v6089 = vpack.c.b16 %v4641, %v4633
    %v6090 = vpack.c.b16 %v4642, %v4634
    %v6091 = vpack.c.b16 %v4643, %v4635
    %v6092 = vpack.c.b16 %v4652, %v4644
    %v6093 = vpack.c.b16 %v4653, %v4645
    %v6094 = vpack.c.b16 %v4654, %v4646
    %v6095 = vpack.c.b16 %v4655, %v4647
    %v6096 = vpack.c.b16 %v4656, %v4648
    %v6097 = vpack.c.b16 %v4657, %v4649
    %v6098 = vpack.c.b16 %v4658, %v4650
    %v6099 = vpack.c.b16 %v4659, %v4651
    %v6100 = vpack.c.b16 %v4668, %v4660
    %v6101 = vpack.c.b16 %v4669, %v4661
    %v6102 = vpack.c.b16 %v4670, %v4662
    %v6103 = vpack.c.b16 %v4671, %v4663
    %v6104 = vpack.c.b16 %v4672, %v4664
    %v6105 = vpack.c.b16 %v4673, %v4665
    %v6106 = vpack.c.b16 %v4674, %v4666
    %v6107 = vpack.c.b16 %v4675, %v4667
    %v6108 = vpack.c.b16 %v4684, %v4676
    %v6109 = vpack.c.b16 %v4685, %v4677
    %v6110 = vpack.c.b16 %v4686, %v4678
    %v6111 = vpack.c.b16 %v4687, %v4679
    %v6112 = vpack.c.b16 %v4688, %v4680
    %v6113 = vpack.c.b16 %v4689, %v4681
    %v6114 = vpack.c.b16 %v4690, %v4682
    %v6115 = vpack.c.b16 %v4691, %v4683
    %v6116 = vpack.c.b16 %v4700, %v4692
    %v6117 = vpack.c.b16 %v4701, %v4693
    %v6118 = vpack.c.b16 %v4702, %v4694
    %v6119 = vpack.c.b16 %v4703, %v4695
    %v6120 = vpack.c.b16 %v4704, %v4696
    %v6121 = vpack.c.b16 %v4705, %v4697
    %v6122 = vpack.c.b16 %v4706, %v4698
    %v6123 = vpack.c.b16 %v4707, %v4699
    %v6124 = vpack.c.b16 %v4716, %v4708
    %v6125 = vpack.c.b16 %v4717, %v4709
    %v6126 = vpack.c.b16 %v4718, %v4710
    %v6127 = vpack.c.b16 %v4719, %v4711
    %v6128 = vpack.c.b16 %v4720, %v4712
    %v6129 = vpack.c.b16 %v4721, %v4713
    %v6130 = vpack.c.b16 %v4722, %v4714
    %v6131 = vpack.c.b16 %v4723, %v4715
    %v6132 = vpack.c.b16 %v4732, %v4724
    %v6133 = vpack.c.b16 %v4733, %v4725
    %v6134 = vpack.c.b16 %v4734, %v4726
    %v6135 = vpack.c.b16 %v4735, %v4727
    %v6136 = vpack.c.b16 %v4736, %v4728
    %v6137 = vpack.c.b16 %v4737, %v4729
    %v6138 = vpack.c.b16 %v4738, %v4730
    %v6139 = vpack.c.b16 %v4739, %v4731
    %v6140 = vpack.c.b16 %v4748, %v4740
    %v6141 = vpack.c.b16 %v4749, %v4741
    %v6142 = vpack.c.b16 %v4750, %v4742
    %v6143 = vpack.c.b16 %v4751, %v4743
    %v6144 = vpack.c.b16 %v4752, %v4744
    %v6145 = vpack.c.b16 %v4753, %v4745
    %v6146 = vpack.c.b16 %v4754, %v4746
    %v6147 = vpack.c.b16 %v4755, %v4747
    %v6148 = vpack.c.b16 %v4764, %v4756
    %v6149 = vpack.c.b16 %v4765, %v4757
    %v6150 = vpack.c.b16 %v4766, %v4758
    %v6151 = vpack.c.b16 %v4767, %v4759
    %v6152 = vpack.c.b16 %v4768, %v4760
    %v6153 = vpack.c.b16 %v4769, %v4761
    %v6154 = vpack.c.b16 %v4770, %v4762
    %v6155 = vpack.c.b16 %v4771, %v4763
    %v6156 = vpack.c.b16 %v4780, %v4772
    %v6157 = vpack.c.b16 %v4781, %v4773
    %v6158 = vpack.c.b16 %v4782, %v4774
    %v6159 = vpack.c.b16 %v4783, %v4775
    %v6160 = vpack.c.b16 %v4784, %v4776
    %v6161 = vpack.c.b16 %v4785, %v4777
    %v6162 = vpack.c.b16 %v4786, %v4778
    %v6163 = vpack.c.b16 %v4787, %v4779
    %v6164 = vpack.c.b16 %v4796, %v4788
    %v6165 = vpack.c.b16 %v4797, %v4789
    %v6166 = vpack.c.b16 %v4798, %v4790
    %v6167 = vpack.c.b16 %v4799, %v4791
    %v6168 = vpack.c.b16 %v4800, %v4792
    %v6169 = vpack.c.b16 %v4801, %v4793
    %v6170 = vpack.c.b16 %v4802, %v4794
    %v6171 = vpack.c.b16 %v4803, %v4795
    %v6172 = vpack.c.b16 %v4812, %v4804
    %v6173 = vpack.c.b16 %v4813, %v4805
    %v6174 = vpack.c.b16 %v4814, %v4806
    %v6175 = vpack.c.b16 %v4815, %v4807
    %v6176 = vpack.c.b16 %v4816, %v4808
    %v6177 = vpack.c.b16 %v4817, %v4809
    %v6178 = vpack.c.b16 %v4818, %v4810
    %v6179 = vpack.c.b16 %v4819, %v4811
    %v6180 = vpack.c.b16 %v4828, %v4820
    %v6181 = vpack.c.b16 %v4829, %v4821
    %v6182 = vpack.c.b16 %v4830, %v4822
    %v6183 = vpack.c.b16 %v4831, %v4823
    %v6184 = vpack.c.b16 %v4832, %v4824
    %v6185 = vpack.c.b16 %v4833, %v4825
    %v6186 = vpack.c.b16 %v4834, %v4826
    %v6187 = vpack.c.b16 %v4835, %v4827
    %v6188 = vpack.c.b16 %v4844, %v4836
    %v6189 = vpack.c.b16 %v4845, %v4837
    %v6190 = vpack.c.b16 %v4846, %v4838
    %v6191 = vpack.c.b16 %v4847, %v4839
    %v6192 = vpack.c.b16 %v4848, %v4840
    %v6193 = vpack.c.b16 %v4849, %v4841
    %v6194 = vpack.c.b16 %v4850, %v4842
    %v6195 = vpack.c.b16 %v4851, %v4843
    %v6196 = vpack.c.b16 %v4860, %v4852
    %v6197 = vpack.c.b16 %v4861, %v4853
    %v6198 = vpack.c.b16 %v4862, %v4854
    %v6199 = vpack.c.b16 %v4863, %v4855
    %v6200 = vpack.c.b16 %v4864, %v4856
    %v6201 = vpack.c.b16 %v4865, %v4857
    %v6202 = vpack.c.b16 %v4866, %v4858
    %v6203 = vpack.c.b16 %v4867, %v4859
    %v6204 = vpack.c.b16 %v4876, %v4868
    %v6205 = vpack.c.b16 %v4877, %v4869
    %v6206 = vpack.c.b16 %v4878, %v4870
    %v6207 = vpack.c.b16 %v4879, %v4871
    %v6208 = vpack.c.b16 %v4880, %v4872
    %v6209 = vpack.c.b16 %v4881, %v4873
    %v6210 = vpack.c.b16 %v4882, %v4874
    %v6211 = vpack.c.b16 %v4883, %v4875
    %v6212 = vpack.c.b16 %v4892, %v4884
    %v6213 = vpack.c.b16 %v4893, %v4885
    %v6214 = vpack.c.b16 %v4894, %v4886
    %v6215 = vpack.c.b16 %v4895, %v4887
    %v6216 = vpack.c.b16 %v4896, %v4888
    %v6217 = vpack.c.b16 %v4897, %v4889
    %v6218 = vpack.c.b16 %v4898, %v4890
    %v6219 = vpack.c.b16 %v4899, %v4891
    %v6220 = vpack.c.b16 %v4908, %v4900
    %v6221 = vpack.c.b16 %v4909, %v4901
    %v6222 = vpack.c.b16 %v4910, %v4902
    %v6223 = vpack.c.b16 %v4911, %v4903
    %v6224 = vpack.c.b16 %v4912, %v4904
    %v6225 = vpack.c.b16 %v4913, %v4905
    %v6226 = vpack.c.b16 %v4914, %v4906
    %v6227 = vpack.c.b16 %v4915, %v4907
    %v6228 = vpack.c.b16 %v4924, %v4916
    %v6229 = vpack.c.b16 %v4925, %v4917
    %v6230 = vpack.c.b16 %v4926, %v4918
    %v6231 = vpack.c.b16 %v4927, %v4919
    %v6232 = vpack.c.b16 %v4928, %v4920
    %v6233 = vpack.c.b16 %v4929, %v4921
    %v6234 = vpack.c.b16 %v4930, %v4922
    %v6235 = vpack.c.b16 %v4931, %v4923
    %v6236 = vpack.c.b16 %v4940, %v4932
    %v6237 = vpack.c.b16 %v4941, %v4933
    %v6238 = vpack.c.b16 %v4942, %v4934
    %v6239 = vpack.c.b16 %v4943, %v4935
    %v6240 = vpack.c.b16 %v4944, %v4936
    %v6241 = vpack.c.b16 %v4945, %v4937
    %v6242 = vpack.c.b16 %v4946, %v4938
    %v6243 = vpack.c.b16 %v4947, %v4939
    %v6244 = vpack.c.b16 %v4956, %v4948
    %v6245 = vpack.c.b16 %v4957, %v4949
    %v6246 = vpack.c.b16 %v4958, %v4950
    %v6247 = vpack.c.b16 %v4959, %v4951
    %v6248 = vpack.c.b16 %v4960, %v4952
    %v6249 = vpack.c.b16 %v4961, %v4953
    %v6250 = vpack.c.b16 %v4962, %v4954
    %v6251 = vpack.c.b16 %v4963, %v4955
    %v6252 = vpack.c.b16 %v4972, %v4964
    %v6253 = vpack.c.b16 %v4973, %v4965
    %v6254 = vpack.c.b16 %v4974, %v4966
    %v6255 = vpack.c.b16 %v4975, %v4967
    %v6256 = vpack.c.b16 %v4976, %v4968
    %v6257 = vpack.c.b16 %v4977, %v4969
    %v6258 = vpack.c.b16 %v4978, %v4970
    %v6259 = vpack.c.b16 %v4979, %v4971
    %v6260 = vpack.c.b16 %v4988, %v4980
    %v6261 = vpack.c.b16 %v4989, %v4981
    %v6262 = vpack.c.b16 %v4990, %v4982
    %v6263 = vpack.c.b16 %v4991, %v4983
    %v6264 = vpack.c.b16 %v4992, %v4984
    %v6265 = vpack.c.b16 %v4993, %v4985
    %v6266 = vpack.c.b16 %v4994, %v4986
    %v6267 = vpack.c.b16 %v4995, %v4987
    %v6268 = vpack.c.b16 %v5004, %v4996
    %v6269 = vpack.c.b16 %v5005, %v4997
    %v6270 = vpack.c.b16 %v5006, %v4998
    %v6271 = vpack.c.b16 %v5007, %v4999
    %v6272 = vpack.c.b16 %v5008, %v5000
    %v6273 = vpack.c.b16 %v5009, %v5001
    %v6274 = vpack.c.b16 %v5010, %v5002
    %v6275 = vpack.c.b16 %v5011, %v5003
    %v6276 = vpack.c.b16 %v5020, %v5012
    %v6277 = vpack.c.b16 %v5021, %v5013
    %v6278 = vpack.c.b16 %v5022, %v5014
    %v6279 = vpack.c.b16 %v5023, %v5015
    %v6280 = vpack.c.b16 %v5024, %v5016
    %v6281 = vpack.c.b16 %v5025, %v5017
    %v6282 = vpack.c.b16 %v5026, %v5018
    %v6283 = vpack.c.b16 %v5027, %v5019
    %v6284 = vpack.c.b16 %v5036, %v5028
    %v6285 = vpack.c.b16 %v5037, %v5029
    %v6286 = vpack.c.b16 %v5038, %v5030
    %v6287 = vpack.c.b16 %v5039, %v5031
    %v6288 = vpack.c.b16 %v5040, %v5032
    %v6289 = vpack.c.b16 %v5041, %v5033
    %v6290 = vpack.c.b16 %v5042, %v5034
    %v6291 = vpack.c.b16 %v5043, %v5035
    %v6292 = vpack.c.b16 %v5052, %v5044
    %v6293 = vpack.c.b16 %v5053, %v5045
    %v6294 = vpack.c.b16 %v5054, %v5046
    %v6295 = vpack.c.b16 %v5055, %v5047
    %v6296 = vpack.c.b16 %v5056, %v5048
    %v6297 = vpack.c.b16 %v5057, %v5049
    %v6298 = vpack.c.b16 %v5058, %v5050
    %v6299 = vpack.c.b16 %v5059, %v5051
    %v6300 = vpack.c.b16 %v5068, %v5060
    %v6301 = vpack.c.b16 %v5069, %v5061
    %v6302 = vpack.c.b16 %v5070, %v5062
    %v6303 = vpack.c.b16 %v5071, %v5063
    %v6304 = vpack.c.b16 %v5072, %v5064
    %v6305 = vpack.c.b16 %v5073, %v5065
    %v6306 = vpack.c.b16 %v5074, %v5066
    %v6307 = vpack.c.b16 %v5075, %v5067
    %v6308 = vpack.c.b16 %v5084, %v5076
    %v6309 = vpack.c.b16 %v5085, %v5077
    %v6310 = vpack.c.b16 %v5086, %v5078
    %v6311 = vpack.c.b16 %v5087, %v5079
    %v6312 = vpack.c.b16 %v5088, %v5080
    %v6313 = vpack.c.b16 %v5089, %v5081
    %v6314 = vpack.c.b16 %v5090, %v5082
    %v6315 = vpack.c.b16 %v5091, %v5083
    %v6316 = vpack.c.b16 %v5100, %v5092
    %v6317 = vpack.c.b16 %v5101, %v5093
    %v6318 = vpack.c.b16 %v5102, %v5094
    %v6319 = vpack.c.b16 %v5103, %v5095
    %v6320 = vpack.c.b16 %v5104, %v5096
    %v6321 = vpack.c.b16 %v5105, %v5097
    %v6322 = vpack.c.b16 %v5106, %v5098
    %v6323 = vpack.c.b16 %v5107, %v5099
    %7540 = vmatpush.bf16.msra.mxu0 %v5164
    %7541 = vmatpush.bf16.msra.mxu0 %v5156
    %7542 = vmatpush.bf16.msra.mxu0 %v5148
    %7543 = vmatpush.bf16.msra.mxu0 %v5140
    %7544 = vmatpush.bf16.msra.mxu0 %v5132
    %7545 = vmatpush.bf16.msra.mxu0 %v5124
    %7546 = vmatpush.bf16.msra.mxu0 %v5116
    %7547 = vmatpush.bf16.msra.mxu0 %v5108
    %7548 = vmatmul.bf16.gmra.mxu0 %v1422
    %v7549 = vpop.f32.mrf.mxu0
    %v7550 = vadd.f32 %v1377, %v7549
    %v7551 = vpop.f32.mrf.mxu0
    %7552 = vdwg.mxu0
    %7553 = vmatpush.bf16.msra.mxu0 %v5228
    %7554 = vmatpush.bf16.msra.mxu0 %v5220
    %7555 = vmatpush.bf16.msra.mxu0 %v5212
    %7556 = vmatpush.bf16.msra.mxu0 %v5204
    %7557 = vmatpush.bf16.msra.mxu0 %v5196
    %7558 = vmatpush.bf16.msra.mxu0 %v5188
    %7559 = vmatpush.bf16.msra.mxu0 %v5180
    %7560 = vmatpush.bf16.msra.mxu0 %v5172
    %7561 = vmatmul.bf16.gmra.mxu0 %v1423
    %v7562 = vpop.f32.mrf.mxu0
    %v7563 = vadd.f32 %v7550, %v7562
    %v7564 = vpop.f32.mrf.mxu0
    %7565 = vdwg.mxu0
    %7566 = vmatpush.bf16.msra.mxu0 %v5292
    %7567 = vmatpush.bf16.msra.mxu0 %v5284
    %7568 = vmatpush.bf16.msra.mxu0 %v5276
    %7569 = vmatpush.bf16.msra.mxu0 %v5268
    %7570 = vmatpush.bf16.msra.mxu0 %v5260
    %7571 = vmatpush.bf16.msra.mxu0 %v5252
    %7572 = vmatpush.bf16.msra.mxu0 %v5244
    %7573 = vmatpush.bf16.msra.mxu0 %v5236
    %7574 = vmatmul.bf16.gmra.mxu0 %v1424
    %v7575 = vpop.f32.mrf.mxu0
    %v7576 = vadd.f32 %v7563, %v7575
    %v7577 = vpop.f32.mrf.mxu0
    %7578 = vdwg.mxu0
    %7579 = vmatpush.bf16.msra.mxu0 %v5356
    %7580 = vmatpush.bf16.msra.mxu0 %v5348
    %7581 = vmatpush.bf16.msra.mxu0 %v5340
    %7582 = vmatpush.bf16.msra.mxu0 %v5332
    %7583 = vmatpush.bf16.msra.mxu0 %v5324
    %7584 = vmatpush.bf16.msra.mxu0 %v5316
    %7585 = vmatpush.bf16.msra.mxu0 %v5308
    %7586 = vmatpush.bf16.msra.mxu0 %v5300
    %7587 = vmatmul.bf16.gmra.mxu0 %v1425
    %v7588 = vpop.f32.mrf.mxu0
    %v7589 = vadd.f32 %v7576, %v7588
    %v7590 = vpop.f32.mrf.mxu0
    %7591 = vdwg.mxu0
    %7592 = vmatpush.bf16.msra.mxu0 %v5420
    %7593 = vmatpush.bf16.msra.mxu0 %v5412
    %7594 = vmatpush.bf16.msra.mxu0 %v5404
    %7595 = vmatpush.bf16.msra.mxu0 %v5396
    %7596 = vmatpush.bf16.msra.mxu0 %v5388
    %7597 = vmatpush.bf16.msra.mxu0 %v5380
    %7598 = vmatpush.bf16.msra.mxu0 %v5372
    %7599 = vmatpush.bf16.msra.mxu0 %v5364
    %7600 = vmatmul.bf16.gmra.mxu0 %v1426
    %v7601 = vpop.f32.mrf.mxu0
    %v7602 = vadd.f32 %v7589, %v7601
    %v7603 = vpop.f32.mrf.mxu0
    %7604 = vdwg.mxu0
    %7605 = vmatpush.bf16.msra.mxu0 %v5484
    %7606 = vmatpush.bf16.msra.mxu0 %v5476
    %7607 = vmatpush.bf16.msra.mxu0 %v5468
    %7608 = vmatpush.bf16.msra.mxu0 %v5460
    %7609 = vmatpush.bf16.msra.mxu0 %v5452
    %7610 = vmatpush.bf16.msra.mxu0 %v5444
    %7611 = vmatpush.bf16.msra.mxu0 %v5436
    %7612 = vmatpush.bf16.msra.mxu0 %v5428
    %7613 = vmatmul.bf16.gmra.mxu0 %v1427
    %v7614 = vpop.f32.mrf.mxu0
    %v7615 = vadd.f32 %v7602, %v7614
    %v7616 = vpop.f32.mrf.mxu0
    %7617 = vdwg.mxu0
    %7618 = vmatpush.bf16.msra.mxu0 %v5548
    %7619 = vmatpush.bf16.msra.mxu0 %v5540
    %7620 = vmatpush.bf16.msra.mxu0 %v5532
    %7621 = vmatpush.bf16.msra.mxu0 %v5524
    %7622 = vmatpush.bf16.msra.mxu0 %v5516
    %7623 = vmatpush.bf16.msra.mxu0 %v5508
    %7624 = vmatpush.bf16.msra.mxu0 %v5500
    %7625 = vmatpush.bf16.msra.mxu0 %v5492
    %7626 = vmatmul.bf16.gmra.mxu0 %v1428
    %v7627 = vpop.f32.mrf.mxu0
    %v7628 = vadd.f32 %v7615, %v7627
    %v7629 = vpop.f32.mrf.mxu0
    %7630 = vdwg.mxu0
    %7631 = vmatpush.bf16.msra.mxu0 %v5612
    %7632 = vmatpush.bf16.msra.mxu0 %v5604
    %7633 = vmatpush.bf16.msra.mxu0 %v5596
    %7634 = vmatpush.bf16.msra.mxu0 %v5588
    %7635 = vmatpush.bf16.msra.mxu0 %v5580
    %7636 = vmatpush.bf16.msra.mxu0 %v5572
    %7637 = vmatpush.bf16.msra.mxu0 %v5564
    %7638 = vmatpush.bf16.msra.mxu0 %v5556
    %7639 = vmatmul.bf16.gmra.mxu0 %v1429
    %v7640 = vpop.f32.mrf.mxu0
    %v7641 = vadd.f32 %v7628, %v7640
    %v7642 = vpop.f32.mrf.mxu0
    %7643 = vdwg.mxu0
    %7644 = vmatpush.bf16.msra.mxu0 %v5676
    %7645 = vmatpush.bf16.msra.mxu0 %v5668
    %7646 = vmatpush.bf16.msra.mxu0 %v5660
    %7647 = vmatpush.bf16.msra.mxu0 %v5652
    %7648 = vmatpush.bf16.msra.mxu0 %v5644
    %7649 = vmatpush.bf16.msra.mxu0 %v5636
    %7650 = vmatpush.bf16.msra.mxu0 %v5628
    %7651 = vmatpush.bf16.msra.mxu0 %v5620
    %7652 = vmatmul.bf16.gmra.mxu0 %v1430
    %v7653 = vpop.f32.mrf.mxu0
    %v7654 = vadd.f32 %v7641, %v7653
    %v7655 = vpop.f32.mrf.mxu0
    %7656 = vdwg.mxu0
    %7657 = vmatpush.bf16.msra.mxu0 %v5740
    %7658 = vmatpush.bf16.msra.mxu0 %v5732
    %7659 = vmatpush.bf16.msra.mxu0 %v5724
    %7660 = vmatpush.bf16.msra.mxu0 %v5716
    %7661 = vmatpush.bf16.msra.mxu0 %v5708
    %7662 = vmatpush.bf16.msra.mxu0 %v5700
    %7663 = vmatpush.bf16.msra.mxu0 %v5692
    %7664 = vmatpush.bf16.msra.mxu0 %v5684
    %7665 = vmatmul.bf16.gmra.mxu0 %v1431
    %v7666 = vpop.f32.mrf.mxu0
    %v7667 = vadd.f32 %v7654, %v7666
    %v7668 = vpop.f32.mrf.mxu0
    %7669 = vdwg.mxu0
    %7670 = vmatpush.bf16.msra.mxu0 %v5804
    %7671 = vmatpush.bf16.msra.mxu0 %v5796
    %7672 = vmatpush.bf16.msra.mxu0 %v5788
    %7673 = vmatpush.bf16.msra.mxu0 %v5780
    %7674 = vmatpush.bf16.msra.mxu0 %v5772
    %7675 = vmatpush.bf16.msra.mxu0 %v5764
    %7676 = vmatpush.bf16.msra.mxu0 %v5756
    %7677 = vmatpush.bf16.msra.mxu0 %v5748
    %7678 = vmatmul.bf16.gmra.mxu0 %v1432
    %v7679 = vpop.f32.mrf.mxu0
    %v7680 = vadd.f32 %v7667, %v7679
    %v7681 = vpop.f32.mrf.mxu0
    %7682 = vdwg.mxu0
    %7683 = vmatpush.bf16.msra.mxu0 %v5868
    %7684 = vmatpush.bf16.msra.mxu0 %v5860
    %7685 = vmatpush.bf16.msra.mxu0 %v5852
    %7686 = vmatpush.bf16.msra.mxu0 %v5844
    %7687 = vmatpush.bf16.msra.mxu0 %v5836
    %7688 = vmatpush.bf16.msra.mxu0 %v5828
    %7689 = vmatpush.bf16.msra.mxu0 %v5820
    %7690 = vmatpush.bf16.msra.mxu0 %v5812
    %7691 = vmatmul.bf16.gmra.mxu0 %v1433
    %v7692 = vpop.f32.mrf.mxu0
    %v7693 = vadd.f32 %v7680, %v7692
    %v7694 = vpop.f32.mrf.mxu0
    %7695 = vdwg.mxu0
    %7696 = vmatpush.bf16.msra.mxu0 %v5932
    %7697 = vmatpush.bf16.msra.mxu0 %v5924
    %7698 = vmatpush.bf16.msra.mxu0 %v5916
    %7699 = vmatpush.bf16.msra.mxu0 %v5908
    %7700 = vmatpush.bf16.msra.mxu0 %v5900
    %7701 = vmatpush.bf16.msra.mxu0 %v5892
    %7702 = vmatpush.bf16.msra.mxu0 %v5884
    %7703 = vmatpush.bf16.msra.mxu0 %v5876
    %7704 = vmatmul.bf16.gmra.mxu0 %v1434
    %v7705 = vpop.f32.mrf.mxu0
    %v7706 = vadd.f32 %v7693, %v7705
    %v7707 = vpop.f32.mrf.mxu0
    %7708 = vdwg.mxu0
    %7709 = vmatpush.bf16.msra.mxu0 %v5996
    %7710 = vmatpush.bf16.msra.mxu0 %v5988
    %7711 = vmatpush.bf16.msra.mxu0 %v5980
    %7712 = vmatpush.bf16.msra.mxu0 %v5972
    %7713 = vmatpush.bf16.msra.mxu0 %v5964
    %7714 = vmatpush.bf16.msra.mxu0 %v5956
    %7715 = vmatpush.bf16.msra.mxu0 %v5948
    %7716 = vmatpush.bf16.msra.mxu0 %v5940
    %7717 = vmatmul.bf16.gmra.mxu0 %v1435
    %v7718 = vpop.f32.mrf.mxu0
    %v7719 = vadd.f32 %v7706, %v7718
    %v7720 = vpop.f32.mrf.mxu0
    %7721 = vdwg.mxu0
    %7722 = vmatpush.bf16.msra.mxu0 %v6060
    %7723 = vmatpush.bf16.msra.mxu0 %v6052
    %7724 = vmatpush.bf16.msra.mxu0 %v6044
    %7725 = vmatpush.bf16.msra.mxu0 %v6036
    %7726 = vmatpush.bf16.msra.mxu0 %v6028
    %7727 = vmatpush.bf16.msra.mxu0 %v6020
    %7728 = vmatpush.bf16.msra.mxu0 %v6012
    %7729 = vmatpush.bf16.msra.mxu0 %v6004
    %7730 = vmatmul.bf16.gmra.mxu0 %v1436
    %v7731 = vpop.f32.mrf.mxu0
    %v7732 = vadd.f32 %v7719, %v7731
    %v7733 = vpop.f32.mrf.mxu0
    %7734 = vdwg.mxu0
    %7735 = vmatpush.bf16.msra.mxu0 %v6124
    %7736 = vmatpush.bf16.msra.mxu0 %v6116
    %7737 = vmatpush.bf16.msra.mxu0 %v6108
    %7738 = vmatpush.bf16.msra.mxu0 %v6100
    %7739 = vmatpush.bf16.msra.mxu0 %v6092
    %7740 = vmatpush.bf16.msra.mxu0 %v6084
    %7741 = vmatpush.bf16.msra.mxu0 %v6076
    %7742 = vmatpush.bf16.msra.mxu0 %v6068
    %7743 = vmatmul.bf16.gmra.mxu0 %v1437
    %v7744 = vpop.f32.mrf.mxu0
    %v7745 = vadd.f32 %v7732, %v7744
    %v7746 = vpop.f32.mrf.mxu0
    %7747 = vdwg.mxu0
    %7748 = vmatpush.bf16.msra.mxu0 %v6188
    %7749 = vmatpush.bf16.msra.mxu0 %v6180
    %7750 = vmatpush.bf16.msra.mxu0 %v6172
    %7751 = vmatpush.bf16.msra.mxu0 %v6164
    %7752 = vmatpush.bf16.msra.mxu0 %v6156
    %7753 = vmatpush.bf16.msra.mxu0 %v6148
    %7754 = vmatpush.bf16.msra.mxu0 %v6140
    %7755 = vmatpush.bf16.msra.mxu0 %v6132
    %7756 = vmatmul.bf16.gmra.mxu0 %v1438
    %v7757 = vpop.f32.mrf.mxu0
    %v7758 = vadd.f32 %v7745, %v7757
    %v7759 = vpop.f32.mrf.mxu0
    %7760 = vdwg.mxu0
    %7761 = vmatpush.bf16.msra.mxu0 %v6252
    %7762 = vmatpush.bf16.msra.mxu0 %v6244
    %7763 = vmatpush.bf16.msra.mxu0 %v6236
    %7764 = vmatpush.bf16.msra.mxu0 %v6228
    %7765 = vmatpush.bf16.msra.mxu0 %v6220
    %7766 = vmatpush.bf16.msra.mxu0 %v6212
    %7767 = vmatpush.bf16.msra.mxu0 %v6204
    %7768 = vmatpush.bf16.msra.mxu0 %v6196
    %7769 = vmatmul.bf16.gmra.mxu0 %v1439
    %v7770 = vpop.f32.mrf.mxu0
    %v7771 = vadd.f32 %v7758, %v7770
    %v7772 = vpop.f32.mrf.mxu0
    %7773 = vdwg.mxu0
    %7774 = vmatpush.bf16.msra.mxu0 %v6316
    %7775 = vmatpush.bf16.msra.mxu0 %v6308
    %7776 = vmatpush.bf16.msra.mxu0 %v6300
    %7777 = vmatpush.bf16.msra.mxu0 %v6292
    %7778 = vmatpush.bf16.msra.mxu0 %v6284
    %7779 = vmatpush.bf16.msra.mxu0 %v6276
    %7780 = vmatpush.bf16.msra.mxu0 %v6268
    %7781 = vmatpush.bf16.msra.mxu0 %v6260
    %7782 = vmatmul.bf16.gmra.mxu0 %v1440
    %v7783 = vpop.f32.mrf.mxu0
    %v7784 = vadd.f32 %v7771, %v7783
    %v7785 = vpop.f32.mrf.mxu0
    %7786 = vdwg.mxu0
    %7787 = vmatpush.bf16.msra.mxu0 %v5165
    %7788 = vmatpush.bf16.msra.mxu0 %v5157
    %7789 = vmatpush.bf16.msra.mxu0 %v5149
    %7790 = vmatpush.bf16.msra.mxu0 %v5141
    %7791 = vmatpush.bf16.msra.mxu0 %v5133
    %7792 = vmatpush.bf16.msra.mxu0 %v5125
    %7793 = vmatpush.bf16.msra.mxu0 %v5117
    %7794 = vmatpush.bf16.msra.mxu0 %v5109
    %7795 = vmatmul.bf16.gmra.mxu0 %v1422
    %v7796 = vpop.f32.mrf.mxu0
    %v7797 = vadd.f32 %v1378, %v7796
    %v7798 = vpop.f32.mrf.mxu0
    %7799 = vdwg.mxu0
    %7800 = vmatpush.bf16.msra.mxu0 %v5229
    %7801 = vmatpush.bf16.msra.mxu0 %v5221
    %7802 = vmatpush.bf16.msra.mxu0 %v5213
    %7803 = vmatpush.bf16.msra.mxu0 %v5205
    %7804 = vmatpush.bf16.msra.mxu0 %v5197
    %7805 = vmatpush.bf16.msra.mxu0 %v5189
    %7806 = vmatpush.bf16.msra.mxu0 %v5181
    %7807 = vmatpush.bf16.msra.mxu0 %v5173
    %7808 = vmatmul.bf16.gmra.mxu0 %v1423
    %v7809 = vpop.f32.mrf.mxu0
    %v7810 = vadd.f32 %v7797, %v7809
    %v7811 = vpop.f32.mrf.mxu0
    %7812 = vdwg.mxu0
    %7813 = vmatpush.bf16.msra.mxu0 %v5293
    %7814 = vmatpush.bf16.msra.mxu0 %v5285
    %7815 = vmatpush.bf16.msra.mxu0 %v5277
    %7816 = vmatpush.bf16.msra.mxu0 %v5269
    %7817 = vmatpush.bf16.msra.mxu0 %v5261
    %7818 = vmatpush.bf16.msra.mxu0 %v5253
    %7819 = vmatpush.bf16.msra.mxu0 %v5245
    %7820 = vmatpush.bf16.msra.mxu0 %v5237
    %7821 = vmatmul.bf16.gmra.mxu0 %v1424
    %v7822 = vpop.f32.mrf.mxu0
    %v7823 = vadd.f32 %v7810, %v7822
    %v7824 = vpop.f32.mrf.mxu0
    %7825 = vdwg.mxu0
    %7826 = vmatpush.bf16.msra.mxu0 %v5357
    %7827 = vmatpush.bf16.msra.mxu0 %v5349
    %7828 = vmatpush.bf16.msra.mxu0 %v5341
    %7829 = vmatpush.bf16.msra.mxu0 %v5333
    %7830 = vmatpush.bf16.msra.mxu0 %v5325
    %7831 = vmatpush.bf16.msra.mxu0 %v5317
    %7832 = vmatpush.bf16.msra.mxu0 %v5309
    %7833 = vmatpush.bf16.msra.mxu0 %v5301
    %7834 = vmatmul.bf16.gmra.mxu0 %v1425
    %v7835 = vpop.f32.mrf.mxu0
    %v7836 = vadd.f32 %v7823, %v7835
    %v7837 = vpop.f32.mrf.mxu0
    %7838 = vdwg.mxu0
    %7839 = vmatpush.bf16.msra.mxu0 %v5421
    %7840 = vmatpush.bf16.msra.mxu0 %v5413
    %7841 = vmatpush.bf16.msra.mxu0 %v5405
    %7842 = vmatpush.bf16.msra.mxu0 %v5397
    %7843 = vmatpush.bf16.msra.mxu0 %v5389
    %7844 = vmatpush.bf16.msra.mxu0 %v5381
    %7845 = vmatpush.bf16.msra.mxu0 %v5373
    %7846 = vmatpush.bf16.msra.mxu0 %v5365
    %7847 = vmatmul.bf16.gmra.mxu0 %v1426
    %v7848 = vpop.f32.mrf.mxu0
    %v7849 = vadd.f32 %v7836, %v7848
    %v7850 = vpop.f32.mrf.mxu0
    %7851 = vdwg.mxu0
    %7852 = vmatpush.bf16.msra.mxu0 %v5485
    %7853 = vmatpush.bf16.msra.mxu0 %v5477
    %7854 = vmatpush.bf16.msra.mxu0 %v5469
    %7855 = vmatpush.bf16.msra.mxu0 %v5461
    %7856 = vmatpush.bf16.msra.mxu0 %v5453
    %7857 = vmatpush.bf16.msra.mxu0 %v5445
    %7858 = vmatpush.bf16.msra.mxu0 %v5437
    %7859 = vmatpush.bf16.msra.mxu0 %v5429
    %7860 = vmatmul.bf16.gmra.mxu0 %v1427
    %v7861 = vpop.f32.mrf.mxu0
    %v7862 = vadd.f32 %v7849, %v7861
    %v7863 = vpop.f32.mrf.mxu0
    %7864 = vdwg.mxu0
    %7865 = vmatpush.bf16.msra.mxu0 %v5549
    %7866 = vmatpush.bf16.msra.mxu0 %v5541
    %7867 = vmatpush.bf16.msra.mxu0 %v5533
    %7868 = vmatpush.bf16.msra.mxu0 %v5525
    %7869 = vmatpush.bf16.msra.mxu0 %v5517
    %7870 = vmatpush.bf16.msra.mxu0 %v5509
    %7871 = vmatpush.bf16.msra.mxu0 %v5501
    %7872 = vmatpush.bf16.msra.mxu0 %v5493
    %7873 = vmatmul.bf16.gmra.mxu0 %v1428
    %v7874 = vpop.f32.mrf.mxu0
    %v7875 = vadd.f32 %v7862, %v7874
    %v7876 = vpop.f32.mrf.mxu0
    %7877 = vdwg.mxu0
    %7878 = vmatpush.bf16.msra.mxu0 %v5613
    %7879 = vmatpush.bf16.msra.mxu0 %v5605
    %7880 = vmatpush.bf16.msra.mxu0 %v5597
    %7881 = vmatpush.bf16.msra.mxu0 %v5589
    %7882 = vmatpush.bf16.msra.mxu0 %v5581
    %7883 = vmatpush.bf16.msra.mxu0 %v5573
    %7884 = vmatpush.bf16.msra.mxu0 %v5565
    %7885 = vmatpush.bf16.msra.mxu0 %v5557
    %7886 = vmatmul.bf16.gmra.mxu0 %v1429
    %v7887 = vpop.f32.mrf.mxu0
    %v7888 = vadd.f32 %v7875, %v7887
    %v7889 = vpop.f32.mrf.mxu0
    %7890 = vdwg.mxu0
    %7891 = vmatpush.bf16.msra.mxu0 %v5677
    %7892 = vmatpush.bf16.msra.mxu0 %v5669
    %7893 = vmatpush.bf16.msra.mxu0 %v5661
    %7894 = vmatpush.bf16.msra.mxu0 %v5653
    %7895 = vmatpush.bf16.msra.mxu0 %v5645
    %7896 = vmatpush.bf16.msra.mxu0 %v5637
    %7897 = vmatpush.bf16.msra.mxu0 %v5629
    %7898 = vmatpush.bf16.msra.mxu0 %v5621
    %7899 = vmatmul.bf16.gmra.mxu0 %v1430
    %v7900 = vpop.f32.mrf.mxu0
    %v7901 = vadd.f32 %v7888, %v7900
    %v7902 = vpop.f32.mrf.mxu0
    %7903 = vdwg.mxu0
    %7904 = vmatpush.bf16.msra.mxu0 %v5741
    %7905 = vmatpush.bf16.msra.mxu0 %v5733
    %7906 = vmatpush.bf16.msra.mxu0 %v5725
    %7907 = vmatpush.bf16.msra.mxu0 %v5717
    %7908 = vmatpush.bf16.msra.mxu0 %v5709
    %7909 = vmatpush.bf16.msra.mxu0 %v5701
    %7910 = vmatpush.bf16.msra.mxu0 %v5693
    %7911 = vmatpush.bf16.msra.mxu0 %v5685
    %7912 = vmatmul.bf16.gmra.mxu0 %v1431
    %v7913 = vpop.f32.mrf.mxu0
    %v7914 = vadd.f32 %v7901, %v7913
    %v7915 = vpop.f32.mrf.mxu0
    %7916 = vdwg.mxu0
    %7917 = vmatpush.bf16.msra.mxu0 %v5805
    %7918 = vmatpush.bf16.msra.mxu0 %v5797
    %7919 = vmatpush.bf16.msra.mxu0 %v5789
    %7920 = vmatpush.bf16.msra.mxu0 %v5781
    %7921 = vmatpush.bf16.msra.mxu0 %v5773
    %7922 = vmatpush.bf16.msra.mxu0 %v5765
    %7923 = vmatpush.bf16.msra.mxu0 %v5757
    %7924 = vmatpush.bf16.msra.mxu0 %v5749
    %7925 = vmatmul.bf16.gmra.mxu0 %v1432
    %v7926 = vpop.f32.mrf.mxu0
    %v7927 = vadd.f32 %v7914, %v7926
    %v7928 = vpop.f32.mrf.mxu0
    %7929 = vdwg.mxu0
    %7930 = vmatpush.bf16.msra.mxu0 %v5869
    %7931 = vmatpush.bf16.msra.mxu0 %v5861
    %7932 = vmatpush.bf16.msra.mxu0 %v5853
    %7933 = vmatpush.bf16.msra.mxu0 %v5845
    %7934 = vmatpush.bf16.msra.mxu0 %v5837
    %7935 = vmatpush.bf16.msra.mxu0 %v5829
    %7936 = vmatpush.bf16.msra.mxu0 %v5821
    %7937 = vmatpush.bf16.msra.mxu0 %v5813
    %7938 = vmatmul.bf16.gmra.mxu0 %v1433
    %v7939 = vpop.f32.mrf.mxu0
    %v7940 = vadd.f32 %v7927, %v7939
    %v7941 = vpop.f32.mrf.mxu0
    %7942 = vdwg.mxu0
    %7943 = vmatpush.bf16.msra.mxu0 %v5933
    %7944 = vmatpush.bf16.msra.mxu0 %v5925
    %7945 = vmatpush.bf16.msra.mxu0 %v5917
    %7946 = vmatpush.bf16.msra.mxu0 %v5909
    %7947 = vmatpush.bf16.msra.mxu0 %v5901
    %7948 = vmatpush.bf16.msra.mxu0 %v5893
    %7949 = vmatpush.bf16.msra.mxu0 %v5885
    %7950 = vmatpush.bf16.msra.mxu0 %v5877
    %7951 = vmatmul.bf16.gmra.mxu0 %v1434
    %v7952 = vpop.f32.mrf.mxu0
    %v7953 = vadd.f32 %v7940, %v7952
    %v7954 = vpop.f32.mrf.mxu0
    %7955 = vdwg.mxu0
    %7956 = vmatpush.bf16.msra.mxu0 %v5997
    %7957 = vmatpush.bf16.msra.mxu0 %v5989
    %7958 = vmatpush.bf16.msra.mxu0 %v5981
    %7959 = vmatpush.bf16.msra.mxu0 %v5973
    %7960 = vmatpush.bf16.msra.mxu0 %v5965
    %7961 = vmatpush.bf16.msra.mxu0 %v5957
    %7962 = vmatpush.bf16.msra.mxu0 %v5949
    %7963 = vmatpush.bf16.msra.mxu0 %v5941
    %7964 = vmatmul.bf16.gmra.mxu0 %v1435
    %v7965 = vpop.f32.mrf.mxu0
    %v7966 = vadd.f32 %v7953, %v7965
    %v7967 = vpop.f32.mrf.mxu0
    %7968 = vdwg.mxu0
    %7969 = vmatpush.bf16.msra.mxu0 %v6061
    %7970 = vmatpush.bf16.msra.mxu0 %v6053
    %7971 = vmatpush.bf16.msra.mxu0 %v6045
    %7972 = vmatpush.bf16.msra.mxu0 %v6037
    %7973 = vmatpush.bf16.msra.mxu0 %v6029
    %7974 = vmatpush.bf16.msra.mxu0 %v6021
    %7975 = vmatpush.bf16.msra.mxu0 %v6013
    %7976 = vmatpush.bf16.msra.mxu0 %v6005
    %7977 = vmatmul.bf16.gmra.mxu0 %v1436
    %v7978 = vpop.f32.mrf.mxu0
    %v7979 = vadd.f32 %v7966, %v7978
    %v7980 = vpop.f32.mrf.mxu0
    %7981 = vdwg.mxu0
    %7982 = vmatpush.bf16.msra.mxu0 %v6125
    %7983 = vmatpush.bf16.msra.mxu0 %v6117
    %7984 = vmatpush.bf16.msra.mxu0 %v6109
    %7985 = vmatpush.bf16.msra.mxu0 %v6101
    %7986 = vmatpush.bf16.msra.mxu0 %v6093
    %7987 = vmatpush.bf16.msra.mxu0 %v6085
    %7988 = vmatpush.bf16.msra.mxu0 %v6077
    %7989 = vmatpush.bf16.msra.mxu0 %v6069
    %7990 = vmatmul.bf16.gmra.mxu0 %v1437
    %v7991 = vpop.f32.mrf.mxu0
    %v7992 = vadd.f32 %v7979, %v7991
    %v7993 = vpop.f32.mrf.mxu0
    %7994 = vdwg.mxu0
    %7995 = vmatpush.bf16.msra.mxu0 %v6189
    %7996 = vmatpush.bf16.msra.mxu0 %v6181
    %7997 = vmatpush.bf16.msra.mxu0 %v6173
    %7998 = vmatpush.bf16.msra.mxu0 %v6165
    %7999 = vmatpush.bf16.msra.mxu0 %v6157
    %8000 = vmatpush.bf16.msra.mxu0 %v6149
    %8001 = vmatpush.bf16.msra.mxu0 %v6141
    %8002 = vmatpush.bf16.msra.mxu0 %v6133
    %8003 = vmatmul.bf16.gmra.mxu0 %v1438
    %v8004 = vpop.f32.mrf.mxu0
    %v8005 = vadd.f32 %v7992, %v8004
    %v8006 = vpop.f32.mrf.mxu0
    %8007 = vdwg.mxu0
    %8008 = vmatpush.bf16.msra.mxu0 %v6253
    %8009 = vmatpush.bf16.msra.mxu0 %v6245
    %8010 = vmatpush.bf16.msra.mxu0 %v6237
    %8011 = vmatpush.bf16.msra.mxu0 %v6229
    %8012 = vmatpush.bf16.msra.mxu0 %v6221
    %8013 = vmatpush.bf16.msra.mxu0 %v6213
    %8014 = vmatpush.bf16.msra.mxu0 %v6205
    %8015 = vmatpush.bf16.msra.mxu0 %v6197
    %8016 = vmatmul.bf16.gmra.mxu0 %v1439
    %v8017 = vpop.f32.mrf.mxu0
    %v8018 = vadd.f32 %v8005, %v8017
    %v8019 = vpop.f32.mrf.mxu0
    %8020 = vdwg.mxu0
    %8021 = vmatpush.bf16.msra.mxu0 %v6317
    %8022 = vmatpush.bf16.msra.mxu0 %v6309
    %8023 = vmatpush.bf16.msra.mxu0 %v6301
    %8024 = vmatpush.bf16.msra.mxu0 %v6293
    %8025 = vmatpush.bf16.msra.mxu0 %v6285
    %8026 = vmatpush.bf16.msra.mxu0 %v6277
    %8027 = vmatpush.bf16.msra.mxu0 %v6269
    %8028 = vmatpush.bf16.msra.mxu0 %v6261
    %8029 = vmatmul.bf16.gmra.mxu0 %v1440
    %v8030 = vpop.f32.mrf.mxu0
    %v8031 = vadd.f32 %v8018, %v8030
    %v8032 = vpop.f32.mrf.mxu0
    %8033 = vdwg.mxu0
    %8034 = vmatpush.bf16.msra.mxu0 %v5166
    %8035 = vmatpush.bf16.msra.mxu0 %v5158
    %8036 = vmatpush.bf16.msra.mxu0 %v5150
    %8037 = vmatpush.bf16.msra.mxu0 %v5142
    %8038 = vmatpush.bf16.msra.mxu0 %v5134
    %8039 = vmatpush.bf16.msra.mxu0 %v5126
    %8040 = vmatpush.bf16.msra.mxu0 %v5118
    %8041 = vmatpush.bf16.msra.mxu0 %v5110
    %8042 = vmatmul.bf16.gmra.mxu0 %v1422
    %v8043 = vpop.f32.mrf.mxu0
    %v8044 = vadd.f32 %v1379, %v8043
    %v8045 = vpop.f32.mrf.mxu0
    %8046 = vdwg.mxu0
    %8047 = vmatpush.bf16.msra.mxu0 %v5230
    %8048 = vmatpush.bf16.msra.mxu0 %v5222
    %8049 = vmatpush.bf16.msra.mxu0 %v5214
    %8050 = vmatpush.bf16.msra.mxu0 %v5206
    %8051 = vmatpush.bf16.msra.mxu0 %v5198
    %8052 = vmatpush.bf16.msra.mxu0 %v5190
    %8053 = vmatpush.bf16.msra.mxu0 %v5182
    %8054 = vmatpush.bf16.msra.mxu0 %v5174
    %8055 = vmatmul.bf16.gmra.mxu0 %v1423
    %v8056 = vpop.f32.mrf.mxu0
    %v8057 = vadd.f32 %v8044, %v8056
    %v8058 = vpop.f32.mrf.mxu0
    %8059 = vdwg.mxu0
    %8060 = vmatpush.bf16.msra.mxu0 %v5294
    %8061 = vmatpush.bf16.msra.mxu0 %v5286
    %8062 = vmatpush.bf16.msra.mxu0 %v5278
    %8063 = vmatpush.bf16.msra.mxu0 %v5270
    %8064 = vmatpush.bf16.msra.mxu0 %v5262
    %8065 = vmatpush.bf16.msra.mxu0 %v5254
    %8066 = vmatpush.bf16.msra.mxu0 %v5246
    %8067 = vmatpush.bf16.msra.mxu0 %v5238
    %8068 = vmatmul.bf16.gmra.mxu0 %v1424
    %v8069 = vpop.f32.mrf.mxu0
    %v8070 = vadd.f32 %v8057, %v8069
    %v8071 = vpop.f32.mrf.mxu0
    %8072 = vdwg.mxu0
    %8073 = vmatpush.bf16.msra.mxu0 %v5358
    %8074 = vmatpush.bf16.msra.mxu0 %v5350
    %8075 = vmatpush.bf16.msra.mxu0 %v5342
    %8076 = vmatpush.bf16.msra.mxu0 %v5334
    %8077 = vmatpush.bf16.msra.mxu0 %v5326
    %8078 = vmatpush.bf16.msra.mxu0 %v5318
    %8079 = vmatpush.bf16.msra.mxu0 %v5310
    %8080 = vmatpush.bf16.msra.mxu0 %v5302
    %8081 = vmatmul.bf16.gmra.mxu0 %v1425
    %v8082 = vpop.f32.mrf.mxu0
    %v8083 = vadd.f32 %v8070, %v8082
    %v8084 = vpop.f32.mrf.mxu0
    %8085 = vdwg.mxu0
    %8086 = vmatpush.bf16.msra.mxu0 %v5422
    %8087 = vmatpush.bf16.msra.mxu0 %v5414
    %8088 = vmatpush.bf16.msra.mxu0 %v5406
    %8089 = vmatpush.bf16.msra.mxu0 %v5398
    %8090 = vmatpush.bf16.msra.mxu0 %v5390
    %8091 = vmatpush.bf16.msra.mxu0 %v5382
    %8092 = vmatpush.bf16.msra.mxu0 %v5374
    %8093 = vmatpush.bf16.msra.mxu0 %v5366
    %8094 = vmatmul.bf16.gmra.mxu0 %v1426
    %v8095 = vpop.f32.mrf.mxu0
    %v8096 = vadd.f32 %v8083, %v8095
    %v8097 = vpop.f32.mrf.mxu0
    %8098 = vdwg.mxu0
    %8099 = vmatpush.bf16.msra.mxu0 %v5486
    %8100 = vmatpush.bf16.msra.mxu0 %v5478
    %8101 = vmatpush.bf16.msra.mxu0 %v5470
    %8102 = vmatpush.bf16.msra.mxu0 %v5462
    %8103 = vmatpush.bf16.msra.mxu0 %v5454
    %8104 = vmatpush.bf16.msra.mxu0 %v5446
    %8105 = vmatpush.bf16.msra.mxu0 %v5438
    %8106 = vmatpush.bf16.msra.mxu0 %v5430
    %8107 = vmatmul.bf16.gmra.mxu0 %v1427
    %v8108 = vpop.f32.mrf.mxu0
    %v8109 = vadd.f32 %v8096, %v8108
    %v8110 = vpop.f32.mrf.mxu0
    %8111 = vdwg.mxu0
    %8112 = vmatpush.bf16.msra.mxu0 %v5550
    %8113 = vmatpush.bf16.msra.mxu0 %v5542
    %8114 = vmatpush.bf16.msra.mxu0 %v5534
    %8115 = vmatpush.bf16.msra.mxu0 %v5526
    %8116 = vmatpush.bf16.msra.mxu0 %v5518
    %8117 = vmatpush.bf16.msra.mxu0 %v5510
    %8118 = vmatpush.bf16.msra.mxu0 %v5502
    %8119 = vmatpush.bf16.msra.mxu0 %v5494
    %8120 = vmatmul.bf16.gmra.mxu0 %v1428
    %v8121 = vpop.f32.mrf.mxu0
    %v8122 = vadd.f32 %v8109, %v8121
    %v8123 = vpop.f32.mrf.mxu0
    %8124 = vdwg.mxu0
    %8125 = vmatpush.bf16.msra.mxu0 %v5614
    %8126 = vmatpush.bf16.msra.mxu0 %v5606
    %8127 = vmatpush.bf16.msra.mxu0 %v5598
    %8128 = vmatpush.bf16.msra.mxu0 %v5590
    %8129 = vmatpush.bf16.msra.mxu0 %v5582
    %8130 = vmatpush.bf16.msra.mxu0 %v5574
    %8131 = vmatpush.bf16.msra.mxu0 %v5566
    %8132 = vmatpush.bf16.msra.mxu0 %v5558
    %8133 = vmatmul.bf16.gmra.mxu0 %v1429
    %v8134 = vpop.f32.mrf.mxu0
    %v8135 = vadd.f32 %v8122, %v8134
    %v8136 = vpop.f32.mrf.mxu0
    %8137 = vdwg.mxu0
    %8138 = vmatpush.bf16.msra.mxu0 %v5678
    %8139 = vmatpush.bf16.msra.mxu0 %v5670
    %8140 = vmatpush.bf16.msra.mxu0 %v5662
    %8141 = vmatpush.bf16.msra.mxu0 %v5654
    %8142 = vmatpush.bf16.msra.mxu0 %v5646
    %8143 = vmatpush.bf16.msra.mxu0 %v5638
    %8144 = vmatpush.bf16.msra.mxu0 %v5630
    %8145 = vmatpush.bf16.msra.mxu0 %v5622
    %8146 = vmatmul.bf16.gmra.mxu0 %v1430
    %v8147 = vpop.f32.mrf.mxu0
    %v8148 = vadd.f32 %v8135, %v8147
    %v8149 = vpop.f32.mrf.mxu0
    %8150 = vdwg.mxu0
    %8151 = vmatpush.bf16.msra.mxu0 %v5742
    %8152 = vmatpush.bf16.msra.mxu0 %v5734
    %8153 = vmatpush.bf16.msra.mxu0 %v5726
    %8154 = vmatpush.bf16.msra.mxu0 %v5718
    %8155 = vmatpush.bf16.msra.mxu0 %v5710
    %8156 = vmatpush.bf16.msra.mxu0 %v5702
    %8157 = vmatpush.bf16.msra.mxu0 %v5694
    %8158 = vmatpush.bf16.msra.mxu0 %v5686
    %8159 = vmatmul.bf16.gmra.mxu0 %v1431
    %v8160 = vpop.f32.mrf.mxu0
    %v8161 = vadd.f32 %v8148, %v8160
    %v8162 = vpop.f32.mrf.mxu0
    %8163 = vdwg.mxu0
    %8164 = vmatpush.bf16.msra.mxu0 %v5806
    %8165 = vmatpush.bf16.msra.mxu0 %v5798
    %8166 = vmatpush.bf16.msra.mxu0 %v5790
    %8167 = vmatpush.bf16.msra.mxu0 %v5782
    %8168 = vmatpush.bf16.msra.mxu0 %v5774
    %8169 = vmatpush.bf16.msra.mxu0 %v5766
    %8170 = vmatpush.bf16.msra.mxu0 %v5758
    %8171 = vmatpush.bf16.msra.mxu0 %v5750
    %8172 = vmatmul.bf16.gmra.mxu0 %v1432
    %v8173 = vpop.f32.mrf.mxu0
    %v8174 = vadd.f32 %v8161, %v8173
    %v8175 = vpop.f32.mrf.mxu0
    %8176 = vdwg.mxu0
    %8177 = vmatpush.bf16.msra.mxu0 %v5870
    %8178 = vmatpush.bf16.msra.mxu0 %v5862
    %8179 = vmatpush.bf16.msra.mxu0 %v5854
    %8180 = vmatpush.bf16.msra.mxu0 %v5846
    %8181 = vmatpush.bf16.msra.mxu0 %v5838
    %8182 = vmatpush.bf16.msra.mxu0 %v5830
    %8183 = vmatpush.bf16.msra.mxu0 %v5822
    %8184 = vmatpush.bf16.msra.mxu0 %v5814
    %8185 = vmatmul.bf16.gmra.mxu0 %v1433
    %v8186 = vpop.f32.mrf.mxu0
    %v8187 = vadd.f32 %v8174, %v8186
    %v8188 = vpop.f32.mrf.mxu0
    %8189 = vdwg.mxu0
    %8190 = vmatpush.bf16.msra.mxu0 %v5934
    %8191 = vmatpush.bf16.msra.mxu0 %v5926
    %8192 = vmatpush.bf16.msra.mxu0 %v5918
    %8193 = vmatpush.bf16.msra.mxu0 %v5910
    %8194 = vmatpush.bf16.msra.mxu0 %v5902
    %8195 = vmatpush.bf16.msra.mxu0 %v5894
    %8196 = vmatpush.bf16.msra.mxu0 %v5886
    %8197 = vmatpush.bf16.msra.mxu0 %v5878
    %8198 = vmatmul.bf16.gmra.mxu0 %v1434
    %v8199 = vpop.f32.mrf.mxu0
    %v8200 = vadd.f32 %v8187, %v8199
    %v8201 = vpop.f32.mrf.mxu0
    %8202 = vdwg.mxu0
    %8203 = vmatpush.bf16.msra.mxu0 %v5998
    %8204 = vmatpush.bf16.msra.mxu0 %v5990
    %8205 = vmatpush.bf16.msra.mxu0 %v5982
    %8206 = vmatpush.bf16.msra.mxu0 %v5974
    %8207 = vmatpush.bf16.msra.mxu0 %v5966
    %8208 = vmatpush.bf16.msra.mxu0 %v5958
    %8209 = vmatpush.bf16.msra.mxu0 %v5950
    %8210 = vmatpush.bf16.msra.mxu0 %v5942
    %8211 = vmatmul.bf16.gmra.mxu0 %v1435
    %v8212 = vpop.f32.mrf.mxu0
    %v8213 = vadd.f32 %v8200, %v8212
    %v8214 = vpop.f32.mrf.mxu0
    %8215 = vdwg.mxu0
    %8216 = vmatpush.bf16.msra.mxu0 %v6062
    %8217 = vmatpush.bf16.msra.mxu0 %v6054
    %8218 = vmatpush.bf16.msra.mxu0 %v6046
    %8219 = vmatpush.bf16.msra.mxu0 %v6038
    %8220 = vmatpush.bf16.msra.mxu0 %v6030
    %8221 = vmatpush.bf16.msra.mxu0 %v6022
    %8222 = vmatpush.bf16.msra.mxu0 %v6014
    %8223 = vmatpush.bf16.msra.mxu0 %v6006
    %8224 = vmatmul.bf16.gmra.mxu0 %v1436
    %v8225 = vpop.f32.mrf.mxu0
    %v8226 = vadd.f32 %v8213, %v8225
    %v8227 = vpop.f32.mrf.mxu0
    %8228 = vdwg.mxu0
    %8229 = vmatpush.bf16.msra.mxu0 %v6126
    %8230 = vmatpush.bf16.msra.mxu0 %v6118
    %8231 = vmatpush.bf16.msra.mxu0 %v6110
    %8232 = vmatpush.bf16.msra.mxu0 %v6102
    %8233 = vmatpush.bf16.msra.mxu0 %v6094
    %8234 = vmatpush.bf16.msra.mxu0 %v6086
    %8235 = vmatpush.bf16.msra.mxu0 %v6078
    %8236 = vmatpush.bf16.msra.mxu0 %v6070
    %8237 = vmatmul.bf16.gmra.mxu0 %v1437
    %v8238 = vpop.f32.mrf.mxu0
    %v8239 = vadd.f32 %v8226, %v8238
    %v8240 = vpop.f32.mrf.mxu0
    %8241 = vdwg.mxu0
    %8242 = vmatpush.bf16.msra.mxu0 %v6190
    %8243 = vmatpush.bf16.msra.mxu0 %v6182
    %8244 = vmatpush.bf16.msra.mxu0 %v6174
    %8245 = vmatpush.bf16.msra.mxu0 %v6166
    %8246 = vmatpush.bf16.msra.mxu0 %v6158
    %8247 = vmatpush.bf16.msra.mxu0 %v6150
    %8248 = vmatpush.bf16.msra.mxu0 %v6142
    %8249 = vmatpush.bf16.msra.mxu0 %v6134
    %8250 = vmatmul.bf16.gmra.mxu0 %v1438
    %v8251 = vpop.f32.mrf.mxu0
    %v8252 = vadd.f32 %v8239, %v8251
    %v8253 = vpop.f32.mrf.mxu0
    %8254 = vdwg.mxu0
    %8255 = vmatpush.bf16.msra.mxu0 %v6254
    %8256 = vmatpush.bf16.msra.mxu0 %v6246
    %8257 = vmatpush.bf16.msra.mxu0 %v6238
    %8258 = vmatpush.bf16.msra.mxu0 %v6230
    %8259 = vmatpush.bf16.msra.mxu0 %v6222
    %8260 = vmatpush.bf16.msra.mxu0 %v6214
    %8261 = vmatpush.bf16.msra.mxu0 %v6206
    %8262 = vmatpush.bf16.msra.mxu0 %v6198
    %8263 = vmatmul.bf16.gmra.mxu0 %v1439
    %v8264 = vpop.f32.mrf.mxu0
    %v8265 = vadd.f32 %v8252, %v8264
    %v8266 = vpop.f32.mrf.mxu0
    %8267 = vdwg.mxu0
    %8268 = vmatpush.bf16.msra.mxu0 %v6318
    %8269 = vmatpush.bf16.msra.mxu0 %v6310
    %8270 = vmatpush.bf16.msra.mxu0 %v6302
    %8271 = vmatpush.bf16.msra.mxu0 %v6294
    %8272 = vmatpush.bf16.msra.mxu0 %v6286
    %8273 = vmatpush.bf16.msra.mxu0 %v6278
    %8274 = vmatpush.bf16.msra.mxu0 %v6270
    %8275 = vmatpush.bf16.msra.mxu0 %v6262
    %8276 = vmatmul.bf16.gmra.mxu0 %v1440
    %v8277 = vpop.f32.mrf.mxu0
    %v8278 = vadd.f32 %v8265, %v8277
    %v8279 = vpop.f32.mrf.mxu0
    %8280 = vdwg.mxu0
    %8281 = vmatpush.bf16.msra.mxu0 %v5167
    %8282 = vmatpush.bf16.msra.mxu0 %v5159
    %8283 = vmatpush.bf16.msra.mxu0 %v5151
    %8284 = vmatpush.bf16.msra.mxu0 %v5143
    %8285 = vmatpush.bf16.msra.mxu0 %v5135
    %8286 = vmatpush.bf16.msra.mxu0 %v5127
    %8287 = vmatpush.bf16.msra.mxu0 %v5119
    %8288 = vmatpush.bf16.msra.mxu0 %v5111
    %8289 = vmatmul.bf16.gmra.mxu0 %v1422
    %v8290 = vpop.f32.mrf.mxu0
    %v8291 = vadd.f32 %v1380, %v8290
    %v8292 = vpop.f32.mrf.mxu0
    %8293 = vdwg.mxu0
    %8294 = vmatpush.bf16.msra.mxu0 %v5231
    %8295 = vmatpush.bf16.msra.mxu0 %v5223
    %8296 = vmatpush.bf16.msra.mxu0 %v5215
    %8297 = vmatpush.bf16.msra.mxu0 %v5207
    %8298 = vmatpush.bf16.msra.mxu0 %v5199
    %8299 = vmatpush.bf16.msra.mxu0 %v5191
    %8300 = vmatpush.bf16.msra.mxu0 %v5183
    %8301 = vmatpush.bf16.msra.mxu0 %v5175
    %8302 = vmatmul.bf16.gmra.mxu0 %v1423
    %v8303 = vpop.f32.mrf.mxu0
    %v8304 = vadd.f32 %v8291, %v8303
    %v8305 = vpop.f32.mrf.mxu0
    %8306 = vdwg.mxu0
    %8307 = vmatpush.bf16.msra.mxu0 %v5295
    %8308 = vmatpush.bf16.msra.mxu0 %v5287
    %8309 = vmatpush.bf16.msra.mxu0 %v5279
    %8310 = vmatpush.bf16.msra.mxu0 %v5271
    %8311 = vmatpush.bf16.msra.mxu0 %v5263
    %8312 = vmatpush.bf16.msra.mxu0 %v5255
    %8313 = vmatpush.bf16.msra.mxu0 %v5247
    %8314 = vmatpush.bf16.msra.mxu0 %v5239
    %8315 = vmatmul.bf16.gmra.mxu0 %v1424
    %v8316 = vpop.f32.mrf.mxu0
    %v8317 = vadd.f32 %v8304, %v8316
    %v8318 = vpop.f32.mrf.mxu0
    %8319 = vdwg.mxu0
    %8320 = vmatpush.bf16.msra.mxu0 %v5359
    %8321 = vmatpush.bf16.msra.mxu0 %v5351
    %8322 = vmatpush.bf16.msra.mxu0 %v5343
    %8323 = vmatpush.bf16.msra.mxu0 %v5335
    %8324 = vmatpush.bf16.msra.mxu0 %v5327
    %8325 = vmatpush.bf16.msra.mxu0 %v5319
    %8326 = vmatpush.bf16.msra.mxu0 %v5311
    %8327 = vmatpush.bf16.msra.mxu0 %v5303
    %8328 = vmatmul.bf16.gmra.mxu0 %v1425
    %v8329 = vpop.f32.mrf.mxu0
    %v8330 = vadd.f32 %v8317, %v8329
    %v8331 = vpop.f32.mrf.mxu0
    %8332 = vdwg.mxu0
    %8333 = vmatpush.bf16.msra.mxu0 %v5423
    %8334 = vmatpush.bf16.msra.mxu0 %v5415
    %8335 = vmatpush.bf16.msra.mxu0 %v5407
    %8336 = vmatpush.bf16.msra.mxu0 %v5399
    %8337 = vmatpush.bf16.msra.mxu0 %v5391
    %8338 = vmatpush.bf16.msra.mxu0 %v5383
    %8339 = vmatpush.bf16.msra.mxu0 %v5375
    %8340 = vmatpush.bf16.msra.mxu0 %v5367
    %8341 = vmatmul.bf16.gmra.mxu0 %v1426
    %v8342 = vpop.f32.mrf.mxu0
    %v8343 = vadd.f32 %v8330, %v8342
    %v8344 = vpop.f32.mrf.mxu0
    %8345 = vdwg.mxu0
    %8346 = vmatpush.bf16.msra.mxu0 %v5487
    %8347 = vmatpush.bf16.msra.mxu0 %v5479
    %8348 = vmatpush.bf16.msra.mxu0 %v5471
    %8349 = vmatpush.bf16.msra.mxu0 %v5463
    %8350 = vmatpush.bf16.msra.mxu0 %v5455
    %8351 = vmatpush.bf16.msra.mxu0 %v5447
    %8352 = vmatpush.bf16.msra.mxu0 %v5439
    %8353 = vmatpush.bf16.msra.mxu0 %v5431
    %8354 = vmatmul.bf16.gmra.mxu0 %v1427
    %v8355 = vpop.f32.mrf.mxu0
    %v8356 = vadd.f32 %v8343, %v8355
    %v8357 = vpop.f32.mrf.mxu0
    %8358 = vdwg.mxu0
    %8359 = vmatpush.bf16.msra.mxu0 %v5551
    %8360 = vmatpush.bf16.msra.mxu0 %v5543
    %8361 = vmatpush.bf16.msra.mxu0 %v5535
    %8362 = vmatpush.bf16.msra.mxu0 %v5527
    %8363 = vmatpush.bf16.msra.mxu0 %v5519
    %8364 = vmatpush.bf16.msra.mxu0 %v5511
    %8365 = vmatpush.bf16.msra.mxu0 %v5503
    %8366 = vmatpush.bf16.msra.mxu0 %v5495
    %8367 = vmatmul.bf16.gmra.mxu0 %v1428
    %v8368 = vpop.f32.mrf.mxu0
    %v8369 = vadd.f32 %v8356, %v8368
    %v8370 = vpop.f32.mrf.mxu0
    %8371 = vdwg.mxu0
    %8372 = vmatpush.bf16.msra.mxu0 %v5615
    %8373 = vmatpush.bf16.msra.mxu0 %v5607
    %8374 = vmatpush.bf16.msra.mxu0 %v5599
    %8375 = vmatpush.bf16.msra.mxu0 %v5591
    %8376 = vmatpush.bf16.msra.mxu0 %v5583
    %8377 = vmatpush.bf16.msra.mxu0 %v5575
    %8378 = vmatpush.bf16.msra.mxu0 %v5567
    %8379 = vmatpush.bf16.msra.mxu0 %v5559
    %8380 = vmatmul.bf16.gmra.mxu0 %v1429
    %v8381 = vpop.f32.mrf.mxu0
    %v8382 = vadd.f32 %v8369, %v8381
    %v8383 = vpop.f32.mrf.mxu0
    %8384 = vdwg.mxu0
    %8385 = vmatpush.bf16.msra.mxu0 %v5679
    %8386 = vmatpush.bf16.msra.mxu0 %v5671
    %8387 = vmatpush.bf16.msra.mxu0 %v5663
    %8388 = vmatpush.bf16.msra.mxu0 %v5655
    %8389 = vmatpush.bf16.msra.mxu0 %v5647
    %8390 = vmatpush.bf16.msra.mxu0 %v5639
    %8391 = vmatpush.bf16.msra.mxu0 %v5631
    %8392 = vmatpush.bf16.msra.mxu0 %v5623
    %8393 = vmatmul.bf16.gmra.mxu0 %v1430
    %v8394 = vpop.f32.mrf.mxu0
    %v8395 = vadd.f32 %v8382, %v8394
    %v8396 = vpop.f32.mrf.mxu0
    %8397 = vdwg.mxu0
    %8398 = vmatpush.bf16.msra.mxu0 %v5743
    %8399 = vmatpush.bf16.msra.mxu0 %v5735
    %8400 = vmatpush.bf16.msra.mxu0 %v5727
    %8401 = vmatpush.bf16.msra.mxu0 %v5719
    %8402 = vmatpush.bf16.msra.mxu0 %v5711
    %8403 = vmatpush.bf16.msra.mxu0 %v5703
    %8404 = vmatpush.bf16.msra.mxu0 %v5695
    %8405 = vmatpush.bf16.msra.mxu0 %v5687
    %8406 = vmatmul.bf16.gmra.mxu0 %v1431
    %v8407 = vpop.f32.mrf.mxu0
    %v8408 = vadd.f32 %v8395, %v8407
    %v8409 = vpop.f32.mrf.mxu0
    %8410 = vdwg.mxu0
    %8411 = vmatpush.bf16.msra.mxu0 %v5807
    %8412 = vmatpush.bf16.msra.mxu0 %v5799
    %8413 = vmatpush.bf16.msra.mxu0 %v5791
    %8414 = vmatpush.bf16.msra.mxu0 %v5783
    %8415 = vmatpush.bf16.msra.mxu0 %v5775
    %8416 = vmatpush.bf16.msra.mxu0 %v5767
    %8417 = vmatpush.bf16.msra.mxu0 %v5759
    %8418 = vmatpush.bf16.msra.mxu0 %v5751
    %8419 = vmatmul.bf16.gmra.mxu0 %v1432
    %v8420 = vpop.f32.mrf.mxu0
    %v8421 = vadd.f32 %v8408, %v8420
    %v8422 = vpop.f32.mrf.mxu0
    %8423 = vdwg.mxu0
    %8424 = vmatpush.bf16.msra.mxu0 %v5871
    %8425 = vmatpush.bf16.msra.mxu0 %v5863
    %8426 = vmatpush.bf16.msra.mxu0 %v5855
    %8427 = vmatpush.bf16.msra.mxu0 %v5847
    %8428 = vmatpush.bf16.msra.mxu0 %v5839
    %8429 = vmatpush.bf16.msra.mxu0 %v5831
    %8430 = vmatpush.bf16.msra.mxu0 %v5823
    %8431 = vmatpush.bf16.msra.mxu0 %v5815
    %8432 = vmatmul.bf16.gmra.mxu0 %v1433
    %v8433 = vpop.f32.mrf.mxu0
    %v8434 = vadd.f32 %v8421, %v8433
    %v8435 = vpop.f32.mrf.mxu0
    %8436 = vdwg.mxu0
    %8437 = vmatpush.bf16.msra.mxu0 %v5935
    %8438 = vmatpush.bf16.msra.mxu0 %v5927
    %8439 = vmatpush.bf16.msra.mxu0 %v5919
    %8440 = vmatpush.bf16.msra.mxu0 %v5911
    %8441 = vmatpush.bf16.msra.mxu0 %v5903
    %8442 = vmatpush.bf16.msra.mxu0 %v5895
    %8443 = vmatpush.bf16.msra.mxu0 %v5887
    %8444 = vmatpush.bf16.msra.mxu0 %v5879
    %8445 = vmatmul.bf16.gmra.mxu0 %v1434
    %v8446 = vpop.f32.mrf.mxu0
    %v8447 = vadd.f32 %v8434, %v8446
    %v8448 = vpop.f32.mrf.mxu0
    %8449 = vdwg.mxu0
    %8450 = vmatpush.bf16.msra.mxu0 %v5999
    %8451 = vmatpush.bf16.msra.mxu0 %v5991
    %8452 = vmatpush.bf16.msra.mxu0 %v5983
    %8453 = vmatpush.bf16.msra.mxu0 %v5975
    %8454 = vmatpush.bf16.msra.mxu0 %v5967
    %8455 = vmatpush.bf16.msra.mxu0 %v5959
    %8456 = vmatpush.bf16.msra.mxu0 %v5951
    %8457 = vmatpush.bf16.msra.mxu0 %v5943
    %8458 = vmatmul.bf16.gmra.mxu0 %v1435
    %v8459 = vpop.f32.mrf.mxu0
    %v8460 = vadd.f32 %v8447, %v8459
    %v8461 = vpop.f32.mrf.mxu0
    %8462 = vdwg.mxu0
    %8463 = vmatpush.bf16.msra.mxu0 %v6063
    %8464 = vmatpush.bf16.msra.mxu0 %v6055
    %8465 = vmatpush.bf16.msra.mxu0 %v6047
    %8466 = vmatpush.bf16.msra.mxu0 %v6039
    %8467 = vmatpush.bf16.msra.mxu0 %v6031
    %8468 = vmatpush.bf16.msra.mxu0 %v6023
    %8469 = vmatpush.bf16.msra.mxu0 %v6015
    %8470 = vmatpush.bf16.msra.mxu0 %v6007
    %8471 = vmatmul.bf16.gmra.mxu0 %v1436
    %v8472 = vpop.f32.mrf.mxu0
    %v8473 = vadd.f32 %v8460, %v8472
    %v8474 = vpop.f32.mrf.mxu0
    %8475 = vdwg.mxu0
    %8476 = vmatpush.bf16.msra.mxu0 %v6127
    %8477 = vmatpush.bf16.msra.mxu0 %v6119
    %8478 = vmatpush.bf16.msra.mxu0 %v6111
    %8479 = vmatpush.bf16.msra.mxu0 %v6103
    %8480 = vmatpush.bf16.msra.mxu0 %v6095
    %8481 = vmatpush.bf16.msra.mxu0 %v6087
    %8482 = vmatpush.bf16.msra.mxu0 %v6079
    %8483 = vmatpush.bf16.msra.mxu0 %v6071
    %8484 = vmatmul.bf16.gmra.mxu0 %v1437
    %v8485 = vpop.f32.mrf.mxu0
    %v8486 = vadd.f32 %v8473, %v8485
    %v8487 = vpop.f32.mrf.mxu0
    %8488 = vdwg.mxu0
    %8489 = vmatpush.bf16.msra.mxu0 %v6191
    %8490 = vmatpush.bf16.msra.mxu0 %v6183
    %8491 = vmatpush.bf16.msra.mxu0 %v6175
    %8492 = vmatpush.bf16.msra.mxu0 %v6167
    %8493 = vmatpush.bf16.msra.mxu0 %v6159
    %8494 = vmatpush.bf16.msra.mxu0 %v6151
    %8495 = vmatpush.bf16.msra.mxu0 %v6143
    %8496 = vmatpush.bf16.msra.mxu0 %v6135
    %8497 = vmatmul.bf16.gmra.mxu0 %v1438
    %v8498 = vpop.f32.mrf.mxu0
    %v8499 = vadd.f32 %v8486, %v8498
    %v8500 = vpop.f32.mrf.mxu0
    %8501 = vdwg.mxu0
    %8502 = vmatpush.bf16.msra.mxu0 %v6255
    %8503 = vmatpush.bf16.msra.mxu0 %v6247
    %8504 = vmatpush.bf16.msra.mxu0 %v6239
    %8505 = vmatpush.bf16.msra.mxu0 %v6231
    %8506 = vmatpush.bf16.msra.mxu0 %v6223
    %8507 = vmatpush.bf16.msra.mxu0 %v6215
    %8508 = vmatpush.bf16.msra.mxu0 %v6207
    %8509 = vmatpush.bf16.msra.mxu0 %v6199
    %8510 = vmatmul.bf16.gmra.mxu0 %v1439
    %v8511 = vpop.f32.mrf.mxu0
    %v8512 = vadd.f32 %v8499, %v8511
    %v8513 = vpop.f32.mrf.mxu0
    %8514 = vdwg.mxu0
    %8515 = vmatpush.bf16.msra.mxu0 %v6319
    %8516 = vmatpush.bf16.msra.mxu0 %v6311
    %8517 = vmatpush.bf16.msra.mxu0 %v6303
    %8518 = vmatpush.bf16.msra.mxu0 %v6295
    %8519 = vmatpush.bf16.msra.mxu0 %v6287
    %8520 = vmatpush.bf16.msra.mxu0 %v6279
    %8521 = vmatpush.bf16.msra.mxu0 %v6271
    %8522 = vmatpush.bf16.msra.mxu0 %v6263
    %8523 = vmatmul.bf16.gmra.mxu0 %v1440
    %v8524 = vpop.f32.mrf.mxu0
    %v8525 = vadd.f32 %v8512, %v8524
    %v8526 = vpop.f32.mrf.mxu0
    %8527 = vdwg.mxu0
    %8528 = vmatpush.bf16.msra.mxu0 %v5168
    %8529 = vmatpush.bf16.msra.mxu0 %v5160
    %8530 = vmatpush.bf16.msra.mxu0 %v5152
    %8531 = vmatpush.bf16.msra.mxu0 %v5144
    %8532 = vmatpush.bf16.msra.mxu0 %v5136
    %8533 = vmatpush.bf16.msra.mxu0 %v5128
    %8534 = vmatpush.bf16.msra.mxu0 %v5120
    %8535 = vmatpush.bf16.msra.mxu0 %v5112
    %8536 = vmatmul.bf16.gmra.mxu0 %v1422
    %v8537 = vpop.f32.mrf.mxu0
    %v8538 = vadd.f32 %v1381, %v8537
    %v8539 = vpop.f32.mrf.mxu0
    %8540 = vdwg.mxu0
    %8541 = vmatpush.bf16.msra.mxu0 %v5232
    %8542 = vmatpush.bf16.msra.mxu0 %v5224
    %8543 = vmatpush.bf16.msra.mxu0 %v5216
    %8544 = vmatpush.bf16.msra.mxu0 %v5208
    %8545 = vmatpush.bf16.msra.mxu0 %v5200
    %8546 = vmatpush.bf16.msra.mxu0 %v5192
    %8547 = vmatpush.bf16.msra.mxu0 %v5184
    %8548 = vmatpush.bf16.msra.mxu0 %v5176
    %8549 = vmatmul.bf16.gmra.mxu0 %v1423
    %v8550 = vpop.f32.mrf.mxu0
    %v8551 = vadd.f32 %v8538, %v8550
    %v8552 = vpop.f32.mrf.mxu0
    %8553 = vdwg.mxu0
    %8554 = vmatpush.bf16.msra.mxu0 %v5296
    %8555 = vmatpush.bf16.msra.mxu0 %v5288
    %8556 = vmatpush.bf16.msra.mxu0 %v5280
    %8557 = vmatpush.bf16.msra.mxu0 %v5272
    %8558 = vmatpush.bf16.msra.mxu0 %v5264
    %8559 = vmatpush.bf16.msra.mxu0 %v5256
    %8560 = vmatpush.bf16.msra.mxu0 %v5248
    %8561 = vmatpush.bf16.msra.mxu0 %v5240
    %8562 = vmatmul.bf16.gmra.mxu0 %v1424
    %v8563 = vpop.f32.mrf.mxu0
    %v8564 = vadd.f32 %v8551, %v8563
    %v8565 = vpop.f32.mrf.mxu0
    %8566 = vdwg.mxu0
    %8567 = vmatpush.bf16.msra.mxu0 %v5360
    %8568 = vmatpush.bf16.msra.mxu0 %v5352
    %8569 = vmatpush.bf16.msra.mxu0 %v5344
    %8570 = vmatpush.bf16.msra.mxu0 %v5336
    %8571 = vmatpush.bf16.msra.mxu0 %v5328
    %8572 = vmatpush.bf16.msra.mxu0 %v5320
    %8573 = vmatpush.bf16.msra.mxu0 %v5312
    %8574 = vmatpush.bf16.msra.mxu0 %v5304
    %8575 = vmatmul.bf16.gmra.mxu0 %v1425
    %v8576 = vpop.f32.mrf.mxu0
    %v8577 = vadd.f32 %v8564, %v8576
    %v8578 = vpop.f32.mrf.mxu0
    %8579 = vdwg.mxu0
    %8580 = vmatpush.bf16.msra.mxu0 %v5424
    %8581 = vmatpush.bf16.msra.mxu0 %v5416
    %8582 = vmatpush.bf16.msra.mxu0 %v5408
    %8583 = vmatpush.bf16.msra.mxu0 %v5400
    %8584 = vmatpush.bf16.msra.mxu0 %v5392
    %8585 = vmatpush.bf16.msra.mxu0 %v5384
    %8586 = vmatpush.bf16.msra.mxu0 %v5376
    %8587 = vmatpush.bf16.msra.mxu0 %v5368
    %8588 = vmatmul.bf16.gmra.mxu0 %v1426
    %v8589 = vpop.f32.mrf.mxu0
    %v8590 = vadd.f32 %v8577, %v8589
    %v8591 = vpop.f32.mrf.mxu0
    %8592 = vdwg.mxu0
    %8593 = vmatpush.bf16.msra.mxu0 %v5488
    %8594 = vmatpush.bf16.msra.mxu0 %v5480
    %8595 = vmatpush.bf16.msra.mxu0 %v5472
    %8596 = vmatpush.bf16.msra.mxu0 %v5464
    %8597 = vmatpush.bf16.msra.mxu0 %v5456
    %8598 = vmatpush.bf16.msra.mxu0 %v5448
    %8599 = vmatpush.bf16.msra.mxu0 %v5440
    %8600 = vmatpush.bf16.msra.mxu0 %v5432
    %8601 = vmatmul.bf16.gmra.mxu0 %v1427
    %v8602 = vpop.f32.mrf.mxu0
    %v8603 = vadd.f32 %v8590, %v8602
    %v8604 = vpop.f32.mrf.mxu0
    %8605 = vdwg.mxu0
    %8606 = vmatpush.bf16.msra.mxu0 %v5552
    %8607 = vmatpush.bf16.msra.mxu0 %v5544
    %8608 = vmatpush.bf16.msra.mxu0 %v5536
    %8609 = vmatpush.bf16.msra.mxu0 %v5528
    %8610 = vmatpush.bf16.msra.mxu0 %v5520
    %8611 = vmatpush.bf16.msra.mxu0 %v5512
    %8612 = vmatpush.bf16.msra.mxu0 %v5504
    %8613 = vmatpush.bf16.msra.mxu0 %v5496
    %8614 = vmatmul.bf16.gmra.mxu0 %v1428
    %v8615 = vpop.f32.mrf.mxu0
    %v8616 = vadd.f32 %v8603, %v8615
    %v8617 = vpop.f32.mrf.mxu0
    %8618 = vdwg.mxu0
    %8619 = vmatpush.bf16.msra.mxu0 %v5616
    %8620 = vmatpush.bf16.msra.mxu0 %v5608
    %8621 = vmatpush.bf16.msra.mxu0 %v5600
    %8622 = vmatpush.bf16.msra.mxu0 %v5592
    %8623 = vmatpush.bf16.msra.mxu0 %v5584
    %8624 = vmatpush.bf16.msra.mxu0 %v5576
    %8625 = vmatpush.bf16.msra.mxu0 %v5568
    %8626 = vmatpush.bf16.msra.mxu0 %v5560
    %8627 = vmatmul.bf16.gmra.mxu0 %v1429
    %v8628 = vpop.f32.mrf.mxu0
    %v8629 = vadd.f32 %v8616, %v8628
    %v8630 = vpop.f32.mrf.mxu0
    %8631 = vdwg.mxu0
    %8632 = vmatpush.bf16.msra.mxu0 %v5680
    %8633 = vmatpush.bf16.msra.mxu0 %v5672
    %8634 = vmatpush.bf16.msra.mxu0 %v5664
    %8635 = vmatpush.bf16.msra.mxu0 %v5656
    %8636 = vmatpush.bf16.msra.mxu0 %v5648
    %8637 = vmatpush.bf16.msra.mxu0 %v5640
    %8638 = vmatpush.bf16.msra.mxu0 %v5632
    %8639 = vmatpush.bf16.msra.mxu0 %v5624
    %8640 = vmatmul.bf16.gmra.mxu0 %v1430
    %v8641 = vpop.f32.mrf.mxu0
    %v8642 = vadd.f32 %v8629, %v8641
    %v8643 = vpop.f32.mrf.mxu0
    %8644 = vdwg.mxu0
    %8645 = vmatpush.bf16.msra.mxu0 %v5744
    %8646 = vmatpush.bf16.msra.mxu0 %v5736
    %8647 = vmatpush.bf16.msra.mxu0 %v5728
    %8648 = vmatpush.bf16.msra.mxu0 %v5720
    %8649 = vmatpush.bf16.msra.mxu0 %v5712
    %8650 = vmatpush.bf16.msra.mxu0 %v5704
    %8651 = vmatpush.bf16.msra.mxu0 %v5696
    %8652 = vmatpush.bf16.msra.mxu0 %v5688
    %8653 = vmatmul.bf16.gmra.mxu0 %v1431
    %v8654 = vpop.f32.mrf.mxu0
    %v8655 = vadd.f32 %v8642, %v8654
    %v8656 = vpop.f32.mrf.mxu0
    %8657 = vdwg.mxu0
    %8658 = vmatpush.bf16.msra.mxu0 %v5808
    %8659 = vmatpush.bf16.msra.mxu0 %v5800
    %8660 = vmatpush.bf16.msra.mxu0 %v5792
    %8661 = vmatpush.bf16.msra.mxu0 %v5784
    %8662 = vmatpush.bf16.msra.mxu0 %v5776
    %8663 = vmatpush.bf16.msra.mxu0 %v5768
    %8664 = vmatpush.bf16.msra.mxu0 %v5760
    %8665 = vmatpush.bf16.msra.mxu0 %v5752
    %8666 = vmatmul.bf16.gmra.mxu0 %v1432
    %v8667 = vpop.f32.mrf.mxu0
    %v8668 = vadd.f32 %v8655, %v8667
    %v8669 = vpop.f32.mrf.mxu0
    %8670 = vdwg.mxu0
    %8671 = vmatpush.bf16.msra.mxu0 %v5872
    %8672 = vmatpush.bf16.msra.mxu0 %v5864
    %8673 = vmatpush.bf16.msra.mxu0 %v5856
    %8674 = vmatpush.bf16.msra.mxu0 %v5848
    %8675 = vmatpush.bf16.msra.mxu0 %v5840
    %8676 = vmatpush.bf16.msra.mxu0 %v5832
    %8677 = vmatpush.bf16.msra.mxu0 %v5824
    %8678 = vmatpush.bf16.msra.mxu0 %v5816
    %8679 = vmatmul.bf16.gmra.mxu0 %v1433
    %v8680 = vpop.f32.mrf.mxu0
    %v8681 = vadd.f32 %v8668, %v8680
    %v8682 = vpop.f32.mrf.mxu0
    %8683 = vdwg.mxu0
    %8684 = vmatpush.bf16.msra.mxu0 %v5936
    %8685 = vmatpush.bf16.msra.mxu0 %v5928
    %8686 = vmatpush.bf16.msra.mxu0 %v5920
    %8687 = vmatpush.bf16.msra.mxu0 %v5912
    %8688 = vmatpush.bf16.msra.mxu0 %v5904
    %8689 = vmatpush.bf16.msra.mxu0 %v5896
    %8690 = vmatpush.bf16.msra.mxu0 %v5888
    %8691 = vmatpush.bf16.msra.mxu0 %v5880
    %8692 = vmatmul.bf16.gmra.mxu0 %v1434
    %v8693 = vpop.f32.mrf.mxu0
    %v8694 = vadd.f32 %v8681, %v8693
    %v8695 = vpop.f32.mrf.mxu0
    %8696 = vdwg.mxu0
    %8697 = vmatpush.bf16.msra.mxu0 %v6000
    %8698 = vmatpush.bf16.msra.mxu0 %v5992
    %8699 = vmatpush.bf16.msra.mxu0 %v5984
    %8700 = vmatpush.bf16.msra.mxu0 %v5976
    %8701 = vmatpush.bf16.msra.mxu0 %v5968
    %8702 = vmatpush.bf16.msra.mxu0 %v5960
    %8703 = vmatpush.bf16.msra.mxu0 %v5952
    %8704 = vmatpush.bf16.msra.mxu0 %v5944
    %8705 = vmatmul.bf16.gmra.mxu0 %v1435
    %v8706 = vpop.f32.mrf.mxu0
    %v8707 = vadd.f32 %v8694, %v8706
    %v8708 = vpop.f32.mrf.mxu0
    %8709 = vdwg.mxu0
    %8710 = vmatpush.bf16.msra.mxu0 %v6064
    %8711 = vmatpush.bf16.msra.mxu0 %v6056
    %8712 = vmatpush.bf16.msra.mxu0 %v6048
    %8713 = vmatpush.bf16.msra.mxu0 %v6040
    %8714 = vmatpush.bf16.msra.mxu0 %v6032
    %8715 = vmatpush.bf16.msra.mxu0 %v6024
    %8716 = vmatpush.bf16.msra.mxu0 %v6016
    %8717 = vmatpush.bf16.msra.mxu0 %v6008
    %8718 = vmatmul.bf16.gmra.mxu0 %v1436
    %v8719 = vpop.f32.mrf.mxu0
    %v8720 = vadd.f32 %v8707, %v8719
    %v8721 = vpop.f32.mrf.mxu0
    %8722 = vdwg.mxu0
    %8723 = vmatpush.bf16.msra.mxu0 %v6128
    %8724 = vmatpush.bf16.msra.mxu0 %v6120
    %8725 = vmatpush.bf16.msra.mxu0 %v6112
    %8726 = vmatpush.bf16.msra.mxu0 %v6104
    %8727 = vmatpush.bf16.msra.mxu0 %v6096
    %8728 = vmatpush.bf16.msra.mxu0 %v6088
    %8729 = vmatpush.bf16.msra.mxu0 %v6080
    %8730 = vmatpush.bf16.msra.mxu0 %v6072
    %8731 = vmatmul.bf16.gmra.mxu0 %v1437
    %v8732 = vpop.f32.mrf.mxu0
    %v8733 = vadd.f32 %v8720, %v8732
    %v8734 = vpop.f32.mrf.mxu0
    %8735 = vdwg.mxu0
    %8736 = vmatpush.bf16.msra.mxu0 %v6192
    %8737 = vmatpush.bf16.msra.mxu0 %v6184
    %8738 = vmatpush.bf16.msra.mxu0 %v6176
    %8739 = vmatpush.bf16.msra.mxu0 %v6168
    %8740 = vmatpush.bf16.msra.mxu0 %v6160
    %8741 = vmatpush.bf16.msra.mxu0 %v6152
    %8742 = vmatpush.bf16.msra.mxu0 %v6144
    %8743 = vmatpush.bf16.msra.mxu0 %v6136
    %8744 = vmatmul.bf16.gmra.mxu0 %v1438
    %v8745 = vpop.f32.mrf.mxu0
    %v8746 = vadd.f32 %v8733, %v8745
    %v8747 = vpop.f32.mrf.mxu0
    %8748 = vdwg.mxu0
    %8749 = vmatpush.bf16.msra.mxu0 %v6256
    %8750 = vmatpush.bf16.msra.mxu0 %v6248
    %8751 = vmatpush.bf16.msra.mxu0 %v6240
    %8752 = vmatpush.bf16.msra.mxu0 %v6232
    %8753 = vmatpush.bf16.msra.mxu0 %v6224
    %8754 = vmatpush.bf16.msra.mxu0 %v6216
    %8755 = vmatpush.bf16.msra.mxu0 %v6208
    %8756 = vmatpush.bf16.msra.mxu0 %v6200
    %8757 = vmatmul.bf16.gmra.mxu0 %v1439
    %v8758 = vpop.f32.mrf.mxu0
    %v8759 = vadd.f32 %v8746, %v8758
    %v8760 = vpop.f32.mrf.mxu0
    %8761 = vdwg.mxu0
    %8762 = vmatpush.bf16.msra.mxu0 %v6320
    %8763 = vmatpush.bf16.msra.mxu0 %v6312
    %8764 = vmatpush.bf16.msra.mxu0 %v6304
    %8765 = vmatpush.bf16.msra.mxu0 %v6296
    %8766 = vmatpush.bf16.msra.mxu0 %v6288
    %8767 = vmatpush.bf16.msra.mxu0 %v6280
    %8768 = vmatpush.bf16.msra.mxu0 %v6272
    %8769 = vmatpush.bf16.msra.mxu0 %v6264
    %8770 = vmatmul.bf16.gmra.mxu0 %v1440
    %v8771 = vpop.f32.mrf.mxu0
    %v8772 = vadd.f32 %v8759, %v8771
    %v8773 = vpop.f32.mrf.mxu0
    %8774 = vdwg.mxu0
    %8775 = vmatpush.bf16.msra.mxu0 %v5169
    %8776 = vmatpush.bf16.msra.mxu0 %v5161
    %8777 = vmatpush.bf16.msra.mxu0 %v5153
    %8778 = vmatpush.bf16.msra.mxu0 %v5145
    %8779 = vmatpush.bf16.msra.mxu0 %v5137
    %8780 = vmatpush.bf16.msra.mxu0 %v5129
    %8781 = vmatpush.bf16.msra.mxu0 %v5121
    %8782 = vmatpush.bf16.msra.mxu0 %v5113
    %8783 = vmatmul.bf16.gmra.mxu0 %v1422
    %v8784 = vpop.f32.mrf.mxu0
    %v8785 = vadd.f32 %v1382, %v8784
    %v8786 = vpop.f32.mrf.mxu0
    %8787 = vdwg.mxu0
    %8788 = vmatpush.bf16.msra.mxu0 %v5233
    %8789 = vmatpush.bf16.msra.mxu0 %v5225
    %8790 = vmatpush.bf16.msra.mxu0 %v5217
    %8791 = vmatpush.bf16.msra.mxu0 %v5209
    %8792 = vmatpush.bf16.msra.mxu0 %v5201
    %8793 = vmatpush.bf16.msra.mxu0 %v5193
    %8794 = vmatpush.bf16.msra.mxu0 %v5185
    %8795 = vmatpush.bf16.msra.mxu0 %v5177
    %8796 = vmatmul.bf16.gmra.mxu0 %v1423
    %v8797 = vpop.f32.mrf.mxu0
    %v8798 = vadd.f32 %v8785, %v8797
    %v8799 = vpop.f32.mrf.mxu0
    %8800 = vdwg.mxu0
    %8801 = vmatpush.bf16.msra.mxu0 %v5297
    %8802 = vmatpush.bf16.msra.mxu0 %v5289
    %8803 = vmatpush.bf16.msra.mxu0 %v5281
    %8804 = vmatpush.bf16.msra.mxu0 %v5273
    %8805 = vmatpush.bf16.msra.mxu0 %v5265
    %8806 = vmatpush.bf16.msra.mxu0 %v5257
    %8807 = vmatpush.bf16.msra.mxu0 %v5249
    %8808 = vmatpush.bf16.msra.mxu0 %v5241
    %8809 = vmatmul.bf16.gmra.mxu0 %v1424
    %v8810 = vpop.f32.mrf.mxu0
    %v8811 = vadd.f32 %v8798, %v8810
    %v8812 = vpop.f32.mrf.mxu0
    %8813 = vdwg.mxu0
    %8814 = vmatpush.bf16.msra.mxu0 %v5361
    %8815 = vmatpush.bf16.msra.mxu0 %v5353
    %8816 = vmatpush.bf16.msra.mxu0 %v5345
    %8817 = vmatpush.bf16.msra.mxu0 %v5337
    %8818 = vmatpush.bf16.msra.mxu0 %v5329
    %8819 = vmatpush.bf16.msra.mxu0 %v5321
    %8820 = vmatpush.bf16.msra.mxu0 %v5313
    %8821 = vmatpush.bf16.msra.mxu0 %v5305
    %8822 = vmatmul.bf16.gmra.mxu0 %v1425
    %v8823 = vpop.f32.mrf.mxu0
    %v8824 = vadd.f32 %v8811, %v8823
    %v8825 = vpop.f32.mrf.mxu0
    %8826 = vdwg.mxu0
    %8827 = vmatpush.bf16.msra.mxu0 %v5425
    %8828 = vmatpush.bf16.msra.mxu0 %v5417
    %8829 = vmatpush.bf16.msra.mxu0 %v5409
    %8830 = vmatpush.bf16.msra.mxu0 %v5401
    %8831 = vmatpush.bf16.msra.mxu0 %v5393
    %8832 = vmatpush.bf16.msra.mxu0 %v5385
    %8833 = vmatpush.bf16.msra.mxu0 %v5377
    %8834 = vmatpush.bf16.msra.mxu0 %v5369
    %8835 = vmatmul.bf16.gmra.mxu0 %v1426
    %v8836 = vpop.f32.mrf.mxu0
    %v8837 = vadd.f32 %v8824, %v8836
    %v8838 = vpop.f32.mrf.mxu0
    %8839 = vdwg.mxu0
    %8840 = vmatpush.bf16.msra.mxu0 %v5489
    %8841 = vmatpush.bf16.msra.mxu0 %v5481
    %8842 = vmatpush.bf16.msra.mxu0 %v5473
    %8843 = vmatpush.bf16.msra.mxu0 %v5465
    %8844 = vmatpush.bf16.msra.mxu0 %v5457
    %8845 = vmatpush.bf16.msra.mxu0 %v5449
    %8846 = vmatpush.bf16.msra.mxu0 %v5441
    %8847 = vmatpush.bf16.msra.mxu0 %v5433
    %8848 = vmatmul.bf16.gmra.mxu0 %v1427
    %v8849 = vpop.f32.mrf.mxu0
    %v8850 = vadd.f32 %v8837, %v8849
    %v8851 = vpop.f32.mrf.mxu0
    %8852 = vdwg.mxu0
    %8853 = vmatpush.bf16.msra.mxu0 %v5553
    %8854 = vmatpush.bf16.msra.mxu0 %v5545
    %8855 = vmatpush.bf16.msra.mxu0 %v5537
    %8856 = vmatpush.bf16.msra.mxu0 %v5529
    %8857 = vmatpush.bf16.msra.mxu0 %v5521
    %8858 = vmatpush.bf16.msra.mxu0 %v5513
    %8859 = vmatpush.bf16.msra.mxu0 %v5505
    %8860 = vmatpush.bf16.msra.mxu0 %v5497
    %8861 = vmatmul.bf16.gmra.mxu0 %v1428
    %v8862 = vpop.f32.mrf.mxu0
    %v8863 = vadd.f32 %v8850, %v8862
    %v8864 = vpop.f32.mrf.mxu0
    %8865 = vdwg.mxu0
    %8866 = vmatpush.bf16.msra.mxu0 %v5617
    %8867 = vmatpush.bf16.msra.mxu0 %v5609
    %8868 = vmatpush.bf16.msra.mxu0 %v5601
    %8869 = vmatpush.bf16.msra.mxu0 %v5593
    %8870 = vmatpush.bf16.msra.mxu0 %v5585
    %8871 = vmatpush.bf16.msra.mxu0 %v5577
    %8872 = vmatpush.bf16.msra.mxu0 %v5569
    %8873 = vmatpush.bf16.msra.mxu0 %v5561
    %8874 = vmatmul.bf16.gmra.mxu0 %v1429
    %v8875 = vpop.f32.mrf.mxu0
    %v8876 = vadd.f32 %v8863, %v8875
    %v8877 = vpop.f32.mrf.mxu0
    %8878 = vdwg.mxu0
    %8879 = vmatpush.bf16.msra.mxu0 %v5681
    %8880 = vmatpush.bf16.msra.mxu0 %v5673
    %8881 = vmatpush.bf16.msra.mxu0 %v5665
    %8882 = vmatpush.bf16.msra.mxu0 %v5657
    %8883 = vmatpush.bf16.msra.mxu0 %v5649
    %8884 = vmatpush.bf16.msra.mxu0 %v5641
    %8885 = vmatpush.bf16.msra.mxu0 %v5633
    %8886 = vmatpush.bf16.msra.mxu0 %v5625
    %8887 = vmatmul.bf16.gmra.mxu0 %v1430
    %v8888 = vpop.f32.mrf.mxu0
    %v8889 = vadd.f32 %v8876, %v8888
    %v8890 = vpop.f32.mrf.mxu0
    %8891 = vdwg.mxu0
    %8892 = vmatpush.bf16.msra.mxu0 %v5745
    %8893 = vmatpush.bf16.msra.mxu0 %v5737
    %8894 = vmatpush.bf16.msra.mxu0 %v5729
    %8895 = vmatpush.bf16.msra.mxu0 %v5721
    %8896 = vmatpush.bf16.msra.mxu0 %v5713
    %8897 = vmatpush.bf16.msra.mxu0 %v5705
    %8898 = vmatpush.bf16.msra.mxu0 %v5697
    %8899 = vmatpush.bf16.msra.mxu0 %v5689
    %8900 = vmatmul.bf16.gmra.mxu0 %v1431
    %v8901 = vpop.f32.mrf.mxu0
    %v8902 = vadd.f32 %v8889, %v8901
    %v8903 = vpop.f32.mrf.mxu0
    %8904 = vdwg.mxu0
    %8905 = vmatpush.bf16.msra.mxu0 %v5809
    %8906 = vmatpush.bf16.msra.mxu0 %v5801
    %8907 = vmatpush.bf16.msra.mxu0 %v5793
    %8908 = vmatpush.bf16.msra.mxu0 %v5785
    %8909 = vmatpush.bf16.msra.mxu0 %v5777
    %8910 = vmatpush.bf16.msra.mxu0 %v5769
    %8911 = vmatpush.bf16.msra.mxu0 %v5761
    %8912 = vmatpush.bf16.msra.mxu0 %v5753
    %8913 = vmatmul.bf16.gmra.mxu0 %v1432
    %v8914 = vpop.f32.mrf.mxu0
    %v8915 = vadd.f32 %v8902, %v8914
    %v8916 = vpop.f32.mrf.mxu0
    %8917 = vdwg.mxu0
    %8918 = vmatpush.bf16.msra.mxu0 %v5873
    %8919 = vmatpush.bf16.msra.mxu0 %v5865
    %8920 = vmatpush.bf16.msra.mxu0 %v5857
    %8921 = vmatpush.bf16.msra.mxu0 %v5849
    %8922 = vmatpush.bf16.msra.mxu0 %v5841
    %8923 = vmatpush.bf16.msra.mxu0 %v5833
    %8924 = vmatpush.bf16.msra.mxu0 %v5825
    %8925 = vmatpush.bf16.msra.mxu0 %v5817
    %8926 = vmatmul.bf16.gmra.mxu0 %v1433
    %v8927 = vpop.f32.mrf.mxu0
    %v8928 = vadd.f32 %v8915, %v8927
    %v8929 = vpop.f32.mrf.mxu0
    %8930 = vdwg.mxu0
    %8931 = vmatpush.bf16.msra.mxu0 %v5937
    %8932 = vmatpush.bf16.msra.mxu0 %v5929
    %8933 = vmatpush.bf16.msra.mxu0 %v5921
    %8934 = vmatpush.bf16.msra.mxu0 %v5913
    %8935 = vmatpush.bf16.msra.mxu0 %v5905
    %8936 = vmatpush.bf16.msra.mxu0 %v5897
    %8937 = vmatpush.bf16.msra.mxu0 %v5889
    %8938 = vmatpush.bf16.msra.mxu0 %v5881
    %8939 = vmatmul.bf16.gmra.mxu0 %v1434
    %v8940 = vpop.f32.mrf.mxu0
    %v8941 = vadd.f32 %v8928, %v8940
    %v8942 = vpop.f32.mrf.mxu0
    %8943 = vdwg.mxu0
    %8944 = vmatpush.bf16.msra.mxu0 %v6001
    %8945 = vmatpush.bf16.msra.mxu0 %v5993
    %8946 = vmatpush.bf16.msra.mxu0 %v5985
    %8947 = vmatpush.bf16.msra.mxu0 %v5977
    %8948 = vmatpush.bf16.msra.mxu0 %v5969
    %8949 = vmatpush.bf16.msra.mxu0 %v5961
    %8950 = vmatpush.bf16.msra.mxu0 %v5953
    %8951 = vmatpush.bf16.msra.mxu0 %v5945
    %8952 = vmatmul.bf16.gmra.mxu0 %v1435
    %v8953 = vpop.f32.mrf.mxu0
    %v8954 = vadd.f32 %v8941, %v8953
    %v8955 = vpop.f32.mrf.mxu0
    %8956 = vdwg.mxu0
    %8957 = vmatpush.bf16.msra.mxu0 %v6065
    %8958 = vmatpush.bf16.msra.mxu0 %v6057
    %8959 = vmatpush.bf16.msra.mxu0 %v6049
    %8960 = vmatpush.bf16.msra.mxu0 %v6041
    %8961 = vmatpush.bf16.msra.mxu0 %v6033
    %8962 = vmatpush.bf16.msra.mxu0 %v6025
    %8963 = vmatpush.bf16.msra.mxu0 %v6017
    %8964 = vmatpush.bf16.msra.mxu0 %v6009
    %8965 = vmatmul.bf16.gmra.mxu0 %v1436
    %v8966 = vpop.f32.mrf.mxu0
    %v8967 = vadd.f32 %v8954, %v8966
    %v8968 = vpop.f32.mrf.mxu0
    %8969 = vdwg.mxu0
    %8970 = vmatpush.bf16.msra.mxu0 %v6129
    %8971 = vmatpush.bf16.msra.mxu0 %v6121
    %8972 = vmatpush.bf16.msra.mxu0 %v6113
    %8973 = vmatpush.bf16.msra.mxu0 %v6105
    %8974 = vmatpush.bf16.msra.mxu0 %v6097
    %8975 = vmatpush.bf16.msra.mxu0 %v6089
    %8976 = vmatpush.bf16.msra.mxu0 %v6081
    %8977 = vmatpush.bf16.msra.mxu0 %v6073
    %8978 = vmatmul.bf16.gmra.mxu0 %v1437
    %v8979 = vpop.f32.mrf.mxu0
    %v8980 = vadd.f32 %v8967, %v8979
    %v8981 = vpop.f32.mrf.mxu0
    %8982 = vdwg.mxu0
    %8983 = vmatpush.bf16.msra.mxu0 %v6193
    %8984 = vmatpush.bf16.msra.mxu0 %v6185
    %8985 = vmatpush.bf16.msra.mxu0 %v6177
    %8986 = vmatpush.bf16.msra.mxu0 %v6169
    %8987 = vmatpush.bf16.msra.mxu0 %v6161
    %8988 = vmatpush.bf16.msra.mxu0 %v6153
    %8989 = vmatpush.bf16.msra.mxu0 %v6145
    %8990 = vmatpush.bf16.msra.mxu0 %v6137
    %8991 = vmatmul.bf16.gmra.mxu0 %v1438
    %v8992 = vpop.f32.mrf.mxu0
    %v8993 = vadd.f32 %v8980, %v8992
    %v8994 = vpop.f32.mrf.mxu0
    %8995 = vdwg.mxu0
    %8996 = vmatpush.bf16.msra.mxu0 %v6257
    %8997 = vmatpush.bf16.msra.mxu0 %v6249
    %8998 = vmatpush.bf16.msra.mxu0 %v6241
    %8999 = vmatpush.bf16.msra.mxu0 %v6233
    %9000 = vmatpush.bf16.msra.mxu0 %v6225
    %9001 = vmatpush.bf16.msra.mxu0 %v6217
    %9002 = vmatpush.bf16.msra.mxu0 %v6209
    %9003 = vmatpush.bf16.msra.mxu0 %v6201
    %9004 = vmatmul.bf16.gmra.mxu0 %v1439
    %v9005 = vpop.f32.mrf.mxu0
    %v9006 = vadd.f32 %v8993, %v9005
    %v9007 = vpop.f32.mrf.mxu0
    %9008 = vdwg.mxu0
    %9009 = vmatpush.bf16.msra.mxu0 %v6321
    %9010 = vmatpush.bf16.msra.mxu0 %v6313
    %9011 = vmatpush.bf16.msra.mxu0 %v6305
    %9012 = vmatpush.bf16.msra.mxu0 %v6297
    %9013 = vmatpush.bf16.msra.mxu0 %v6289
    %9014 = vmatpush.bf16.msra.mxu0 %v6281
    %9015 = vmatpush.bf16.msra.mxu0 %v6273
    %9016 = vmatpush.bf16.msra.mxu0 %v6265
    %9017 = vmatmul.bf16.gmra.mxu0 %v1440
    %v9018 = vpop.f32.mrf.mxu0
    %v9019 = vadd.f32 %v9006, %v9018
    %v9020 = vpop.f32.mrf.mxu0
    %9021 = vdwg.mxu0
    %9022 = vmatpush.bf16.msra.mxu0 %v5170
    %9023 = vmatpush.bf16.msra.mxu0 %v5162
    %9024 = vmatpush.bf16.msra.mxu0 %v5154
    %9025 = vmatpush.bf16.msra.mxu0 %v5146
    %9026 = vmatpush.bf16.msra.mxu0 %v5138
    %9027 = vmatpush.bf16.msra.mxu0 %v5130
    %9028 = vmatpush.bf16.msra.mxu0 %v5122
    %9029 = vmatpush.bf16.msra.mxu0 %v5114
    %9030 = vmatmul.bf16.gmra.mxu0 %v1422
    %v9031 = vpop.f32.mrf.mxu0
    %v9032 = vadd.f32 %v1383, %v9031
    %v9033 = vpop.f32.mrf.mxu0
    %9034 = vdwg.mxu0
    %9035 = vmatpush.bf16.msra.mxu0 %v5234
    %9036 = vmatpush.bf16.msra.mxu0 %v5226
    %9037 = vmatpush.bf16.msra.mxu0 %v5218
    %9038 = vmatpush.bf16.msra.mxu0 %v5210
    %9039 = vmatpush.bf16.msra.mxu0 %v5202
    %9040 = vmatpush.bf16.msra.mxu0 %v5194
    %9041 = vmatpush.bf16.msra.mxu0 %v5186
    %9042 = vmatpush.bf16.msra.mxu0 %v5178
    %9043 = vmatmul.bf16.gmra.mxu0 %v1423
    %v9044 = vpop.f32.mrf.mxu0
    %v9045 = vadd.f32 %v9032, %v9044
    %v9046 = vpop.f32.mrf.mxu0
    %9047 = vdwg.mxu0
    %9048 = vmatpush.bf16.msra.mxu0 %v5298
    %9049 = vmatpush.bf16.msra.mxu0 %v5290
    %9050 = vmatpush.bf16.msra.mxu0 %v5282
    %9051 = vmatpush.bf16.msra.mxu0 %v5274
    %9052 = vmatpush.bf16.msra.mxu0 %v5266
    %9053 = vmatpush.bf16.msra.mxu0 %v5258
    %9054 = vmatpush.bf16.msra.mxu0 %v5250
    %9055 = vmatpush.bf16.msra.mxu0 %v5242
    %9056 = vmatmul.bf16.gmra.mxu0 %v1424
    %v9057 = vpop.f32.mrf.mxu0
    %v9058 = vadd.f32 %v9045, %v9057
    %v9059 = vpop.f32.mrf.mxu0
    %9060 = vdwg.mxu0
    %9061 = vmatpush.bf16.msra.mxu0 %v5362
    %9062 = vmatpush.bf16.msra.mxu0 %v5354
    %9063 = vmatpush.bf16.msra.mxu0 %v5346
    %9064 = vmatpush.bf16.msra.mxu0 %v5338
    %9065 = vmatpush.bf16.msra.mxu0 %v5330
    %9066 = vmatpush.bf16.msra.mxu0 %v5322
    %9067 = vmatpush.bf16.msra.mxu0 %v5314
    %9068 = vmatpush.bf16.msra.mxu0 %v5306
    %9069 = vmatmul.bf16.gmra.mxu0 %v1425
    %v9070 = vpop.f32.mrf.mxu0
    %v9071 = vadd.f32 %v9058, %v9070
    %v9072 = vpop.f32.mrf.mxu0
    %9073 = vdwg.mxu0
    %9074 = vmatpush.bf16.msra.mxu0 %v5426
    %9075 = vmatpush.bf16.msra.mxu0 %v5418
    %9076 = vmatpush.bf16.msra.mxu0 %v5410
    %9077 = vmatpush.bf16.msra.mxu0 %v5402
    %9078 = vmatpush.bf16.msra.mxu0 %v5394
    %9079 = vmatpush.bf16.msra.mxu0 %v5386
    %9080 = vmatpush.bf16.msra.mxu0 %v5378
    %9081 = vmatpush.bf16.msra.mxu0 %v5370
    %9082 = vmatmul.bf16.gmra.mxu0 %v1426
    %v9083 = vpop.f32.mrf.mxu0
    %v9084 = vadd.f32 %v9071, %v9083
    %v9085 = vpop.f32.mrf.mxu0
    %9086 = vdwg.mxu0
    %9087 = vmatpush.bf16.msra.mxu0 %v5490
    %9088 = vmatpush.bf16.msra.mxu0 %v5482
    %9089 = vmatpush.bf16.msra.mxu0 %v5474
    %9090 = vmatpush.bf16.msra.mxu0 %v5466
    %9091 = vmatpush.bf16.msra.mxu0 %v5458
    %9092 = vmatpush.bf16.msra.mxu0 %v5450
    %9093 = vmatpush.bf16.msra.mxu0 %v5442
    %9094 = vmatpush.bf16.msra.mxu0 %v5434
    %9095 = vmatmul.bf16.gmra.mxu0 %v1427
    %v9096 = vpop.f32.mrf.mxu0
    %v9097 = vadd.f32 %v9084, %v9096
    %v9098 = vpop.f32.mrf.mxu0
    %9099 = vdwg.mxu0
    %9100 = vmatpush.bf16.msra.mxu0 %v5554
    %9101 = vmatpush.bf16.msra.mxu0 %v5546
    %9102 = vmatpush.bf16.msra.mxu0 %v5538
    %9103 = vmatpush.bf16.msra.mxu0 %v5530
    %9104 = vmatpush.bf16.msra.mxu0 %v5522
    %9105 = vmatpush.bf16.msra.mxu0 %v5514
    %9106 = vmatpush.bf16.msra.mxu0 %v5506
    %9107 = vmatpush.bf16.msra.mxu0 %v5498
    %9108 = vmatmul.bf16.gmra.mxu0 %v1428
    %v9109 = vpop.f32.mrf.mxu0
    %v9110 = vadd.f32 %v9097, %v9109
    %v9111 = vpop.f32.mrf.mxu0
    %9112 = vdwg.mxu0
    %9113 = vmatpush.bf16.msra.mxu0 %v5618
    %9114 = vmatpush.bf16.msra.mxu0 %v5610
    %9115 = vmatpush.bf16.msra.mxu0 %v5602
    %9116 = vmatpush.bf16.msra.mxu0 %v5594
    %9117 = vmatpush.bf16.msra.mxu0 %v5586
    %9118 = vmatpush.bf16.msra.mxu0 %v5578
    %9119 = vmatpush.bf16.msra.mxu0 %v5570
    %9120 = vmatpush.bf16.msra.mxu0 %v5562
    %9121 = vmatmul.bf16.gmra.mxu0 %v1429
    %v9122 = vpop.f32.mrf.mxu0
    %v9123 = vadd.f32 %v9110, %v9122
    %v9124 = vpop.f32.mrf.mxu0
    %9125 = vdwg.mxu0
    %9126 = vmatpush.bf16.msra.mxu0 %v5682
    %9127 = vmatpush.bf16.msra.mxu0 %v5674
    %9128 = vmatpush.bf16.msra.mxu0 %v5666
    %9129 = vmatpush.bf16.msra.mxu0 %v5658
    %9130 = vmatpush.bf16.msra.mxu0 %v5650
    %9131 = vmatpush.bf16.msra.mxu0 %v5642
    %9132 = vmatpush.bf16.msra.mxu0 %v5634
    %9133 = vmatpush.bf16.msra.mxu0 %v5626
    %9134 = vmatmul.bf16.gmra.mxu0 %v1430
    %v9135 = vpop.f32.mrf.mxu0
    %v9136 = vadd.f32 %v9123, %v9135
    %v9137 = vpop.f32.mrf.mxu0
    %9138 = vdwg.mxu0
    %9139 = vmatpush.bf16.msra.mxu0 %v5746
    %9140 = vmatpush.bf16.msra.mxu0 %v5738
    %9141 = vmatpush.bf16.msra.mxu0 %v5730
    %9142 = vmatpush.bf16.msra.mxu0 %v5722
    %9143 = vmatpush.bf16.msra.mxu0 %v5714
    %9144 = vmatpush.bf16.msra.mxu0 %v5706
    %9145 = vmatpush.bf16.msra.mxu0 %v5698
    %9146 = vmatpush.bf16.msra.mxu0 %v5690
    %9147 = vmatmul.bf16.gmra.mxu0 %v1431
    %v9148 = vpop.f32.mrf.mxu0
    %v9149 = vadd.f32 %v9136, %v9148
    %v9150 = vpop.f32.mrf.mxu0
    %9151 = vdwg.mxu0
    %9152 = vmatpush.bf16.msra.mxu0 %v5810
    %9153 = vmatpush.bf16.msra.mxu0 %v5802
    %9154 = vmatpush.bf16.msra.mxu0 %v5794
    %9155 = vmatpush.bf16.msra.mxu0 %v5786
    %9156 = vmatpush.bf16.msra.mxu0 %v5778
    %9157 = vmatpush.bf16.msra.mxu0 %v5770
    %9158 = vmatpush.bf16.msra.mxu0 %v5762
    %9159 = vmatpush.bf16.msra.mxu0 %v5754
    %9160 = vmatmul.bf16.gmra.mxu0 %v1432
    %v9161 = vpop.f32.mrf.mxu0
    %v9162 = vadd.f32 %v9149, %v9161
    %v9163 = vpop.f32.mrf.mxu0
    %9164 = vdwg.mxu0
    %9165 = vmatpush.bf16.msra.mxu0 %v5874
    %9166 = vmatpush.bf16.msra.mxu0 %v5866
    %9167 = vmatpush.bf16.msra.mxu0 %v5858
    %9168 = vmatpush.bf16.msra.mxu0 %v5850
    %9169 = vmatpush.bf16.msra.mxu0 %v5842
    %9170 = vmatpush.bf16.msra.mxu0 %v5834
    %9171 = vmatpush.bf16.msra.mxu0 %v5826
    %9172 = vmatpush.bf16.msra.mxu0 %v5818
    %9173 = vmatmul.bf16.gmra.mxu0 %v1433
    %v9174 = vpop.f32.mrf.mxu0
    %v9175 = vadd.f32 %v9162, %v9174
    %v9176 = vpop.f32.mrf.mxu0
    %9177 = vdwg.mxu0
    %9178 = vmatpush.bf16.msra.mxu0 %v5938
    %9179 = vmatpush.bf16.msra.mxu0 %v5930
    %9180 = vmatpush.bf16.msra.mxu0 %v5922
    %9181 = vmatpush.bf16.msra.mxu0 %v5914
    %9182 = vmatpush.bf16.msra.mxu0 %v5906
    %9183 = vmatpush.bf16.msra.mxu0 %v5898
    %9184 = vmatpush.bf16.msra.mxu0 %v5890
    %9185 = vmatpush.bf16.msra.mxu0 %v5882
    %9186 = vmatmul.bf16.gmra.mxu0 %v1434
    %v9187 = vpop.f32.mrf.mxu0
    %v9188 = vadd.f32 %v9175, %v9187
    %v9189 = vpop.f32.mrf.mxu0
    %9190 = vdwg.mxu0
    %9191 = vmatpush.bf16.msra.mxu0 %v6002
    %9192 = vmatpush.bf16.msra.mxu0 %v5994
    %9193 = vmatpush.bf16.msra.mxu0 %v5986
    %9194 = vmatpush.bf16.msra.mxu0 %v5978
    %9195 = vmatpush.bf16.msra.mxu0 %v5970
    %9196 = vmatpush.bf16.msra.mxu0 %v5962
    %9197 = vmatpush.bf16.msra.mxu0 %v5954
    %9198 = vmatpush.bf16.msra.mxu0 %v5946
    %9199 = vmatmul.bf16.gmra.mxu0 %v1435
    %v9200 = vpop.f32.mrf.mxu0
    %v9201 = vadd.f32 %v9188, %v9200
    %v9202 = vpop.f32.mrf.mxu0
    %9203 = vdwg.mxu0
    %9204 = vmatpush.bf16.msra.mxu0 %v6066
    %9205 = vmatpush.bf16.msra.mxu0 %v6058
    %9206 = vmatpush.bf16.msra.mxu0 %v6050
    %9207 = vmatpush.bf16.msra.mxu0 %v6042
    %9208 = vmatpush.bf16.msra.mxu0 %v6034
    %9209 = vmatpush.bf16.msra.mxu0 %v6026
    %9210 = vmatpush.bf16.msra.mxu0 %v6018
    %9211 = vmatpush.bf16.msra.mxu0 %v6010
    %9212 = vmatmul.bf16.gmra.mxu0 %v1436
    %v9213 = vpop.f32.mrf.mxu0
    %v9214 = vadd.f32 %v9201, %v9213
    %v9215 = vpop.f32.mrf.mxu0
    %9216 = vdwg.mxu0
    %9217 = vmatpush.bf16.msra.mxu0 %v6130
    %9218 = vmatpush.bf16.msra.mxu0 %v6122
    %9219 = vmatpush.bf16.msra.mxu0 %v6114
    %9220 = vmatpush.bf16.msra.mxu0 %v6106
    %9221 = vmatpush.bf16.msra.mxu0 %v6098
    %9222 = vmatpush.bf16.msra.mxu0 %v6090
    %9223 = vmatpush.bf16.msra.mxu0 %v6082
    %9224 = vmatpush.bf16.msra.mxu0 %v6074
    %9225 = vmatmul.bf16.gmra.mxu0 %v1437
    %v9226 = vpop.f32.mrf.mxu0
    %v9227 = vadd.f32 %v9214, %v9226
    %v9228 = vpop.f32.mrf.mxu0
    %9229 = vdwg.mxu0
    %9230 = vmatpush.bf16.msra.mxu0 %v6194
    %9231 = vmatpush.bf16.msra.mxu0 %v6186
    %9232 = vmatpush.bf16.msra.mxu0 %v6178
    %9233 = vmatpush.bf16.msra.mxu0 %v6170
    %9234 = vmatpush.bf16.msra.mxu0 %v6162
    %9235 = vmatpush.bf16.msra.mxu0 %v6154
    %9236 = vmatpush.bf16.msra.mxu0 %v6146
    %9237 = vmatpush.bf16.msra.mxu0 %v6138
    %9238 = vmatmul.bf16.gmra.mxu0 %v1438
    %v9239 = vpop.f32.mrf.mxu0
    %v9240 = vadd.f32 %v9227, %v9239
    %v9241 = vpop.f32.mrf.mxu0
    %9242 = vdwg.mxu0
    %9243 = vmatpush.bf16.msra.mxu0 %v6258
    %9244 = vmatpush.bf16.msra.mxu0 %v6250
    %9245 = vmatpush.bf16.msra.mxu0 %v6242
    %9246 = vmatpush.bf16.msra.mxu0 %v6234
    %9247 = vmatpush.bf16.msra.mxu0 %v6226
    %9248 = vmatpush.bf16.msra.mxu0 %v6218
    %9249 = vmatpush.bf16.msra.mxu0 %v6210
    %9250 = vmatpush.bf16.msra.mxu0 %v6202
    %9251 = vmatmul.bf16.gmra.mxu0 %v1439
    %v9252 = vpop.f32.mrf.mxu0
    %v9253 = vadd.f32 %v9240, %v9252
    %v9254 = vpop.f32.mrf.mxu0
    %9255 = vdwg.mxu0
    %9256 = vmatpush.bf16.msra.mxu0 %v6322
    %9257 = vmatpush.bf16.msra.mxu0 %v6314
    %9258 = vmatpush.bf16.msra.mxu0 %v6306
    %9259 = vmatpush.bf16.msra.mxu0 %v6298
    %9260 = vmatpush.bf16.msra.mxu0 %v6290
    %9261 = vmatpush.bf16.msra.mxu0 %v6282
    %9262 = vmatpush.bf16.msra.mxu0 %v6274
    %9263 = vmatpush.bf16.msra.mxu0 %v6266
    %9264 = vmatmul.bf16.gmra.mxu0 %v1440
    %v9265 = vpop.f32.mrf.mxu0
    %v9266 = vadd.f32 %v9253, %v9265
    %v9267 = vpop.f32.mrf.mxu0
    %9268 = vdwg.mxu0
    %9269 = vmatpush.bf16.msra.mxu0 %v5171
    %9270 = vmatpush.bf16.msra.mxu0 %v5163
    %9271 = vmatpush.bf16.msra.mxu0 %v5155
    %9272 = vmatpush.bf16.msra.mxu0 %v5147
    %9273 = vmatpush.bf16.msra.mxu0 %v5139
    %9274 = vmatpush.bf16.msra.mxu0 %v5131
    %9275 = vmatpush.bf16.msra.mxu0 %v5123
    %9276 = vmatpush.bf16.msra.mxu0 %v5115
    %9277 = vmatmul.bf16.gmra.mxu0 %v1422
    %v9278 = vpop.f32.mrf.mxu0
    %v9279 = vadd.f32 %v1384, %v9278
    %v9280 = vpop.f32.mrf.mxu0
    %9281 = vdwg.mxu0
    %9282 = vmatpush.bf16.msra.mxu0 %v5235
    %9283 = vmatpush.bf16.msra.mxu0 %v5227
    %9284 = vmatpush.bf16.msra.mxu0 %v5219
    %9285 = vmatpush.bf16.msra.mxu0 %v5211
    %9286 = vmatpush.bf16.msra.mxu0 %v5203
    %9287 = vmatpush.bf16.msra.mxu0 %v5195
    %9288 = vmatpush.bf16.msra.mxu0 %v5187
    %9289 = vmatpush.bf16.msra.mxu0 %v5179
    %9290 = vmatmul.bf16.gmra.mxu0 %v1423
    %v9291 = vpop.f32.mrf.mxu0
    %v9292 = vadd.f32 %v9279, %v9291
    %v9293 = vpop.f32.mrf.mxu0
    %9294 = vdwg.mxu0
    %9295 = vmatpush.bf16.msra.mxu0 %v5299
    %9296 = vmatpush.bf16.msra.mxu0 %v5291
    %9297 = vmatpush.bf16.msra.mxu0 %v5283
    %9298 = vmatpush.bf16.msra.mxu0 %v5275
    %9299 = vmatpush.bf16.msra.mxu0 %v5267
    %9300 = vmatpush.bf16.msra.mxu0 %v5259
    %9301 = vmatpush.bf16.msra.mxu0 %v5251
    %9302 = vmatpush.bf16.msra.mxu0 %v5243
    %9303 = vmatmul.bf16.gmra.mxu0 %v1424
    %v9304 = vpop.f32.mrf.mxu0
    %v9305 = vadd.f32 %v9292, %v9304
    %v9306 = vpop.f32.mrf.mxu0
    %9307 = vdwg.mxu0
    %9308 = vmatpush.bf16.msra.mxu0 %v5363
    %9309 = vmatpush.bf16.msra.mxu0 %v5355
    %9310 = vmatpush.bf16.msra.mxu0 %v5347
    %9311 = vmatpush.bf16.msra.mxu0 %v5339
    %9312 = vmatpush.bf16.msra.mxu0 %v5331
    %9313 = vmatpush.bf16.msra.mxu0 %v5323
    %9314 = vmatpush.bf16.msra.mxu0 %v5315
    %9315 = vmatpush.bf16.msra.mxu0 %v5307
    %9316 = vmatmul.bf16.gmra.mxu0 %v1425
    %v9317 = vpop.f32.mrf.mxu0
    %v9318 = vadd.f32 %v9305, %v9317
    %v9319 = vpop.f32.mrf.mxu0
    %9320 = vdwg.mxu0
    %9321 = vmatpush.bf16.msra.mxu0 %v5427
    %9322 = vmatpush.bf16.msra.mxu0 %v5419
    %9323 = vmatpush.bf16.msra.mxu0 %v5411
    %9324 = vmatpush.bf16.msra.mxu0 %v5403
    %9325 = vmatpush.bf16.msra.mxu0 %v5395
    %9326 = vmatpush.bf16.msra.mxu0 %v5387
    %9327 = vmatpush.bf16.msra.mxu0 %v5379
    %9328 = vmatpush.bf16.msra.mxu0 %v5371
    %9329 = vmatmul.bf16.gmra.mxu0 %v1426
    %v9330 = vpop.f32.mrf.mxu0
    %v9331 = vadd.f32 %v9318, %v9330
    %v9332 = vpop.f32.mrf.mxu0
    %9333 = vdwg.mxu0
    %9334 = vmatpush.bf16.msra.mxu0 %v5491
    %9335 = vmatpush.bf16.msra.mxu0 %v5483
    %9336 = vmatpush.bf16.msra.mxu0 %v5475
    %9337 = vmatpush.bf16.msra.mxu0 %v5467
    %9338 = vmatpush.bf16.msra.mxu0 %v5459
    %9339 = vmatpush.bf16.msra.mxu0 %v5451
    %9340 = vmatpush.bf16.msra.mxu0 %v5443
    %9341 = vmatpush.bf16.msra.mxu0 %v5435
    %9342 = vmatmul.bf16.gmra.mxu0 %v1427
    %v9343 = vpop.f32.mrf.mxu0
    %v9344 = vadd.f32 %v9331, %v9343
    %v9345 = vpop.f32.mrf.mxu0
    %9346 = vdwg.mxu0
    %9347 = vmatpush.bf16.msra.mxu0 %v5555
    %9348 = vmatpush.bf16.msra.mxu0 %v5547
    %9349 = vmatpush.bf16.msra.mxu0 %v5539
    %9350 = vmatpush.bf16.msra.mxu0 %v5531
    %9351 = vmatpush.bf16.msra.mxu0 %v5523
    %9352 = vmatpush.bf16.msra.mxu0 %v5515
    %9353 = vmatpush.bf16.msra.mxu0 %v5507
    %9354 = vmatpush.bf16.msra.mxu0 %v5499
    %9355 = vmatmul.bf16.gmra.mxu0 %v1428
    %v9356 = vpop.f32.mrf.mxu0
    %v9357 = vadd.f32 %v9344, %v9356
    %v9358 = vpop.f32.mrf.mxu0
    %9359 = vdwg.mxu0
    %9360 = vmatpush.bf16.msra.mxu0 %v5619
    %9361 = vmatpush.bf16.msra.mxu0 %v5611
    %9362 = vmatpush.bf16.msra.mxu0 %v5603
    %9363 = vmatpush.bf16.msra.mxu0 %v5595
    %9364 = vmatpush.bf16.msra.mxu0 %v5587
    %9365 = vmatpush.bf16.msra.mxu0 %v5579
    %9366 = vmatpush.bf16.msra.mxu0 %v5571
    %9367 = vmatpush.bf16.msra.mxu0 %v5563
    %9368 = vmatmul.bf16.gmra.mxu0 %v1429
    %v9369 = vpop.f32.mrf.mxu0
    %v9370 = vadd.f32 %v9357, %v9369
    %v9371 = vpop.f32.mrf.mxu0
    %9372 = vdwg.mxu0
    %9373 = vmatpush.bf16.msra.mxu0 %v5683
    %9374 = vmatpush.bf16.msra.mxu0 %v5675
    %9375 = vmatpush.bf16.msra.mxu0 %v5667
    %9376 = vmatpush.bf16.msra.mxu0 %v5659
    %9377 = vmatpush.bf16.msra.mxu0 %v5651
    %9378 = vmatpush.bf16.msra.mxu0 %v5643
    %9379 = vmatpush.bf16.msra.mxu0 %v5635
    %9380 = vmatpush.bf16.msra.mxu0 %v5627
    %9381 = vmatmul.bf16.gmra.mxu0 %v1430
    %v9382 = vpop.f32.mrf.mxu0
    %v9383 = vadd.f32 %v9370, %v9382
    %v9384 = vpop.f32.mrf.mxu0
    %9385 = vdwg.mxu0
    %9386 = vmatpush.bf16.msra.mxu0 %v5747
    %9387 = vmatpush.bf16.msra.mxu0 %v5739
    %9388 = vmatpush.bf16.msra.mxu0 %v5731
    %9389 = vmatpush.bf16.msra.mxu0 %v5723
    %9390 = vmatpush.bf16.msra.mxu0 %v5715
    %9391 = vmatpush.bf16.msra.mxu0 %v5707
    %9392 = vmatpush.bf16.msra.mxu0 %v5699
    %9393 = vmatpush.bf16.msra.mxu0 %v5691
    %9394 = vmatmul.bf16.gmra.mxu0 %v1431
    %v9395 = vpop.f32.mrf.mxu0
    %v9396 = vadd.f32 %v9383, %v9395
    %v9397 = vpop.f32.mrf.mxu0
    %9398 = vdwg.mxu0
    %9399 = vmatpush.bf16.msra.mxu0 %v5811
    %9400 = vmatpush.bf16.msra.mxu0 %v5803
    %9401 = vmatpush.bf16.msra.mxu0 %v5795
    %9402 = vmatpush.bf16.msra.mxu0 %v5787
    %9403 = vmatpush.bf16.msra.mxu0 %v5779
    %9404 = vmatpush.bf16.msra.mxu0 %v5771
    %9405 = vmatpush.bf16.msra.mxu0 %v5763
    %9406 = vmatpush.bf16.msra.mxu0 %v5755
    %9407 = vmatmul.bf16.gmra.mxu0 %v1432
    %v9408 = vpop.f32.mrf.mxu0
    %v9409 = vadd.f32 %v9396, %v9408
    %v9410 = vpop.f32.mrf.mxu0
    %9411 = vdwg.mxu0
    %9412 = vmatpush.bf16.msra.mxu0 %v5875
    %9413 = vmatpush.bf16.msra.mxu0 %v5867
    %9414 = vmatpush.bf16.msra.mxu0 %v5859
    %9415 = vmatpush.bf16.msra.mxu0 %v5851
    %9416 = vmatpush.bf16.msra.mxu0 %v5843
    %9417 = vmatpush.bf16.msra.mxu0 %v5835
    %9418 = vmatpush.bf16.msra.mxu0 %v5827
    %9419 = vmatpush.bf16.msra.mxu0 %v5819
    %9420 = vmatmul.bf16.gmra.mxu0 %v1433
    %v9421 = vpop.f32.mrf.mxu0
    %v9422 = vadd.f32 %v9409, %v9421
    %v9423 = vpop.f32.mrf.mxu0
    %9424 = vdwg.mxu0
    %9425 = vmatpush.bf16.msra.mxu0 %v5939
    %9426 = vmatpush.bf16.msra.mxu0 %v5931
    %9427 = vmatpush.bf16.msra.mxu0 %v5923
    %9428 = vmatpush.bf16.msra.mxu0 %v5915
    %9429 = vmatpush.bf16.msra.mxu0 %v5907
    %9430 = vmatpush.bf16.msra.mxu0 %v5899
    %9431 = vmatpush.bf16.msra.mxu0 %v5891
    %9432 = vmatpush.bf16.msra.mxu0 %v5883
    %9433 = vmatmul.bf16.gmra.mxu0 %v1434
    %v9434 = vpop.f32.mrf.mxu0
    %v9435 = vadd.f32 %v9422, %v9434
    %v9436 = vpop.f32.mrf.mxu0
    %9437 = vdwg.mxu0
    %9438 = vmatpush.bf16.msra.mxu0 %v6003
    %9439 = vmatpush.bf16.msra.mxu0 %v5995
    %9440 = vmatpush.bf16.msra.mxu0 %v5987
    %9441 = vmatpush.bf16.msra.mxu0 %v5979
    %9442 = vmatpush.bf16.msra.mxu0 %v5971
    %9443 = vmatpush.bf16.msra.mxu0 %v5963
    %9444 = vmatpush.bf16.msra.mxu0 %v5955
    %9445 = vmatpush.bf16.msra.mxu0 %v5947
    %9446 = vmatmul.bf16.gmra.mxu0 %v1435
    %v9447 = vpop.f32.mrf.mxu0
    %v9448 = vadd.f32 %v9435, %v9447
    %v9449 = vpop.f32.mrf.mxu0
    %9450 = vdwg.mxu0
    %9451 = vmatpush.bf16.msra.mxu0 %v6067
    %9452 = vmatpush.bf16.msra.mxu0 %v6059
    %9453 = vmatpush.bf16.msra.mxu0 %v6051
    %9454 = vmatpush.bf16.msra.mxu0 %v6043
    %9455 = vmatpush.bf16.msra.mxu0 %v6035
    %9456 = vmatpush.bf16.msra.mxu0 %v6027
    %9457 = vmatpush.bf16.msra.mxu0 %v6019
    %9458 = vmatpush.bf16.msra.mxu0 %v6011
    %9459 = vmatmul.bf16.gmra.mxu0 %v1436
    %v9460 = vpop.f32.mrf.mxu0
    %v9461 = vadd.f32 %v9448, %v9460
    %v9462 = vpop.f32.mrf.mxu0
    %9463 = vdwg.mxu0
    %9464 = vmatpush.bf16.msra.mxu0 %v6131
    %9465 = vmatpush.bf16.msra.mxu0 %v6123
    %9466 = vmatpush.bf16.msra.mxu0 %v6115
    %9467 = vmatpush.bf16.msra.mxu0 %v6107
    %9468 = vmatpush.bf16.msra.mxu0 %v6099
    %9469 = vmatpush.bf16.msra.mxu0 %v6091
    %9470 = vmatpush.bf16.msra.mxu0 %v6083
    %9471 = vmatpush.bf16.msra.mxu0 %v6075
    %9472 = vmatmul.bf16.gmra.mxu0 %v1437
    %v9473 = vpop.f32.mrf.mxu0
    %v9474 = vadd.f32 %v9461, %v9473
    %v9475 = vpop.f32.mrf.mxu0
    %9476 = vdwg.mxu0
    %9477 = vmatpush.bf16.msra.mxu0 %v6195
    %9478 = vmatpush.bf16.msra.mxu0 %v6187
    %9479 = vmatpush.bf16.msra.mxu0 %v6179
    %9480 = vmatpush.bf16.msra.mxu0 %v6171
    %9481 = vmatpush.bf16.msra.mxu0 %v6163
    %9482 = vmatpush.bf16.msra.mxu0 %v6155
    %9483 = vmatpush.bf16.msra.mxu0 %v6147
    %9484 = vmatpush.bf16.msra.mxu0 %v6139
    %9485 = vmatmul.bf16.gmra.mxu0 %v1438
    %v9486 = vpop.f32.mrf.mxu0
    %v9487 = vadd.f32 %v9474, %v9486
    %v9488 = vpop.f32.mrf.mxu0
    %9489 = vdwg.mxu0
    %9490 = vmatpush.bf16.msra.mxu0 %v6259
    %9491 = vmatpush.bf16.msra.mxu0 %v6251
    %9492 = vmatpush.bf16.msra.mxu0 %v6243
    %9493 = vmatpush.bf16.msra.mxu0 %v6235
    %9494 = vmatpush.bf16.msra.mxu0 %v6227
    %9495 = vmatpush.bf16.msra.mxu0 %v6219
    %9496 = vmatpush.bf16.msra.mxu0 %v6211
    %9497 = vmatpush.bf16.msra.mxu0 %v6203
    %9498 = vmatmul.bf16.gmra.mxu0 %v1439
    %v9499 = vpop.f32.mrf.mxu0
    %v9500 = vadd.f32 %v9487, %v9499
    %v9501 = vpop.f32.mrf.mxu0
    %9502 = vdwg.mxu0
    %9503 = vmatpush.bf16.msra.mxu0 %v6323
    %9504 = vmatpush.bf16.msra.mxu0 %v6315
    %9505 = vmatpush.bf16.msra.mxu0 %v6307
    %9506 = vmatpush.bf16.msra.mxu0 %v6299
    %9507 = vmatpush.bf16.msra.mxu0 %v6291
    %9508 = vmatpush.bf16.msra.mxu0 %v6283
    %9509 = vmatpush.bf16.msra.mxu0 %v6275
    %9510 = vmatpush.bf16.msra.mxu0 %v6267
    %9511 = vmatmul.bf16.gmra.mxu0 %v1440
    %v9512 = vpop.f32.mrf.mxu0
    %v9513 = vadd.f32 %v9500, %v9512
    %v9514 = vpop.f32.mrf.mxu0
    %9515 = vdwg.mxu0
    %v9516 = vmax.f32 %v7784, 0.0
    %v9517 = vmax.f32 %v8031, 0.0
    %v9518 = vmax.f32 %v8278, 0.0
    %v9519 = vmax.f32 %v8525, 0.0
    %v9520 = vmax.f32 %v8772, 0.0
    %v9521 = vmax.f32 %v9019, 0.0
    %v9522 = vmax.f32 %v9266, 0.0
    %v9523 = vmax.f32 %v9513, 0.0
    %v9524 = vpack.c.bf16 %v9516, %v9516
    %v9525 = vpack.c.bf16 %v9517, %v9517
    %v9526 = vpack.c.bf16 %v9518, %v9518
    %v9527 = vpack.c.bf16 %v9519, %v9519
    %v9528 = vpack.c.bf16 %v9520, %v9520
    %v9529 = vpack.c.bf16 %v9521, %v9521
    %v9530 = vpack.c.bf16 %v9522, %v9522
    %v9531 = vpack.c.bf16 %v9523, %v9523
    %v9532 = vld [vmem:[#allocation6] sm:$0xff]
    %v9533 = vld [vmem:[#allocation6 + $0x8] sm:$0xff]
    %v9534 = vld [vmem:[#allocation6 + $0x10] sm:$0xff]
    %v9535 = vld [vmem:[#allocation6 + $0x18] sm:$0xff]
    %v9536 = vld [vmem:[#allocation6 + $0x20] sm:$0xff]
    %v9537 = vld [vmem:[#allocation6 + $0x28] sm:$0xff]
    %v9538 = vld [vmem:[#allocation6 + $0x30] sm:$0xff]
    %v9539 = vld [vmem:[#allocation6 + $0x38] sm:$0xff]
    %v9540 = vld [vmem:[#allocation6 + $0x40] sm:$0xff]
    %v9541 = vld [vmem:[#allocation6 + $0x48] sm:$0xff]
    %v9542 = vld [vmem:[#allocation6 + $0x50] sm:$0xff]
    %v9543 = vld [vmem:[#allocation6 + $0x58] sm:$0xff]
    %v9544 = vld [vmem:[#allocation6 + $0x60] sm:$0xff]
    %v9545 = vld [vmem:[#allocation6 + $0x68] sm:$0xff]
    %v9546 = vld [vmem:[#allocation6 + $0x70] sm:$0xff]
    %v9547 = vld [vmem:[#allocation6 + $0x78] sm:$0xff]
    %v9548 = vld [vmem:[#allocation6 + $0x80] sm:$0xff]
    %v9549 = vld [vmem:[#allocation6 + $0x88] sm:$0xff]
    %v9550 = vld [vmem:[#allocation6 + $0x90] sm:$0xff]
    %v9551 = vld [vmem:[#allocation6 + $0x98] sm:$0xff]
    %v9552 = vld [vmem:[#allocation6 + $0xa0] sm:$0xff]
    %v9553 = vld [vmem:[#allocation6 + $0xa8] sm:$0xff]
    %v9554 = vld [vmem:[#allocation6 + $0xb0] sm:$0xff]
    %v9555 = vld [vmem:[#allocation6 + $0xb8] sm:$0xff]
    %v9556 = vld [vmem:[#allocation6 + $0xc0] sm:$0xff]
    %v9557 = vld [vmem:[#allocation6 + $0xc8] sm:$0xff]
    %v9558 = vld [vmem:[#allocation6 + $0xd0] sm:$0xff]
    %v9559 = vld [vmem:[#allocation6 + $0xd8] sm:$0xff]
    %v9560 = vld [vmem:[#allocation6 + $0xe0] sm:$0xff]
    %v9561 = vld [vmem:[#allocation6 + $0xe8] sm:$0xff]
    %v9562 = vld [vmem:[#allocation6 + $0xf0] sm:$0xff]
    %v9563 = vld [vmem:[#allocation6 + $0xf8] sm:$0xff]
    %v9564 = vld [vmem:[#allocation6 + $0x100] sm:$0xff]
    %v9565 = vld [vmem:[#allocation6 + $0x108] sm:$0xff]
    %v9566 = vld [vmem:[#allocation6 + $0x110] sm:$0xff]
    %v9567 = vld [vmem:[#allocation6 + $0x118] sm:$0xff]
    %v9568 = vld [vmem:[#allocation6 + $0x120] sm:$0xff]
    %v9569 = vld [vmem:[#allocation6 + $0x128] sm:$0xff]
    %v9570 = vld [vmem:[#allocation6 + $0x130] sm:$0xff]
    %v9571 = vld [vmem:[#allocation6 + $0x138] sm:$0xff]
    %v9572 = vld [vmem:[#allocation6 + $0x140] sm:$0xff]
    %v9573 = vld [vmem:[#allocation6 + $0x148] sm:$0xff]
    %v9574 = vld [vmem:[#allocation6 + $0x150] sm:$0xff]
    %v9575 = vld [vmem:[#allocation6 + $0x158] sm:$0xff]
    %v9576 = vld [vmem:[#allocation6 + $0x160] sm:$0xff]
    %v9577 = vld [vmem:[#allocation6 + $0x168] sm:$0xff]
    %v9578 = vld [vmem:[#allocation6 + $0x170] sm:$0xff]
    %v9579 = vld [vmem:[#allocation6 + $0x178] sm:$0xff]
    %v9580 = vld [vmem:[#allocation6 + $0x180] sm:$0xff]
    %v9581 = vld [vmem:[#allocation6 + $0x188] sm:$0xff]
    %v9582 = vld [vmem:[#allocation6 + $0x190] sm:$0xff]
    %v9583 = vld [vmem:[#allocation6 + $0x198] sm:$0xff]
    %v9584 = vld [vmem:[#allocation6 + $0x1a0] sm:$0xff]
    %v9585 = vld [vmem:[#allocation6 + $0x1a8] sm:$0xff]
    %v9586 = vld [vmem:[#allocation6 + $0x1b0] sm:$0xff]
    %v9587 = vld [vmem:[#allocation6 + $0x1b8] sm:$0xff]
    %v9588 = vld [vmem:[#allocation6 + $0x1c0] sm:$0xff]
    %v9589 = vld [vmem:[#allocation6 + $0x1c8] sm:$0xff]
    %v9590 = vld [vmem:[#allocation6 + $0x1d0] sm:$0xff]
    %v9591 = vld [vmem:[#allocation6 + $0x1d8] sm:$0xff]
    %v9592 = vld [vmem:[#allocation6 + $0x1e0] sm:$0xff]
    %v9593 = vld [vmem:[#allocation6 + $0x1e8] sm:$0xff]
    %v9594 = vld [vmem:[#allocation6 + $0x1f0] sm:$0xff]
    %v9595 = vld [vmem:[#allocation6 + $0x1f8] sm:$0xff]
    %v9596 = vld [vmem:[#allocation6 + $0x200] sm:$0xff]
    %v9597 = vld [vmem:[#allocation6 + $0x208] sm:$0xff]
    %v9598 = vld [vmem:[#allocation6 + $0x210] sm:$0xff]
    %v9599 = vld [vmem:[#allocation6 + $0x218] sm:$0xff]
    %v9600 = vld [vmem:[#allocation6 + $0x220] sm:$0xff]
    %v9601 = vld [vmem:[#allocation6 + $0x228] sm:$0xff]
    %v9602 = vld [vmem:[#allocation6 + $0x230] sm:$0xff]
    %v9603 = vld [vmem:[#allocation6 + $0x238] sm:$0xff]
    %v9604 = vld [vmem:[#allocation6 + $0x240] sm:$0xff]
    %v9605 = vld [vmem:[#allocation6 + $0x248] sm:$0xff]
    %v9606 = vld [vmem:[#allocation6 + $0x250] sm:$0xff]
    %v9607 = vld [vmem:[#allocation6 + $0x258] sm:$0xff]
    %v9608 = vld [vmem:[#allocation6 + $0x260] sm:$0xff]
    %v9609 = vld [vmem:[#allocation6 + $0x268] sm:$0xff]
    %v9610 = vld [vmem:[#allocation6 + $0x270] sm:$0xff]
    %v9611 = vld [vmem:[#allocation6 + $0x278] sm:$0xff]
    %v9612 = vld [vmem:[#allocation6 + $0x280] sm:$0xff]
    %v9613 = vld [vmem:[#allocation6 + $0x288] sm:$0xff]
    %v9614 = vld [vmem:[#allocation6 + $0x290] sm:$0xff]
    %v9615 = vld [vmem:[#allocation6 + $0x298] sm:$0xff]
    %v9616 = vld [vmem:[#allocation6 + $0x2a0] sm:$0xff]
    %v9617 = vld [vmem:[#allocation6 + $0x2a8] sm:$0xff]
    %v9618 = vld [vmem:[#allocation6 + $0x2b0] sm:$0xff]
    %v9619 = vld [vmem:[#allocation6 + $0x2b8] sm:$0xff]
    %v9620 = vld [vmem:[#allocation6 + $0x2c0] sm:$0xff]
    %v9621 = vld [vmem:[#allocation6 + $0x2c8] sm:$0xff]
    %v9622 = vld [vmem:[#allocation6 + $0x2d0] sm:$0xff]
    %v9623 = vld [vmem:[#allocation6 + $0x2d8] sm:$0xff]
    %v9624 = vld [vmem:[#allocation6 + $0x2e0] sm:$0xff]
    %v9625 = vld [vmem:[#allocation6 + $0x2e8] sm:$0xff]
    %v9626 = vld [vmem:[#allocation6 + $0x2f0] sm:$0xff]
    %v9627 = vld [vmem:[#allocation6 + $0x2f8] sm:$0xff]
    %v9628 = vld [vmem:[#allocation6 + $0x300] sm:$0xff]
    %v9629 = vld [vmem:[#allocation6 + $0x308] sm:$0xff]
    %v9630 = vld [vmem:[#allocation6 + $0x310] sm:$0xff]
    %v9631 = vld [vmem:[#allocation6 + $0x318] sm:$0xff]
    %v9632 = vld [vmem:[#allocation6 + $0x320] sm:$0xff]
    %v9633 = vld [vmem:[#allocation6 + $0x328] sm:$0xff]
    %v9634 = vld [vmem:[#allocation6 + $0x330] sm:$0xff]
    %v9635 = vld [vmem:[#allocation6 + $0x338] sm:$0xff]
    %v9636 = vld [vmem:[#allocation6 + $0x340] sm:$0xff]
    %v9637 = vld [vmem:[#allocation6 + $0x348] sm:$0xff]
    %v9638 = vld [vmem:[#allocation6 + $0x350] sm:$0xff]
    %v9639 = vld [vmem:[#allocation6 + $0x358] sm:$0xff]
    %v9640 = vld [vmem:[#allocation6 + $0x360] sm:$0xff]
    %v9641 = vld [vmem:[#allocation6 + $0x368] sm:$0xff]
    %v9642 = vld [vmem:[#allocation6 + $0x370] sm:$0xff]
    %v9643 = vld [vmem:[#allocation6 + $0x378] sm:$0xff]
    %v9644 = vld [vmem:[#allocation6 + $0x380] sm:$0xff]
    %v9645 = vld [vmem:[#allocation6 + $0x388] sm:$0xff]
    %v9646 = vld [vmem:[#allocation6 + $0x390] sm:$0xff]
    %v9647 = vld [vmem:[#allocation6 + $0x398] sm:$0xff]
    %v9648 = vld [vmem:[#allocation6 + $0x3a0] sm:$0xff]
    %v9649 = vld [vmem:[#allocation6 + $0x3a8] sm:$0xff]
    %v9650 = vld [vmem:[#allocation6 + $0x3b0] sm:$0xff]
    %v9651 = vld [vmem:[#allocation6 + $0x3b8] sm:$0xff]
    %v9652 = vld [vmem:[#allocation6 + $0x3c0] sm:$0xff]
    %v9653 = vld [vmem:[#allocation6 + $0x3c8] sm:$0xff]
    %v9654 = vld [vmem:[#allocation6 + $0x3d0] sm:$0xff]
    %v9655 = vld [vmem:[#allocation6 + $0x3d8] sm:$0xff]
    %v9656 = vld [vmem:[#allocation6 + $0x3e0] sm:$0xff]
    %v9657 = vld [vmem:[#allocation6 + $0x3e8] sm:$0xff]
    %v9658 = vld [vmem:[#allocation6 + $0x3f0] sm:$0xff]
    %v9659 = vld [vmem:[#allocation6 + $0x3f8] sm:$0xff]
    %v9660 = vld [vmem:[#allocation6 + $0x400] sm:$0xff]
    %v9661 = vld [vmem:[#allocation6 + $0x408] sm:$0xff]
    %v9662 = vld [vmem:[#allocation6 + $0x410] sm:$0xff]
    %v9663 = vld [vmem:[#allocation6 + $0x418] sm:$0xff]
    %v9664 = vld [vmem:[#allocation6 + $0x420] sm:$0xff]
    %v9665 = vld [vmem:[#allocation6 + $0x428] sm:$0xff]
    %v9666 = vld [vmem:[#allocation6 + $0x430] sm:$0xff]
    %v9667 = vld [vmem:[#allocation6 + $0x438] sm:$0xff]
    %v9668 = vld [vmem:[#allocation6 + $0x440] sm:$0xff]
    %v9669 = vld [vmem:[#allocation6 + $0x448] sm:$0xff]
    %v9670 = vld [vmem:[#allocation6 + $0x450] sm:$0xff]
    %v9671 = vld [vmem:[#allocation6 + $0x458] sm:$0xff]
    %v9672 = vld [vmem:[#allocation6 + $0x460] sm:$0xff]
    %v9673 = vld [vmem:[#allocation6 + $0x468] sm:$0xff]
    %v9674 = vld [vmem:[#allocation6 + $0x470] sm:$0xff]
    %v9675 = vld [vmem:[#allocation6 + $0x478] sm:$0xff]
    %v9676 = vld [vmem:[#allocation6 + $0x480] sm:$0xff]
    %v9677 = vld [vmem:[#allocation6 + $0x488] sm:$0xff]
    %v9678 = vld [vmem:[#allocation6 + $0x490] sm:$0xff]
    %v9679 = vld [vmem:[#allocation6 + $0x498] sm:$0xff]
    %v9680 = vld [vmem:[#allocation6 + $0x4a0] sm:$0xff]
    %v9681 = vld [vmem:[#allocation6 + $0x4a8] sm:$0xff]
    %v9682 = vld [vmem:[#allocation6 + $0x4b0] sm:$0xff]
    %v9683 = vld [vmem:[#allocation6 + $0x4b8] sm:$0xff]
    %v9684 = vld [vmem:[#allocation6 + $0x4c0] sm:$0xff]
    %v9685 = vld [vmem:[#allocation6 + $0x4c8] sm:$0xff]
    %v9686 = vld [vmem:[#allocation6 + $0x4d0] sm:$0xff]
    %v9687 = vld [vmem:[#allocation6 + $0x4d8] sm:$0xff]
    %v9688 = vld [vmem:[#allocation6 + $0x4e0] sm:$0xff]
    %v9689 = vld [vmem:[#allocation6 + $0x4e8] sm:$0xff]
    %v9690 = vld [vmem:[#allocation6 + $0x4f0] sm:$0xff]
    %v9691 = vld [vmem:[#allocation6 + $0x4f8] sm:$0xff]
    %v9692 = vld [vmem:[#allocation6 + $0x500] sm:$0xff]
    %v9693 = vld [vmem:[#allocation6 + $0x508] sm:$0xff]
    %v9694 = vld [vmem:[#allocation6 + $0x510] sm:$0xff]
    %v9695 = vld [vmem:[#allocation6 + $0x518] sm:$0xff]
    %v9696 = vld [vmem:[#allocation6 + $0x520] sm:$0xff]
    %v9697 = vld [vmem:[#allocation6 + $0x528] sm:$0xff]
    %v9698 = vld [vmem:[#allocation6 + $0x530] sm:$0xff]
    %v9699 = vld [vmem:[#allocation6 + $0x538] sm:$0xff]
    %v9700 = vld [vmem:[#allocation6 + $0x540] sm:$0xff]
    %v9701 = vld [vmem:[#allocation6 + $0x548] sm:$0xff]
    %v9702 = vld [vmem:[#allocation6 + $0x550] sm:$0xff]
    %v9703 = vld [vmem:[#allocation6 + $0x558] sm:$0xff]
    %v9704 = vld [vmem:[#allocation6 + $0x560] sm:$0xff]
    %v9705 = vld [vmem:[#allocation6 + $0x568] sm:$0xff]
    %v9706 = vld [vmem:[#allocation6 + $0x570] sm:$0xff]
    %v9707 = vld [vmem:[#allocation6 + $0x578] sm:$0xff]
    %v9708 = vld [vmem:[#allocation6 + $0x580] sm:$0xff]
    %v9709 = vld [vmem:[#allocation6 + $0x588] sm:$0xff]
    %v9710 = vld [vmem:[#allocation6 + $0x590] sm:$0xff]
    %v9711 = vld [vmem:[#allocation6 + $0x598] sm:$0xff]
    %v9712 = vld [vmem:[#allocation6 + $0x5a0] sm:$0xff]
    %v9713 = vld [vmem:[#allocation6 + $0x5a8] sm:$0xff]
    %v9714 = vld [vmem:[#allocation6 + $0x5b0] sm:$0xff]
    %v9715 = vld [vmem:[#allocation6 + $0x5b8] sm:$0xff]
    %v9716 = vld [vmem:[#allocation6 + $0x5c0] sm:$0xff]
    %v9717 = vld [vmem:[#allocation6 + $0x5c8] sm:$0xff]
    %v9718 = vld [vmem:[#allocation6 + $0x5d0] sm:$0xff]
    %v9719 = vld [vmem:[#allocation6 + $0x5d8] sm:$0xff]
    %v9720 = vld [vmem:[#allocation6 + $0x5e0] sm:$0xff]
    %v9721 = vld [vmem:[#allocation6 + $0x5e8] sm:$0xff]
    %v9722 = vld [vmem:[#allocation6 + $0x5f0] sm:$0xff]
    %v9723 = vld [vmem:[#allocation6 + $0x5f8] sm:$0xff]
    %v9724 = vld [vmem:[#allocation6 + $0x600] sm:$0xff]
    %v9725 = vld [vmem:[#allocation6 + $0x608] sm:$0xff]
    %v9726 = vld [vmem:[#allocation6 + $0x610] sm:$0xff]
    %v9727 = vld [vmem:[#allocation6 + $0x618] sm:$0xff]
    %v9728 = vld [vmem:[#allocation6 + $0x620] sm:$0xff]
    %v9729 = vld [vmem:[#allocation6 + $0x628] sm:$0xff]
    %v9730 = vld [vmem:[#allocation6 + $0x630] sm:$0xff]
    %v9731 = vld [vmem:[#allocation6 + $0x638] sm:$0xff]
    %v9732 = vld [vmem:[#allocation6 + $0x640] sm:$0xff]
    %v9733 = vld [vmem:[#allocation6 + $0x648] sm:$0xff]
    %v9734 = vld [vmem:[#allocation6 + $0x650] sm:$0xff]
    %v9735 = vld [vmem:[#allocation6 + $0x658] sm:$0xff]
    %v9736 = vld [vmem:[#allocation6 + $0x660] sm:$0xff]
    %v9737 = vld [vmem:[#allocation6 + $0x668] sm:$0xff]
    %v9738 = vld [vmem:[#allocation6 + $0x670] sm:$0xff]
    %v9739 = vld [vmem:[#allocation6 + $0x678] sm:$0xff]
    %v9740 = vld [vmem:[#allocation6 + $0x680] sm:$0xff]
    %v9741 = vld [vmem:[#allocation6 + $0x688] sm:$0xff]
    %v9742 = vld [vmem:[#allocation6 + $0x690] sm:$0xff]
    %v9743 = vld [vmem:[#allocation6 + $0x698] sm:$0xff]
    %v9744 = vld [vmem:[#allocation6 + $0x6a0] sm:$0xff]
    %v9745 = vld [vmem:[#allocation6 + $0x6a8] sm:$0xff]
    %v9746 = vld [vmem:[#allocation6 + $0x6b0] sm:$0xff]
    %v9747 = vld [vmem:[#allocation6 + $0x6b8] sm:$0xff]
    %v9748 = vld [vmem:[#allocation6 + $0x6c0] sm:$0xff]
    %v9749 = vld [vmem:[#allocation6 + $0x6c8] sm:$0xff]
    %v9750 = vld [vmem:[#allocation6 + $0x6d0] sm:$0xff]
    %v9751 = vld [vmem:[#allocation6 + $0x6d8] sm:$0xff]
    %v9752 = vld [vmem:[#allocation6 + $0x6e0] sm:$0xff]
    %v9753 = vld [vmem:[#allocation6 + $0x6e8] sm:$0xff]
    %v9754 = vld [vmem:[#allocation6 + $0x6f0] sm:$0xff]
    %v9755 = vld [vmem:[#allocation6 + $0x6f8] sm:$0xff]
    %v9756 = vld [vmem:[#allocation6 + $0x700] sm:$0xff]
    %v9757 = vld [vmem:[#allocation6 + $0x708] sm:$0xff]
    %v9758 = vld [vmem:[#allocation6 + $0x710] sm:$0xff]
    %v9759 = vld [vmem:[#allocation6 + $0x718] sm:$0xff]
    %v9760 = vld [vmem:[#allocation6 + $0x720] sm:$0xff]
    %v9761 = vld [vmem:[#allocation6 + $0x728] sm:$0xff]
    %v9762 = vld [vmem:[#allocation6 + $0x730] sm:$0xff]
    %v9763 = vld [vmem:[#allocation6 + $0x738] sm:$0xff]
    %v9764 = vld [vmem:[#allocation6 + $0x740] sm:$0xff]
    %v9765 = vld [vmem:[#allocation6 + $0x748] sm:$0xff]
    %v9766 = vld [vmem:[#allocation6 + $0x750] sm:$0xff]
    %v9767 = vld [vmem:[#allocation6 + $0x758] sm:$0xff]
    %v9768 = vld [vmem:[#allocation6 + $0x760] sm:$0xff]
    %v9769 = vld [vmem:[#allocation6 + $0x768] sm:$0xff]
    %v9770 = vld [vmem:[#allocation6 + $0x770] sm:$0xff]
    %v9771 = vld [vmem:[#allocation6 + $0x778] sm:$0xff]
    %v9772 = vld [vmem:[#allocation6 + $0x780] sm:$0xff]
    %v9773 = vld [vmem:[#allocation6 + $0x788] sm:$0xff]
    %v9774 = vld [vmem:[#allocation6 + $0x790] sm:$0xff]
    %v9775 = vld [vmem:[#allocation6 + $0x798] sm:$0xff]
    %v9776 = vld [vmem:[#allocation6 + $0x7a0] sm:$0xff]
    %v9777 = vld [vmem:[#allocation6 + $0x7a8] sm:$0xff]
    %v9778 = vld [vmem:[#allocation6 + $0x7b0] sm:$0xff]
    %v9779 = vld [vmem:[#allocation6 + $0x7b8] sm:$0xff]
    %v9780 = vld [vmem:[#allocation6 + $0x7c0] sm:$0xff]
    %v9781 = vld [vmem:[#allocation6 + $0x7c8] sm:$0xff]
    %v9782 = vld [vmem:[#allocation6 + $0x7d0] sm:$0xff]
    %v9783 = vld [vmem:[#allocation6 + $0x7d8] sm:$0xff]
    %v9784 = vld [vmem:[#allocation6 + $0x7e0] sm:$0xff]
    %v9785 = vld [vmem:[#allocation6 + $0x7e8] sm:$0xff]
    %v9786 = vld [vmem:[#allocation6 + $0x7f0] sm:$0xff]
    %v9787 = vld [vmem:[#allocation6 + $0x7f8] sm:$0xff]
    %v9788 = vld [vmem:[#allocation7] sm:$0xf]
    %v9790 = vperm.slane %v9788, 0
    %v9791 = vperm.slane %v9788, 1
    %v9792 = vperm.slane %v9788, 2
    %v9793 = vperm.slane %v9788, 3
    %v10054 = vunpack.c.l.b16 %v9532
    %v10055 = vunpack.c.h.b16 %v9532
    %v10056 = vunpack.c.l.b16 %v9533
    %v10057 = vunpack.c.h.b16 %v9533
    %v10058 = vunpack.c.l.b16 %v9534
    %v10059 = vunpack.c.h.b16 %v9534
    %v10060 = vunpack.c.l.b16 %v9535
    %v10061 = vunpack.c.h.b16 %v9535
    %v10062 = vunpack.c.l.b16 %v9536
    %v10063 = vunpack.c.h.b16 %v9536
    %v10064 = vunpack.c.l.b16 %v9537
    %v10065 = vunpack.c.h.b16 %v9537
    %v10066 = vunpack.c.l.b16 %v9538
    %v10067 = vunpack.c.h.b16 %v9538
    %v10068 = vunpack.c.l.b16 %v9539
    %v10069 = vunpack.c.h.b16 %v9539
    %v10070 = vunpack.c.l.b16 %v9540
    %v10071 = vunpack.c.h.b16 %v9540
    %v10072 = vunpack.c.l.b16 %v9541
    %v10073 = vunpack.c.h.b16 %v9541
    %v10074 = vunpack.c.l.b16 %v9542
    %v10075 = vunpack.c.h.b16 %v9542
    %v10076 = vunpack.c.l.b16 %v9543
    %v10077 = vunpack.c.h.b16 %v9543
    %v10078 = vunpack.c.l.b16 %v9544
    %v10079 = vunpack.c.h.b16 %v9544
    %v10080 = vunpack.c.l.b16 %v9545
    %v10081 = vunpack.c.h.b16 %v9545
    %v10082 = vunpack.c.l.b16 %v9546
    %v10083 = vunpack.c.h.b16 %v9546
    %v10084 = vunpack.c.l.b16 %v9547
    %v10085 = vunpack.c.h.b16 %v9547
    %v10086 = vunpack.c.l.b16 %v9548
    %v10087 = vunpack.c.h.b16 %v9548
    %v10088 = vunpack.c.l.b16 %v9549
    %v10089 = vunpack.c.h.b16 %v9549
    %v10090 = vunpack.c.l.b16 %v9550
    %v10091 = vunpack.c.h.b16 %v9550
    %v10092 = vunpack.c.l.b16 %v9551
    %v10093 = vunpack.c.h.b16 %v9551
    %v10094 = vunpack.c.l.b16 %v9552
    %v10095 = vunpack.c.h.b16 %v9552
    %v10096 = vunpack.c.l.b16 %v9553
    %v10097 = vunpack.c.h.b16 %v9553
    %v10098 = vunpack.c.l.b16 %v9554
    %v10099 = vunpack.c.h.b16 %v9554
    %v10100 = vunpack.c.l.b16 %v9555
    %v10101 = vunpack.c.h.b16 %v9555
    %v10102 = vunpack.c.l.b16 %v9556
    %v10103 = vunpack.c.h.b16 %v9556
    %v10104 = vunpack.c.l.b16 %v9557
    %v10105 = vunpack.c.h.b16 %v9557
    %v10106 = vunpack.c.l.b16 %v9558
    %v10107 = vunpack.c.h.b16 %v9558
    %v10108 = vunpack.c.l.b16 %v9559
    %v10109 = vunpack.c.h.b16 %v9559
    %v10110 = vunpack.c.l.b16 %v9560
    %v10111 = vunpack.c.h.b16 %v9560
    %v10112 = vunpack.c.l.b16 %v9561
    %v10113 = vunpack.c.h.b16 %v9561
    %v10114 = vunpack.c.l.b16 %v9562
    %v10115 = vunpack.c.h.b16 %v9562
    %v10116 = vunpack.c.l.b16 %v9563
    %v10117 = vunpack.c.h.b16 %v9563
    %v10118 = vunpack.c.l.b16 %v9564
    %v10119 = vunpack.c.h.b16 %v9564
    %v10120 = vunpack.c.l.b16 %v9565
    %v10121 = vunpack.c.h.b16 %v9565
    %v10122 = vunpack.c.l.b16 %v9566
    %v10123 = vunpack.c.h.b16 %v9566
    %v10124 = vunpack.c.l.b16 %v9567
    %v10125 = vunpack.c.h.b16 %v9567
    %v10126 = vunpack.c.l.b16 %v9568
    %v10127 = vunpack.c.h.b16 %v9568
    %v10128 = vunpack.c.l.b16 %v9569
    %v10129 = vunpack.c.h.b16 %v9569
    %v10130 = vunpack.c.l.b16 %v9570
    %v10131 = vunpack.c.h.b16 %v9570
    %v10132 = vunpack.c.l.b16 %v9571
    %v10133 = vunpack.c.h.b16 %v9571
    %v10134 = vunpack.c.l.b16 %v9572
    %v10135 = vunpack.c.h.b16 %v9572
    %v10136 = vunpack.c.l.b16 %v9573
    %v10137 = vunpack.c.h.b16 %v9573
    %v10138 = vunpack.c.l.b16 %v9574
    %v10139 = vunpack.c.h.b16 %v9574
    %v10140 = vunpack.c.l.b16 %v9575
    %v10141 = vunpack.c.h.b16 %v9575
    %v10142 = vunpack.c.l.b16 %v9576
    %v10143 = vunpack.c.h.b16 %v9576
    %v10144 = vunpack.c.l.b16 %v9577
    %v10145 = vunpack.c.h.b16 %v9577
    %v10146 = vunpack.c.l.b16 %v9578
    %v10147 = vunpack.c.h.b16 %v9578
    %v10148 = vunpack.c.l.b16 %v9579
    %v10149 = vunpack.c.h.b16 %v9579
    %v10150 = vunpack.c.l.b16 %v9580
    %v10151 = vunpack.c.h.b16 %v9580
    %v10152 = vunpack.c.l.b16 %v9581
    %v10153 = vunpack.c.h.b16 %v9581
    %v10154 = vunpack.c.l.b16 %v9582
    %v10155 = vunpack.c.h.b16 %v9582
    %v10156 = vunpack.c.l.b16 %v9583
    %v10157 = vunpack.c.h.b16 %v9583
    %v10158 = vunpack.c.l.b16 %v9584
    %v10159 = vunpack.c.h.b16 %v9584
    %v10160 = vunpack.c.l.b16 %v9585
    %v10161 = vunpack.c.h.b16 %v9585
    %v10162 = vunpack.c.l.b16 %v9586
    %v10163 = vunpack.c.h.b16 %v9586
    %v10164 = vunpack.c.l.b16 %v9587
    %v10165 = vunpack.c.h.b16 %v9587
    %v10166 = vunpack.c.l.b16 %v9588
    %v10167 = vunpack.c.h.b16 %v9588
    %v10168 = vunpack.c.l.b16 %v9589
    %v10169 = vunpack.c.h.b16 %v9589
    %v10170 = vunpack.c.l.b16 %v9590
    %v10171 = vunpack.c.h.b16 %v9590
    %v10172 = vunpack.c.l.b16 %v9591
    %v10173 = vunpack.c.h.b16 %v9591
    %v10174 = vunpack.c.l.b16 %v9592
    %v10175 = vunpack.c.h.b16 %v9592
    %v10176 = vunpack.c.l.b16 %v9593
    %v10177 = vunpack.c.h.b16 %v9593
    %v10178 = vunpack.c.l.b16 %v9594
    %v10179 = vunpack.c.h.b16 %v9594
    %v10180 = vunpack.c.l.b16 %v9595
    %v10181 = vunpack.c.h.b16 %v9595
    %v10182 = vunpack.c.l.b16 %v9596
    %v10183 = vunpack.c.h.b16 %v9596
    %v10184 = vunpack.c.l.b16 %v9597
    %v10185 = vunpack.c.h.b16 %v9597
    %v10186 = vunpack.c.l.b16 %v9598
    %v10187 = vunpack.c.h.b16 %v9598
    %v10188 = vunpack.c.l.b16 %v9599
    %v10189 = vunpack.c.h.b16 %v9599
    %v10190 = vunpack.c.l.b16 %v9600
    %v10191 = vunpack.c.h.b16 %v9600
    %v10192 = vunpack.c.l.b16 %v9601
    %v10193 = vunpack.c.h.b16 %v9601
    %v10194 = vunpack.c.l.b16 %v9602
    %v10195 = vunpack.c.h.b16 %v9602
    %v10196 = vunpack.c.l.b16 %v9603
    %v10197 = vunpack.c.h.b16 %v9603
    %v10198 = vunpack.c.l.b16 %v9604
    %v10199 = vunpack.c.h.b16 %v9604
    %v10200 = vunpack.c.l.b16 %v9605
    %v10201 = vunpack.c.h.b16 %v9605
    %v10202 = vunpack.c.l.b16 %v9606
    %v10203 = vunpack.c.h.b16 %v9606
    %v10204 = vunpack.c.l.b16 %v9607
    %v10205 = vunpack.c.h.b16 %v9607
    %v10206 = vunpack.c.l.b16 %v9608
    %v10207 = vunpack.c.h.b16 %v9608
    %v10208 = vunpack.c.l.b16 %v9609
    %v10209 = vunpack.c.h.b16 %v9609
    %v10210 = vunpack.c.l.b16 %v9610
    %v10211 = vunpack.c.h.b16 %v9610
    %v10212 = vunpack.c.l.b16 %v9611
    %v10213 = vunpack.c.h.b16 %v9611
    %v10214 = vunpack.c.l.b16 %v9612
    %v10215 = vunpack.c.h.b16 %v9612
    %v10216 = vunpack.c.l.b16 %v9613
    %v10217 = vunpack.c.h.b16 %v9613
    %v10218 = vunpack.c.l.b16 %v9614
    %v10219 = vunpack.c.h.b16 %v9614
    %v10220 = vunpack.c.l.b16 %v9615
    %v10221 = vunpack.c.h.b16 %v9615
    %v10222 = vunpack.c.l.b16 %v9616
    %v10223 = vunpack.c.h.b16 %v9616
    %v10224 = vunpack.c.l.b16 %v9617
    %v10225 = vunpack.c.h.b16 %v9617
    %v10226 = vunpack.c.l.b16 %v9618
    %v10227 = vunpack.c.h.b16 %v9618
    %v10228 = vunpack.c.l.b16 %v9619
    %v10229 = vunpack.c.h.b16 %v9619
    %v10230 = vunpack.c.l.b16 %v9620
    %v10231 = vunpack.c.h.b16 %v9620
    %v10232 = vunpack.c.l.b16 %v9621
    %v10233 = vunpack.c.h.b16 %v9621
    %v10234 = vunpack.c.l.b16 %v9622
    %v10235 = vunpack.c.h.b16 %v9622
    %v10236 = vunpack.c.l.b16 %v9623
    %v10237 = vunpack.c.h.b16 %v9623
    %v10238 = vunpack.c.l.b16 %v9624
    %v10239 = vunpack.c.h.b16 %v9624
    %v10240 = vunpack.c.l.b16 %v9625
    %v10241 = vunpack.c.h.b16 %v9625
    %v10242 = vunpack.c.l.b16 %v9626
    %v10243 = vunpack.c.h.b16 %v9626
    %v10244 = vunpack.c.l.b16 %v9627
    %v10245 = vunpack.c.h.b16 %v9627
    %v10246 = vunpack.c.l.b16 %v9628
    %v10247 = vunpack.c.h.b16 %v9628
    %v10248 = vunpack.c.l.b16 %v9629
    %v10249 = vunpack.c.h.b16 %v9629
    %v10250 = vunpack.c.l.b16 %v9630
    %v10251 = vunpack.c.h.b16 %v9630
    %v10252 = vunpack.c.l.b16 %v9631
    %v10253 = vunpack.c.h.b16 %v9631
    %v10254 = vunpack.c.l.b16 %v9632
    %v10255 = vunpack.c.h.b16 %v9632
    %v10256 = vunpack.c.l.b16 %v9633
    %v10257 = vunpack.c.h.b16 %v9633
    %v10258 = vunpack.c.l.b16 %v9634
    %v10259 = vunpack.c.h.b16 %v9634
    %v10260 = vunpack.c.l.b16 %v9635
    %v10261 = vunpack.c.h.b16 %v9635
    %v10262 = vunpack.c.l.b16 %v9636
    %v10263 = vunpack.c.h.b16 %v9636
    %v10264 = vunpack.c.l.b16 %v9637
    %v10265 = vunpack.c.h.b16 %v9637
    %v10266 = vunpack.c.l.b16 %v9638
    %v10267 = vunpack.c.h.b16 %v9638
    %v10268 = vunpack.c.l.b16 %v9639
    %v10269 = vunpack.c.h.b16 %v9639
    %v10270 = vunpack.c.l.b16 %v9640
    %v10271 = vunpack.c.h.b16 %v9640
    %v10272 = vunpack.c.l.b16 %v9641
    %v10273 = vunpack.c.h.b16 %v9641
    %v10274 = vunpack.c.l.b16 %v9642
    %v10275 = vunpack.c.h.b16 %v9642
    %v10276 = vunpack.c.l.b16 %v9643
    %v10277 = vunpack.c.h.b16 %v9643
    %v10278 = vunpack.c.l.b16 %v9644
    %v10279 = vunpack.c.h.b16 %v9644
    %v10280 = vunpack.c.l.b16 %v9645
    %v10281 = vunpack.c.h.b16 %v9645
    %v10282 = vunpack.c.l.b16 %v9646
    %v10283 = vunpack.c.h.b16 %v9646
    %v10284 = vunpack.c.l.b16 %v9647
    %v10285 = vunpack.c.h.b16 %v9647
    %v10286 = vunpack.c.l.b16 %v9648
    %v10287 = vunpack.c.h.b16 %v9648
    %v10288 = vunpack.c.l.b16 %v9649
    %v10289 = vunpack.c.h.b16 %v9649
    %v10290 = vunpack.c.l.b16 %v9650
    %v10291 = vunpack.c.h.b16 %v9650
    %v10292 = vunpack.c.l.b16 %v9651
    %v10293 = vunpack.c.h.b16 %v9651
    %v10294 = vunpack.c.l.b16 %v9652
    %v10295 = vunpack.c.h.b16 %v9652
    %v10296 = vunpack.c.l.b16 %v9653
    %v10297 = vunpack.c.h.b16 %v9653
    %v10298 = vunpack.c.l.b16 %v9654
    %v10299 = vunpack.c.h.b16 %v9654
    %v10300 = vunpack.c.l.b16 %v9655
    %v10301 = vunpack.c.h.b16 %v9655
    %v10302 = vunpack.c.l.b16 %v9656
    %v10303 = vunpack.c.h.b16 %v9656
    %v10304 = vunpack.c.l.b16 %v9657
    %v10305 = vunpack.c.h.b16 %v9657
    %v10306 = vunpack.c.l.b16 %v9658
    %v10307 = vunpack.c.h.b16 %v9658
    %v10308 = vunpack.c.l.b16 %v9659
    %v10309 = vunpack.c.h.b16 %v9659
    %v10310 = vunpack.c.l.b16 %v9660
    %v10311 = vunpack.c.h.b16 %v9660
    %v10312 = vunpack.c.l.b16 %v9661
    %v10313 = vunpack.c.h.b16 %v9661
    %v10314 = vunpack.c.l.b16 %v9662
    %v10315 = vunpack.c.h.b16 %v9662
    %v10316 = vunpack.c.l.b16 %v9663
    %v10317 = vunpack.c.h.b16 %v9663
    %v10318 = vunpack.c.l.b16 %v9664
    %v10319 = vunpack.c.h.b16 %v9664
    %v10320 = vunpack.c.l.b16 %v9665
    %v10321 = vunpack.c.h.b16 %v9665
    %v10322 = vunpack.c.l.b16 %v9666
    %v10323 = vunpack.c.h.b16 %v9666
    %v10324 = vunpack.c.l.b16 %v9667
    %v10325 = vunpack.c.h.b16 %v9667
    %v10326 = vunpack.c.l.b16 %v9668
    %v10327 = vunpack.c.h.b16 %v9668
    %v10328 = vunpack.c.l.b16 %v9669
    %v10329 = vunpack.c.h.b16 %v9669
    %v10330 = vunpack.c.l.b16 %v9670
    %v10331 = vunpack.c.h.b16 %v9670
    %v10332 = vunpack.c.l.b16 %v9671
    %v10333 = vunpack.c.h.b16 %v9671
    %v10334 = vunpack.c.l.b16 %v9672
    %v10335 = vunpack.c.h.b16 %v9672
    %v10336 = vunpack.c.l.b16 %v9673
    %v10337 = vunpack.c.h.b16 %v9673
    %v10338 = vunpack.c.l.b16 %v9674
    %v10339 = vunpack.c.h.b16 %v9674
    %v10340 = vunpack.c.l.b16 %v9675
    %v10341 = vunpack.c.h.b16 %v9675
    %v10342 = vunpack.c.l.b16 %v9676
    %v10343 = vunpack.c.h.b16 %v9676
    %v10344 = vunpack.c.l.b16 %v9677
    %v10345 = vunpack.c.h.b16 %v9677
    %v10346 = vunpack.c.l.b16 %v9678
    %v10347 = vunpack.c.h.b16 %v9678
    %v10348 = vunpack.c.l.b16 %v9679
    %v10349 = vunpack.c.h.b16 %v9679
    %v10350 = vunpack.c.l.b16 %v9680
    %v10351 = vunpack.c.h.b16 %v9680
    %v10352 = vunpack.c.l.b16 %v9681
    %v10353 = vunpack.c.h.b16 %v9681
    %v10354 = vunpack.c.l.b16 %v9682
    %v10355 = vunpack.c.h.b16 %v9682
    %v10356 = vunpack.c.l.b16 %v9683
    %v10357 = vunpack.c.h.b16 %v9683
    %v10358 = vunpack.c.l.b16 %v9684
    %v10359 = vunpack.c.h.b16 %v9684
    %v10360 = vunpack.c.l.b16 %v9685
    %v10361 = vunpack.c.h.b16 %v9685
    %v10362 = vunpack.c.l.b16 %v9686
    %v10363 = vunpack.c.h.b16 %v9686
    %v10364 = vunpack.c.l.b16 %v9687
    %v10365 = vunpack.c.h.b16 %v9687
    %v10366 = vunpack.c.l.b16 %v9688
    %v10367 = vunpack.c.h.b16 %v9688
    %v10368 = vunpack.c.l.b16 %v9689
    %v10369 = vunpack.c.h.b16 %v9689
    %v10370 = vunpack.c.l.b16 %v9690
    %v10371 = vunpack.c.h.b16 %v9690
    %v10372 = vunpack.c.l.b16 %v9691
    %v10373 = vunpack.c.h.b16 %v9691
    %v10374 = vunpack.c.l.b16 %v9692
    %v10375 = vunpack.c.h.b16 %v9692
    %v10376 = vunpack.c.l.b16 %v9693
    %v10377 = vunpack.c.h.b16 %v9693
    %v10378 = vunpack.c.l.b16 %v9694
    %v10379 = vunpack.c.h.b16 %v9694
    %v10380 = vunpack.c.l.b16 %v9695
    %v10381 = vunpack.c.h.b16 %v9695
    %v10382 = vunpack.c.l.b16 %v9696
    %v10383 = vunpack.c.h.b16 %v9696
    %v10384 = vunpack.c.l.b16 %v9697
    %v10385 = vunpack.c.h.b16 %v9697
    %v10386 = vunpack.c.l.b16 %v9698
    %v10387 = vunpack.c.h.b16 %v9698
    %v10388 = vunpack.c.l.b16 %v9699
    %v10389 = vunpack.c.h.b16 %v9699
    %v10390 = vunpack.c.l.b16 %v9700
    %v10391 = vunpack.c.h.b16 %v9700
    %v10392 = vunpack.c.l.b16 %v9701
    %v10393 = vunpack.c.h.b16 %v9701
    %v10394 = vunpack.c.l.b16 %v9702
    %v10395 = vunpack.c.h.b16 %v9702
    %v10396 = vunpack.c.l.b16 %v9703
    %v10397 = vunpack.c.h.b16 %v9703
    %v10398 = vunpack.c.l.b16 %v9704
    %v10399 = vunpack.c.h.b16 %v9704
    %v10400 = vunpack.c.l.b16 %v9705
    %v10401 = vunpack.c.h.b16 %v9705
    %v10402 = vunpack.c.l.b16 %v9706
    %v10403 = vunpack.c.h.b16 %v9706
    %v10404 = vunpack.c.l.b16 %v9707
    %v10405 = vunpack.c.h.b16 %v9707
    %v10406 = vunpack.c.l.b16 %v9708
    %v10407 = vunpack.c.h.b16 %v9708
    %v10408 = vunpack.c.l.b16 %v9709
    %v10409 = vunpack.c.h.b16 %v9709
    %v10410 = vunpack.c.l.b16 %v9710
    %v10411 = vunpack.c.h.b16 %v9710
    %v10412 = vunpack.c.l.b16 %v9711
    %v10413 = vunpack.c.h.b16 %v9711
    %v10414 = vunpack.c.l.b16 %v9712
    %v10415 = vunpack.c.h.b16 %v9712
    %v10416 = vunpack.c.l.b16 %v9713
    %v10417 = vunpack.c.h.b16 %v9713
    %v10418 = vunpack.c.l.b16 %v9714
    %v10419 = vunpack.c.h.b16 %v9714
    %v10420 = vunpack.c.l.b16 %v9715
    %v10421 = vunpack.c.h.b16 %v9715
    %v10422 = vunpack.c.l.b16 %v9716
    %v10423 = vunpack.c.h.b16 %v9716
    %v10424 = vunpack.c.l.b16 %v9717
    %v10425 = vunpack.c.h.b16 %v9717
    %v10426 = vunpack.c.l.b16 %v9718
    %v10427 = vunpack.c.h.b16 %v9718
    %v10428 = vunpack.c.l.b16 %v9719
    %v10429 = vunpack.c.h.b16 %v9719
    %v10430 = vunpack.c.l.b16 %v9720
    %v10431 = vunpack.c.h.b16 %v9720
    %v10432 = vunpack.c.l.b16 %v9721
    %v10433 = vunpack.c.h.b16 %v9721
    %v10434 = vunpack.c.l.b16 %v9722
    %v10435 = vunpack.c.h.b16 %v9722
    %v10436 = vunpack.c.l.b16 %v9723
    %v10437 = vunpack.c.h.b16 %v9723
    %v10438 = vunpack.c.l.b16 %v9724
    %v10439 = vunpack.c.h.b16 %v9724
    %v10440 = vunpack.c.l.b16 %v9725
    %v10441 = vunpack.c.h.b16 %v9725
    %v10442 = vunpack.c.l.b16 %v9726
    %v10443 = vunpack.c.h.b16 %v9726
    %v10444 = vunpack.c.l.b16 %v9727
    %v10445 = vunpack.c.h.b16 %v9727
    %v10446 = vunpack.c.l.b16 %v9728
    %v10447 = vunpack.c.h.b16 %v9728
    %v10448 = vunpack.c.l.b16 %v9729
    %v10449 = vunpack.c.h.b16 %v9729
    %v10450 = vunpack.c.l.b16 %v9730
    %v10451 = vunpack.c.h.b16 %v9730
    %v10452 = vunpack.c.l.b16 %v9731
    %v10453 = vunpack.c.h.b16 %v9731
    %v10454 = vunpack.c.l.b16 %v9732
    %v10455 = vunpack.c.h.b16 %v9732
    %v10456 = vunpack.c.l.b16 %v9733
    %v10457 = vunpack.c.h.b16 %v9733
    %v10458 = vunpack.c.l.b16 %v9734
    %v10459 = vunpack.c.h.b16 %v9734
    %v10460 = vunpack.c.l.b16 %v9735
    %v10461 = vunpack.c.h.b16 %v9735
    %v10462 = vunpack.c.l.b16 %v9736
    %v10463 = vunpack.c.h.b16 %v9736
    %v10464 = vunpack.c.l.b16 %v9737
    %v10465 = vunpack.c.h.b16 %v9737
    %v10466 = vunpack.c.l.b16 %v9738
    %v10467 = vunpack.c.h.b16 %v9738
    %v10468 = vunpack.c.l.b16 %v9739
    %v10469 = vunpack.c.h.b16 %v9739
    %v10470 = vunpack.c.l.b16 %v9740
    %v10471 = vunpack.c.h.b16 %v9740
    %v10472 = vunpack.c.l.b16 %v9741
    %v10473 = vunpack.c.h.b16 %v9741
    %v10474 = vunpack.c.l.b16 %v9742
    %v10475 = vunpack.c.h.b16 %v9742
    %v10476 = vunpack.c.l.b16 %v9743
    %v10477 = vunpack.c.h.b16 %v9743
    %v10478 = vunpack.c.l.b16 %v9744
    %v10479 = vunpack.c.h.b16 %v9744
    %v10480 = vunpack.c.l.b16 %v9745
    %v10481 = vunpack.c.h.b16 %v9745
    %v10482 = vunpack.c.l.b16 %v9746
    %v10483 = vunpack.c.h.b16 %v9746
    %v10484 = vunpack.c.l.b16 %v9747
    %v10485 = vunpack.c.h.b16 %v9747
    %v10486 = vunpack.c.l.b16 %v9748
    %v10487 = vunpack.c.h.b16 %v9748
    %v10488 = vunpack.c.l.b16 %v9749
    %v10489 = vunpack.c.h.b16 %v9749
    %v10490 = vunpack.c.l.b16 %v9750
    %v10491 = vunpack.c.h.b16 %v9750
    %v10492 = vunpack.c.l.b16 %v9751
    %v10493 = vunpack.c.h.b16 %v9751
    %v10494 = vunpack.c.l.b16 %v9752
    %v10495 = vunpack.c.h.b16 %v9752
    %v10496 = vunpack.c.l.b16 %v9753
    %v10497 = vunpack.c.h.b16 %v9753
    %v10498 = vunpack.c.l.b16 %v9754
    %v10499 = vunpack.c.h.b16 %v9754
    %v10500 = vunpack.c.l.b16 %v9755
    %v10501 = vunpack.c.h.b16 %v9755
    %v10502 = vunpack.c.l.b16 %v9756
    %v10503 = vunpack.c.h.b16 %v9756
    %v10504 = vunpack.c.l.b16 %v9757
    %v10505 = vunpack.c.h.b16 %v9757
    %v10506 = vunpack.c.l.b16 %v9758
    %v10507 = vunpack.c.h.b16 %v9758
    %v10508 = vunpack.c.l.b16 %v9759
    %v10509 = vunpack.c.h.b16 %v9759
    %v10510 = vunpack.c.l.b16 %v9760
    %v10511 = vunpack.c.h.b16 %v9760
    %v10512 = vunpack.c.l.b16 %v9761
    %v10513 = vunpack.c.h.b16 %v9761
    %v10514 = vunpack.c.l.b16 %v9762
    %v10515 = vunpack.c.h.b16 %v9762
    %v10516 = vunpack.c.l.b16 %v9763
    %v10517 = vunpack.c.h.b16 %v9763
    %v10518 = vunpack.c.l.b16 %v9764
    %v10519 = vunpack.c.h.b16 %v9764
    %v10520 = vunpack.c.l.b16 %v9765
    %v10521 = vunpack.c.h.b16 %v9765
    %v10522 = vunpack.c.l.b16 %v9766
    %v10523 = vunpack.c.h.b16 %v9766
    %v10524 = vunpack.c.l.b16 %v9767
    %v10525 = vunpack.c.h.b16 %v9767
    %v10526 = vunpack.c.l.b16 %v9768
    %v10527 = vunpack.c.h.b16 %v9768
    %v10528 = vunpack.c.l.b16 %v9769
    %v10529 = vunpack.c.h.b16 %v9769
    %v10530 = vunpack.c.l.b16 %v9770
    %v10531 = vunpack.c.h.b16 %v9770
    %v10532 = vunpack.c.l.b16 %v9771
    %v10533 = vunpack.c.h.b16 %v9771
    %v10534 = vunpack.c.l.b16 %v9772
    %v10535 = vunpack.c.h.b16 %v9772
    %v10536 = vunpack.c.l.b16 %v9773
    %v10537 = vunpack.c.h.b16 %v9773
    %v10538 = vunpack.c.l.b16 %v9774
    %v10539 = vunpack.c.h.b16 %v9774
    %v10540 = vunpack.c.l.b16 %v9775
    %v10541 = vunpack.c.h.b16 %v9775
    %v10542 = vunpack.c.l.b16 %v9776
    %v10543 = vunpack.c.h.b16 %v9776
    %v10544 = vunpack.c.l.b16 %v9777
    %v10545 = vunpack.c.h.b16 %v9777
    %v10546 = vunpack.c.l.b16 %v9778
    %v10547 = vunpack.c.h.b16 %v9778
    %v10548 = vunpack.c.l.b16 %v9779
    %v10549 = vunpack.c.h.b16 %v9779
    %v10550 = vunpack.c.l.b16 %v9780
    %v10551 = vunpack.c.h.b16 %v9780
    %v10552 = vunpack.c.l.b16 %v9781
    %v10553 = vunpack.c.h.b16 %v9781
    %v10554 = vunpack.c.l.b16 %v9782
    %v10555 = vunpack.c.h.b16 %v9782
    %v10556 = vunpack.c.l.b16 %v9783
    %v10557 = vunpack.c.h.b16 %v9783
    %v10558 = vunpack.c.l.b16 %v9784
    %v10559 = vunpack.c.h.b16 %v9784
    %v10560 = vunpack.c.l.b16 %v9785
    %v10561 = vunpack.c.h.b16 %v9785
    %v10562 = vunpack.c.l.b16 %v9786
    %v10563 = vunpack.c.h.b16 %v9786
    %v10564 = vunpack.c.l.b16 %v9787
    %v10565 = vunpack.c.h.b16 %v9787
    %v10566 = vpack.c.b16 %v10058, %v10054
    %v10567 = vpack.c.b16 %v10059, %v10055
    %v10568 = vpack.c.b16 %v10060, %v10056
    %v10569 = vpack.c.b16 %v10061, %v10057
    %v10570 = vpack.c.b16 %v10066, %v10062
    %v10571 = vpack.c.b16 %v10067, %v10063
    %v10572 = vpack.c.b16 %v10068, %v10064
    %v10573 = vpack.c.b16 %v10069, %v10065
    %v10574 = vpack.c.b16 %v10074, %v10070
    %v10575 = vpack.c.b16 %v10075, %v10071
    %v10576 = vpack.c.b16 %v10076, %v10072
    %v10577 = vpack.c.b16 %v10077, %v10073
    %v10578 = vpack.c.b16 %v10082, %v10078
    %v10579 = vpack.c.b16 %v10083, %v10079
    %v10580 = vpack.c.b16 %v10084, %v10080
    %v10581 = vpack.c.b16 %v10085, %v10081
    %v10582 = vpack.c.b16 %v10090, %v10086
    %v10583 = vpack.c.b16 %v10091, %v10087
    %v10584 = vpack.c.b16 %v10092, %v10088
    %v10585 = vpack.c.b16 %v10093, %v10089
    %v10586 = vpack.c.b16 %v10098, %v10094
    %v10587 = vpack.c.b16 %v10099, %v10095
    %v10588 = vpack.c.b16 %v10100, %v10096
    %v10589 = vpack.c.b16 %v10101, %v10097
    %v10590 = vpack.c.b16 %v10106, %v10102
    %v10591 = vpack.c.b16 %v10107, %v10103
    %v10592 = vpack.c.b16 %v10108, %v10104
    %v10593 = vpack.c.b16 %v10109, %v10105
    %v10594 = vpack.c.b16 %v10114, %v10110
    %v10595 = vpack.c.b16 %v10115, %v10111
    %v10596 = vpack.c.b16 %v10116, %v10112
    %v10597 = vpack.c.b16 %v10117, %v10113
    %v10598 = vpack.c.b16 %v10122, %v10118
    %v10599 = vpack.c.b16 %v10123, %v10119
    %v10600 = vpack.c.b16 %v10124, %v10120
    %v10601 = vpack.c.b16 %v10125, %v10121
    %v10602 = vpack.c.b16 %v10130, %v10126
    %v10603 = vpack.c.b16 %v10131, %v10127
    %v10604 = vpack.c.b16 %v10132, %v10128
    %v10605 = vpack.c.b16 %v10133, %v10129
    %v10606 = vpack.c.b16 %v10138, %v10134
    %v10607 = vpack.c.b16 %v10139, %v10135
    %v10608 = vpack.c.b16 %v10140, %v10136
    %v10609 = vpack.c.b16 %v10141, %v10137
    %v10610 = vpack.c.b16 %v10146, %v10142
    %v10611 = vpack.c.b16 %v10147, %v10143
    %v10612 = vpack.c.b16 %v10148, %v10144
    %v10613 = vpack.c.b16 %v10149, %v10145
    %v10614 = vpack.c.b16 %v10154, %v10150
    %v10615 = vpack.c.b16 %v10155, %v10151
    %v10616 = vpack.c.b16 %v10156, %v10152
    %v10617 = vpack.c.b16 %v10157, %v10153
    %v10618 = vpack.c.b16 %v10162, %v10158
    %v10619 = vpack.c.b16 %v10163, %v10159
    %v10620 = vpack.c.b16 %v10164, %v10160
    %v10621 = vpack.c.b16 %v10165, %v10161
    %v10622 = vpack.c.b16 %v10170, %v10166
    %v10623 = vpack.c.b16 %v10171, %v10167
    %v10624 = vpack.c.b16 %v10172, %v10168
    %v10625 = vpack.c.b16 %v10173, %v10169
    %v10626 = vpack.c.b16 %v10178, %v10174
    %v10627 = vpack.c.b16 %v10179, %v10175
    %v10628 = vpack.c.b16 %v10180, %v10176
    %v10629 = vpack.c.b16 %v10181, %v10177
    %v10630 = vpack.c.b16 %v10186, %v10182
    %v10631 = vpack.c.b16 %v10187, %v10183
    %v10632 = vpack.c.b16 %v10188, %v10184
    %v10633 = vpack.c.b16 %v10189, %v10185
    %v10634 = vpack.c.b16 %v10194, %v10190
    %v10635 = vpack.c.b16 %v10195, %v10191
    %v10636 = vpack.c.b16 %v10196, %v10192
    %v10637 = vpack.c.b16 %v10197, %v10193
    %v10638 = vpack.c.b16 %v10202, %v10198
    %v10639 = vpack.c.b16 %v10203, %v10199
    %v10640 = vpack.c.b16 %v10204, %v10200
    %v10641 = vpack.c.b16 %v10205, %v10201
    %v10642 = vpack.c.b16 %v10210, %v10206
    %v10643 = vpack.c.b16 %v10211, %v10207
    %v10644 = vpack.c.b16 %v10212, %v10208
    %v10645 = vpack.c.b16 %v10213, %v10209
    %v10646 = vpack.c.b16 %v10218, %v10214
    %v10647 = vpack.c.b16 %v10219, %v10215
    %v10648 = vpack.c.b16 %v10220, %v10216
    %v10649 = vpack.c.b16 %v10221, %v10217
    %v10650 = vpack.c.b16 %v10226, %v10222
    %v10651 = vpack.c.b16 %v10227, %v10223
    %v10652 = vpack.c.b16 %v10228, %v10224
    %v10653 = vpack.c.b16 %v10229, %v10225
    %v10654 = vpack.c.b16 %v10234, %v10230
    %v10655 = vpack.c.b16 %v10235, %v10231
    %v10656 = vpack.c.b16 %v10236, %v10232
    %v10657 = vpack.c.b16 %v10237, %v10233
    %v10658 = vpack.c.b16 %v10242, %v10238
    %v10659 = vpack.c.b16 %v10243, %v10239
    %v10660 = vpack.c.b16 %v10244, %v10240
    %v10661 = vpack.c.b16 %v10245, %v10241
    %v10662 = vpack.c.b16 %v10250, %v10246
    %v10663 = vpack.c.b16 %v10251, %v10247
    %v10664 = vpack.c.b16 %v10252, %v10248
    %v10665 = vpack.c.b16 %v10253, %v10249
    %v10666 = vpack.c.b16 %v10258, %v10254
    %v10667 = vpack.c.b16 %v10259, %v10255
    %v10668 = vpack.c.b16 %v10260, %v10256
    %v10669 = vpack.c.b16 %v10261, %v10257
    %v10670 = vpack.c.b16 %v10266, %v10262
    %v10671 = vpack.c.b16 %v10267, %v10263
    %v10672 = vpack.c.b16 %v10268, %v10264
    %v10673 = vpack.c.b16 %v10269, %v10265
    %v10674 = vpack.c.b16 %v10274, %v10270
    %v10675 = vpack.c.b16 %v10275, %v10271
    %v10676 = vpack.c.b16 %v10276, %v10272
    %v10677 = vpack.c.b16 %v10277, %v10273
    %v10678 = vpack.c.b16 %v10282, %v10278
    %v10679 = vpack.c.b16 %v10283, %v10279
    %v10680 = vpack.c.b16 %v10284, %v10280
    %v10681 = vpack.c.b16 %v10285, %v10281
    %v10682 = vpack.c.b16 %v10290, %v10286
    %v10683 = vpack.c.b16 %v10291, %v10287
    %v10684 = vpack.c.b16 %v10292, %v10288
    %v10685 = vpack.c.b16 %v10293, %v10289
    %v10686 = vpack.c.b16 %v10298, %v10294
    %v10687 = vpack.c.b16 %v10299, %v10295
    %v10688 = vpack.c.b16 %v10300, %v10296
    %v10689 = vpack.c.b16 %v10301, %v10297
    %v10690 = vpack.c.b16 %v10306, %v10302
    %v10691 = vpack.c.b16 %v10307, %v10303
    %v10692 = vpack.c.b16 %v10308, %v10304
    %v10693 = vpack.c.b16 %v10309, %v10305
    %v10694 = vpack.c.b16 %v10314, %v10310
    %v10695 = vpack.c.b16 %v10315, %v10311
    %v10696 = vpack.c.b16 %v10316, %v10312
    %v10697 = vpack.c.b16 %v10317, %v10313
    %v10698 = vpack.c.b16 %v10322, %v10318
    %v10699 = vpack.c.b16 %v10323, %v10319
    %v10700 = vpack.c.b16 %v10324, %v10320
    %v10701 = vpack.c.b16 %v10325, %v10321
    %v10702 = vpack.c.b16 %v10330, %v10326
    %v10703 = vpack.c.b16 %v10331, %v10327
    %v10704 = vpack.c.b16 %v10332, %v10328
    %v10705 = vpack.c.b16 %v10333, %v10329
    %v10706 = vpack.c.b16 %v10338, %v10334
    %v10707 = vpack.c.b16 %v10339, %v10335
    %v10708 = vpack.c.b16 %v10340, %v10336
    %v10709 = vpack.c.b16 %v10341, %v10337
    %v10710 = vpack.c.b16 %v10346, %v10342
    %v10711 = vpack.c.b16 %v10347, %v10343
    %v10712 = vpack.c.b16 %v10348, %v10344
    %v10713 = vpack.c.b16 %v10349, %v10345
    %v10714 = vpack.c.b16 %v10354, %v10350
    %v10715 = vpack.c.b16 %v10355, %v10351
    %v10716 = vpack.c.b16 %v10356, %v10352
    %v10717 = vpack.c.b16 %v10357, %v10353
    %v10718 = vpack.c.b16 %v10362, %v10358
    %v10719 = vpack.c.b16 %v10363, %v10359
    %v10720 = vpack.c.b16 %v10364, %v10360
    %v10721 = vpack.c.b16 %v10365, %v10361
    %v10722 = vpack.c.b16 %v10370, %v10366
    %v10723 = vpack.c.b16 %v10371, %v10367
    %v10724 = vpack.c.b16 %v10372, %v10368
    %v10725 = vpack.c.b16 %v10373, %v10369
    %v10726 = vpack.c.b16 %v10378, %v10374
    %v10727 = vpack.c.b16 %v10379, %v10375
    %v10728 = vpack.c.b16 %v10380, %v10376
    %v10729 = vpack.c.b16 %v10381, %v10377
    %v10730 = vpack.c.b16 %v10386, %v10382
    %v10731 = vpack.c.b16 %v10387, %v10383
    %v10732 = vpack.c.b16 %v10388, %v10384
    %v10733 = vpack.c.b16 %v10389, %v10385
    %v10734 = vpack.c.b16 %v10394, %v10390
    %v10735 = vpack.c.b16 %v10395, %v10391
    %v10736 = vpack.c.b16 %v10396, %v10392
    %v10737 = vpack.c.b16 %v10397, %v10393
    %v10738 = vpack.c.b16 %v10402, %v10398
    %v10739 = vpack.c.b16 %v10403, %v10399
    %v10740 = vpack.c.b16 %v10404, %v10400
    %v10741 = vpack.c.b16 %v10405, %v10401
    %v10742 = vpack.c.b16 %v10410, %v10406
    %v10743 = vpack.c.b16 %v10411, %v10407
    %v10744 = vpack.c.b16 %v10412, %v10408
    %v10745 = vpack.c.b16 %v10413, %v10409
    %v10746 = vpack.c.b16 %v10418, %v10414
    %v10747 = vpack.c.b16 %v10419, %v10415
    %v10748 = vpack.c.b16 %v10420, %v10416
    %v10749 = vpack.c.b16 %v10421, %v10417
    %v10750 = vpack.c.b16 %v10426, %v10422
    %v10751 = vpack.c.b16 %v10427, %v10423
    %v10752 = vpack.c.b16 %v10428, %v10424
    %v10753 = vpack.c.b16 %v10429, %v10425
    %v10754 = vpack.c.b16 %v10434, %v10430
    %v10755 = vpack.c.b16 %v10435, %v10431
    %v10756 = vpack.c.b16 %v10436, %v10432
    %v10757 = vpack.c.b16 %v10437, %v10433
    %v10758 = vpack.c.b16 %v10442, %v10438
    %v10759 = vpack.c.b16 %v10443, %v10439
    %v10760 = vpack.c.b16 %v10444, %v10440
    %v10761 = vpack.c.b16 %v10445, %v10441
    %v10762 = vpack.c.b16 %v10450, %v10446
    %v10763 = vpack.c.b16 %v10451, %v10447
    %v10764 = vpack.c.b16 %v10452, %v10448
    %v10765 = vpack.c.b16 %v10453, %v10449
    %v10766 = vpack.c.b16 %v10458, %v10454
    %v10767 = vpack.c.b16 %v10459, %v10455
    %v10768 = vpack.c.b16 %v10460, %v10456
    %v10769 = vpack.c.b16 %v10461, %v10457
    %v10770 = vpack.c.b16 %v10466, %v10462
    %v10771 = vpack.c.b16 %v10467, %v10463
    %v10772 = vpack.c.b16 %v10468, %v10464
    %v10773 = vpack.c.b16 %v10469, %v10465
    %v10774 = vpack.c.b16 %v10474, %v10470
    %v10775 = vpack.c.b16 %v10475, %v10471
    %v10776 = vpack.c.b16 %v10476, %v10472
    %v10777 = vpack.c.b16 %v10477, %v10473
    %v10778 = vpack.c.b16 %v10482, %v10478
    %v10779 = vpack.c.b16 %v10483, %v10479
    %v10780 = vpack.c.b16 %v10484, %v10480
    %v10781 = vpack.c.b16 %v10485, %v10481
    %v10782 = vpack.c.b16 %v10490, %v10486
    %v10783 = vpack.c.b16 %v10491, %v10487
    %v10784 = vpack.c.b16 %v10492, %v10488
    %v10785 = vpack.c.b16 %v10493, %v10489
    %v10786 = vpack.c.b16 %v10498, %v10494
    %v10787 = vpack.c.b16 %v10499, %v10495
    %v10788 = vpack.c.b16 %v10500, %v10496
    %v10789 = vpack.c.b16 %v10501, %v10497
    %v10790 = vpack.c.b16 %v10506, %v10502
    %v10791 = vpack.c.b16 %v10507, %v10503
    %v10792 = vpack.c.b16 %v10508, %v10504
    %v10793 = vpack.c.b16 %v10509, %v10505
    %v10794 = vpack.c.b16 %v10514, %v10510
    %v10795 = vpack.c.b16 %v10515, %v10511
    %v10796 = vpack.c.b16 %v10516, %v10512
    %v10797 = vpack.c.b16 %v10517, %v10513
    %v10798 = vpack.c.b16 %v10522, %v10518
    %v10799 = vpack.c.b16 %v10523, %v10519
    %v10800 = vpack.c.b16 %v10524, %v10520
    %v10801 = vpack.c.b16 %v10525, %v10521
    %v10802 = vpack.c.b16 %v10530, %v10526
    %v10803 = vpack.c.b16 %v10531, %v10527
    %v10804 = vpack.c.b16 %v10532, %v10528
    %v10805 = vpack.c.b16 %v10533, %v10529
    %v10806 = vpack.c.b16 %v10538, %v10534
    %v10807 = vpack.c.b16 %v10539, %v10535
    %v10808 = vpack.c.b16 %v10540, %v10536
    %v10809 = vpack.c.b16 %v10541, %v10537
    %v10810 = vpack.c.b16 %v10546, %v10542
    %v10811 = vpack.c.b16 %v10547, %v10543
    %v10812 = vpack.c.b16 %v10548, %v10544
    %v10813 = vpack.c.b16 %v10549, %v10545
    %v10814 = vpack.c.b16 %v10554, %v10550
    %v10815 = vpack.c.b16 %v10555, %v10551
    %v10816 = vpack.c.b16 %v10556, %v10552
    %v10817 = vpack.c.b16 %v10557, %v10553
    %v10818 = vpack.c.b16 %v10562, %v10558
    %v10819 = vpack.c.b16 %v10563, %v10559
    %v10820 = vpack.c.b16 %v10564, %v10560
    %v10821 = vpack.c.b16 %v10565, %v10561
    %11078 = vmatpush.bf16.msra.mxu0 %v10594
    %11079 = vmatpush.bf16.msra.mxu0 %v10590
    %11080 = vmatpush.bf16.msra.mxu0 %v10586
    %11081 = vmatpush.bf16.msra.mxu0 %v10582
    %11082 = vmatpush.bf16.msra.mxu0 %v10578
    %11083 = vmatpush.bf16.msra.mxu0 %v10574
    %11084 = vmatpush.bf16.msra.mxu0 %v10570
    %11085 = vmatpush.bf16.msra.mxu0 %v10566
    %11086 = vmatmul.bf16.gmra.mxu0 %v9524
    %v11087 = vpop.f32.mrf.mxu0
    %v11088 = vadd.f32 %v9790, %v11087
    %v11089 = vpop.f32.mrf.mxu0
    %11090 = vdwg.mxu0
    %11091 = vmatpush.bf16.msra.mxu0 %v10626
    %11092 = vmatpush.bf16.msra.mxu0 %v10622
    %11093 = vmatpush.bf16.msra.mxu0 %v10618
    %11094 = vmatpush.bf16.msra.mxu0 %v10614
    %11095 = vmatpush.bf16.msra.mxu0 %v10610
    %11096 = vmatpush.bf16.msra.mxu0 %v10606
    %11097 = vmatpush.bf16.msra.mxu0 %v10602
    %11098 = vmatpush.bf16.msra.mxu0 %v10598
    %11099 = vmatmul.bf16.gmra.mxu0 %v9525
    %v11100 = vpop.f32.mrf.mxu0
    %v11101 = vadd.f32 %v11088, %v11100
    %v11102 = vpop.f32.mrf.mxu0
    %11103 = vdwg.mxu0
    %11104 = vmatpush.bf16.msra.mxu0 %v10658
    %11105 = vmatpush.bf16.msra.mxu0 %v10654
    %11106 = vmatpush.bf16.msra.mxu0 %v10650
    %11107 = vmatpush.bf16.msra.mxu0 %v10646
    %11108 = vmatpush.bf16.msra.mxu0 %v10642
    %11109 = vmatpush.bf16.msra.mxu0 %v10638
    %11110 = vmatpush.bf16.msra.mxu0 %v10634
    %11111 = vmatpush.bf16.msra.mxu0 %v10630
    %11112 = vmatmul.bf16.gmra.mxu0 %v9526
    %v11113 = vpop.f32.mrf.mxu0
    %v11114 = vadd.f32 %v11101, %v11113
    %v11115 = vpop.f32.mrf.mxu0
    %11116 = vdwg.mxu0
    %11117 = vmatpush.bf16.msra.mxu0 %v10690
    %11118 = vmatpush.bf16.msra.mxu0 %v10686
    %11119 = vmatpush.bf16.msra.mxu0 %v10682
    %11120 = vmatpush.bf16.msra.mxu0 %v10678
    %11121 = vmatpush.bf16.msra.mxu0 %v10674
    %11122 = vmatpush.bf16.msra.mxu0 %v10670
    %11123 = vmatpush.bf16.msra.mxu0 %v10666
    %11124 = vmatpush.bf16.msra.mxu0 %v10662
    %11125 = vmatmul.bf16.gmra.mxu0 %v9527
    %v11126 = vpop.f32.mrf.mxu0
    %v11127 = vadd.f32 %v11114, %v11126
    %v11128 = vpop.f32.mrf.mxu0
    %11129 = vdwg.mxu0
    %11130 = vmatpush.bf16.msra.mxu0 %v10722
    %11131 = vmatpush.bf16.msra.mxu0 %v10718
    %11132 = vmatpush.bf16.msra.mxu0 %v10714
    %11133 = vmatpush.bf16.msra.mxu0 %v10710
    %11134 = vmatpush.bf16.msra.mxu0 %v10706
    %11135 = vmatpush.bf16.msra.mxu0 %v10702
    %11136 = vmatpush.bf16.msra.mxu0 %v10698
    %11137 = vmatpush.bf16.msra.mxu0 %v10694
    %11138 = vmatmul.bf16.gmra.mxu0 %v9528
    %v11139 = vpop.f32.mrf.mxu0
    %v11140 = vadd.f32 %v11127, %v11139
    %v11141 = vpop.f32.mrf.mxu0
    %11142 = vdwg.mxu0
    %11143 = vmatpush.bf16.msra.mxu0 %v10754
    %11144 = vmatpush.bf16.msra.mxu0 %v10750
    %11145 = vmatpush.bf16.msra.mxu0 %v10746
    %11146 = vmatpush.bf16.msra.mxu0 %v10742
    %11147 = vmatpush.bf16.msra.mxu0 %v10738
    %11148 = vmatpush.bf16.msra.mxu0 %v10734
    %11149 = vmatpush.bf16.msra.mxu0 %v10730
    %11150 = vmatpush.bf16.msra.mxu0 %v10726
    %11151 = vmatmul.bf16.gmra.mxu0 %v9529
    %v11152 = vpop.f32.mrf.mxu0
    %v11153 = vadd.f32 %v11140, %v11152
    %v11154 = vpop.f32.mrf.mxu0
    %11155 = vdwg.mxu0
    %11156 = vmatpush.bf16.msra.mxu0 %v10786
    %11157 = vmatpush.bf16.msra.mxu0 %v10782
    %11158 = vmatpush.bf16.msra.mxu0 %v10778
    %11159 = vmatpush.bf16.msra.mxu0 %v10774
    %11160 = vmatpush.bf16.msra.mxu0 %v10770
    %11161 = vmatpush.bf16.msra.mxu0 %v10766
    %11162 = vmatpush.bf16.msra.mxu0 %v10762
    %11163 = vmatpush.bf16.msra.mxu0 %v10758
    %11164 = vmatmul.bf16.gmra.mxu0 %v9530
    %v11165 = vpop.f32.mrf.mxu0
    %v11166 = vadd.f32 %v11153, %v11165
    %v11167 = vpop.f32.mrf.mxu0
    %11168 = vdwg.mxu0
    %11169 = vmatpush.bf16.msra.mxu0 %v10818
    %11170 = vmatpush.bf16.msra.mxu0 %v10814
    %11171 = vmatpush.bf16.msra.mxu0 %v10810
    %11172 = vmatpush.bf16.msra.mxu0 %v10806
    %11173 = vmatpush.bf16.msra.mxu0 %v10802
    %11174 = vmatpush.bf16.msra.mxu0 %v10798
    %11175 = vmatpush.bf16.msra.mxu0 %v10794
    %11176 = vmatpush.bf16.msra.mxu0 %v10790
    %11177 = vmatmul.bf16.gmra.mxu0 %v9531
    %v11178 = vpop.f32.mrf.mxu0
    %v11179 = vadd.f32 %v11166, %v11178
    %v11180 = vpop.f32.mrf.mxu0
    %11181 = vdwg.mxu0
    %11182 = vmatpush.bf16.msra.mxu0 %v10595
    %11183 = vmatpush.bf16.msra.mxu0 %v10591
    %11184 = vmatpush.bf16.msra.mxu0 %v10587
    %11185 = vmatpush.bf16.msra.mxu0 %v10583
    %11186 = vmatpush.bf16.msra.mxu0 %v10579
    %11187 = vmatpush.bf16.msra.mxu0 %v10575
    %11188 = vmatpush.bf16.msra.mxu0 %v10571
    %11189 = vmatpush.bf16.msra.mxu0 %v10567
    %11190 = vmatmul.bf16.gmra.mxu0 %v9524
    %v11191 = vpop.f32.mrf.mxu0
    %v11192 = vadd.f32 %v9791, %v11191
    %v11193 = vpop.f32.mrf.mxu0
    %11194 = vdwg.mxu0
    %11195 = vmatpush.bf16.msra.mxu0 %v10627
    %11196 = vmatpush.bf16.msra.mxu0 %v10623
    %11197 = vmatpush.bf16.msra.mxu0 %v10619
    %11198 = vmatpush.bf16.msra.mxu0 %v10615
    %11199 = vmatpush.bf16.msra.mxu0 %v10611
    %11200 = vmatpush.bf16.msra.mxu0 %v10607
    %11201 = vmatpush.bf16.msra.mxu0 %v10603
    %11202 = vmatpush.bf16.msra.mxu0 %v10599
    %11203 = vmatmul.bf16.gmra.mxu0 %v9525
    %v11204 = vpop.f32.mrf.mxu0
    %v11205 = vadd.f32 %v11192, %v11204
    %v11206 = vpop.f32.mrf.mxu0
    %11207 = vdwg.mxu0
    %11208 = vmatpush.bf16.msra.mxu0 %v10659
    %11209 = vmatpush.bf16.msra.mxu0 %v10655
    %11210 = vmatpush.bf16.msra.mxu0 %v10651
    %11211 = vmatpush.bf16.msra.mxu0 %v10647
    %11212 = vmatpush.bf16.msra.mxu0 %v10643
    %11213 = vmatpush.bf16.msra.mxu0 %v10639
    %11214 = vmatpush.bf16.msra.mxu0 %v10635
    %11215 = vmatpush.bf16.msra.mxu0 %v10631
    %11216 = vmatmul.bf16.gmra.mxu0 %v9526
    %v11217 = vpop.f32.mrf.mxu0
    %v11218 = vadd.f32 %v11205, %v11217
    %v11219 = vpop.f32.mrf.mxu0
    %11220 = vdwg.mxu0
    %11221 = vmatpush.bf16.msra.mxu0 %v10691
    %11222 = vmatpush.bf16.msra.mxu0 %v10687
    %11223 = vmatpush.bf16.msra.mxu0 %v10683
    %11224 = vmatpush.bf16.msra.mxu0 %v10679
    %11225 = vmatpush.bf16.msra.mxu0 %v10675
    %11226 = vmatpush.bf16.msra.mxu0 %v10671
    %11227 = vmatpush.bf16.msra.mxu0 %v10667
    %11228 = vmatpush.bf16.msra.mxu0 %v10663
    %11229 = vmatmul.bf16.gmra.mxu0 %v9527
    %v11230 = vpop.f32.mrf.mxu0
    %v11231 = vadd.f32 %v11218, %v11230
    %v11232 = vpop.f32.mrf.mxu0
    %11233 = vdwg.mxu0
    %11234 = vmatpush.bf16.msra.mxu0 %v10723
    %11235 = vmatpush.bf16.msra.mxu0 %v10719
    %11236 = vmatpush.bf16.msra.mxu0 %v10715
    %11237 = vmatpush.bf16.msra.mxu0 %v10711
    %11238 = vmatpush.bf16.msra.mxu0 %v10707
    %11239 = vmatpush.bf16.msra.mxu0 %v10703
    %11240 = vmatpush.bf16.msra.mxu0 %v10699
    %11241 = vmatpush.bf16.msra.mxu0 %v10695
    %11242 = vmatmul.bf16.gmra.mxu0 %v9528
    %v11243 = vpop.f32.mrf.mxu0
    %v11244 = vadd.f32 %v11231, %v11243
    %v11245 = vpop.f32.mrf.mxu0
    %11246 = vdwg.mxu0
    %11247 = vmatpush.bf16.msra.mxu0 %v10755
    %11248 = vmatpush.bf16.msra.mxu0 %v10751
    %11249 = vmatpush.bf16.msra.mxu0 %v10747
    %11250 = vmatpush.bf16.msra.mxu0 %v10743
    %11251 = vmatpush.bf16.msra.mxu0 %v10739
    %11252 = vmatpush.bf16.msra.mxu0 %v10735
    %11253 = vmatpush.bf16.msra.mxu0 %v10731
    %11254 = vmatpush.bf16.msra.mxu0 %v10727
    %11255 = vmatmul.bf16.gmra.mxu0 %v9529
    %v11256 = vpop.f32.mrf.mxu0
    %v11257 = vadd.f32 %v11244, %v11256
    %v11258 = vpop.f32.mrf.mxu0
    %11259 = vdwg.mxu0
    %11260 = vmatpush.bf16.msra.mxu0 %v10787
    %11261 = vmatpush.bf16.msra.mxu0 %v10783
    %11262 = vmatpush.bf16.msra.mxu0 %v10779
    %11263 = vmatpush.bf16.msra.mxu0 %v10775
    %11264 = vmatpush.bf16.msra.mxu0 %v10771
    %11265 = vmatpush.bf16.msra.mxu0 %v10767
    %11266 = vmatpush.bf16.msra.mxu0 %v10763
    %11267 = vmatpush.bf16.msra.mxu0 %v10759
    %11268 = vmatmul.bf16.gmra.mxu0 %v9530
    %v11269 = vpop.f32.mrf.mxu0
    %v11270 = vadd.f32 %v11257, %v11269
    %v11271 = vpop.f32.mrf.mxu0
    %11272 = vdwg.mxu0
    %11273 = vmatpush.bf16.msra.mxu0 %v10819
    %11274 = vmatpush.bf16.msra.mxu0 %v10815
    %11275 = vmatpush.bf16.msra.mxu0 %v10811
    %11276 = vmatpush.bf16.msra.mxu0 %v10807
    %11277 = vmatpush.bf16.msra.mxu0 %v10803
    %11278 = vmatpush.bf16.msra.mxu0 %v10799
    %11279 = vmatpush.bf16.msra.mxu0 %v10795
    %11280 = vmatpush.bf16.msra.mxu0 %v10791
    %11281 = vmatmul.bf16.gmra.mxu0 %v9531
    %v11282 = vpop.f32.mrf.mxu0
    %v11283 = vadd.f32 %v11270, %v11282
    %v11284 = vpop.f32.mrf.mxu0
    %11285 = vdwg.mxu0
    %11286 = vmatpush.bf16.msra.mxu0 %v10596
    %11287 = vmatpush.bf16.msra.mxu0 %v10592
    %11288 = vmatpush.bf16.msra.mxu0 %v10588
    %11289 = vmatpush.bf16.msra.mxu0 %v10584
    %11290 = vmatpush.bf16.msra.mxu0 %v10580
    %11291 = vmatpush.bf16.msra.mxu0 %v10576
    %11292 = vmatpush.bf16.msra.mxu0 %v10572
    %11293 = vmatpush.bf16.msra.mxu0 %v10568
    %11294 = vmatmul.bf16.gmra.mxu0 %v9524
    %v11295 = vpop.f32.mrf.mxu0
    %v11296 = vadd.f32 %v9792, %v11295
    %v11297 = vpop.f32.mrf.mxu0
    %11298 = vdwg.mxu0
    %11299 = vmatpush.bf16.msra.mxu0 %v10628
    %11300 = vmatpush.bf16.msra.mxu0 %v10624
    %11301 = vmatpush.bf16.msra.mxu0 %v10620
    %11302 = vmatpush.bf16.msra.mxu0 %v10616
    %11303 = vmatpush.bf16.msra.mxu0 %v10612
    %11304 = vmatpush.bf16.msra.mxu0 %v10608
    %11305 = vmatpush.bf16.msra.mxu0 %v10604
    %11306 = vmatpush.bf16.msra.mxu0 %v10600
    %11307 = vmatmul.bf16.gmra.mxu0 %v9525
    %v11308 = vpop.f32.mrf.mxu0
    %v11309 = vadd.f32 %v11296, %v11308
    %v11310 = vpop.f32.mrf.mxu0
    %11311 = vdwg.mxu0
    %11312 = vmatpush.bf16.msra.mxu0 %v10660
    %11313 = vmatpush.bf16.msra.mxu0 %v10656
    %11314 = vmatpush.bf16.msra.mxu0 %v10652
    %11315 = vmatpush.bf16.msra.mxu0 %v10648
    %11316 = vmatpush.bf16.msra.mxu0 %v10644
    %11317 = vmatpush.bf16.msra.mxu0 %v10640
    %11318 = vmatpush.bf16.msra.mxu0 %v10636
    %11319 = vmatpush.bf16.msra.mxu0 %v10632
    %11320 = vmatmul.bf16.gmra.mxu0 %v9526
    %v11321 = vpop.f32.mrf.mxu0
    %v11322 = vadd.f32 %v11309, %v11321
    %v11323 = vpop.f32.mrf.mxu0
    %11324 = vdwg.mxu0
    %11325 = vmatpush.bf16.msra.mxu0 %v10692
    %11326 = vmatpush.bf16.msra.mxu0 %v10688
    %11327 = vmatpush.bf16.msra.mxu0 %v10684
    %11328 = vmatpush.bf16.msra.mxu0 %v10680
    %11329 = vmatpush.bf16.msra.mxu0 %v10676
    %11330 = vmatpush.bf16.msra.mxu0 %v10672
    %11331 = vmatpush.bf16.msra.mxu0 %v10668
    %11332 = vmatpush.bf16.msra.mxu0 %v10664
    %11333 = vmatmul.bf16.gmra.mxu0 %v9527
    %v11334 = vpop.f32.mrf.mxu0
    %v11335 = vadd.f32 %v11322, %v11334
    %v11336 = vpop.f32.mrf.mxu0
    %11337 = vdwg.mxu0
    %11338 = vmatpush.bf16.msra.mxu0 %v10724
    %11339 = vmatpush.bf16.msra.mxu0 %v10720
    %11340 = vmatpush.bf16.msra.mxu0 %v10716
    %11341 = vmatpush.bf16.msra.mxu0 %v10712
    %11342 = vmatpush.bf16.msra.mxu0 %v10708
    %11343 = vmatpush.bf16.msra.mxu0 %v10704
    %11344 = vmatpush.bf16.msra.mxu0 %v10700
    %11345 = vmatpush.bf16.msra.mxu0 %v10696
    %11346 = vmatmul.bf16.gmra.mxu0 %v9528
    %v11347 = vpop.f32.mrf.mxu0
    %v11348 = vadd.f32 %v11335, %v11347
    %v11349 = vpop.f32.mrf.mxu0
    %11350 = vdwg.mxu0
    %11351 = vmatpush.bf16.msra.mxu0 %v10756
    %11352 = vmatpush.bf16.msra.mxu0 %v10752
    %11353 = vmatpush.bf16.msra.mxu0 %v10748
    %11354 = vmatpush.bf16.msra.mxu0 %v10744
    %11355 = vmatpush.bf16.msra.mxu0 %v10740
    %11356 = vmatpush.bf16.msra.mxu0 %v10736
    %11357 = vmatpush.bf16.msra.mxu0 %v10732
    %11358 = vmatpush.bf16.msra.mxu0 %v10728
    %11359 = vmatmul.bf16.gmra.mxu0 %v9529
    %v11360 = vpop.f32.mrf.mxu0
    %v11361 = vadd.f32 %v11348, %v11360
    %v11362 = vpop.f32.mrf.mxu0
    %11363 = vdwg.mxu0
    %11364 = vmatpush.bf16.msra.mxu0 %v10788
    %11365 = vmatpush.bf16.msra.mxu0 %v10784
    %11366 = vmatpush.bf16.msra.mxu0 %v10780
    %11367 = vmatpush.bf16.msra.mxu0 %v10776
    %11368 = vmatpush.bf16.msra.mxu0 %v10772
    %11369 = vmatpush.bf16.msra.mxu0 %v10768
    %11370 = vmatpush.bf16.msra.mxu0 %v10764
    %11371 = vmatpush.bf16.msra.mxu0 %v10760
    %11372 = vmatmul.bf16.gmra.mxu0 %v9530
    %v11373 = vpop.f32.mrf.mxu0
    %v11374 = vadd.f32 %v11361, %v11373
    %v11375 = vpop.f32.mrf.mxu0
    %11376 = vdwg.mxu0
    %11377 = vmatpush.bf16.msra.mxu0 %v10820
    %11378 = vmatpush.bf16.msra.mxu0 %v10816
    %11379 = vmatpush.bf16.msra.mxu0 %v10812
    %11380 = vmatpush.bf16.msra.mxu0 %v10808
    %11381 = vmatpush.bf16.msra.mxu0 %v10804
    %11382 = vmatpush.bf16.msra.mxu0 %v10800
    %11383 = vmatpush.bf16.msra.mxu0 %v10796
    %11384 = vmatpush.bf16.msra.mxu0 %v10792
    %11385 = vmatmul.bf16.gmra.mxu0 %v9531
    %v11386 = vpop.f32.mrf.mxu0
    %v11387 = vadd.f32 %v11374, %v11386
    %v11388 = vpop.f32.mrf.mxu0
    %11389 = vdwg.mxu0
    %11390 = vmatpush.bf16.msra.mxu0 %v10597
    %11391 = vmatpush.bf16.msra.mxu0 %v10593
    %11392 = vmatpush.bf16.msra.mxu0 %v10589
    %11393 = vmatpush.bf16.msra.mxu0 %v10585
    %11394 = vmatpush.bf16.msra.mxu0 %v10581
    %11395 = vmatpush.bf16.msra.mxu0 %v10577
    %11396 = vmatpush.bf16.msra.mxu0 %v10573
    %11397 = vmatpush.bf16.msra.mxu0 %v10569
    %11398 = vmatmul.bf16.gmra.mxu0 %v9524
    %v11399 = vpop.f32.mrf.mxu0
    %v11400 = vadd.f32 %v9793, %v11399
    %v11401 = vpop.f32.mrf.mxu0
    %11402 = vdwg.mxu0
    %11403 = vmatpush.bf16.msra.mxu0 %v10629
    %11404 = vmatpush.bf16.msra.mxu0 %v10625
    %11405 = vmatpush.bf16.msra.mxu0 %v10621
    %11406 = vmatpush.bf16.msra.mxu0 %v10617
    %11407 = vmatpush.bf16.msra.mxu0 %v10613
    %11408 = vmatpush.bf16.msra.mxu0 %v10609
    %11409 = vmatpush.bf16.msra.mxu0 %v10605
    %11410 = vmatpush.bf16.msra.mxu0 %v10601
    %11411 = vmatmul.bf16.gmra.mxu0 %v9525
    %v11412 = vpop.f32.mrf.mxu0
    %v11413 = vadd.f32 %v11400, %v11412
    %v11414 = vpop.f32.mrf.mxu0
    %11415 = vdwg.mxu0
    %11416 = vmatpush.bf16.msra.mxu0 %v10661
    %11417 = vmatpush.bf16.msra.mxu0 %v10657
    %11418 = vmatpush.bf16.msra.mxu0 %v10653
    %11419 = vmatpush.bf16.msra.mxu0 %v10649
    %11420 = vmatpush.bf16.msra.mxu0 %v10645
    %11421 = vmatpush.bf16.msra.mxu0 %v10641
    %11422 = vmatpush.bf16.msra.mxu0 %v10637
    %11423 = vmatpush.bf16.msra.mxu0 %v10633
    %11424 = vmatmul.bf16.gmra.mxu0 %v9526
    %v11425 = vpop.f32.mrf.mxu0
    %v11426 = vadd.f32 %v11413, %v11425
    %v11427 = vpop.f32.mrf.mxu0
    %11428 = vdwg.mxu0
    %11429 = vmatpush.bf16.msra.mxu0 %v10693
    %11430 = vmatpush.bf16.msra.mxu0 %v10689
    %11431 = vmatpush.bf16.msra.mxu0 %v10685
    %11432 = vmatpush.bf16.msra.mxu0 %v10681
    %11433 = vmatpush.bf16.msra.mxu0 %v10677
    %11434 = vmatpush.bf16.msra.mxu0 %v10673
    %11435 = vmatpush.bf16.msra.mxu0 %v10669
    %11436 = vmatpush.bf16.msra.mxu0 %v10665
    %11437 = vmatmul.bf16.gmra.mxu0 %v9527
    %v11438 = vpop.f32.mrf.mxu0
    %v11439 = vadd.f32 %v11426, %v11438
    %v11440 = vpop.f32.mrf.mxu0
    %11441 = vdwg.mxu0
    %11442 = vmatpush.bf16.msra.mxu0 %v10725
    %11443 = vmatpush.bf16.msra.mxu0 %v10721
    %11444 = vmatpush.bf16.msra.mxu0 %v10717
    %11445 = vmatpush.bf16.msra.mxu0 %v10713
    %11446 = vmatpush.bf16.msra.mxu0 %v10709
    %11447 = vmatpush.bf16.msra.mxu0 %v10705
    %11448 = vmatpush.bf16.msra.mxu0 %v10701
    %11449 = vmatpush.bf16.msra.mxu0 %v10697
    %11450 = vmatmul.bf16.gmra.mxu0 %v9528
    %v11451 = vpop.f32.mrf.mxu0
    %v11452 = vadd.f32 %v11439, %v11451
    %v11453 = vpop.f32.mrf.mxu0
    %11454 = vdwg.mxu0
    %11455 = vmatpush.bf16.msra.mxu0 %v10757
    %11456 = vmatpush.bf16.msra.mxu0 %v10753
    %11457 = vmatpush.bf16.msra.mxu0 %v10749
    %11458 = vmatpush.bf16.msra.mxu0 %v10745
    %11459 = vmatpush.bf16.msra.mxu0 %v10741
    %11460 = vmatpush.bf16.msra.mxu0 %v10737
    %11461 = vmatpush.bf16.msra.mxu0 %v10733
    %11462 = vmatpush.bf16.msra.mxu0 %v10729
    %11463 = vmatmul.bf16.gmra.mxu0 %v9529
    %v11464 = vpop.f32.mrf.mxu0
    %v11465 = vadd.f32 %v11452, %v11464
    %v11466 = vpop.f32.mrf.mxu0
    %11467 = vdwg.mxu0
    %11468 = vmatpush.bf16.msra.mxu0 %v10789
    %11469 = vmatpush.bf16.msra.mxu0 %v10785
    %11470 = vmatpush.bf16.msra.mxu0 %v10781
    %11471 = vmatpush.bf16.msra.mxu0 %v10777
    %11472 = vmatpush.bf16.msra.mxu0 %v10773
    %11473 = vmatpush.bf16.msra.mxu0 %v10769
    %11474 = vmatpush.bf16.msra.mxu0 %v10765
    %11475 = vmatpush.bf16.msra.mxu0 %v10761
    %11476 = vmatmul.bf16.gmra.mxu0 %v9530
    %v11477 = vpop.f32.mrf.mxu0
    %v11478 = vadd.f32 %v11465, %v11477
    %v11479 = vpop.f32.mrf.mxu0
    %11480 = vdwg.mxu0
    %11481 = vmatpush.bf16.msra.mxu0 %v10821
    %11482 = vmatpush.bf16.msra.mxu0 %v10817
    %11483 = vmatpush.bf16.msra.mxu0 %v10813
    %11484 = vmatpush.bf16.msra.mxu0 %v10809
    %11485 = vmatpush.bf16.msra.mxu0 %v10805
    %11486 = vmatpush.bf16.msra.mxu0 %v10801
    %11487 = vmatpush.bf16.msra.mxu0 %v10797
    %11488 = vmatpush.bf16.msra.mxu0 %v10793
    %11489 = vmatmul.bf16.gmra.mxu0 %v9531
    %v11490 = vpop.f32.mrf.mxu0
    %v11491 = vadd.f32 %v11478, %v11490
    %v11492 = vpop.f32.mrf.mxu0
    %11493 = vdwg.mxu0
    %v11494 = vmax.f32 %v11179, 0.0
    %v11495 = vmax.f32 %v11283, 0.0
    %v11496 = vmax.f32 %v11387, 0.0
    %v11497 = vmax.f32 %v11491, 0.0
    %v11498 = vpack.c.bf16 %v11494, %v11494
    %v11499 = vpack.c.bf16 %v11495, %v11495
    %v11500 = vpack.c.bf16 %v11496, %v11496
    %v11501 = vpack.c.bf16 %v11497, %v11497
    %v11502 = vld [vmem:[#allocation9] sm:$0xff]
    %v11503 = vld [vmem:[#allocation9 + $0x8] sm:$0xff]
    %v11504 = vld [vmem:[#allocation9 + $0x10] sm:$0xff]
    %v11505 = vld [vmem:[#allocation9 + $0x18] sm:$0xff]
    %v11506 = vld [vmem:[#allocation9 + $0x20] sm:$0xff]
    %v11507 = vld [vmem:[#allocation9 + $0x28] sm:$0xff]
    %v11508 = vld [vmem:[#allocation9 + $0x30] sm:$0xff]
    %v11509 = vld [vmem:[#allocation9 + $0x38] sm:$0xff]
    %v11510 = vld [vmem:[#allocation9 + $0x40] sm:$0xff]
    %v11511 = vld [vmem:[#allocation9 + $0x48] sm:$0xff]
    %v11512 = vld [vmem:[#allocation9 + $0x50] sm:$0xff]
    %v11513 = vld [vmem:[#allocation9 + $0x58] sm:$0xff]
    %v11514 = vld [vmem:[#allocation9 + $0x60] sm:$0xff]
    %v11515 = vld [vmem:[#allocation9 + $0x68] sm:$0xff]
    %v11516 = vld [vmem:[#allocation9 + $0x70] sm:$0xff]
    %v11517 = vld [vmem:[#allocation9 + $0x78] sm:$0xff]
    %v11518 = vld [vmem:[#allocation9 + $0x80] sm:$0xff]
    %v11519 = vld [vmem:[#allocation9 + $0x88] sm:$0xff]
    %v11520 = vld [vmem:[#allocation9 + $0x90] sm:$0xff]
    %v11521 = vld [vmem:[#allocation9 + $0x98] sm:$0xff]
    %v11522 = vld [vmem:[#allocation9 + $0xa0] sm:$0xff]
    %v11523 = vld [vmem:[#allocation9 + $0xa8] sm:$0xff]
    %v11524 = vld [vmem:[#allocation9 + $0xb0] sm:$0xff]
    %v11525 = vld [vmem:[#allocation9 + $0xb8] sm:$0xff]
    %v11526 = vld [vmem:[#allocation9 + $0xc0] sm:$0xff]
    %v11527 = vld [vmem:[#allocation9 + $0xc8] sm:$0xff]
    %v11528 = vld [vmem:[#allocation9 + $0xd0] sm:$0xff]
    %v11529 = vld [vmem:[#allocation9 + $0xd8] sm:$0xff]
    %v11530 = vld [vmem:[#allocation9 + $0xe0] sm:$0xff]
    %v11531 = vld [vmem:[#allocation9 + $0xe8] sm:$0xff]
    %v11532 = vld [vmem:[#allocation9 + $0xf0] sm:$0xff]
    %v11533 = vld [vmem:[#allocation9 + $0xf8] sm:$0xff]
    %v11534 = vld [vmem:[#allocation9 + $0x100] sm:$0xff]
    %v11535 = vld [vmem:[#allocation9 + $0x108] sm:$0xff]
    %v11536 = vld [vmem:[#allocation9 + $0x110] sm:$0xff]
    %v11537 = vld [vmem:[#allocation9 + $0x118] sm:$0xff]
    %v11538 = vld [vmem:[#allocation9 + $0x120] sm:$0xff]
    %v11539 = vld [vmem:[#allocation9 + $0x128] sm:$0xff]
    %v11540 = vld [vmem:[#allocation9 + $0x130] sm:$0xff]
    %v11541 = vld [vmem:[#allocation9 + $0x138] sm:$0xff]
    %v11542 = vld [vmem:[#allocation9 + $0x140] sm:$0xff]
    %v11543 = vld [vmem:[#allocation9 + $0x148] sm:$0xff]
    %v11544 = vld [vmem:[#allocation9 + $0x150] sm:$0xff]
    %v11545 = vld [vmem:[#allocation9 + $0x158] sm:$0xff]
    %v11546 = vld [vmem:[#allocation9 + $0x160] sm:$0xff]
    %v11547 = vld [vmem:[#allocation9 + $0x168] sm:$0xff]
    %v11548 = vld [vmem:[#allocation9 + $0x170] sm:$0xff]
    %v11549 = vld [vmem:[#allocation9 + $0x178] sm:$0xff]
    %v11550 = vld [vmem:[#allocation9 + $0x180] sm:$0xff]
    %v11551 = vld [vmem:[#allocation9 + $0x188] sm:$0xff]
    %v11552 = vld [vmem:[#allocation9 + $0x190] sm:$0xff]
    %v11553 = vld [vmem:[#allocation9 + $0x198] sm:$0xff]
    %v11554 = vld [vmem:[#allocation9 + $0x1a0] sm:$0xff]
    %v11555 = vld [vmem:[#allocation9 + $0x1a8] sm:$0xff]
    %v11556 = vld [vmem:[#allocation9 + $0x1b0] sm:$0xff]
    %v11557 = vld [vmem:[#allocation9 + $0x1b8] sm:$0xff]
    %v11558 = vld [vmem:[#allocation9 + $0x1c0] sm:$0xff]
    %v11559 = vld [vmem:[#allocation9 + $0x1c8] sm:$0xff]
    %v11560 = vld [vmem:[#allocation9 + $0x1d0] sm:$0xff]
    %v11561 = vld [vmem:[#allocation9 + $0x1d8] sm:$0xff]
    %v11562 = vld [vmem:[#allocation9 + $0x1e0] sm:$0xff]
    %v11563 = vld [vmem:[#allocation9 + $0x1e8] sm:$0xff]
    %v11564 = vld [vmem:[#allocation9 + $0x1f0] sm:$0xff]
    %v11565 = vld [vmem:[#allocation9 + $0x1f8] sm:$0xff]
    %v11566 = vld [vmem:[#allocation10] sm:$0x3]
    %v11568 = vperm.slane %v11566, 0
    %v11569 = vperm.slane %v11566, 1
    %v11636 = vunpack.c.l.b16 %v11502
    %v11637 = vunpack.c.h.b16 %v11502
    %v11638 = vunpack.c.l.b16 %v11503
    %v11639 = vunpack.c.h.b16 %v11503
    %v11640 = vunpack.c.l.b16 %v11504
    %v11641 = vunpack.c.h.b16 %v11504
    %v11642 = vunpack.c.l.b16 %v11505
    %v11643 = vunpack.c.h.b16 %v11505
    %v11644 = vunpack.c.l.b16 %v11506
    %v11645 = vunpack.c.h.b16 %v11506
    %v11646 = vunpack.c.l.b16 %v11507
    %v11647 = vunpack.c.h.b16 %v11507
    %v11648 = vunpack.c.l.b16 %v11508
    %v11649 = vunpack.c.h.b16 %v11508
    %v11650 = vunpack.c.l.b16 %v11509
    %v11651 = vunpack.c.h.b16 %v11509
    %v11652 = vunpack.c.l.b16 %v11510
    %v11653 = vunpack.c.h.b16 %v11510
    %v11654 = vunpack.c.l.b16 %v11511
    %v11655 = vunpack.c.h.b16 %v11511
    %v11656 = vunpack.c.l.b16 %v11512
    %v11657 = vunpack.c.h.b16 %v11512
    %v11658 = vunpack.c.l.b16 %v11513
    %v11659 = vunpack.c.h.b16 %v11513
    %v11660 = vunpack.c.l.b16 %v11514
    %v11661 = vunpack.c.h.b16 %v11514
    %v11662 = vunpack.c.l.b16 %v11515
    %v11663 = vunpack.c.h.b16 %v11515
    %v11664 = vunpack.c.l.b16 %v11516
    %v11665 = vunpack.c.h.b16 %v11516
    %v11666 = vunpack.c.l.b16 %v11517
    %v11667 = vunpack.c.h.b16 %v11517
    %v11668 = vunpack.c.l.b16 %v11518
    %v11669 = vunpack.c.h.b16 %v11518
    %v11670 = vunpack.c.l.b16 %v11519
    %v11671 = vunpack.c.h.b16 %v11519
    %v11672 = vunpack.c.l.b16 %v11520
    %v11673 = vunpack.c.h.b16 %v11520
    %v11674 = vunpack.c.l.b16 %v11521
    %v11675 = vunpack.c.h.b16 %v11521
    %v11676 = vunpack.c.l.b16 %v11522
    %v11677 = vunpack.c.h.b16 %v11522
    %v11678 = vunpack.c.l.b16 %v11523
    %v11679 = vunpack.c.h.b16 %v11523
    %v11680 = vunpack.c.l.b16 %v11524
    %v11681 = vunpack.c.h.b16 %v11524
    %v11682 = vunpack.c.l.b16 %v11525
    %v11683 = vunpack.c.h.b16 %v11525
    %v11684 = vunpack.c.l.b16 %v11526
    %v11685 = vunpack.c.h.b16 %v11526
    %v11686 = vunpack.c.l.b16 %v11527
    %v11687 = vunpack.c.h.b16 %v11527
    %v11688 = vunpack.c.l.b16 %v11528
    %v11689 = vunpack.c.h.b16 %v11528
    %v11690 = vunpack.c.l.b16 %v11529
    %v11691 = vunpack.c.h.b16 %v11529
    %v11692 = vunpack.c.l.b16 %v11530
    %v11693 = vunpack.c.h.b16 %v11530
    %v11694 = vunpack.c.l.b16 %v11531
    %v11695 = vunpack.c.h.b16 %v11531
    %v11696 = vunpack.c.l.b16 %v11532
    %v11697 = vunpack.c.h.b16 %v11532
    %v11698 = vunpack.c.l.b16 %v11533
    %v11699 = vunpack.c.h.b16 %v11533
    %v11700 = vunpack.c.l.b16 %v11534
    %v11701 = vunpack.c.h.b16 %v11534
    %v11702 = vunpack.c.l.b16 %v11535
    %v11703 = vunpack.c.h.b16 %v11535
    %v11704 = vunpack.c.l.b16 %v11536
    %v11705 = vunpack.c.h.b16 %v11536
    %v11706 = vunpack.c.l.b16 %v11537
    %v11707 = vunpack.c.h.b16 %v11537
    %v11708 = vunpack.c.l.b16 %v11538
    %v11709 = vunpack.c.h.b16 %v11538
    %v11710 = vunpack.c.l.b16 %v11539
    %v11711 = vunpack.c.h.b16 %v11539
    %v11712 = vunpack.c.l.b16 %v11540
    %v11713 = vunpack.c.h.b16 %v11540
    %v11714 = vunpack.c.l.b16 %v11541
    %v11715 = vunpack.c.h.b16 %v11541
    %v11716 = vunpack.c.l.b16 %v11542
    %v11717 = vunpack.c.h.b16 %v11542
    %v11718 = vunpack.c.l.b16 %v11543
    %v11719 = vunpack.c.h.b16 %v11543
    %v11720 = vunpack.c.l.b16 %v11544
    %v11721 = vunpack.c.h.b16 %v11544
    %v11722 = vunpack.c.l.b16 %v11545
    %v11723 = vunpack.c.h.b16 %v11545
    %v11724 = vunpack.c.l.b16 %v11546
    %v11725 = vunpack.c.h.b16 %v11546
    %v11726 = vunpack.c.l.b16 %v11547
    %v11727 = vunpack.c.h.b16 %v11547
    %v11728 = vunpack.c.l.b16 %v11548
    %v11729 = vunpack.c.h.b16 %v11548
    %v11730 = vunpack.c.l.b16 %v11549
    %v11731 = vunpack.c.h.b16 %v11549
    %v11732 = vunpack.c.l.b16 %v11550
    %v11733 = vunpack.c.h.b16 %v11550
    %v11734 = vunpack.c.l.b16 %v11551
    %v11735 = vunpack.c.h.b16 %v11551
    %v11736 = vunpack.c.l.b16 %v11552
    %v11737 = vunpack.c.h.b16 %v11552
    %v11738 = vunpack.c.l.b16 %v11553
    %v11739 = vunpack.c.h.b16 %v11553
    %v11740 = vunpack.c.l.b16 %v11554
    %v11741 = vunpack.c.h.b16 %v11554
    %v11742 = vunpack.c.l.b16 %v11555
    %v11743 = vunpack.c.h.b16 %v11555
    %v11744 = vunpack.c.l.b16 %v11556
    %v11745 = vunpack.c.h.b16 %v11556
    %v11746 = vunpack.c.l.b16 %v11557
    %v11747 = vunpack.c.h.b16 %v11557
    %v11748 = vunpack.c.l.b16 %v11558
    %v11749 = vunpack.c.h.b16 %v11558
    %v11750 = vunpack.c.l.b16 %v11559
    %v11751 = vunpack.c.h.b16 %v11559
    %v11752 = vunpack.c.l.b16 %v11560
    %v11753 = vunpack.c.h.b16 %v11560
    %v11754 = vunpack.c.l.b16 %v11561
    %v11755 = vunpack.c.h.b16 %v11561
    %v11756 = vunpack.c.l.b16 %v11562
    %v11757 = vunpack.c.h.b16 %v11562
    %v11758 = vunpack.c.l.b16 %v11563
    %v11759 = vunpack.c.h.b16 %v11563
    %v11760 = vunpack.c.l.b16 %v11564
    %v11761 = vunpack.c.h.b16 %v11564
    %v11762 = vunpack.c.l.b16 %v11565
    %v11763 = vunpack.c.h.b16 %v11565
    %v11764 = vpack.c.b16 %v11638, %v11636
    %v11765 = vpack.c.b16 %v11639, %v11637
    %v11766 = vpack.c.b16 %v11642, %v11640
    %v11767 = vpack.c.b16 %v11643, %v11641
    %v11768 = vpack.c.b16 %v11646, %v11644
    %v11769 = vpack.c.b16 %v11647, %v11645
    %v11770 = vpack.c.b16 %v11650, %v11648
    %v11771 = vpack.c.b16 %v11651, %v11649
    %v11772 = vpack.c.b16 %v11654, %v11652
    %v11773 = vpack.c.b16 %v11655, %v11653
    %v11774 = vpack.c.b16 %v11658, %v11656
    %v11775 = vpack.c.b16 %v11659, %v11657
    %v11776 = vpack.c.b16 %v11662, %v11660
    %v11777 = vpack.c.b16 %v11663, %v11661
    %v11778 = vpack.c.b16 %v11666, %v11664
    %v11779 = vpack.c.b16 %v11667, %v11665
    %v11780 = vpack.c.b16 %v11670, %v11668
    %v11781 = vpack.c.b16 %v11671, %v11669
    %v11782 = vpack.c.b16 %v11674, %v11672
    %v11783 = vpack.c.b16 %v11675, %v11673
    %v11784 = vpack.c.b16 %v11678, %v11676
    %v11785 = vpack.c.b16 %v11679, %v11677
    %v11786 = vpack.c.b16 %v11682, %v11680
    %v11787 = vpack.c.b16 %v11683, %v11681
    %v11788 = vpack.c.b16 %v11686, %v11684
    %v11789 = vpack.c.b16 %v11687, %v11685
    %v11790 = vpack.c.b16 %v11690, %v11688
    %v11791 = vpack.c.b16 %v11691, %v11689
    %v11792 = vpack.c.b16 %v11694, %v11692
    %v11793 = vpack.c.b16 %v11695, %v11693
    %v11794 = vpack.c.b16 %v11698, %v11696
    %v11795 = vpack.c.b16 %v11699, %v11697
    %v11796 = vpack.c.b16 %v11702, %v11700
    %v11797 = vpack.c.b16 %v11703, %v11701
    %v11798 = vpack.c.b16 %v11706, %v11704
    %v11799 = vpack.c.b16 %v11707, %v11705
    %v11800 = vpack.c.b16 %v11710, %v11708
    %v11801 = vpack.c.b16 %v11711, %v11709
    %v11802 = vpack.c.b16 %v11714, %v11712
    %v11803 = vpack.c.b16 %v11715, %v11713
    %v11804 = vpack.c.b16 %v11718, %v11716
    %v11805 = vpack.c.b16 %v11719, %v11717
    %v11806 = vpack.c.b16 %v11722, %v11720
    %v11807 = vpack.c.b16 %v11723, %v11721
    %v11808 = vpack.c.b16 %v11726, %v11724
    %v11809 = vpack.c.b16 %v11727, %v11725
    %v11810 = vpack.c.b16 %v11730, %v11728
    %v11811 = vpack.c.b16 %v11731, %v11729
    %v11812 = vpack.c.b16 %v11734, %v11732
    %v11813 = vpack.c.b16 %v11735, %v11733
    %v11814 = vpack.c.b16 %v11738, %v11736
    %v11815 = vpack.c.b16 %v11739, %v11737
    %v11816 = vpack.c.b16 %v11742, %v11740
    %v11817 = vpack.c.b16 %v11743, %v11741
    %v11818 = vpack.c.b16 %v11746, %v11744
    %v11819 = vpack.c.b16 %v11747, %v11745
    %v11820 = vpack.c.b16 %v11750, %v11748
    %v11821 = vpack.c.b16 %v11751, %v11749
    %v11822 = vpack.c.b16 %v11754, %v11752
    %v11823 = vpack.c.b16 %v11755, %v11753
    %v11824 = vpack.c.b16 %v11758, %v11756
    %v11825 = vpack.c.b16 %v11759, %v11757
    %v11826 = vpack.c.b16 %v11762, %v11760
    %v11827 = vpack.c.b16 %v11763, %v11761
    %11892 = vmatpush.bf16.msra.mxu0 %v11778
    %11893 = vmatpush.bf16.msra.mxu0 %v11776
    %11894 = vmatpush.bf16.msra.mxu0 %v11774
    %11895 = vmatpush.bf16.msra.mxu0 %v11772
    %11896 = vmatpush.bf16.msra.mxu0 %v11770
    %11897 = vmatpush.bf16.msra.mxu0 %v11768
    %11898 = vmatpush.bf16.msra.mxu0 %v11766
    %11899 = vmatpush.bf16.msra.mxu0 %v11764
    %11900 = vmatmul.bf16.gmra.mxu0 %v11498
    %v11901 = vpop.f32.mrf.mxu0
    %v11902 = vadd.f32 %v11568, %v11901
    %v11903 = vpop.f32.mrf.mxu0
    %11904 = vdwg.mxu0
    %11905 = vmatpush.bf16.msra.mxu0 %v11794
    %11906 = vmatpush.bf16.msra.mxu0 %v11792
    %11907 = vmatpush.bf16.msra.mxu0 %v11790
    %11908 = vmatpush.bf16.msra.mxu0 %v11788
    %11909 = vmatpush.bf16.msra.mxu0 %v11786
    %11910 = vmatpush.bf16.msra.mxu0 %v11784
    %11911 = vmatpush.bf16.msra.mxu0 %v11782
    %11912 = vmatpush.bf16.msra.mxu0 %v11780
    %11913 = vmatmul.bf16.gmra.mxu0 %v11499
    %v11914 = vpop.f32.mrf.mxu0
    %v11915 = vadd.f32 %v11902, %v11914
    %v11916 = vpop.f32.mrf.mxu0
    %11917 = vdwg.mxu0
    %11918 = vmatpush.bf16.msra.mxu0 %v11810
    %11919 = vmatpush.bf16.msra.mxu0 %v11808
    %11920 = vmatpush.bf16.msra.mxu0 %v11806
    %11921 = vmatpush.bf16.msra.mxu0 %v11804
    %11922 = vmatpush.bf16.msra.mxu0 %v11802
    %11923 = vmatpush.bf16.msra.mxu0 %v11800
    %11924 = vmatpush.bf16.msra.mxu0 %v11798
    %11925 = vmatpush.bf16.msra.mxu0 %v11796
    %11926 = vmatmul.bf16.gmra.mxu0 %v11500
    %v11927 = vpop.f32.mrf.mxu0
    %v11928 = vadd.f32 %v11915, %v11927
    %v11929 = vpop.f32.mrf.mxu0
    %11930 = vdwg.mxu0
    %11931 = vmatpush.bf16.msra.mxu0 %v11826
    %11932 = vmatpush.bf16.msra.mxu0 %v11824
    %11933 = vmatpush.bf16.msra.mxu0 %v11822
    %11934 = vmatpush.bf16.msra.mxu0 %v11820
    %11935 = vmatpush.bf16.msra.mxu0 %v11818
    %11936 = vmatpush.bf16.msra.mxu0 %v11816
    %11937 = vmatpush.bf16.msra.mxu0 %v11814
    %11938 = vmatpush.bf16.msra.mxu0 %v11812
    %11939 = vmatmul.bf16.gmra.mxu0 %v11501
    %v11940 = vpop.f32.mrf.mxu0
    %v11941 = vadd.f32 %v11928, %v11940
    %v11942 = vpop.f32.mrf.mxu0
    %11943 = vdwg.mxu0
    %11944 = vmatpush.bf16.msra.mxu0 %v11779
    %11945 = vmatpush.bf16.msra.mxu0 %v11777
    %11946 = vmatpush.bf16.msra.mxu0 %v11775
    %11947 = vmatpush.bf16.msra.mxu0 %v11773
    %11948 = vmatpush.bf16.msra.mxu0 %v11771
    %11949 = vmatpush.bf16.msra.mxu0 %v11769
    %11950 = vmatpush.bf16.msra.mxu0 %v11767
    %11951 = vmatpush.bf16.msra.mxu0 %v11765
    %11952 = vmatmul.bf16.gmra.mxu0 %v11498
    %v11953 = vpop.f32.mrf.mxu0
    %v11954 = vadd.f32 %v11569, %v11953
    %v11955 = vpop.f32.mrf.mxu0
    %11956 = vdwg.mxu0
    %11957 = vmatpush.bf16.msra.mxu0 %v11795
    %11958 = vmatpush.bf16.msra.mxu0 %v11793
    %11959 = vmatpush.bf16.msra.mxu0 %v11791
    %11960 = vmatpush.bf16.msra.mxu0 %v11789
    %11961 = vmatpush.bf16.msra.mxu0 %v11787
    %11962 = vmatpush.bf16.msra.mxu0 %v11785
    %11963 = vmatpush.bf16.msra.mxu0 %v11783
    %11964 = vmatpush.bf16.msra.mxu0 %v11781
    %11965 = vmatmul.bf16.gmra.mxu0 %v11499
    %v11966 = vpop.f32.mrf.mxu0
    %v11967 = vadd.f32 %v11954, %v11966
    %v11968 = vpop.f32.mrf.mxu0
    %11969 = vdwg.mxu0
    %11970 = vmatpush.bf16.msra.mxu0 %v11811
    %11971 = vmatpush.bf16.msra.mxu0 %v11809
    %11972 = vmatpush.bf16.msra.mxu0 %v11807
    %11973 = vmatpush.bf16.msra.mxu0 %v11805
    %11974 = vmatpush.bf16.msra.mxu0 %v11803
    %11975 = vmatpush.bf16.msra.mxu0 %v11801
    %11976 = vmatpush.bf16.msra.mxu0 %v11799
    %11977 = vmatpush.bf16.msra.mxu0 %v11797
    %11978 = vmatmul.bf16.gmra.mxu0 %v11500
    %v11979 = vpop.f32.mrf.mxu0
    %v11980 = vadd.f32 %v11967, %v11979
    %v11981 = vpop.f32.mrf.mxu0
    %11982 = vdwg.mxu0
    %11983 = vmatpush.bf16.msra.mxu0 %v11827
    %11984 = vmatpush.bf16.msra.mxu0 %v11825
    %11985 = vmatpush.bf16.msra.mxu0 %v11823
    %11986 = vmatpush.bf16.msra.mxu0 %v11821
    %11987 = vmatpush.bf16.msra.mxu0 %v11819
    %11988 = vmatpush.bf16.msra.mxu0 %v11817
    %11989 = vmatpush.bf16.msra.mxu0 %v11815
    %11990 = vmatpush.bf16.msra.mxu0 %v11813
    %11991 = vmatmul.bf16.gmra.mxu0 %v11501
    %v11992 = vpop.f32.mrf.mxu0
    %v11993 = vadd.f32 %v11980, %v11992
    %v11994 = vpop.f32.mrf.mxu0
    %11995 = vdwg.mxu0
    %v11996 = vmax.f32 %v11941, 0.0
    %v11997 = vmax.f32 %v11993, 0.0
    %v11998 = vpack.c.bf16 %v11996, %v11996
    %v11999 = vpack.c.bf16 %v11997, %v11997
    %v12000 = vld [vmem:[#allocation12] sm:$0xf]
    %v12001 = vld [vmem:[#allocation12 + $0x4] sm:$0xf]
    %v12002 = vld [vmem:[#allocation12 + $0x8] sm:$0xf]
    %v12003 = vld [vmem:[#allocation12 + $0xc] sm:$0xf]
    %v12004 = vld [vmem:[#allocation12 + $0x10] sm:$0xf]
    %v12005 = vld [vmem:[#allocation12 + $0x14] sm:$0xf]
    %v12006 = vld [vmem:[#allocation12 + $0x18] sm:$0xf]
    %v12007 = vld [vmem:[#allocation12 + $0x1c] sm:$0xf]
    %v12008 = vld [vmem:[#allocation12 + $0x20] sm:$0xf]
    %v12009 = vld [vmem:[#allocation12 + $0x24] sm:$0xf]
    %v12010 = vld [vmem:[#allocation12 + $0x28] sm:$0xf]
    %v12011 = vld [vmem:[#allocation12 + $0x2c] sm:$0xf]
    %v12012 = vld [vmem:[#allocation12 + $0x30] sm:$0xf]
    %v12013 = vld [vmem:[#allocation12 + $0x34] sm:$0xf]
    %v12014 = vld [vmem:[#allocation12 + $0x38] sm:$0xf]
    %v12015 = vld [vmem:[#allocation12 + $0x3c] sm:$0xf]
    %v12016 = vld [vmem:[#allocation12 + $0x40] sm:$0xf]
    %v12017 = vld [vmem:[#allocation12 + $0x44] sm:$0xf]
    %v12018 = vld [vmem:[#allocation12 + $0x48] sm:$0xf]
    %v12019 = vld [vmem:[#allocation12 + $0x4c] sm:$0xf]
    %v12020 = vld [vmem:[#allocation12 + $0x50] sm:$0xf]
    %v12021 = vld [vmem:[#allocation12 + $0x54] sm:$0xf]
    %v12022 = vld [vmem:[#allocation12 + $0x58] sm:$0xf]
    %v12023 = vld [vmem:[#allocation12 + $0x5c] sm:$0xf]
    %v12024 = vld [vmem:[#allocation12 + $0x60] sm:$0xf]
    %v12025 = vld [vmem:[#allocation12 + $0x64] sm:$0xf]
    %v12026 = vld [vmem:[#allocation12 + $0x68] sm:$0xf]
    %v12027 = vld [vmem:[#allocation12 + $0x6c] sm:$0xf]
    %v12028 = vld [vmem:[#allocation12 + $0x70] sm:$0xf]
    %v12029 = vld [vmem:[#allocation12 + $0x74] sm:$0xf]
    %v12030 = vld [vmem:[#allocation12 + $0x78] sm:$0xf]
    %v12031 = vld [vmem:[#allocation12 + $0x7c] sm:$0xf]
    %v12032 = vld [vmem:[#allocation13] sm:$0x1]
    %v12034 = vperm.slane %v12032, 0
    %v12068 = vunpack.c.l.b16 %v12000
    %v12069 = vunpack.c.l.b16 %v12001
    %v12070 = vunpack.c.l.b16 %v12002
    %v12071 = vunpack.c.l.b16 %v12003
    %v12072 = vunpack.c.l.b16 %v12004
    %v12073 = vunpack.c.l.b16 %v12005
    %v12074 = vunpack.c.l.b16 %v12006
    %v12075 = vunpack.c.l.b16 %v12007
    %v12076 = vunpack.c.l.b16 %v12008
    %v12077 = vunpack.c.l.b16 %v12009
    %v12078 = vunpack.c.l.b16 %v12010
    %v12079 = vunpack.c.l.b16 %v12011
    %v12080 = vunpack.c.l.b16 %v12012
    %v12081 = vunpack.c.l.b16 %v12013
    %v12082 = vunpack.c.l.b16 %v12014
    %v12083 = vunpack.c.l.b16 %v12015
    %v12084 = vunpack.c.l.b16 %v12016
    %v12085 = vunpack.c.l.b16 %v12017
    %v12086 = vunpack.c.l.b16 %v12018
    %v12087 = vunpack.c.l.b16 %v12019
    %v12088 = vunpack.c.l.b16 %v12020
    %v12089 = vunpack.c.l.b16 %v12021
    %v12090 = vunpack.c.l.b16 %v12022
    %v12091 = vunpack.c.l.b16 %v12023
    %v12092 = vunpack.c.l.b16 %v12024
    %v12093 = vunpack.c.l.b16 %v12025
    %v12094 = vunpack.c.l.b16 %v12026
    %v12095 = vunpack.c.l.b16 %v12027
    %v12096 = vunpack.c.l.b16 %v12028
    %v12097 = vunpack.c.l.b16 %v12029
    %v12098 = vunpack.c.l.b16 %v12030
    %v12099 = vunpack.c.l.b16 %v12031
    %v12100 = vpack.c.b16 %v12069, %v12068
    %v12101 = vpack.c.b16 %v12071, %v12070
    %v12102 = vpack.c.b16 %v12073, %v12072
    %v12103 = vpack.c.b16 %v12075, %v12074
    %v12104 = vpack.c.b16 %v12077, %v12076
    %v12105 = vpack.c.b16 %v12079, %v12078
    %v12106 = vpack.c.b16 %v12081, %v12080
    %v12107 = vpack.c.b16 %v12083, %v12082
    %v12108 = vpack.c.b16 %v12085, %v12084
    %v12109 = vpack.c.b16 %v12087, %v12086
    %v12110 = vpack.c.b16 %v12089, %v12088
    %v12111 = vpack.c.b16 %v12091, %v12090
    %v12112 = vpack.c.b16 %v12093, %v12092
    %v12113 = vpack.c.b16 %v12095, %v12094
    %v12114 = vpack.c.b16 %v12097, %v12096
    %v12115 = vpack.c.b16 %v12099, %v12098
    %12132 = vmatpush.bf16.msra.mxu0 %v12107
    %12133 = vmatpush.bf16.msra.mxu0 %v12106
    %12134 = vmatpush.bf16.msra.mxu0 %v12105
    %12135 = vmatpush.bf16.msra.mxu0 %v12104
    %12136 = vmatpush.bf16.msra.mxu0 %v12103
    %12137 = vmatpush.bf16.msra.mxu0 %v12102
    %12138 = vmatpush.bf16.msra.mxu0 %v12101
    %12139 = vmatpush.bf16.msra.mxu0 %v12100
    %12140 = vmatmul.bf16.gmra.mxu0 %v11998
    %v12141 = vpop.f32.mrf.mxu0
    %v12142 = vadd.f32 %v12034, %v12141
    %v12143 = vpop.f32.mrf.mxu0
    %12144 = vdwg.mxu0
    %12145 = vmatpush.bf16.msra.mxu0 %v12115
    %12146 = vmatpush.bf16.msra.mxu0 %v12114
    %12147 = vmatpush.bf16.msra.mxu0 %v12113
    %12148 = vmatpush.bf16.msra.mxu0 %v12112
    %12149 = vmatpush.bf16.msra.mxu0 %v12111
    %12150 = vmatpush.bf16.msra.mxu0 %v12110
    %12151 = vmatpush.bf16.msra.mxu0 %v12109
    %12152 = vmatpush.bf16.msra.mxu0 %v12108
    %12153 = vmatmul.bf16.gmra.mxu0 %v11999
    %v12154 = vpop.f32.mrf.mxu0
    %v12155 = vadd.f32 %v12142, %v12154
    %v12156 = vpop.f32.mrf.mxu0
    %12157 = vdwg.mxu0
    %v12158 = vmax.f32 %v12155, 0.0
    %v12159 = vlaneseq
    %v12160 = vand.u32 %v12159, 127
    %vm12161 = vcmp.lt.s32.totalorder %v12160, 100
    %v12162 = vsel %vm12161, %v12158, -1e+30
    %12163 = vmax.xlane.f32.xlu0 %v12162
    %v12164 = vpop.xlane.xlu0 %12163
    %v12165 = vsub.f32 %v12162, %v12164
    %v12166 = vmul.f32 %v12165, 1.442695
    %v12167 = vpow.pop %v12166
    %12168 = vadd.xlane.f32.xlu0 %v12167
    %v12169 = vpop.xlane.xlu0 %12168
    %v12170 = vrcp.pop %v12169
    %v12171 = vmul.f32 %v12167, %v12170
    %12172 = vst [vmem:[%s9] sm:$0xff] %v12171
    // Predicated region
    $region70: #{classifier_forward.1} parent=1 // pred_check
      _
    $region71: #{classifier_forward.1} parent=1 // pred_check_branch
      %12174 = sbr.rel (0) target = $region73
    $region72: #{classifier_forward.1} parent=1 // pred_region
      _
    $region73: #{classifier_forward.1} parent=1 // pred_fallthru
      _
    // Predicated region
    $region74: #{classifier_forward.1} parent=1 // pred_check
      _
    $region75: #{classifier_forward.1} parent=1 // pred_check_branch
      %12176 = sbr.rel (0) target = $region77
    $region76: #{classifier_forward.1} parent=1 // pred_region
      _
    $region77: #{classifier_forward.1} parent=1 // pred_fallthru
      _
    %12177 = vsyncpa [#allocation3], 1
    %12178 = vsyncpa [#allocation5], 1
    %12179 = vsyncpa [#allocation8], 1
    %12180 = vsyncpa [#allocation11], 1
    %12181 = vsyncpa [#allocation14], 1

</llo_original>
